<compile_context>
chip_gen: v5e
topology: v5e:2x2
jax: 0.10.0
libtpu: 0.0.40
codegen_flags: <defaults>
</compile_context>

<pallas_src>
import math

import jax
import jax.numpy as jnp
from jax.experimental import pallas as pl
from jax.experimental.pallas import tpu as pltpu

# ---- model hyper-parameters (small but consistent with the module) ----------
L = 128            # sequence length (hard-coded by the mask generators)
D_MODEL = 32
NHEAD = 4
HEAD_DIM = D_MODEL // NHEAD
DFF = 64           # dim_feedforward
N_LAYERS = 2
EPS = 1e-5         # LayerNorm eps (PyTorch default)
NEG_INF = -1e30    # additive mask value (PyTorch uses -inf; finite is safer)


def _layernorm(x, gamma, beta):
    mu = jnp.mean(x, axis=-1, keepdims=True)
    var = jnp.mean((x - mu) ** 2, axis=-1, keepdims=True)
    return (x - mu) * jax.lax.rsqrt(var + EPS) * gamma + beta


# -----------------------------------------------------------------------------
# Fused Pallas kernel: ALL encoder layers for one batch block per grid step.
# -----------------------------------------------------------------------------
def fused_encoder_kernel(x_ref, maskb_ref,
                         wqkv_ref, wo_ref, w1_ref, w2_ref,
                         bqkv_ref, b1_ref, vec_ref,
                         y_ref, attn_ref):
    bblk = x_ref.shape[0]
    n_layers = wqkv_ref.shape[0]
    M = bblk * L
    scale = 1.0 / math.sqrt(HEAD_DIM)

    # Activations stay resident across all layers (no HBM round trip).
    xm = x_ref[...].reshape(M, D_MODEL)                      # (M, D) f32

    for layer in range(n_layers):                            # static unroll
        wqkv = wqkv_ref[layer]                               # (D, 3D)  bf16
        wo = wo_ref[layer]                                   # (D, D)   bf16
        w1 = w1_ref[layer]                                   # (D, DFF) bf16
        w2 = w2_ref[layer]                                   # (DFF, D) bf16
        bqkv = bqkv_ref[layer]                               # (1, 3D)  f32
        b1 = b1_ref[layer]                                   # (1, DFF) f32
        vec = vec_ref[layer]                                 # (6, D)   f32
        bo, b2 = vec[0:1], vec[1:2]
        g1, be1 = vec[2:3], vec[3:4]
        g2, be2 = vec[4:5], vec[5:6]
        mask_bias = maskb_ref[layer]                         # (bblk, 1, L) f32

        # Fused QKV projection: single MXU pass (N=96), bf16 in / f32 accum.
        qkv = jnp.dot(xm.astype(jnp.bfloat16), wqkv,
                      preferred_element_type=jnp.float32) + bqkv
        q = (qkv[:, 0:D_MODEL] * scale).reshape(bblk, L, D_MODEL)
        k = qkv[:, D_MODEL:2 * D_MODEL].reshape(bblk, L, D_MODEL)
        v = qkv[:, 2 * D_MODEL:3 * D_MODEL].reshape(bblk, L, D_MODEL)

        attn_out = jnp.zeros((M, D_MODEL), jnp.float32)      # sum_h ctx_h @ Wo_h
        attn_acc = jnp.zeros((bblk, L, L), jnp.float32)      # head-summed probs
        for h in range(NHEAD):                               # static unroll
            sl = slice(h * HEAD_DIM, (h + 1) * HEAD_DIM)
            qh = q[..., sl].astype(jnp.bfloat16)
            kh = k[..., sl].astype(jnp.bfloat16)
            vh = v[..., sl].astype(jnp.bfloat16)

            # q . k^T via contraction of the last dims (no explicit transpose).
            s = jnp.einsum('bqd,bkd->bqk', qh, kh,
                           preferred_element_type=jnp.float32) + mask_bias
            m = jnp.max(s, axis=-1, keepdims=True)
            p = jnp.exp(s - m)                               # unnormalized probs
            inv = pl.reciprocal(jnp.sum(p, axis=-1, keepdims=True))

            # Deferred normalization: scale the narrow context, not (L, L) p.
            ctx = jnp.einsum('bqk,bkd->bqd', p.astype(jnp.bfloat16), vh,
                             preferred_element_type=jnp.float32) * inv
            attn_acc = attn_acc + p * inv                    # returned weights

            # Accumulate output projection per head (no lane concat).
            attn_out = attn_out + jnp.dot(
                ctx.reshape(M, HEAD_DIM).astype(jnp.bfloat16), wo[sl, :],
                preferred_element_type=jnp.float32)

        # Attention weights averaged over heads (PyTorch MHA default).
        attn_ref[layer] = attn_acc * (1.0 / NHEAD)

        # residual + LayerNorm1   (dropout1 = identity in eval mode)
        h1 = _layernorm(xm + attn_out + bo, g1, be1)

        # feed-forward: linear1 -> relu -> linear2  (dropout = identity)
        f = jnp.dot(h1.astype(jnp.bfloat16), w1,
                    preferred_element_type=jnp.float32) + b1
        f = jnp.maximum(f, 0.0)
        f = jnp.dot(f.astype(jnp.bfloat16), w2,
                    preferred_element_type=jnp.float32) + b2

        # residual + LayerNorm2   (dropout2 = identity)
        xm = _layernorm(h1 + f, g2, be2)

    y_ref[...] = xm.reshape(bblk, L, D_MODEL)


# -----------------------------------------------------------------------------
# Wrapper: ONE pallas_call for the whole stack, grid over batch blocks.
# -----------------------------------------------------------------------------
def _pick_batch_block(B):
    # Largest divisor of B that still gives >= 2 grid steps (v7x dual TC);
    # falls back to the whole batch for B == 1.
    for d in range(B // 2, 0, -1):
        if B % d == 0:
            return d
    return B


def run_fused_encoder(x_bld, mask_bias, packed):
    B = x_bld.shape[0]
    n_layers = mask_bias.shape[0]
    bblk = _pick_batch_block(B)
    nb = B // bblk

    wqkv, wo, w1, w2, bqkv, b1, vec = packed

    def wspec(a):
        nd = a.ndim
        return pl.BlockSpec(a.shape, lambda b, _nd=nd: (0,) * _nd)

    in_specs = [
        pl.BlockSpec((bblk, L, D_MODEL), lambda b: (b, 0, 0)),
        pl.BlockSpec((n_layers, bblk, 1, L), lambda b: (0, b, 0, 0)),
        wspec(wqkv), wspec(wo), wspec(w1), wspec(w2),
        wspec(bqkv), wspec(b1), wspec(vec),
    ]
    out_specs = [
        pl.BlockSpec((bblk, L, D_MODEL), lambda b: (b, 0, 0)),
        pl.BlockSpec((n_layers, bblk, L, L), lambda b: (0, b, 0, 0)),
    ]
    out_shape = [
        jax.ShapeDtypeStruct((B, L, D_MODEL), jnp.float32),
        jax.ShapeDtypeStruct((n_layers, B, L, L), jnp.float32),
    ]

    y, attn = pl.pallas_call(
        fused_encoder_kernel,
        grid=(nb,),
        in_specs=in_specs,
        out_specs=out_specs,
        out_shape=out_shape,
        compiler_params=pltpu.CompilerParams(
            dimension_semantics=("parallel",)),
    )(x_bld, mask_bias, wqkv, wo, w1, w2, bqkv, b1, vec)
    return y, attn


# -----------------------------------------------------------------------------
# Mask generators (vectorized JAX equivalents of the torch static methods).
# -----------------------------------------------------------------------------
def generate_ignore_padding_mask(begin_offsets, end_offsets):
    idx = jnp.arange(L)[None, :]
    return idx >= end_offsets[:, None]                       # (B, L) bool


def generate_only_look_at_question_mask(begin_offsets, end_offsets):
    idx = jnp.arange(L)[None, :]
    m = idx >= begin_offsets[:, None]
    return m.at[:, 0].set(True)


def generate_only_look_at_comment_mask(begin_offsets, end_offsets):
    idx = jnp.arange(L)[None, :]
    inside = (idx >= begin_offsets[:, None]) & (idx < end_offsets[:, None])
    return ~inside


def build_mask_bias(begin_offsets, end_offsets, masking_strategies):
    # Precompute all layers' additive mask biases once: (n_layers, B, 1, L).
    biases = []
    for strat in masking_strategies:
        if strat == 'question_only':
            mask = generate_only_look_at_question_mask(begin_offsets, end_offsets)
        elif strat == 'comment_only':
            mask = generate_only_look_at_comment_mask(begin_offsets, end_offsets)
        else:
            mask = generate_ignore_padding_mask(begin_offsets, end_offsets)
        biases.append(jnp.where(mask, NEG_INF, 0.0).astype(jnp.float32))
    return jnp.stack(biases)[:, :, None, :]


# -----------------------------------------------------------------------------
# Parameter init (deterministic, shapes match the torch module's __init__).
# Linear / in_proj weights are stored pre-transposed as (in, out).
# -----------------------------------------------------------------------------
def init_layer_params(key):
    ks = jax.random.split(key, 12)

    def w(k, shape, scale=0.05):
        return jax.random.normal(k, shape, jnp.float32) * scale

    return dict(
        wq=w(ks[0], (D_MODEL, D_MODEL)),
        wk=w(ks[1], (D_MODEL, D_MODEL)),
        wv=w(ks[2], (D_MODEL, D_MODEL)),
        bq=w(ks[3], (1, D_MODEL), 0.01),
        bk=w(ks[4], (1, D_MODEL), 0.01),
        bv=w(ks[5], (1, D_MODEL), 0.01),
        wo=w(ks[6], (D_MODEL, D_MODEL)),
        bo=w(ks[7], (1, D_MODEL), 0.01),
        w1=w(ks[8], (D_MODEL, DFF)),
        b1=w(ks[9], (1, DFF), 0.01),
        w2=w(ks[10], (DFF, D_MODEL)),
        b2=w(ks[11], (1, D_MODEL), 0.01),
        g1=jnp.ones((1, D_MODEL), jnp.float32),
        be1=jnp.zeros((1, D_MODEL), jnp.float32),
        g2=jnp.ones((1, D_MODEL), jnp.float32),
        be2=jnp.zeros((1, D_MODEL), jnp.float32),
    )


def pack_params(layer_params):
    """Stack per-layer params into a few arrays; weights in bf16 for the MXU."""
    wqkv = jnp.stack([jnp.concatenate([p['wq'], p['wk'], p['wv']], axis=1)
                      for p in layer_params]).astype(jnp.bfloat16)  # (N,D,3D)
    wo = jnp.stack([p['wo'] for p in layer_params]).astype(jnp.bfloat16)
    w1 = jnp.stack([p['w1'] for p in layer_params]).astype(jnp.bfloat16)
    w2 = jnp.stack([p['w2'] for p in layer_params]).astype(jnp.bfloat16)
    bqkv = jnp.stack([jnp.concatenate([p['bq'], p['bk'], p['bv']], axis=1)
                      for p in layer_params])                       # (N,1,3D)
    b1 = jnp.stack([p['b1'] for p in layer_params])                 # (N,1,DFF)
    vec = jnp.stack([jnp.concatenate(
        [p['bo'], p['b2'], p['g1'], p['be1'], p['g2'], p['be2']], axis=0)
        for p in layer_params])                                     # (N,6,D)
    return (wqkv, wo, w1, w2, bqkv, b1, vec)


# -----------------------------------------------------------------------------
# Full module forward.
# -----------------------------------------------------------------------------
def transformer_encoder_with_attention(src_lbd, begin_offsets, end_offsets,
                                        layer_params, masking_strategies=None):
    n_layers = len(layer_params)
    if masking_strategies is None or len(masking_strategies) != n_layers:
        masking_strategies = ['pad'] * n_layers
    if masking_strategies[-1] != 'pad':
        raise ValueError('Masking strategies needs to end with a pad strategy!')

    x = jnp.transpose(src_lbd, (1, 0, 2))      # (L, B, D) -> (B, L, D)
    mask_bias = build_mask_bias(begin_offsets, end_offsets, masking_strategies)
    packed = pack_params(layer_params)
    y, attn = run_fused_encoder(x, mask_bias, packed)
    out = jnp.transpose(y, (1, 0, 2))          # back to (L, B, D)
    return out, attn                           # attn: (n_layers, B, L, L)


# -----------------------------------------------------------------------------
if __name__ == "__main__":
    key = jax.random.PRNGKey(0)
    k_src, k_params = jax.random.split(key)

    B = 2
    # PyTorch-convention input: (seq, batch, d_model)
    src = jax.random.normal(k_src, (L, B, D_MODEL), jnp.float32)
    begin_offsets = jnp.array([10, 20], dtype=jnp.int32)
    end_offsets = jnp.array([100, 128], dtype=jnp.int32)

    layer_keys = jax.random.split(k_params, N_LAYERS)
    layer_params = [init_layer_params(k) for k in layer_keys]

    out, attn_stack = transformer_encoder_with_attention(
        src, begin_offsets, end_offsets, layer_params, masking_strategies=None)

    out = jax.block_until_ready(out)
    attn_stack = jax.block_until_ready(attn_stack)

    assert out.shape == (L, B, D_MODEL)
    assert attn_stack.shape == (N_LAYERS, B, L, L)
    assert bool(jnp.all(jnp.isfinite(out)))
    # attention rows sum to 1 over keys
    assert bool(jnp.allclose(jnp.sum(attn_stack, axis=-1), 1.0, atol=1e-4))

    print("KERNEL_OK")
</pallas_src>

<mosaic_0001>
module attributes {stable_mosaic.version = 11 : i64} {
  func.func @fused_encoder_kernel(%arg0: i32, %arg1: memref<1x128x32xf32, #tpu.memory_space<vmem>>, %arg2: memref<2x1x1x128xf32, #tpu.memory_space<vmem>>, %arg3: memref<2x32x96xbf16, #tpu.memory_space<vmem>>, %arg4: memref<2x32x32xbf16, #tpu.memory_space<vmem>>, %arg5: memref<2x32x64xbf16, #tpu.memory_space<vmem>>, %arg6: memref<2x64x32xbf16, #tpu.memory_space<vmem>>, %arg7: memref<2x1x96xf32, #tpu.memory_space<vmem>>, %arg8: memref<2x1x64xf32, #tpu.memory_space<vmem>>, %arg9: memref<2x6x32xf32, #tpu.memory_space<vmem>>, %arg10: memref<1x128x32xf32, #tpu.memory_space<vmem>>, %arg11: memref<2x1x128x128xf32, #tpu.memory_space<vmem>>) attributes {dimension_semantics = [#tpu.dimension_semantics<parallel>], iteration_bounds = array<i64: 2>, scalar_prefetch = 0 : i64, scratch_operands = 0 : i64, tpu.core_type = #tpu.core_type<tc>, window_params = [{transform_indices = @transform_0, window_bounds = array<i64: 1, 128, 32>}, {transform_indices = @transform_1, window_bounds = array<i64: 2, 1, 1, 128>}, {pipeline_mode = #tpu.pipeline_mode<synchronous>, transform_indices = @transform_2, window_bounds = array<i64: 2, 32, 96>}, {pipeline_mode = #tpu.pipeline_mode<synchronous>, transform_indices = @transform_3, window_bounds = array<i64: 2, 32, 32>}, {pipeline_mode = #tpu.pipeline_mode<synchronous>, transform_indices = @transform_4, window_bounds = array<i64: 2, 32, 64>}, {pipeline_mode = #tpu.pipeline_mode<synchronous>, transform_indices = @transform_5, window_bounds = array<i64: 2, 64, 32>}, {pipeline_mode = #tpu.pipeline_mode<synchronous>, transform_indices = @transform_6, window_bounds = array<i64: 2, 1, 96>}, {pipeline_mode = #tpu.pipeline_mode<synchronous>, transform_indices = @transform_7, window_bounds = array<i64: 2, 1, 64>}, {pipeline_mode = #tpu.pipeline_mode<synchronous>, transform_indices = @transform_8, window_bounds = array<i64: 2, 6, 32>}, {transform_indices = @transform_9, window_bounds = array<i64: 1, 128, 32>}, {transform_indices = @transform_10, window_bounds = array<i64: 2, 1, 128, 128>}]} {
    %c0 = arith.constant 0 : index
    %c0_0 = arith.constant 0 : index
    %c0_1 = arith.constant 0 : index
    %0 = vector.load %arg1[%c0, %c0_0, %c0_1] : memref<1x128x32xf32, #tpu.memory_space<vmem>>, vector<1x128x32xf32>
    %1 = vector.shape_cast %0 : vector<1x128x32xf32> to vector<128x32xf32>
    %c0_2 = arith.constant 0 : index
    %c0_3 = arith.constant 0 : index
    %c0_4 = arith.constant 0 : index
    %2 = vector.load %arg3[%c0_2, %c0_3, %c0_4] : memref<2x32x96xbf16, #tpu.memory_space<vmem>>, vector<1x32x96xbf16>
    %3 = vector.shape_cast %2 : vector<1x32x96xbf16> to vector<32x96xbf16>
    %c0_5 = arith.constant 0 : index
    %c0_6 = arith.constant 0 : index
    %c0_7 = arith.constant 0 : index
    %4 = vector.load %arg4[%c0_5, %c0_6, %c0_7] : memref<2x32x32xbf16, #tpu.memory_space<vmem>>, vector<1x32x32xbf16>
    %5 = vector.shape_cast %4 : vector<1x32x32xbf16> to vector<32x32xbf16>
    %c0_8 = arith.constant 0 : index
    %c0_9 = arith.constant 0 : index
    %c0_10 = arith.constant 0 : index
    %6 = vector.load %arg5[%c0_8, %c0_9, %c0_10] : memref<2x32x64xbf16, #tpu.memory_space<vmem>>, vector<1x32x64xbf16>
    %7 = vector.shape_cast %6 : vector<1x32x64xbf16> to vector<32x64xbf16>
    %c0_11 = arith.constant 0 : index
    %c0_12 = arith.constant 0 : index
    %c0_13 = arith.constant 0 : index
    %8 = vector.load %arg6[%c0_11, %c0_12, %c0_13] : memref<2x64x32xbf16, #tpu.memory_space<vmem>>, vector<1x64x32xbf16>
    %9 = vector.shape_cast %8 : vector<1x64x32xbf16> to vector<64x32xbf16>
    %c0_14 = arith.constant 0 : index
    %c0_15 = arith.constant 0 : index
    %c0_16 = arith.constant 0 : index
    %10 = vector.load %arg7[%c0_14, %c0_15, %c0_16] : memref<2x1x96xf32, #tpu.memory_space<vmem>>, vector<1x1x96xf32>
    %11 = vector.shape_cast %10 : vector<1x1x96xf32> to vector<1x96xf32>
    %c0_17 = arith.constant 0 : index
    %c0_18 = arith.constant 0 : index
    %c0_19 = arith.constant 0 : index
    %12 = vector.load %arg8[%c0_17, %c0_18, %c0_19] : memref<2x1x64xf32, #tpu.memory_space<vmem>>, vector<1x1x64xf32>
    %13 = vector.shape_cast %12 : vector<1x1x64xf32> to vector<1x64xf32>
    %c0_20 = arith.constant 0 : index
    %c0_21 = arith.constant 0 : index
    %c0_22 = arith.constant 0 : index
    %14 = vector.load %arg9[%c0_20, %c0_21, %c0_22] : memref<2x6x32xf32, #tpu.memory_space<vmem>>, vector<1x6x32xf32>
    %15 = vector.shape_cast %14 : vector<1x6x32xf32> to vector<6x32xf32>
    %16 = vector.extract_strided_slice %15 {offsets = [0, 0], sizes = [1, 32], strides = [1, 1]} : vector<6x32xf32> to vector<1x32xf32>
    %17 = vector.extract_strided_slice %15 {offsets = [1, 0], sizes = [1, 32], strides = [1, 1]} : vector<6x32xf32> to vector<1x32xf32>
    %18 = vector.extract_strided_slice %15 {offsets = [2, 0], sizes = [1, 32], strides = [1, 1]} : vector<6x32xf32> to vector<1x32xf32>
    %19 = vector.extract_strided_slice %15 {offsets = [3, 0], sizes = [1, 32], strides = [1, 1]} : vector<6x32xf32> to vector<1x32xf32>
    %20 = vector.extract_strided_slice %15 {offsets = [4, 0], sizes = [1, 32], strides = [1, 1]} : vector<6x32xf32> to vector<1x32xf32>
    %21 = vector.extract_strided_slice %15 {offsets = [5, 0], sizes = [1, 32], strides = [1, 1]} : vector<6x32xf32> to vector<1x32xf32>
    %c0_23 = arith.constant 0 : index
    %c0_24 = arith.constant 0 : index
    %c0_25 = arith.constant 0 : index
    %c0_26 = arith.constant 0 : index
    %22 = vector.load %arg2[%c0_23, %c0_24, %c0_25, %c0_26] : memref<2x1x1x128xf32, #tpu.memory_space<vmem>>, vector<1x1x1x128xf32>
    %23 = vector.shape_cast %22 : vector<1x1x1x128xf32> to vector<1x1x128xf32>
    %24 = arith.truncf %1 : vector<128x32xf32> to vector<128x32xbf16>
    %cst = arith.constant dense<0.000000e+00> : vector<128x96xf32>
    %25 = tpu.matmul %24, %3, %cst {dimension_numbers = #tpu.dot_dimension_numbers<[1], [0], [0], [1], [0, 0, 1, 1], [], []>} : vector<128x32xbf16>, vector<32x96xbf16>, vector<128x96xf32> -> vector<128x96xf32>
    %26 = vector.broadcast %11 : vector<1x96xf32> to vector<128x96xf32>
    %27 = arith.addf %25, %26 : vector<128x96xf32>
    %28 = vector.extract_strided_slice %27 {offsets = [0, 0], sizes = [128, 32], strides = [1, 1]} : vector<128x96xf32> to vector<128x32xf32>
    %cst_27 = arith.constant 0.353553385 : f32
    %29 = vector.broadcast %cst_27 : f32 to vector<128x32xf32>
    %30 = arith.mulf %28, %29 : vector<128x32xf32>
    %31 = vector.shape_cast %30 : vector<128x32xf32> to vector<1x128x32xf32>
    %32 = vector.extract_strided_slice %27 {offsets = [0, 32], sizes = [128, 32], strides = [1, 1]} : vector<128x96xf32> to vector<128x32xf32>
    %33 = vector.shape_cast %32 : vector<128x32xf32> to vector<1x128x32xf32>
    %34 = vector.extract_strided_slice %27 {offsets = [0, 64], sizes = [128, 32], strides = [1, 1]} : vector<128x96xf32> to vector<128x32xf32>
    %35 = vector.shape_cast %34 : vector<128x32xf32> to vector<1x128x32xf32>
    %cst_28 = arith.constant 0.000000e+00 : f32
    %36 = vector.broadcast %cst_28 : f32 to vector<128x32xf32>
    %cst_29 = arith.constant 0.000000e+00 : f32
    %37 = vector.broadcast %cst_29 : f32 to vector<1x128x128xf32>
    %38 = vector.extract_strided_slice %31 {offsets = [0, 0, 0], sizes = [1, 128, 8], strides = [1, 1, 1]} : vector<1x128x32xf32> to vector<1x128x8xf32>
    %39 = arith.truncf %38 : vector<1x128x8xf32> to vector<1x128x8xbf16>
    %40 = vector.extract_strided_slice %33 {offsets = [0, 0, 0], sizes = [1, 128, 8], strides = [1, 1, 1]} : vector<1x128x32xf32> to vector<1x128x8xf32>
    %41 = arith.truncf %40 : vector<1x128x8xf32> to vector<1x128x8xbf16>
    %42 = vector.extract_strided_slice %35 {offsets = [0, 0, 0], sizes = [1, 128, 8], strides = [1, 1, 1]} : vector<1x128x32xf32> to vector<1x128x8xf32>
    %43 = arith.truncf %42 : vector<1x128x8xf32> to vector<1x128x8xbf16>
    "tpu.trace_start"() <{level = 10 : i32, message = "bqd,bkd->bqk"}> : () -> ()
    %cst_30 = arith.constant dense<0.000000e+00> : vector<1x128x128xf32>
    %44 = tpu.matmul %39, %41, %cst_30 {dimension_numbers = #tpu.dot_dimension_numbers<[2], [2], [1], [1], [0, 0, 0, 1, 1, 1], [0], [0]>} : vector<1x128x8xbf16>, vector<1x128x8xbf16>, vector<1x128x128xf32> -> vector<1x128x128xf32>
    "tpu.trace_stop"() : () -> ()
    %45 = vector.broadcast %23 : vector<1x1x128xf32> to vector<1x128x128xf32>
    %46 = arith.addf %44, %45 : vector<1x128x128xf32>
    %cst_31 = arith.constant dense<0xFF800000> : vector<1x128xf32>
    %47 = vector.multi_reduction <maximumf>, %46, %cst_31 [2] : vector<1x128x128xf32> to vector<1x128xf32>
    %48 = vector.shape_cast %47 : vector<1x128xf32> to vector<1x128x1xf32>
    %49 = vector.broadcast %48 : vector<1x128x1xf32> to vector<1x128x128xf32>
    %50 = arith.subf %46, %49 : vector<1x128x128xf32>
    %51 = math.exp %50 : vector<1x128x128xf32>
    %cst_32 = arith.constant dense<0.000000e+00> : vector<1x128xf32>
    %52 = vector.multi_reduction <add>, %51, %cst_32 [2] : vector<1x128x128xf32> to vector<1x128xf32>
    %53 = vector.shape_cast %52 : vector<1x128xf32> to vector<1x128x1xf32>
    %54 = tpu.reciprocal %53 : vector<1x128x1xf32> -> vector<1x128x1xf32>
    %55 = arith.truncf %51 : vector<1x128x128xf32> to vector<1x128x128xbf16>
    "tpu.trace_start"() <{level = 10 : i32, message = "bqk,bkd->bqd"}> : () -> ()
    %cst_33 = arith.constant dense<0.000000e+00> : vector<1x128x8xf32>
    %56 = tpu.matmul %55, %43, %cst_33 {dimension_numbers = #tpu.dot_dimension_numbers<[2], [1], [1], [2], [0, 0, 0, 1, 1, 2], [0], [0]>} : vector<1x128x128xbf16>, vector<1x128x8xbf16>, vector<1x128x8xf32> -> vector<1x128x8xf32>
    "tpu.trace_stop"() : () -> ()
    %57 = vector.broadcast %54 : vector<1x128x1xf32> to vector<1x128x8xf32>
    %58 = arith.mulf %56, %57 : vector<1x128x8xf32>
    %59 = vector.broadcast %54 : vector<1x128x1xf32> to vector<1x128x128xf32>
    %60 = arith.mulf %51, %59 : vector<1x128x128xf32>
    %61 = arith.addf %37, %60 : vector<1x128x128xf32>
    %62 = vector.shape_cast %58 : vector<1x128x8xf32> to vector<128x8xf32>
    %63 = arith.truncf %62 : vector<128x8xf32> to vector<128x8xbf16>
    %64 = vector.extract_strided_slice %5 {offsets = [0, 0], sizes = [8, 32], strides = [1, 1]} : vector<32x32xbf16> to vector<8x32xbf16>
    %cst_34 = arith.constant dense<0.000000e+00> : vector<128x32xf32>
    %65 = tpu.matmul %63, %64, %cst_34 {dimension_numbers = #tpu.dot_dimension_numbers<[1], [0], [0], [1], [0, 0, 1, 1], [], []>} : vector<128x8xbf16>, vector<8x32xbf16>, vector<128x32xf32> -> vector<128x32xf32>
    %66 = arith.addf %36, %65 : vector<128x32xf32>
    %67 = vector.extract_strided_slice %31 {offsets = [0, 0, 8], sizes = [1, 128, 8], strides = [1, 1, 1]} : vector<1x128x32xf32> to vector<1x128x8xf32>
    %68 = arith.truncf %67 : vector<1x128x8xf32> to vector<1x128x8xbf16>
    %69 = vector.extract_strided_slice %33 {offsets = [0, 0, 8], sizes = [1, 128, 8], strides = [1, 1, 1]} : vector<1x128x32xf32> to vector<1x128x8xf32>
    %70 = arith.truncf %69 : vector<1x128x8xf32> to vector<1x128x8xbf16>
    %71 = vector.extract_strided_slice %35 {offsets = [0, 0, 8], sizes = [1, 128, 8], strides = [1, 1, 1]} : vector<1x128x32xf32> to vector<1x128x8xf32>
    %72 = arith.truncf %71 : vector<1x128x8xf32> to vector<1x128x8xbf16>
    "tpu.trace_start"() <{level = 10 : i32, message = "bqd,bkd->bqk"}> : () -> ()
    %cst_35 = arith.constant dense<0.000000e+00> : vector<1x128x128xf32>
    %73 = tpu.matmul %68, %70, %cst_35 {dimension_numbers = #tpu.dot_dimension_numbers<[2], [2], [1], [1], [0, 0, 0, 1, 1, 1], [0], [0]>} : vector<1x128x8xbf16>, vector<1x128x8xbf16>, vector<1x128x128xf32> -> vector<1x128x128xf32>
    "tpu.trace_stop"() : () -> ()
    %74 = vector.broadcast %23 : vector<1x1x128xf32> to vector<1x128x128xf32>
    %75 = arith.addf %73, %74 : vector<1x128x128xf32>
    %cst_36 = arith.constant dense<0xFF800000> : vector<1x128xf32>
    %76 = vector.multi_reduction <maximumf>, %75, %cst_36 [2] : vector<1x128x128xf32> to vector<1x128xf32>
    %77 = vector.shape_cast %76 : vector<1x128xf32> to vector<1x128x1xf32>
    %78 = vector.broadcast %77 : vector<1x128x1xf32> to vector<1x128x128xf32>
    %79 = arith.subf %75, %78 : vector<1x128x128xf32>
    %80 = math.exp %79 : vector<1x128x128xf32>
    %cst_37 = arith.constant dense<0.000000e+00> : vector<1x128xf32>
    %81 = vector.multi_reduction <add>, %80, %cst_37 [2] : vector<1x128x128xf32> to vector<1x128xf32>
    %82 = vector.shape_cast %81 : vector<1x128xf32> to vector<1x128x1xf32>
    %83 = tpu.reciprocal %82 : vector<1x128x1xf32> -> vector<1x128x1xf32>
    %84 = arith.truncf %80 : vector<1x128x128xf32> to vector<1x128x128xbf16>
    "tpu.trace_start"() <{level = 10 : i32, message = "bqk,bkd->bqd"}> : () -> ()
    %cst_38 = arith.constant dense<0.000000e+00> : vector<1x128x8xf32>
    %85 = tpu.matmul %84, %72, %cst_38 {dimension_numbers = #tpu.dot_dimension_numbers<[2], [1], [1], [2], [0, 0, 0, 1, 1, 2], [0], [0]>} : vector<1x128x128xbf16>, vector<1x128x8xbf16>, vector<1x128x8xf32> -> vector<1x128x8xf32>
    "tpu.trace_stop"() : () -> ()
    %86 = vector.broadcast %83 : vector<1x128x1xf32> to vector<1x128x8xf32>
    %87 = arith.mulf %85, %86 : vector<1x128x8xf32>
    %88 = vector.broadcast %83 : vector<1x128x1xf32> to vector<1x128x128xf32>
    %89 = arith.mulf %80, %88 : vector<1x128x128xf32>
    %90 = arith.addf %61, %89 : vector<1x128x128xf32>
    %91 = vector.shape_cast %87 : vector<1x128x8xf32> to vector<128x8xf32>
    %92 = arith.truncf %91 : vector<128x8xf32> to vector<128x8xbf16>
    %93 = vector.extract_strided_slice %5 {offsets = [8, 0], sizes = [8, 32], strides = [1, 1]} : vector<32x32xbf16> to vector<8x32xbf16>
    %cst_39 = arith.constant dense<0.000000e+00> : vector<128x32xf32>
    %94 = tpu.matmul %92, %93, %cst_39 {dimension_numbers = #tpu.dot_dimension_numbers<[1], [0], [0], [1], [0, 0, 1, 1], [], []>} : vector<128x8xbf16>, vector<8x32xbf16>, vector<128x32xf32> -> vector<128x32xf32>
    %95 = arith.addf %66, %94 : vector<128x32xf32>
    %96 = vector.extract_strided_slice %31 {offsets = [0, 0, 16], sizes = [1, 128, 8], strides = [1, 1, 1]} : vector<1x128x32xf32> to vector<1x128x8xf32>
    %97 = arith.truncf %96 : vector<1x128x8xf32> to vector<1x128x8xbf16>
    %98 = vector.extract_strided_slice %33 {offsets = [0, 0, 16], sizes = [1, 128, 8], strides = [1, 1, 1]} : vector<1x128x32xf32> to vector<1x128x8xf32>
    %99 = arith.truncf %98 : vector<1x128x8xf32> to vector<1x128x8xbf16>
    %100 = vector.extract_strided_slice %35 {offsets = [0, 0, 16], sizes = [1, 128, 8], strides = [1, 1, 1]} : vector<1x128x32xf32> to vector<1x128x8xf32>
    %101 = arith.truncf %100 : vector<1x128x8xf32> to vector<1x128x8xbf16>
    "tpu.trace_start"() <{level = 10 : i32, message = "bqd,bkd->bqk"}> : () -> ()
    %cst_40 = arith.constant dense<0.000000e+00> : vector<1x128x128xf32>
    %102 = tpu.matmul %97, %99, %cst_40 {dimension_numbers = #tpu.dot_dimension_numbers<[2], [2], [1], [1], [0, 0, 0, 1, 1, 1], [0], [0]>} : vector<1x128x8xbf16>, vector<1x128x8xbf16>, vector<1x128x128xf32> -> vector<1x128x128xf32>
    "tpu.trace_stop"() : () -> ()
    %103 = vector.broadcast %23 : vector<1x1x128xf32> to vector<1x128x128xf32>
    %104 = arith.addf %102, %103 : vector<1x128x128xf32>
    %cst_41 = arith.constant dense<0xFF800000> : vector<1x128xf32>
    %105 = vector.multi_reduction <maximumf>, %104, %cst_41 [2] : vector<1x128x128xf32> to vector<1x128xf32>
    %106 = vector.shape_cast %105 : vector<1x128xf32> to vector<1x128x1xf32>
    %107 = vector.broadcast %106 : vector<1x128x1xf32> to vector<1x128x128xf32>
    %108 = arith.subf %104, %107 : vector<1x128x128xf32>
    %109 = math.exp %108 : vector<1x128x128xf32>
    %cst_42 = arith.constant dense<0.000000e+00> : vector<1x128xf32>
    %110 = vector.multi_reduction <add>, %109, %cst_42 [2] : vector<1x128x128xf32> to vector<1x128xf32>
    %111 = vector.shape_cast %110 : vector<1x128xf32> to vector<1x128x1xf32>
    %112 = tpu.reciprocal %111 : vector<1x128x1xf32> -> vector<1x128x1xf32>
    %113 = arith.truncf %109 : vector<1x128x128xf32> to vector<1x128x128xbf16>
    "tpu.trace_start"() <{level = 10 : i32, message = "bqk,bkd->bqd"}> : () -> ()
    %cst_43 = arith.constant dense<0.000000e+00> : vector<1x128x8xf32>
    %114 = tpu.matmul %113, %101, %cst_43 {dimension_numbers = #tpu.dot_dimension_numbers<[2], [1], [1], [2], [0, 0, 0, 1, 1, 2], [0], [0]>} : vector<1x128x128xbf16>, vector<1x128x8xbf16>, vector<1x128x8xf32> -> vector<1x128x8xf32>
    "tpu.trace_stop"() : () -> ()
    %115 = vector.broadcast %112 : vector<1x128x1xf32> to vector<1x128x8xf32>
    %116 = arith.mulf %114, %115 : vector<1x128x8xf32>
    %117 = vector.broadcast %112 : vector<1x128x1xf32> to vector<1x128x128xf32>
    %118 = arith.mulf %109, %117 : vector<1x128x128xf32>
    %119 = arith.addf %90, %118 : vector<1x128x128xf32>
    %120 = vector.shape_cast %116 : vector<1x128x8xf32> to vector<128x8xf32>
    %121 = arith.truncf %120 : vector<128x8xf32> to vector<128x8xbf16>
    %122 = vector.extract_strided_slice %5 {offsets = [16, 0], sizes = [8, 32], strides = [1, 1]} : vector<32x32xbf16> to vector<8x32xbf16>
    %cst_44 = arith.constant dense<0.000000e+00> : vector<128x32xf32>
    %123 = tpu.matmul %121, %122, %cst_44 {dimension_numbers = #tpu.dot_dimension_numbers<[1], [0], [0], [1], [0, 0, 1, 1], [], []>} : vector<128x8xbf16>, vector<8x32xbf16>, vector<128x32xf32> -> vector<128x32xf32>
    %124 = arith.addf %95, %123 : vector<128x32xf32>
    %125 = vector.extract_strided_slice %31 {offsets = [0, 0, 24], sizes = [1, 128, 8], strides = [1, 1, 1]} : vector<1x128x32xf32> to vector<1x128x8xf32>
    %126 = arith.truncf %125 : vector<1x128x8xf32> to vector<1x128x8xbf16>
    %127 = vector.extract_strided_slice %33 {offsets = [0, 0, 24], sizes = [1, 128, 8], strides = [1, 1, 1]} : vector<1x128x32xf32> to vector<1x128x8xf32>
    %128 = arith.truncf %127 : vector<1x128x8xf32> to vector<1x128x8xbf16>
    %129 = vector.extract_strided_slice %35 {offsets = [0, 0, 24], sizes = [1, 128, 8], strides = [1, 1, 1]} : vector<1x128x32xf32> to vector<1x128x8xf32>
    %130 = arith.truncf %129 : vector<1x128x8xf32> to vector<1x128x8xbf16>
    "tpu.trace_start"() <{level = 10 : i32, message = "bqd,bkd->bqk"}> : () -> ()
    %cst_45 = arith.constant dense<0.000000e+00> : vector<1x128x128xf32>
    %131 = tpu.matmul %126, %128, %cst_45 {dimension_numbers = #tpu.dot_dimension_numbers<[2], [2], [1], [1], [0, 0, 0, 1, 1, 1], [0], [0]>} : vector<1x128x8xbf16>, vector<1x128x8xbf16>, vector<1x128x128xf32> -> vector<1x128x128xf32>
    "tpu.trace_stop"() : () -> ()
    %132 = vector.broadcast %23 : vector<1x1x128xf32> to vector<1x128x128xf32>
    %133 = arith.addf %131, %132 : vector<1x128x128xf32>
    %cst_46 = arith.constant dense<0xFF800000> : vector<1x128xf32>
    %134 = vector.multi_reduction <maximumf>, %133, %cst_46 [2] : vector<1x128x128xf32> to vector<1x128xf32>
    %135 = vector.shape_cast %134 : vector<1x128xf32> to vector<1x128x1xf32>
    %136 = vector.broadcast %135 : vector<1x128x1xf32> to vector<1x128x128xf32>
    %137 = arith.subf %133, %136 : vector<1x128x128xf32>
    %138 = math.exp %137 : vector<1x128x128xf32>
    %cst_47 = arith.constant dense<0.000000e+00> : vector<1x128xf32>
    %139 = vector.multi_reduction <add>, %138, %cst_47 [2] : vector<1x128x128xf32> to vector<1x128xf32>
    %140 = vector.shape_cast %139 : vector<1x128xf32> to vector<1x128x1xf32>
    %141 = tpu.reciprocal %140 : vector<1x128x1xf32> -> vector<1x128x1xf32>
    %142 = arith.truncf %138 : vector<1x128x128xf32> to vector<1x128x128xbf16>
    "tpu.trace_start"() <{level = 10 : i32, message = "bqk,bkd->bqd"}> : () -> ()
    %cst_48 = arith.constant dense<0.000000e+00> : vector<1x128x8xf32>
    %143 = tpu.matmul %142, %130, %cst_48 {dimension_numbers = #tpu.dot_dimension_numbers<[2], [1], [1], [2], [0, 0, 0, 1, 1, 2], [0], [0]>} : vector<1x128x128xbf16>, vector<1x128x8xbf16>, vector<1x128x8xf32> -> vector<1x128x8xf32>
    "tpu.trace_stop"() : () -> ()
    %144 = vector.broadcast %141 : vector<1x128x1xf32> to vector<1x128x8xf32>
    %145 = arith.mulf %143, %144 : vector<1x128x8xf32>
    %146 = vector.broadcast %141 : vector<1x128x1xf32> to vector<1x128x128xf32>
    %147 = arith.mulf %138, %146 : vector<1x128x128xf32>
    %148 = arith.addf %119, %147 : vector<1x128x128xf32>
    %149 = vector.shape_cast %145 : vector<1x128x8xf32> to vector<128x8xf32>
    %150 = arith.truncf %149 : vector<128x8xf32> to vector<128x8xbf16>
    %151 = vector.extract_strided_slice %5 {offsets = [24, 0], sizes = [8, 32], strides = [1, 1]} : vector<32x32xbf16> to vector<8x32xbf16>
    %cst_49 = arith.constant dense<0.000000e+00> : vector<128x32xf32>
    %152 = tpu.matmul %150, %151, %cst_49 {dimension_numbers = #tpu.dot_dimension_numbers<[1], [0], [0], [1], [0, 0, 1, 1], [], []>} : vector<128x8xbf16>, vector<8x32xbf16>, vector<128x32xf32> -> vector<128x32xf32>
    %153 = arith.addf %124, %152 : vector<128x32xf32>
    %cst_50 = arith.constant 2.500000e-01 : f32
    %154 = vector.broadcast %cst_50 : f32 to vector<1x128x128xf32>
    %155 = arith.mulf %148, %154 : vector<1x128x128xf32>
    %c0_51 = arith.constant 0 : index
    %c0_52 = arith.constant 0 : index
    %c0_53 = arith.constant 0 : index
    %c0_54 = arith.constant 0 : index
    %156 = vector.load %arg11[%c0_51, %c0_52, %c0_53, %c0_54] : memref<2x1x128x128xf32, #tpu.memory_space<vmem>>, vector<1x1x128x128xf32>
    %157 = vector.shape_cast %156 : vector<1x1x128x128xf32> to vector<1x128x128xf32>
    %158 = vector.shape_cast %155 : vector<1x128x128xf32> to vector<1x1x128x128xf32>
    tpu.vector_store %arg11[%c0_51, %c0_52, %c0_53, %c0_54], %158 {strides = array<i32>} : memref<2x1x128x128xf32, #tpu.memory_space<vmem>>, vector<1x1x128x128xf32>,
    %159 = arith.addf %1, %153 : vector<128x32xf32>
    %160 = vector.broadcast %16 : vector<1x32xf32> to vector<128x32xf32>
    %161 = arith.addf %159, %160 : vector<128x32xf32>
    %cst_55 = arith.constant dense<0.000000e+00> : vector<128xf32>
    %162 = vector.multi_reduction <add>, %161, %cst_55 [1] : vector<128x32xf32> to vector<128xf32>
    %163 = vector.shape_cast %162 : vector<128xf32> to vector<128x1xf32>
    %cst_56 = arith.constant 3.200000e+01 : f32
    %164 = vector.broadcast %cst_56 : f32 to vector<128x1xf32>
    %165 = arith.divf %163, %164 : vector<128x1xf32>
    %166 = vector.broadcast %165 : vector<128x1xf32> to vector<128x32xf32>
    %167 = arith.subf %161, %166 : vector<128x32xf32>
    %168 = arith.mulf %167, %167 : vector<128x32xf32>
    %cst_57 = arith.constant dense<0.000000e+00> : vector<128xf32>
    %169 = vector.multi_reduction <add>, %168, %cst_57 [1] : vector<128x32xf32> to vector<128xf32>
    %170 = vector.shape_cast %169 : vector<128xf32> to vector<128x1xf32>
    %cst_58 = arith.constant 3.200000e+01 : f32
    %171 = vector.broadcast %cst_58 : f32 to vector<128x1xf32>
    %172 = arith.divf %170, %171 : vector<128x1xf32>
    %173 = vector.broadcast %165 : vector<128x1xf32> to vector<128x32xf32>
    %174 = arith.subf %161, %173 : vector<128x32xf32>
    %cst_59 = arith.constant 9.99999974E-6 : f32
    %175 = vector.broadcast %cst_59 : f32 to vector<128x1xf32>
    %176 = arith.addf %172, %175 : vector<128x1xf32>
    %177 = math.rsqrt %176 : vector<128x1xf32>
    %178 = vector.broadcast %177 : vector<128x1xf32> to vector<128x32xf32>
    %179 = arith.mulf %174, %178 : vector<128x32xf32>
    %180 = vector.broadcast %18 : vector<1x32xf32> to vector<128x32xf32>
    %181 = arith.mulf %179, %180 : vector<128x32xf32>
    %182 = vector.broadcast %19 : vector<1x32xf32> to vector<128x32xf32>
    %183 = arith.addf %181, %182 : vector<128x32xf32>
    %184 = arith.truncf %183 : vector<128x32xf32> to vector<128x32xbf16>
    %cst_60 = arith.constant dense<0.000000e+00> : vector<128x64xf32>
    %185 = tpu.matmul %184, %7, %cst_60 {dimension_numbers = #tpu.dot_dimension_numbers<[1], [0], [0], [1], [0, 0, 1, 1], [], []>} : vector<128x32xbf16>, vector<32x64xbf16>, vector<128x64xf32> -> vector<128x64xf32>
    %186 = vector.broadcast %13 : vector<1x64xf32> to vector<128x64xf32>
    %187 = arith.addf %185, %186 : vector<128x64xf32>
    %cst_61 = arith.constant 0.000000e+00 : f32
    %188 = vector.broadcast %cst_61 : f32 to vector<128x64xf32>
    %189 = arith.maximumf %187, %188 : vector<128x64xf32>
    %190 = arith.truncf %189 : vector<128x64xf32> to vector<128x64xbf16>
    %cst_62 = arith.constant dense<0.000000e+00> : vector<128x32xf32>
    %191 = tpu.matmul %190, %9, %cst_62 {dimension_numbers = #tpu.dot_dimension_numbers<[1], [0], [0], [1], [0, 0, 1, 1], [], []>} : vector<128x64xbf16>, vector<64x32xbf16>, vector<128x32xf32> -> vector<128x32xf32>
    %192 = vector.broadcast %17 : vector<1x32xf32> to vector<128x32xf32>
    %193 = arith.addf %191, %192 : vector<128x32xf32>
    %194 = arith.addf %183, %193 : vector<128x32xf32>
    %cst_63 = arith.constant dense<0.000000e+00> : vector<128xf32>
    %195 = vector.multi_reduction <add>, %194, %cst_63 [1] : vector<128x32xf32> to vector<128xf32>
    %196 = vector.shape_cast %195 : vector<128xf32> to vector<128x1xf32>
    %cst_64 = arith.constant 3.200000e+01 : f32
    %197 = vector.broadcast %cst_64 : f32 to vector<128x1xf32>
    %198 = arith.divf %196, %197 : vector<128x1xf32>
    %199 = vector.broadcast %198 : vector<128x1xf32> to vector<128x32xf32>
    %200 = arith.subf %194, %199 : vector<128x32xf32>
    %201 = arith.mulf %200, %200 : vector<128x32xf32>
    %cst_65 = arith.constant dense<0.000000e+00> : vector<128xf32>
    %202 = vector.multi_reduction <add>, %201, %cst_65 [1] : vector<128x32xf32> to vector<128xf32>
    %203 = vector.shape_cast %202 : vector<128xf32> to vector<128x1xf32>
    %cst_66 = arith.constant 3.200000e+01 : f32
    %204 = vector.broadcast %cst_66 : f32 to vector<128x1xf32>
    %205 = arith.divf %203, %204 : vector<128x1xf32>
    %206 = vector.broadcast %198 : vector<128x1xf32> to vector<128x32xf32>
    %207 = arith.subf %194, %206 : vector<128x32xf32>
    %cst_67 = arith.constant 9.99999974E-6 : f32
    %208 = vector.broadcast %cst_67 : f32 to vector<128x1xf32>
    %209 = arith.addf %205, %208 : vector<128x1xf32>
    %210 = math.rsqrt %209 : vector<128x1xf32>
    %211 = vector.broadcast %210 : vector<128x1xf32> to vector<128x32xf32>
    %212 = arith.mulf %207, %211 : vector<128x32xf32>
    %213 = vector.broadcast %20 : vector<1x32xf32> to vector<128x32xf32>
    %214 = arith.mulf %212, %213 : vector<128x32xf32>
    %215 = vector.broadcast %21 : vector<1x32xf32> to vector<128x32xf32>
    %216 = arith.addf %214, %215 : vector<128x32xf32>
    %c1 = arith.constant 1 : index
    %c0_68 = arith.constant 0 : index
    %c0_69 = arith.constant 0 : index
    %217 = vector.load %arg3[%c1, %c0_68, %c0_69] : memref<2x32x96xbf16, #tpu.memory_space<vmem>>, vector<1x32x96xbf16>
    %218 = vector.shape_cast %217 : vector<1x32x96xbf16> to vector<32x96xbf16>
    %c1_70 = arith.constant 1 : index
    %c0_71 = arith.constant 0 : index
    %c0_72 = arith.constant 0 : index
    %219 = vector.load %arg4[%c1_70, %c0_71, %c0_72] : memref<2x32x32xbf16, #tpu.memory_space<vmem>>, vector<1x32x32xbf16>
    %220 = vector.shape_cast %219 : vector<1x32x32xbf16> to vector<32x32xbf16>
    %c1_73 = arith.constant 1 : index
    %c0_74 = arith.constant 0 : index
    %c0_75 = arith.constant 0 : index
    %221 = vector.load %arg5[%c1_73, %c0_74, %c0_75] : memref<2x32x64xbf16, #tpu.memory_space<vmem>>, vector<1x32x64xbf16>
    %222 = vector.shape_cast %221 : vector<1x32x64xbf16> to vector<32x64xbf16>
    %c1_76 = arith.constant 1 : index
    %c0_77 = arith.constant 0 : index
    %c0_78 = arith.constant 0 : index
    %223 = vector.load %arg6[%c1_76, %c0_77, %c0_78] : memref<2x64x32xbf16, #tpu.memory_space<vmem>>, vector<1x64x32xbf16>
    %224 = vector.shape_cast %223 : vector<1x64x32xbf16> to vector<64x32xbf16>
    %c1_79 = arith.constant 1 : index
    %c0_80 = arith.constant 0 : index
    %c0_81 = arith.constant 0 : index
    %225 = vector.load %arg7[%c1_79, %c0_80, %c0_81] : memref<2x1x96xf32, #tpu.memory_space<vmem>>, vector<1x1x96xf32>
    %226 = vector.shape_cast %225 : vector<1x1x96xf32> to vector<1x96xf32>
    %c1_82 = arith.constant 1 : index
    %c0_83 = arith.constant 0 : index
    %c0_84 = arith.constant 0 : index
    %227 = vector.load %arg8[%c1_82, %c0_83, %c0_84] : memref<2x1x64xf32, #tpu.memory_space<vmem>>, vector<1x1x64xf32>
    %228 = vector.shape_cast %227 : vector<1x1x64xf32> to vector<1x64xf32>
    %c1_85 = arith.constant 1 : index
    %c0_86 = arith.constant 0 : index
    %c0_87 = arith.constant 0 : index
    %229 = vector.load %arg9[%c1_85, %c0_86, %c0_87] : memref<2x6x32xf32, #tpu.memory_space<vmem>>, vector<1x6x32xf32>
    %230 = vector.shape_cast %229 : vector<1x6x32xf32> to vector<6x32xf32>
    %231 = vector.extract_strided_slice %230 {offsets = [0, 0], sizes = [1, 32], strides = [1, 1]} : vector<6x32xf32> to vector<1x32xf32>
    %232 = vector.extract_strided_slice %230 {offsets = [1, 0], sizes = [1, 32], strides = [1, 1]} : vector<6x32xf32> to vector<1x32xf32>
    %233 = vector.extract_strided_slice %230 {offsets = [2, 0], sizes = [1, 32], strides = [1, 1]} : vector<6x32xf32> to vector<1x32xf32>
    %234 = vector.extract_strided_slice %230 {offsets = [3, 0], sizes = [1, 32], strides = [1, 1]} : vector<6x32xf32> to vector<1x32xf32>
    %235 = vector.extract_strided_slice %230 {offsets = [4, 0], sizes = [1, 32], strides = [1, 1]} : vector<6x32xf32> to vector<1x32xf32>
    %236 = vector.extract_strided_slice %230 {offsets = [5, 0], sizes = [1, 32], strides = [1, 1]} : vector<6x32xf32> to vector<1x32xf32>
    %c1_88 = arith.constant 1 : index
    %c0_89 = arith.constant 0 : index
    %c0_90 = arith.constant 0 : index
    %c0_91 = arith.constant 0 : index
    %237 = vector.load %arg2[%c1_88, %c0_89, %c0_90, %c0_91] : memref<2x1x1x128xf32, #tpu.memory_space<vmem>>, vector<1x1x1x128xf32>
    %238 = vector.shape_cast %237 : vector<1x1x1x128xf32> to vector<1x1x128xf32>
    %239 = arith.truncf %216 : vector<128x32xf32> to vector<128x32xbf16>
    %cst_92 = arith.constant dense<0.000000e+00> : vector<128x96xf32>
    %240 = tpu.matmul %239, %218, %cst_92 {dimension_numbers = #tpu.dot_dimension_numbers<[1], [0], [0], [1], [0, 0, 1, 1], [], []>} : vector<128x32xbf16>, vector<32x96xbf16>, vector<128x96xf32> -> vector<128x96xf32>
    %241 = vector.broadcast %226 : vector<1x96xf32> to vector<128x96xf32>
    %242 = arith.addf %240, %241 : vector<128x96xf32>
    %243 = vector.extract_strided_slice %242 {offsets = [0, 0], sizes = [128, 32], strides = [1, 1]} : vector<128x96xf32> to vector<128x32xf32>
    %cst_93 = arith.constant 0.353553385 : f32
    %244 = vector.broadcast %cst_93 : f32 to vector<128x32xf32>
    %245 = arith.mulf %243, %244 : vector<128x32xf32>
    %246 = vector.shape_cast %245 : vector<128x32xf32> to vector<1x128x32xf32>
    %247 = vector.extract_strided_slice %242 {offsets = [0, 32], sizes = [128, 32], strides = [1, 1]} : vector<128x96xf32> to vector<128x32xf32>
    %248 = vector.shape_cast %247 : vector<128x32xf32> to vector<1x128x32xf32>
    %249 = vector.extract_strided_slice %242 {offsets = [0, 64], sizes = [128, 32], strides = [1, 1]} : vector<128x96xf32> to vector<128x32xf32>
    %250 = vector.shape_cast %249 : vector<128x32xf32> to vector<1x128x32xf32>
    %cst_94 = arith.constant 0.000000e+00 : f32
    %251 = vector.broadcast %cst_94 : f32 to vector<128x32xf32>
    %cst_95 = arith.constant 0.000000e+00 : f32
    %252 = vector.broadcast %cst_95 : f32 to vector<1x128x128xf32>
    %253 = vector.extract_strided_slice %246 {offsets = [0, 0, 0], sizes = [1, 128, 8], strides = [1, 1, 1]} : vector<1x128x32xf32> to vector<1x128x8xf32>
    %254 = arith.truncf %253 : vector<1x128x8xf32> to vector<1x128x8xbf16>
    %255 = vector.extract_strided_slice %248 {offsets = [0, 0, 0], sizes = [1, 128, 8], strides = [1, 1, 1]} : vector<1x128x32xf32> to vector<1x128x8xf32>
    %256 = arith.truncf %255 : vector<1x128x8xf32> to vector<1x128x8xbf16>
    %257 = vector.extract_strided_slice %250 {offsets = [0, 0, 0], sizes = [1, 128, 8], strides = [1, 1, 1]} : vector<1x128x32xf32> to vector<1x128x8xf32>
    %258 = arith.truncf %257 : vector<1x128x8xf32> to vector<1x128x8xbf16>
    "tpu.trace_start"() <{level = 10 : i32, message = "bqd,bkd->bqk"}> : () -> ()
    %cst_96 = arith.constant dense<0.000000e+00> : vector<1x128x128xf32>
    %259 = tpu.matmul %254, %256, %cst_96 {dimension_numbers = #tpu.dot_dimension_numbers<[2], [2], [1], [1], [0, 0, 0, 1, 1, 1], [0], [0]>} : vector<1x128x8xbf16>, vector<1x128x8xbf16>, vector<1x128x128xf32> -> vector<1x128x128xf32>
    "tpu.trace_stop"() : () -> ()
    %260 = vector.broadcast %238 : vector<1x1x128xf32> to vector<1x128x128xf32>
    %261 = arith.addf %259, %260 : vector<1x128x128xf32>
    %cst_97 = arith.constant dense<0xFF800000> : vector<1x128xf32>
    %262 = vector.multi_reduction <maximumf>, %261, %cst_97 [2] : vector<1x128x128xf32> to vector<1x128xf32>
    %263 = vector.shape_cast %262 : vector<1x128xf32> to vector<1x128x1xf32>
    %264 = vector.broadcast %263 : vector<1x128x1xf32> to vector<1x128x128xf32>
    %265 = arith.subf %261, %264 : vector<1x128x128xf32>
    %266 = math.exp %265 : vector<1x128x128xf32>
    %cst_98 = arith.constant dense<0.000000e+00> : vector<1x128xf32>
    %267 = vector.multi_reduction <add>, %266, %cst_98 [2] : vector<1x128x128xf32> to vector<1x128xf32>
    %268 = vector.shape_cast %267 : vector<1x128xf32> to vector<1x128x1xf32>
    %269 = tpu.reciprocal %268 : vector<1x128x1xf32> -> vector<1x128x1xf32>
    %270 = arith.truncf %266 : vector<1x128x128xf32> to vector<1x128x128xbf16>
    "tpu.trace_start"() <{level = 10 : i32, message = "bqk,bkd->bqd"}> : () -> ()
    %cst_99 = arith.constant dense<0.000000e+00> : vector<1x128x8xf32>
    %271 = tpu.matmul %270, %258, %cst_99 {dimension_numbers = #tpu.dot_dimension_numbers<[2], [1], [1], [2], [0, 0, 0, 1, 1, 2], [0], [0]>} : vector<1x128x128xbf16>, vector<1x128x8xbf16>, vector<1x128x8xf32> -> vector<1x128x8xf32>
    "tpu.trace_stop"() : () -> ()
    %272 = vector.broadcast %269 : vector<1x128x1xf32> to vector<1x128x8xf32>
    %273 = arith.mulf %271, %272 : vector<1x128x8xf32>
    %274 = vector.broadcast %269 : vector<1x128x1xf32> to vector<1x128x128xf32>
    %275 = arith.mulf %266, %274 : vector<1x128x128xf32>
    %276 = arith.addf %252, %275 : vector<1x128x128xf32>
    %277 = vector.shape_cast %273 : vector<1x128x8xf32> to vector<128x8xf32>
    %278 = arith.truncf %277 : vector<128x8xf32> to vector<128x8xbf16>
    %279 = vector.extract_strided_slice %220 {offsets = [0, 0], sizes = [8, 32], strides = [1, 1]} : vector<32x32xbf16> to vector<8x32xbf16>
    %cst_100 = arith.constant dense<0.000000e+00> : vector<128x32xf32>
    %280 = tpu.matmul %278, %279, %cst_100 {dimension_numbers = #tpu.dot_dimension_numbers<[1], [0], [0], [1], [0, 0, 1, 1], [], []>} : vector<128x8xbf16>, vector<8x32xbf16>, vector<128x32xf32> -> vector<128x32xf32>
    %281 = arith.addf %251, %280 : vector<128x32xf32>
    %282 = vector.extract_strided_slice %246 {offsets = [0, 0, 8], sizes = [1, 128, 8], strides = [1, 1, 1]} : vector<1x128x32xf32> to vector<1x128x8xf32>
    %283 = arith.truncf %282 : vector<1x128x8xf32> to vector<1x128x8xbf16>
    %284 = vector.extract_strided_slice %248 {offsets = [0, 0, 8], sizes = [1, 128, 8], strides = [1, 1, 1]} : vector<1x128x32xf32> to vector<1x128x8xf32>
    %285 = arith.truncf %284 : vector<1x128x8xf32> to vector<1x128x8xbf16>
    %286 = vector.extract_strided_slice %250 {offsets = [0, 0, 8], sizes = [1, 128, 8], strides = [1, 1, 1]} : vector<1x128x32xf32> to vector<1x128x8xf32>
    %287 = arith.truncf %286 : vector<1x128x8xf32> to vector<1x128x8xbf16>
    "tpu.trace_start"() <{level = 10 : i32, message = "bqd,bkd->bqk"}> : () -> ()
    %cst_101 = arith.constant dense<0.000000e+00> : vector<1x128x128xf32>
    %288 = tpu.matmul %283, %285, %cst_101 {dimension_numbers = #tpu.dot_dimension_numbers<[2], [2], [1], [1], [0, 0, 0, 1, 1, 1], [0], [0]>} : vector<1x128x8xbf16>, vector<1x128x8xbf16>, vector<1x128x128xf32> -> vector<1x128x128xf32>
    "tpu.trace_stop"() : () -> ()
    %289 = vector.broadcast %238 : vector<1x1x128xf32> to vector<1x128x128xf32>
    %290 = arith.addf %288, %289 : vector<1x128x128xf32>
    %cst_102 = arith.constant dense<0xFF800000> : vector<1x128xf32>
    %291 = vector.multi_reduction <maximumf>, %290, %cst_102 [2] : vector<1x128x128xf32> to vector<1x128xf32>
    %292 = vector.shape_cast %291 : vector<1x128xf32> to vector<1x128x1xf32>
    %293 = vector.broadcast %292 : vector<1x128x1xf32> to vector<1x128x128xf32>
    %294 = arith.subf %290, %293 : vector<1x128x128xf32>
    %295 = math.exp %294 : vector<1x128x128xf32>
    %cst_103 = arith.constant dense<0.000000e+00> : vector<1x128xf32>
    %296 = vector.multi_reduction <add>, %295, %cst_103 [2] : vector<1x128x128xf32> to vector<1x128xf32>
    %297 = vector.shape_cast %296 : vector<1x128xf32> to vector<1x128x1xf32>
    %298 = tpu.reciprocal %297 : vector<1x128x1xf32> -> vector<1x128x1xf32>
    %299 = arith.truncf %295 : vector<1x128x128xf32> to vector<1x128x128xbf16>
    "tpu.trace_start"() <{level = 10 : i32, message = "bqk,bkd->bqd"}> : () -> ()
    %cst_104 = arith.constant dense<0.000000e+00> : vector<1x128x8xf32>
    %300 = tpu.matmul %299, %287, %cst_104 {dimension_numbers = #tpu.dot_dimension_numbers<[2], [1], [1], [2], [0, 0, 0, 1, 1, 2], [0], [0]>} : vector<1x128x128xbf16>, vector<1x128x8xbf16>, vector<1x128x8xf32> -> vector<1x128x8xf32>
    "tpu.trace_stop"() : () -> ()
    %301 = vector.broadcast %298 : vector<1x128x1xf32> to vector<1x128x8xf32>
    %302 = arith.mulf %300, %301 : vector<1x128x8xf32>
    %303 = vector.broadcast %298 : vector<1x128x1xf32> to vector<1x128x128xf32>
    %304 = arith.mulf %295, %303 : vector<1x128x128xf32>
    %305 = arith.addf %276, %304 : vector<1x128x128xf32>
    %306 = vector.shape_cast %302 : vector<1x128x8xf32> to vector<128x8xf32>
    %307 = arith.truncf %306 : vector<128x8xf32> to vector<128x8xbf16>
    %308 = vector.extract_strided_slice %220 {offsets = [8, 0], sizes = [8, 32], strides = [1, 1]} : vector<32x32xbf16> to vector<8x32xbf16>
    %cst_105 = arith.constant dense<0.000000e+00> : vector<128x32xf32>
    %309 = tpu.matmul %307, %308, %cst_105 {dimension_numbers = #tpu.dot_dimension_numbers<[1], [0], [0], [1], [0, 0, 1, 1], [], []>} : vector<128x8xbf16>, vector<8x32xbf16>, vector<128x32xf32> -> vector<128x32xf32>
    %310 = arith.addf %281, %309 : vector<128x32xf32>
    %311 = vector.extract_strided_slice %246 {offsets = [0, 0, 16], sizes = [1, 128, 8], strides = [1, 1, 1]} : vector<1x128x32xf32> to vector<1x128x8xf32>
    %312 = arith.truncf %311 : vector<1x128x8xf32> to vector<1x128x8xbf16>
    %313 = vector.extract_strided_slice %248 {offsets = [0, 0, 16], sizes = [1, 128, 8], strides = [1, 1, 1]} : vector<1x128x32xf32> to vector<1x128x8xf32>
    %314 = arith.truncf %313 : vector<1x128x8xf32> to vector<1x128x8xbf16>
    %315 = vector.extract_strided_slice %250 {offsets = [0, 0, 16], sizes = [1, 128, 8], strides = [1, 1, 1]} : vector<1x128x32xf32> to vector<1x128x8xf32>
    %316 = arith.truncf %315 : vector<1x128x8xf32> to vector<1x128x8xbf16>
    "tpu.trace_start"() <{level = 10 : i32, message = "bqd,bkd->bqk"}> : () -> ()
    %cst_106 = arith.constant dense<0.000000e+00> : vector<1x128x128xf32>
    %317 = tpu.matmul %312, %314, %cst_106 {dimension_numbers = #tpu.dot_dimension_numbers<[2], [2], [1], [1], [0, 0, 0, 1, 1, 1], [0], [0]>} : vector<1x128x8xbf16>, vector<1x128x8xbf16>, vector<1x128x128xf32> -> vector<1x128x128xf32>
    "tpu.trace_stop"() : () -> ()
    %318 = vector.broadcast %238 : vector<1x1x128xf32> to vector<1x128x128xf32>
    %319 = arith.addf %317, %318 : vector<1x128x128xf32>
    %cst_107 = arith.constant dense<0xFF800000> : vector<1x128xf32>
    %320 = vector.multi_reduction <maximumf>, %319, %cst_107 [2] : vector<1x128x128xf32> to vector<1x128xf32>
    %321 = vector.shape_cast %320 : vector<1x128xf32> to vector<1x128x1xf32>
    %322 = vector.broadcast %321 : vector<1x128x1xf32> to vector<1x128x128xf32>
    %323 = arith.subf %319, %322 : vector<1x128x128xf32>
    %324 = math.exp %323 : vector<1x128x128xf32>
    %cst_108 = arith.constant dense<0.000000e+00> : vector<1x128xf32>
    %325 = vector.multi_reduction <add>, %324, %cst_108 [2] : vector<1x128x128xf32> to vector<1x128xf32>
    %326 = vector.shape_cast %325 : vector<1x128xf32> to vector<1x128x1xf32>
    %327 = tpu.reciprocal %326 : vector<1x128x1xf32> -> vector<1x128x1xf32>
    %328 = arith.truncf %324 : vector<1x128x128xf32> to vector<1x128x128xbf16>
    "tpu.trace_start"() <{level = 10 : i32, message = "bqk,bkd->bqd"}> : () -> ()
    %cst_109 = arith.constant dense<0.000000e+00> : vector<1x128x8xf32>
    %329 = tpu.matmul %328, %316, %cst_109 {dimension_numbers = #tpu.dot_dimension_numbers<[2], [1], [1], [2], [0, 0, 0, 1, 1, 2], [0], [0]>} : vector<1x128x128xbf16>, vector<1x128x8xbf16>, vector<1x128x8xf32> -> vector<1x128x8xf32>
    "tpu.trace_stop"() : () -> ()
    %330 = vector.broadcast %327 : vector<1x128x1xf32> to vector<1x128x8xf32>
    %331 = arith.mulf %329, %330 : vector<1x128x8xf32>
    %332 = vector.broadcast %327 : vector<1x128x1xf32> to vector<1x128x128xf32>
    %333 = arith.mulf %324, %332 : vector<1x128x128xf32>
    %334 = arith.addf %305, %333 : vector<1x128x128xf32>
    %335 = vector.shape_cast %331 : vector<1x128x8xf32> to vector<128x8xf32>
    %336 = arith.truncf %335 : vector<128x8xf32> to vector<128x8xbf16>
    %337 = vector.extract_strided_slice %220 {offsets = [16, 0], sizes = [8, 32], strides = [1, 1]} : vector<32x32xbf16> to vector<8x32xbf16>
    %cst_110 = arith.constant dense<0.000000e+00> : vector<128x32xf32>
    %338 = tpu.matmul %336, %337, %cst_110 {dimension_numbers = #tpu.dot_dimension_numbers<[1], [0], [0], [1], [0, 0, 1, 1], [], []>} : vector<128x8xbf16>, vector<8x32xbf16>, vector<128x32xf32> -> vector<128x32xf32>
    %339 = arith.addf %310, %338 : vector<128x32xf32>
    %340 = vector.extract_strided_slice %246 {offsets = [0, 0, 24], sizes = [1, 128, 8], strides = [1, 1, 1]} : vector<1x128x32xf32> to vector<1x128x8xf32>
    %341 = arith.truncf %340 : vector<1x128x8xf32> to vector<1x128x8xbf16>
    %342 = vector.extract_strided_slice %248 {offsets = [0, 0, 24], sizes = [1, 128, 8], strides = [1, 1, 1]} : vector<1x128x32xf32> to vector<1x128x8xf32>
    %343 = arith.truncf %342 : vector<1x128x8xf32> to vector<1x128x8xbf16>
    %344 = vector.extract_strided_slice %250 {offsets = [0, 0, 24], sizes = [1, 128, 8], strides = [1, 1, 1]} : vector<1x128x32xf32> to vector<1x128x8xf32>
    %345 = arith.truncf %344 : vector<1x128x8xf32> to vector<1x128x8xbf16>
    "tpu.trace_start"() <{level = 10 : i32, message = "bqd,bkd->bqk"}> : () -> ()
    %cst_111 = arith.constant dense<0.000000e+00> : vector<1x128x128xf32>
    %346 = tpu.matmul %341, %343, %cst_111 {dimension_numbers = #tpu.dot_dimension_numbers<[2], [2], [1], [1], [0, 0, 0, 1, 1, 1], [0], [0]>} : vector<1x128x8xbf16>, vector<1x128x8xbf16>, vector<1x128x128xf32> -> vector<1x128x128xf32>
    "tpu.trace_stop"() : () -> ()
    %347 = vector.broadcast %238 : vector<1x1x128xf32> to vector<1x128x128xf32>
    %348 = arith.addf %346, %347 : vector<1x128x128xf32>
    %cst_112 = arith.constant dense<0xFF800000> : vector<1x128xf32>
    %349 = vector.multi_reduction <maximumf>, %348, %cst_112 [2] : vector<1x128x128xf32> to vector<1x128xf32>
    %350 = vector.shape_cast %349 : vector<1x128xf32> to vector<1x128x1xf32>
    %351 = vector.broadcast %350 : vector<1x128x1xf32> to vector<1x128x128xf32>
    %352 = arith.subf %348, %351 : vector<1x128x128xf32>
    %353 = math.exp %352 : vector<1x128x128xf32>
    %cst_113 = arith.constant dense<0.000000e+00> : vector<1x128xf32>
    %354 = vector.multi_reduction <add>, %353, %cst_113 [2] : vector<1x128x128xf32> to vector<1x128xf32>
    %355 = vector.shape_cast %354 : vector<1x128xf32> to vector<1x128x1xf32>
    %356 = tpu.reciprocal %355 : vector<1x128x1xf32> -> vector<1x128x1xf32>
    %357 = arith.truncf %353 : vector<1x128x128xf32> to vector<1x128x128xbf16>
    "tpu.trace_start"() <{level = 10 : i32, message = "bqk,bkd->bqd"}> : () -> ()
    %cst_114 = arith.constant dense<0.000000e+00> : vector<1x128x8xf32>
    %358 = tpu.matmul %357, %345, %cst_114 {dimension_numbers = #tpu.dot_dimension_numbers<[2], [1], [1], [2], [0, 0, 0, 1, 1, 2], [0], [0]>} : vector<1x128x128xbf16>, vector<1x128x8xbf16>, vector<1x128x8xf32> -> vector<1x128x8xf32>
    "tpu.trace_stop"() : () -> ()
    %359 = vector.broadcast %356 : vector<1x128x1xf32> to vector<1x128x8xf32>
    %360 = arith.mulf %358, %359 : vector<1x128x8xf32>
    %361 = vector.broadcast %356 : vector<1x128x1xf32> to vector<1x128x128xf32>
    %362 = arith.mulf %353, %361 : vector<1x128x128xf32>
    %363 = arith.addf %334, %362 : vector<1x128x128xf32>
    %364 = vector.shape_cast %360 : vector<1x128x8xf32> to vector<128x8xf32>
    %365 = arith.truncf %364 : vector<128x8xf32> to vector<128x8xbf16>
    %366 = vector.extract_strided_slice %220 {offsets = [24, 0], sizes = [8, 32], strides = [1, 1]} : vector<32x32xbf16> to vector<8x32xbf16>
    %cst_115 = arith.constant dense<0.000000e+00> : vector<128x32xf32>
    %367 = tpu.matmul %365, %366, %cst_115 {dimension_numbers = #tpu.dot_dimension_numbers<[1], [0], [0], [1], [0, 0, 1, 1], [], []>} : vector<128x8xbf16>, vector<8x32xbf16>, vector<128x32xf32> -> vector<128x32xf32>
    %368 = arith.addf %339, %367 : vector<128x32xf32>
    %cst_116 = arith.constant 2.500000e-01 : f32
    %369 = vector.broadcast %cst_116 : f32 to vector<1x128x128xf32>
    %370 = arith.mulf %363, %369 : vector<1x128x128xf32>
    %c1_117 = arith.constant 1 : index
    %c0_118 = arith.constant 0 : index
    %c0_119 = arith.constant 0 : index
    %c0_120 = arith.constant 0 : index
    %371 = vector.load %arg11[%c1_117, %c0_118, %c0_119, %c0_120] : memref<2x1x128x128xf32, #tpu.memory_space<vmem>>, vector<1x1x128x128xf32>
    %372 = vector.shape_cast %371 : vector<1x1x128x128xf32> to vector<1x128x128xf32>
    %373 = vector.shape_cast %370 : vector<1x128x128xf32> to vector<1x1x128x128xf32>
    tpu.vector_store %arg11[%c1_117, %c0_118, %c0_119, %c0_120], %373 {strides = array<i32>} : memref<2x1x128x128xf32, #tpu.memory_space<vmem>>, vector<1x1x128x128xf32>,
    %374 = arith.addf %216, %368 : vector<128x32xf32>
    %375 = vector.broadcast %231 : vector<1x32xf32> to vector<128x32xf32>
    %376 = arith.addf %374, %375 : vector<128x32xf32>
    %cst_121 = arith.constant dense<0.000000e+00> : vector<128xf32>
    %377 = vector.multi_reduction <add>, %376, %cst_121 [1] : vector<128x32xf32> to vector<128xf32>
    %378 = vector.shape_cast %377 : vector<128xf32> to vector<128x1xf32>
    %cst_122 = arith.constant 3.200000e+01 : f32
    %379 = vector.broadcast %cst_122 : f32 to vector<128x1xf32>
    %380 = arith.divf %378, %379 : vector<128x1xf32>
    %381 = vector.broadcast %380 : vector<128x1xf32> to vector<128x32xf32>
    %382 = arith.subf %376, %381 : vector<128x32xf32>
    %383 = arith.mulf %382, %382 : vector<128x32xf32>
    %cst_123 = arith.constant dense<0.000000e+00> : vector<128xf32>
    %384 = vector.multi_reduction <add>, %383, %cst_123 [1] : vector<128x32xf32> to vector<128xf32>
    %385 = vector.shape_cast %384 : vector<128xf32> to vector<128x1xf32>
    %cst_124 = arith.constant 3.200000e+01 : f32
    %386 = vector.broadcast %cst_124 : f32 to vector<128x1xf32>
    %387 = arith.divf %385, %386 : vector<128x1xf32>
    %388 = vector.broadcast %380 : vector<128x1xf32> to vector<128x32xf32>
    %389 = arith.subf %376, %388 : vector<128x32xf32>
    %cst_125 = arith.constant 9.99999974E-6 : f32
    %390 = vector.broadcast %cst_125 : f32 to vector<128x1xf32>
    %391 = arith.addf %387, %390 : vector<128x1xf32>
    %392 = math.rsqrt %391 : vector<128x1xf32>
    %393 = vector.broadcast %392 : vector<128x1xf32> to vector<128x32xf32>
    %394 = arith.mulf %389, %393 : vector<128x32xf32>
    %395 = vector.broadcast %233 : vector<1x32xf32> to vector<128x32xf32>
    %396 = arith.mulf %394, %395 : vector<128x32xf32>
    %397 = vector.broadcast %234 : vector<1x32xf32> to vector<128x32xf32>
    %398 = arith.addf %396, %397 : vector<128x32xf32>
    %399 = arith.truncf %398 : vector<128x32xf32> to vector<128x32xbf16>
    %cst_126 = arith.constant dense<0.000000e+00> : vector<128x64xf32>
    %400 = tpu.matmul %399, %222, %cst_126 {dimension_numbers = #tpu.dot_dimension_numbers<[1], [0], [0], [1], [0, 0, 1, 1], [], []>} : vector<128x32xbf16>, vector<32x64xbf16>, vector<128x64xf32> -> vector<128x64xf32>
    %401 = vector.broadcast %228 : vector<1x64xf32> to vector<128x64xf32>
    %402 = arith.addf %400, %401 : vector<128x64xf32>
    %cst_127 = arith.constant 0.000000e+00 : f32
    %403 = vector.broadcast %cst_127 : f32 to vector<128x64xf32>
    %404 = arith.maximumf %402, %403 : vector<128x64xf32>
    %405 = arith.truncf %404 : vector<128x64xf32> to vector<128x64xbf16>
    %cst_128 = arith.constant dense<0.000000e+00> : vector<128x32xf32>
    %406 = tpu.matmul %405, %224, %cst_128 {dimension_numbers = #tpu.dot_dimension_numbers<[1], [0], [0], [1], [0, 0, 1, 1], [], []>} : vector<128x64xbf16>, vector<64x32xbf16>, vector<128x32xf32> -> vector<128x32xf32>
    %407 = vector.broadcast %232 : vector<1x32xf32> to vector<128x32xf32>
    %408 = arith.addf %406, %407 : vector<128x32xf32>
    %409 = arith.addf %398, %408 : vector<128x32xf32>
    %cst_129 = arith.constant dense<0.000000e+00> : vector<128xf32>
    %410 = vector.multi_reduction <add>, %409, %cst_129 [1] : vector<128x32xf32> to vector<128xf32>
    %411 = vector.shape_cast %410 : vector<128xf32> to vector<128x1xf32>
    %cst_130 = arith.constant 3.200000e+01 : f32
    %412 = vector.broadcast %cst_130 : f32 to vector<128x1xf32>
    %413 = arith.divf %411, %412 : vector<128x1xf32>
    %414 = vector.broadcast %413 : vector<128x1xf32> to vector<128x32xf32>
    %415 = arith.subf %409, %414 : vector<128x32xf32>
    %416 = arith.mulf %415, %415 : vector<128x32xf32>
    %cst_131 = arith.constant dense<0.000000e+00> : vector<128xf32>
    %417 = vector.multi_reduction <add>, %416, %cst_131 [1] : vector<128x32xf32> to vector<128xf32>
    %418 = vector.shape_cast %417 : vector<128xf32> to vector<128x1xf32>
    %cst_132 = arith.constant 3.200000e+01 : f32
    %419 = vector.broadcast %cst_132 : f32 to vector<128x1xf32>
    %420 = arith.divf %418, %419 : vector<128x1xf32>
    %421 = vector.broadcast %413 : vector<128x1xf32> to vector<128x32xf32>
    %422 = arith.subf %409, %421 : vector<128x32xf32>
    %cst_133 = arith.constant 9.99999974E-6 : f32
    %423 = vector.broadcast %cst_133 : f32 to vector<128x1xf32>
    %424 = arith.addf %420, %423 : vector<128x1xf32>
    %425 = math.rsqrt %424 : vector<128x1xf32>
    %426 = vector.broadcast %425 : vector<128x1xf32> to vector<128x32xf32>
    %427 = arith.mulf %422, %426 : vector<128x32xf32>
    %428 = vector.broadcast %235 : vector<1x32xf32> to vector<128x32xf32>
    %429 = arith.mulf %427, %428 : vector<128x32xf32>
    %430 = vector.broadcast %236 : vector<1x32xf32> to vector<128x32xf32>
    %431 = arith.addf %429, %430 : vector<128x32xf32>
    %432 = vector.shape_cast %431 : vector<128x32xf32> to vector<1x128x32xf32>
    %c0_134 = arith.constant 0 : index
    %c0_135 = arith.constant 0 : index
    %c0_136 = arith.constant 0 : index
    %433 = vector.load %arg10[%c0_134, %c0_135, %c0_136] : memref<1x128x32xf32, #tpu.memory_space<vmem>>, vector<1x128x32xf32>
    tpu.vector_store %arg10[%c0_134, %c0_135, %c0_136], %432 {strides = array<i32>} : memref<1x128x32xf32, #tpu.memory_space<vmem>>, vector<1x128x32xf32>,
    return
  }
  func.func @transform_0(%arg0: i32) -> (i32, i32, i32) {
    %c0_i32 = arith.constant 0 : i32
    %c0_i32_0 = arith.constant 0 : i32
    %c0_i32_1 = arith.constant 0 : i32
    return %arg0, %c0_i32, %c0_i32_0 : i32, i32, i32
  }
  func.func @transform_1(%arg0: i32) -> (i32, i32, i32, i32) {
    %c0_i32 = arith.constant 0 : i32
    %c0_i32_0 = arith.constant 0 : i32
    %c0_i32_1 = arith.constant 0 : i32
    %c0_i32_2 = arith.constant 0 : i32
    return %c0_i32, %arg0, %c0_i32_0, %c0_i32_1 : i32, i32, i32, i32
  }
  func.func @transform_2(%arg0: i32) -> (i32, i32, i32) {
    %c0_i32 = arith.constant 0 : i32
    %c0_i32_0 = arith.constant 0 : i32
    %c0_i32_1 = arith.constant 0 : i32
    %c0_i32_2 = arith.constant 0 : i32
    return %c0_i32, %c0_i32_0, %c0_i32_1 : i32, i32, i32
  }
  func.func @transform_3(%arg0: i32) -> (i32, i32, i32) {
    %c0_i32 = arith.constant 0 : i32
    %c0_i32_0 = arith.constant 0 : i32
    %c0_i32_1 = arith.constant 0 : i32
    %c0_i32_2 = arith.constant 0 : i32
    return %c0_i32, %c0_i32_0, %c0_i32_1 : i32, i32, i32
  }
  func.func @transform_4(%arg0: i32) -> (i32, i32, i32) {
    %c0_i32 = arith.constant 0 : i32
    %c0_i32_0 = arith.constant 0 : i32
    %c0_i32_1 = arith.constant 0 : i32
    %c0_i32_2 = arith.constant 0 : i32
    return %c0_i32, %c0_i32_0, %c0_i32_1 : i32, i32, i32
  }
  func.func @transform_5(%arg0: i32) -> (i32, i32, i32) {
    %c0_i32 = arith.constant 0 : i32
    %c0_i32_0 = arith.constant 0 : i32
    %c0_i32_1 = arith.constant 0 : i32
    %c0_i32_2 = arith.constant 0 : i32
    return %c0_i32, %c0_i32_0, %c0_i32_1 : i32, i32, i32
  }
  func.func @transform_6(%arg0: i32) -> (i32, i32, i32) {
    %c0_i32 = arith.constant 0 : i32
    %c0_i32_0 = arith.constant 0 : i32
    %c0_i32_1 = arith.constant 0 : i32
    %c0_i32_2 = arith.constant 0 : i32
    return %c0_i32, %c0_i32_0, %c0_i32_1 : i32, i32, i32
  }
  func.func @transform_7(%arg0: i32) -> (i32, i32, i32) {
    %c0_i32 = arith.constant 0 : i32
    %c0_i32_0 = arith.constant 0 : i32
    %c0_i32_1 = arith.constant 0 : i32
    %c0_i32_2 = arith.constant 0 : i32
    return %c0_i32, %c0_i32_0, %c0_i32_1 : i32, i32, i32
  }
  func.func @transform_8(%arg0: i32) -> (i32, i32, i32) {
    %c0_i32 = arith.constant 0 : i32
    %c0_i32_0 = arith.constant 0 : i32
    %c0_i32_1 = arith.constant 0 : i32
    %c0_i32_2 = arith.constant 0 : i32
    return %c0_i32, %c0_i32_0, %c0_i32_1 : i32, i32, i32
  }
  func.func @transform_9(%arg0: i32) -> (i32, i32, i32) {
    %c0_i32 = arith.constant 0 : i32
    %c0_i32_0 = arith.constant 0 : i32
    %c0_i32_1 = arith.constant 0 : i32
    return %arg0, %c0_i32, %c0_i32_0 : i32, i32, i32
  }
  func.func @transform_10(%arg0: i32) -> (i32, i32, i32, i32) {
    %c0_i32 = arith.constant 0 : i32
    %c0_i32_0 = arith.constant 0 : i32
    %c0_i32_1 = arith.constant 0 : i32
    %c0_i32_2 = arith.constant 0 : i32
    return %c0_i32, %arg0, %c0_i32_0, %c0_i32_1 : i32, i32, i32, i32
  }
}

</mosaic_0001>

<llo_original>
// kernel: tpu_custom_call.1
$region0: #{tpu_custom_call.1}
  #allocation0 [shape = 'u32[]', space=smem, size = 0x4, offset = 0x4, fixed_abs, tag = 'smem constant byte address 0x4 - core index']
  #allocation1 [shape = 'u32[72,128]{1,0:T(1,128)}', space=vmem, size = 0x9000, scoped, tag = 'internal scratch']
  #allocation5 [shape = 's32[]', space=sflag, size = 0x4, offset = 0, fixed_abs, tag = 'sflag constant byte address 0x0 - dummy sync flag']
  %s0 = inlined_call_operand.vmem [shape: f32[2,128,32], index: 0, kind: input, shape index: {}]
  %s1 = inlined_call_operand.vmem [shape: f32[2,2,1,128], index: 1, kind: input, shape index: {}]
  %s2 = inlined_call_operand.vmem [shape: bf16[2,32,96], index: 2, kind: input, shape index: {}]
  %s3 = inlined_call_operand.vmem [shape: bf16[2,32,32], index: 3, kind: input, shape index: {}]
  %s4 = inlined_call_operand.vmem [shape: bf16[2,32,64], index: 4, kind: input, shape index: {}]
  %s5 = inlined_call_operand.vmem [shape: bf16[2,64,32], index: 5, kind: input, shape index: {}]
  %s6 = inlined_call_operand.vmem [shape: f32[2,1,96], index: 6, kind: input, shape index: {}]
  %s7 = inlined_call_operand.vmem [shape: f32[2,1,64], index: 7, kind: input, shape index: {}]
  %s8 = inlined_call_operand.vmem [shape: f32[2,6,32], index: 8, kind: input, shape index: {}]
  %s9 = inlined_call_operand.vmem [shape: f32[2,128,32], index: 9, kind: output, shape index: {0}]
  %s10 = inlined_call_operand.hbm [shape: f32[2,2,128,128], index: 10, kind: output, shape index: {1}]
  %11 = xla_tuple %s9, %s10
  %s12 = sld [smem:[#allocation0]]
  $region111: #{tpu_custom_call.1} parent=0
    _
  %s14 = ssub.s32 1, %s12
  %s15 = scalar_select 0, %s14, %s12
  $region1: #{tpu_custom_call.1} parent=0
    #allocation2 [shape = 'u8[2048]{0}', space=vmem, size = 0x800, scoped, tag = 'input window, operand 1']
    #allocation3 [shape = 'u8[262144]{0}', space=vmem, size = 0x40000, scoped, tag = 'output window, operand 1']
    #allocation4 [shape = 's32[2]{0}', space=sflag, size = 0x8, scoped, tag = 'scoped memory for tpu_custom_call.1']
    %16 = vsyncpa [#allocation4], 0
    %s17 = scalar_lea.sflag [#allocation4], 1
    %18 = vsyncpa %s17, 0
    loop: start=0, step=1, limit=4
    $region2: #{tpu_custom_call.1} parent=1 // loop_pre_header
      _
    $region3: #{tpu_custom_call.1} parent=1 // loop_header
      %s20 = sphi 0, %s24
      %p21 = scmp.ge.s32.totalorder %s20, 4
      %s30 = sphi 0, %s32
      %s33 = sphi 0, %s30
      %s34 = sphi 0, %s33
      %s50 = sphi 0, %s34
      %s56 = sphi 0, %s58
      %s59 = sphi 0, %s56
      %s60 = sphi 0, %s59
      %s76 = sphi 0, %s60
      %s80 = sphi 0, %s80
      %s82 = sphi 0, %s80
      %s83 = sphi 0, %s82
      %s97 = sphi 0, %s83
      %s101 = sphi 0, %s101
      %s103 = sphi 0, %s101
      %s104 = sphi 0, %s103
      %s118 = sphi 0, %s104
      %s122 = sphi 0, %s122
      %s124 = sphi 0, %s122
      %s125 = sphi 0, %s124
      %s139 = sphi 0, %s125
      %s143 = sphi 0, %s143
      %s145 = sphi 0, %s143
      %s146 = sphi 0, %s145
      %s160 = sphi 0, %s146
      %s164 = sphi 0, %s164
      %s166 = sphi 0, %s164
      %s167 = sphi 0, %s166
      %s181 = sphi 0, %s167
      %s185 = sphi 0, %s185
      %s187 = sphi 0, %s185
      %s188 = sphi 0, %s187
      %s202 = sphi 0, %s188
      %s206 = sphi 0, %s206
      %s208 = sphi 0, %s206
      %s209 = sphi 0, %s208
      %s223 = sphi 0, %s209
      %s229 = sphi 0, %s231
      %s232 = sphi 0, %s229
      %s233 = sphi 0, %s232
      %s249 = sphi 0, %s233
      %s255 = sphi 0, %s257
      %s258 = sphi 0, %s255
      %s259 = sphi 0, %s258
      %s275 = sphi 0, %s259
    $region4: #{tpu_custom_call.1} parent=1 // loop_header_branch
      %23 = sbr.rel (%p21) target = $region8
    $region5: #{tpu_custom_call.1} parent=1 // loop_body
      %s25 = ssub.s32 %s20, 1
      %s26 = ssub.s32 %s20, 2
      %s27 = sadd.s32 %s20, 1
      %s28 = ssub.s32 %s20, %s27
      %p29 = scmp.eq.s32.totalorder %s28, 0
      %s31 = sadd.s32 %s30, 1
      %s32 = scalar_select %p29, %s30, %s31
      %p35 = pneg %p29
      %p36 = scmp.eq.s32.totalorder %s20, 1
      %p37 = por %p35, %p36
      %p38 = scmp.ne.s32.totalorder %s30, %s33
      %p39 = scmp.eq.s32.totalorder %s20, 0
      %p40 = por %p38, %p39
      %p41 = scmp.ne.s32.totalorder %s30, %s33
      %p42 = scmp.eq.s32.totalorder %s25, 1
      %p43 = por %p41, %p42
      %p44 = scmp.ne.s32.totalorder %s33, %s34
      %p45 = scmp.eq.s32.totalorder %s25, 0
      %p46 = por %p44, %p45
      %p47 = scmp.ne.s32.totalorder %s33, %s34
      %p48 = scmp.eq.s32.totalorder %s26, 1
      %p49 = por %p47, %p48
      %p51 = scmp.ne.s32.totalorder %s34, %s50
      %p52 = scmp.eq.s32.totalorder %s26, 0
      %p53 = por %p51, %p52
      %s54 = ssub.s32 %s20, %s27
      %p55 = scmp.eq.s32.totalorder %s54, 0
      %s57 = sadd.s32 %s56, 1
      %s58 = scalar_select %p55, %s56, %s57
      %p61 = pneg %p55
      %p62 = scmp.eq.s32.totalorder %s20, 1
      %p63 = por %p61, %p62
      %p64 = scmp.ne.s32.totalorder %s56, %s59
      %p65 = scmp.eq.s32.totalorder %s20, 0
      %p66 = por %p64, %p65
      %p67 = scmp.ne.s32.totalorder %s56, %s59
      %p68 = scmp.eq.s32.totalorder %s25, 1
      %p69 = por %p67, %p68
      %p70 = scmp.ne.s32.totalorder %s59, %s60
      %p71 = scmp.eq.s32.totalorder %s25, 0
      %p72 = por %p70, %p71
      %p73 = scmp.ne.s32.totalorder %s59, %s60
      %p74 = scmp.eq.s32.totalorder %s26, 1
      %p75 = por %p73, %p74
      %p77 = scmp.ne.s32.totalorder %s60, %s76
      %p78 = scmp.eq.s32.totalorder %s26, 0
      %p79 = por %p77, %p78
      %s81 = sadd.s32 %s80, 1
      %p84 = scmp.eq.s32.totalorder %s20, 1
      %p85 = scmp.ne.s32.totalorder %s80, %s82
      %p86 = scmp.eq.s32.totalorder %s20, 0
      %p87 = por %p85, %p86
      %p88 = scmp.ne.s32.totalorder %s80, %s82
      %p89 = scmp.eq.s32.totalorder %s25, 1
      %p90 = por %p88, %p89
      %p91 = scmp.ne.s32.totalorder %s82, %s83
      %p92 = scmp.eq.s32.totalorder %s25, 0
      %p93 = por %p91, %p92
      %p94 = scmp.ne.s32.totalorder %s82, %s83
      %p95 = scmp.eq.s32.totalorder %s26, 1
      %p96 = por %p94, %p95
      %p98 = scmp.ne.s32.totalorder %s83, %s97
      %p99 = scmp.eq.s32.totalorder %s26, 0
      %p100 = por %p98, %p99
      %s102 = sadd.s32 %s101, 1
      %p105 = scmp.eq.s32.totalorder %s20, 1
      %p106 = scmp.ne.s32.totalorder %s101, %s103
      %p107 = scmp.eq.s32.totalorder %s20, 0
      %p108 = por %p106, %p107
      %p109 = scmp.ne.s32.totalorder %s101, %s103
      %p110 = scmp.eq.s32.totalorder %s25, 1
      %p111 = por %p109, %p110
      %p112 = scmp.ne.s32.totalorder %s103, %s104
      %p113 = scmp.eq.s32.totalorder %s25, 0
      %p114 = por %p112, %p113
      %p115 = scmp.ne.s32.totalorder %s103, %s104
      %p116 = scmp.eq.s32.totalorder %s26, 1
      %p117 = por %p115, %p116
      %p119 = scmp.ne.s32.totalorder %s104, %s118
      %p120 = scmp.eq.s32.totalorder %s26, 0
      %p121 = por %p119, %p120
      %s123 = sadd.s32 %s122, 1
      %p126 = scmp.eq.s32.totalorder %s20, 1
      %p127 = scmp.ne.s32.totalorder %s122, %s124
      %p128 = scmp.eq.s32.totalorder %s20, 0
      %p129 = por %p127, %p128
      %p130 = scmp.ne.s32.totalorder %s122, %s124
      %p131 = scmp.eq.s32.totalorder %s25, 1
      %p132 = por %p130, %p131
      %p133 = scmp.ne.s32.totalorder %s124, %s125
      %p134 = scmp.eq.s32.totalorder %s25, 0
      %p135 = por %p133, %p134
      %p136 = scmp.ne.s32.totalorder %s124, %s125
      %p137 = scmp.eq.s32.totalorder %s26, 1
      %p138 = por %p136, %p137
      %p140 = scmp.ne.s32.totalorder %s125, %s139
      %p141 = scmp.eq.s32.totalorder %s26, 0
      %p142 = por %p140, %p141
      %s144 = sadd.s32 %s143, 1
      %p147 = scmp.eq.s32.totalorder %s20, 1
      %p148 = scmp.ne.s32.totalorder %s143, %s145
      %p149 = scmp.eq.s32.totalorder %s20, 0
      %p150 = por %p148, %p149
      %p151 = scmp.ne.s32.totalorder %s143, %s145
      %p152 = scmp.eq.s32.totalorder %s25, 1
      %p153 = por %p151, %p152
      %p154 = scmp.ne.s32.totalorder %s145, %s146
      %p155 = scmp.eq.s32.totalorder %s25, 0
      %p156 = por %p154, %p155
      %p157 = scmp.ne.s32.totalorder %s145, %s146
      %p158 = scmp.eq.s32.totalorder %s26, 1
      %p159 = por %p157, %p158
      %p161 = scmp.ne.s32.totalorder %s146, %s160
      %p162 = scmp.eq.s32.totalorder %s26, 0
      %p163 = por %p161, %p162
      %s165 = sadd.s32 %s164, 1
      %p168 = scmp.eq.s32.totalorder %s20, 1
      %p169 = scmp.ne.s32.totalorder %s164, %s166
      %p170 = scmp.eq.s32.totalorder %s20, 0
      %p171 = por %p169, %p170
      %p172 = scmp.ne.s32.totalorder %s164, %s166
      %p173 = scmp.eq.s32.totalorder %s25, 1
      %p174 = por %p172, %p173
      %p175 = scmp.ne.s32.totalorder %s166, %s167
      %p176 = scmp.eq.s32.totalorder %s25, 0
      %p177 = por %p175, %p176
      %p178 = scmp.ne.s32.totalorder %s166, %s167
      %p179 = scmp.eq.s32.totalorder %s26, 1
      %p180 = por %p178, %p179
      %p182 = scmp.ne.s32.totalorder %s167, %s181
      %p183 = scmp.eq.s32.totalorder %s26, 0
      %p184 = por %p182, %p183
      %s186 = sadd.s32 %s185, 1
      %p189 = scmp.eq.s32.totalorder %s20, 1
      %p190 = scmp.ne.s32.totalorder %s185, %s187
      %p191 = scmp.eq.s32.totalorder %s20, 0
      %p192 = por %p190, %p191
      %p193 = scmp.ne.s32.totalorder %s185, %s187
      %p194 = scmp.eq.s32.totalorder %s25, 1
      %p195 = por %p193, %p194
      %p196 = scmp.ne.s32.totalorder %s187, %s188
      %p197 = scmp.eq.s32.totalorder %s25, 0
      %p198 = por %p196, %p197
      %p199 = scmp.ne.s32.totalorder %s187, %s188
      %p200 = scmp.eq.s32.totalorder %s26, 1
      %p201 = por %p199, %p200
      %p203 = scmp.ne.s32.totalorder %s188, %s202
      %p204 = scmp.eq.s32.totalorder %s26, 0
      %p205 = por %p203, %p204
      %s207 = sadd.s32 %s206, 1
      %p210 = scmp.eq.s32.totalorder %s20, 1
      %p211 = scmp.ne.s32.totalorder %s206, %s208
      %p212 = scmp.eq.s32.totalorder %s20, 0
      %p213 = por %p211, %p212
      %p214 = scmp.ne.s32.totalorder %s206, %s208
      %p215 = scmp.eq.s32.totalorder %s25, 1
      %p216 = por %p214, %p215
      %p217 = scmp.ne.s32.totalorder %s208, %s209
      %p218 = scmp.eq.s32.totalorder %s25, 0
      %p219 = por %p217, %p218
      %p220 = scmp.ne.s32.totalorder %s208, %s209
      %p221 = scmp.eq.s32.totalorder %s26, 1
      %p222 = por %p220, %p221
      %p224 = scmp.ne.s32.totalorder %s209, %s223
      %p225 = scmp.eq.s32.totalorder %s26, 0
      %p226 = por %p224, %p225
      %s227 = ssub.s32 %s20, %s27
      %p228 = scmp.eq.s32.totalorder %s227, 0
      %s230 = sadd.s32 %s229, 1
      %s231 = scalar_select %p228, %s229, %s230
      %p234 = pneg %p228
      %p235 = scmp.eq.s32.totalorder %s20, 1
      %p236 = por %p234, %p235
      %p237 = scmp.ne.s32.totalorder %s229, %s232
      %p238 = scmp.eq.s32.totalorder %s20, 0
      %p239 = por %p237, %p238
      %p240 = scmp.ne.s32.totalorder %s229, %s232
      %p241 = scmp.eq.s32.totalorder %s25, 1
      %p242 = por %p240, %p241
      %p243 = scmp.ne.s32.totalorder %s232, %s233
      %p244 = scmp.eq.s32.totalorder %s25, 0
      %p245 = por %p243, %p244
      %p246 = scmp.ne.s32.totalorder %s232, %s233
      %p247 = scmp.eq.s32.totalorder %s26, 1
      %p248 = por %p246, %p247
      %p250 = scmp.ne.s32.totalorder %s233, %s249
      %p251 = scmp.eq.s32.totalorder %s26, 0
      %p252 = por %p250, %p251
      %s253 = ssub.s32 %s20, %s27
      %p254 = scmp.eq.s32.totalorder %s253, 0
      %s256 = sadd.s32 %s255, 1
      %s257 = scalar_select %p254, %s255, %s256
      %p260 = pneg %p254
      %p261 = scmp.eq.s32.totalorder %s20, 1
      %p262 = por %p260, %p261
      %p263 = scmp.ne.s32.totalorder %s255, %s258
      %p264 = scmp.eq.s32.totalorder %s20, 0
      %p265 = por %p263, %p264
      %p266 = scmp.ne.s32.totalorder %s255, %s258
      %p267 = scmp.eq.s32.totalorder %s25, 1
      %p268 = por %p266, %p267
      %p269 = scmp.ne.s32.totalorder %s258, %s259
      %p270 = scmp.eq.s32.totalorder %s25, 0
      %p271 = por %p269, %p270
      %p272 = scmp.ne.s32.totalorder %s258, %s259
      %p273 = scmp.eq.s32.totalorder %s26, 1
      %p274 = por %p272, %p273
      %p276 = scmp.ne.s32.totalorder %s259, %s275
      %p277 = scmp.eq.s32.totalorder %s26, 0
      %p278 = por %p276, %p277
      %p279 = scmp.le.s32.totalorder 1, %s20
      %p280 = scmp.lt.s32.totalorder %s20, 3
      %p281 = pnand %p279, %p280
      %p282 = pneg %p281
      // Predicated region
      $region9: #{tpu_custom_call.1} parent=5 // pred_check
        _
      $region10: #{tpu_custom_call.1} parent=5 // pred_check_branch
        %284 = sbr.rel (%p281) target = $region12
      $region11: #{tpu_custom_call.1} parent=5 // pred_region
        %s285 = ssub.s32 %s20, 1
        // Predicated region
        $region13: #{tpu_custom_call.1} parent=11 // pred_check
          %p286 = pneg %p93
        $region14: #{tpu_custom_call.1} parent=11 // pred_check_branch
          %288 = sbr.rel (%p286) target = $region16
        $region15: #{tpu_custom_call.1} parent=11 // pred_region
          _
        $region16: #{tpu_custom_call.1} parent=11 // pred_fallthru
          _
        // Predicated region
        $region17: #{tpu_custom_call.1} parent=11 // pred_check
          %p289 = pneg %p114
        $region18: #{tpu_custom_call.1} parent=11 // pred_check_branch
          %291 = sbr.rel (%p289) target = $region20
        $region19: #{tpu_custom_call.1} parent=11 // pred_region
          _
        $region20: #{tpu_custom_call.1} parent=11 // pred_fallthru
          _
        // Predicated region
        $region21: #{tpu_custom_call.1} parent=11 // pred_check
          %p292 = pneg %p135
        $region22: #{tpu_custom_call.1} parent=11 // pred_check_branch
          %294 = sbr.rel (%p292) target = $region24
        $region23: #{tpu_custom_call.1} parent=11 // pred_region
          _
        $region24: #{tpu_custom_call.1} parent=11 // pred_fallthru
          _
        // Predicated region
        $region25: #{tpu_custom_call.1} parent=11 // pred_check
          %p295 = pneg %p156
        $region26: #{tpu_custom_call.1} parent=11 // pred_check_branch
          %297 = sbr.rel (%p295) target = $region28
        $region27: #{tpu_custom_call.1} parent=11 // pred_region
          _
        $region28: #{tpu_custom_call.1} parent=11 // pred_fallthru
          _
        // Predicated region
        $region29: #{tpu_custom_call.1} parent=11 // pred_check
          %p298 = pneg %p177
        $region30: #{tpu_custom_call.1} parent=11 // pred_check_branch
          %300 = sbr.rel (%p298) target = $region32
        $region31: #{tpu_custom_call.1} parent=11 // pred_region
          _
        $region32: #{tpu_custom_call.1} parent=11 // pred_fallthru
          _
        // Predicated region
        $region33: #{tpu_custom_call.1} parent=11 // pred_check
          %p301 = pneg %p198
        $region34: #{tpu_custom_call.1} parent=11 // pred_check_branch
          %303 = sbr.rel (%p301) target = $region36
        $region35: #{tpu_custom_call.1} parent=11 // pred_region
          _
        $region36: #{tpu_custom_call.1} parent=11 // pred_fallthru
          _
        // Predicated region
        $region37: #{tpu_custom_call.1} parent=11 // pred_check
          %p304 = pneg %p219
        $region38: #{tpu_custom_call.1} parent=11 // pred_check_branch
          %306 = sbr.rel (%p304) target = $region40
        $region39: #{tpu_custom_call.1} parent=11 // pred_region
          _
        $region40: #{tpu_custom_call.1} parent=11 // pred_fallthru
          _
      $region12: #{tpu_custom_call.1} parent=5 // pred_fallthru
        _
      %p307 = scmp.lt.s32.totalorder %s20, 2
      // Predicated region
      $region41: #{tpu_custom_call.1} parent=5 // pred_check
        %p308 = pneg %p307
      $region42: #{tpu_custom_call.1} parent=5 // pred_check_branch
        %310 = sbr.rel (%p308) target = $region44
      $region43: #{tpu_custom_call.1} parent=5 // pred_region
        // Predicated region
        $region45: #{tpu_custom_call.1} parent=43 // pred_check
          %p311 = pneg %p40
        $region46: #{tpu_custom_call.1} parent=43 // pred_check_branch
          %313 = sbr.rel (%p311) target = $region48
        $region47: #{tpu_custom_call.1} parent=43 // pred_region
          %p314 = scmp.lt.s32.totalorder %s20, 1
          %s315 = scalar_select %p314, %s20, 1
          %s316 = smul.addr %s315, 16
          %s317 = smul.addr %s316, 8
          %s318 = scalar_lea.vmem %s0, %s317
        $region48: #{tpu_custom_call.1} parent=43 // pred_fallthru
          _
        // Predicated region
        $region49: #{tpu_custom_call.1} parent=43 // pred_check
          %p319 = pneg %p66
        $region50: #{tpu_custom_call.1} parent=43 // pred_check_branch
          %321 = sbr.rel (%p319) target = $region52
        $region51: #{tpu_custom_call.1} parent=43 // pred_region
          %s322 = sand.u32 %s56, 1
          %s323 = sand.u32 %s56, 1
          %s324 = smul.addr %s323, 2
          %s325 = scalar_lea.vmem [#allocation2], %s324
          %s326 = scalar_lea.vmem %s1, %s20
          // Predicated region
          $region53: #{tpu_custom_call.1} parent=51 // pred_check
            _
          $region54: #{tpu_custom_call.1} parent=51 // pred_check_branch
            %328 = sbr.rel (0) target = $region56
          $region55: #{tpu_custom_call.1} parent=51 // pred_region
            // Predicated region
            $region57: #{tpu_custom_call.1} parent=55 // pred_check
              _
            $region58: #{tpu_custom_call.1} parent=55 // pred_check_branch
              %330 = sbr.rel target = $region60
            $region59: #{tpu_custom_call.1} parent=55 // pred_region
              // Predicated region
              $region72: #{tpu_custom_call.1} parent=59 // pred_check
                _
              $region73: #{tpu_custom_call.1} parent=59 // pred_check_branch
                %348 = sbr.rel (0) target = $region75
              $region74: #{tpu_custom_call.1} parent=59 // pred_region
                %s350 = ssub.s32 2, 1
                loop: start=0, step=1, limit=1
                $region76: #{tpu_custom_call.1} parent=74 // loop_pre_header
                  _
                $region77: #{tpu_custom_call.1} parent=74 // loop_header
                  %s352 = sphi 0, %s356
                  %p353 = scmp.ge.s32.totalorder %s352, 1
                  %s357 = sphi %s326, %s326
                  %s358 = sphi %s325, %s325
                $region78: #{tpu_custom_call.1} parent=74 // loop_header_branch
                  %355 = sbr.rel (%p353) target = $region82
                $region79: #{tpu_custom_call.1} parent=74 // loop_body
                  %v359 = vld [vmem:[%s357] sm:%s350]
                  %360 = vst [vmem:[%s358] sm:%s350] %v359
                  %v361 = vld [vmem:[%s357 + $0x2] sm:%s350]
                  %362 = vst [vmem:[%s358 + $0x1] sm:%s350] %v361
                $region80: #{tpu_custom_call.1} parent=74 // loop_footer
                  %s356 = sadd.s32 1, %s352
                $region81: #{tpu_custom_call.1} parent=74 // loop_footer_branch
                  %351 = sbr.rel target = $region77
                $region82: #{tpu_custom_call.1} parent=74 // loop_exit
                  _
              $region75: #{tpu_custom_call.1} parent=59 // pred_fallthru
                _
            $region60: #{tpu_custom_call.1} parent=55 // pred_fallthru
              _
            // Predicated region
            $region61: #{tpu_custom_call.1} parent=55 // pred_check
              _
            $region62: #{tpu_custom_call.1} parent=55 // pred_check_branch
              %332 = sbr.rel (0) target = $region64
            $region63: #{tpu_custom_call.1} parent=55 // pred_region
              %s334 = ssub.s32 2, 1
              loop: start=0, step=1, limit=1
              $region65: #{tpu_custom_call.1} parent=63 // loop_pre_header
                _
              $region66: #{tpu_custom_call.1} parent=63 // loop_header
                %s336 = sphi 0, %s340
                %p337 = scmp.ge.s32.totalorder %s336, 1
                %s341 = sphi %s326, %s326
                %s342 = sphi %s325, %s325
              $region67: #{tpu_custom_call.1} parent=63 // loop_header_branch
                %339 = sbr.rel (%p337) target = $region71
              $region68: #{tpu_custom_call.1} parent=63 // loop_body
                %v343 = vld [vmem:[%s341] sm:%s334]
                %344 = vst [vmem:[%s342] sm:%s334] %v343
                %v345 = vld [vmem:[%s341 + $0x2] sm:%s334]
                %346 = vst [vmem:[%s342 + $0x1] sm:%s334] %v345
              $region69: #{tpu_custom_call.1} parent=63 // loop_footer
                %s340 = sadd.s32 1, %s336
              $region70: #{tpu_custom_call.1} parent=63 // loop_footer_branch
                %335 = sbr.rel target = $region66
              $region71: #{tpu_custom_call.1} parent=63 // loop_exit
                _
            $region64: #{tpu_custom_call.1} parent=55 // pred_fallthru
              _
          $region56: #{tpu_custom_call.1} parent=51 // pred_fallthru
            _
          %363 = vnop
        $region52: #{tpu_custom_call.1} parent=43 // pred_fallthru
          _
      $region44: #{tpu_custom_call.1} parent=5 // pred_fallthru
        _
      %p364 = scmp.le.s32.totalorder 1, %s20
      %p365 = scmp.lt.s32.totalorder %s20, 3
      %p366 = pnand %p364, %p365
      %p367 = pneg %p366
      // Predicated region
      $region83: #{tpu_custom_call.1} parent=5 // pred_check
        _
      $region84: #{tpu_custom_call.1} parent=5 // pred_check_branch
        %369 = sbr.rel (%p366) target = $region86
      $region85: #{tpu_custom_call.1} parent=5 // pred_region
        %s370 = ssub.s32 %s20, 1
        %s371 = sand.u32 %s59, 1
        %s372 = sand.u32 %s59, 1
        %s373 = smul.addr %s372, 2
        %s374 = scalar_lea.vmem [#allocation2], %s373
        // Predicated region
        $region87: #{tpu_custom_call.1} parent=85 // pred_check
          %p375 = pneg %p72
        $region88: #{tpu_custom_call.1} parent=85 // pred_check_branch
          %377 = sbr.rel (%p375) target = $region90
        $region89: #{tpu_custom_call.1} parent=85 // pred_region
          _
        $region90: #{tpu_custom_call.1} parent=85 // pred_fallthru
          _
        %p378 = scmp.lt.s32.totalorder %s25, 1
        %s379 = scalar_select %p378, %s25, 1
        %s380 = smul.addr %s379, 16
        %s381 = smul.addr %s380, 8
        %s382 = scalar_lea.vmem %s0, %s381
        %p383 = pneg %p46
        %p384 = pneg %p43
        %s385 = sand.u32 %s59, 1
        %s386 = sand.u32 %s59, 1
        %s387 = smul.addr %s386, 2
        %s388 = scalar_lea.vmem [#allocation2], %s387
        %p389 = pneg %p72
        %p390 = pneg %p69
        %p391 = pneg %p93
        %p392 = pneg %p90
        %p393 = pneg %p114
        %p394 = pneg %p111
        %p395 = pneg %p135
        %p396 = pneg %p132
        %p397 = pneg %p156
        %p398 = pneg %p153
        %p399 = pneg %p177
        %p400 = pneg %p174
        %p401 = pneg %p198
        %p402 = pneg %p195
        %p403 = pneg %p219
        %p404 = pneg %p216
        %p405 = pneg %p245
        %p406 = pneg %p242
        %p407 = scmp.lt.s32.totalorder %s25, 1
        %s408 = scalar_select %p407, %s25, 1
        %s409 = smul.addr %s408, 16
        %s410 = smul.addr %s409, 8
        %s411 = scalar_lea.vmem %s9, %s410
        %p412 = pneg %p271
        %p413 = pneg %p268
        %s414 = sand.u32 %s258, 1
        %s415 = scalar_lea.sflag [#allocation4], %s414
        %s416 = sand.u32 %s258, 1
        %s417 = smul.addr %s416, 256
        %s418 = scalar_lea.vmem [#allocation3], %s417
        %p419 = scmp.lt.s32.totalorder %s25, 1
        %s420 = scalar_select %p419, %s25, 1
        %s421 = smul.addr %s420, 16
        %s422 = smul.addr %s421, 8
        %s423 = scalar_lea.vmem %s0, %s422
        %p424 = scmp.lt.s32.totalorder %s25, 1
        %s425 = scalar_select %p424, %s25, 1
        %s426 = smul.addr %s425, 16
        %s427 = smul.addr %s426, 8
        %s428 = scalar_lea.vmem %s9, %s427
        %v430 = vld [vmem:[%s423] sm:$0xff]
        %v431 = vld [vmem:[%s423 + $0x8] sm:$0xff]
        %v432 = vld [vmem:[%s423 + $0x10] sm:$0xff]
        %v433 = vld [vmem:[%s423 + $0x18] sm:$0xff]
        %v434 = vld [vmem:[%s423 + $0x20] sm:$0xff]
        %v435 = vld [vmem:[%s423 + $0x28] sm:$0xff]
        %v436 = vld [vmem:[%s423 + $0x30] sm:$0xff]
        %v437 = vld [vmem:[%s423 + $0x38] sm:$0xff]
        %v438 = vld [vmem:[%s423 + $0x40] sm:$0xff]
        %v439 = vld [vmem:[%s423 + $0x48] sm:$0xff]
        %v440 = vld [vmem:[%s423 + $0x50] sm:$0xff]
        %v441 = vld [vmem:[%s423 + $0x58] sm:$0xff]
        %v442 = vld [vmem:[%s423 + $0x60] sm:$0xff]
        %v443 = vld [vmem:[%s423 + $0x68] sm:$0xff]
        %v444 = vld [vmem:[%s423 + $0x70] sm:$0xff]
        %v445 = vld [vmem:[%s423 + $0x78] sm:$0xff]
        %v446 = vld [vmem:[%s2] sm:$0xf]
        %v447 = vld [vmem:[%s2 + $0x4] sm:$0xf]
        %v448 = vld [vmem:[%s2 + $0x8] sm:$0xf]
        %v449 = vld [vmem:[%s2 + $0xc] sm:$0xf]
        %v450 = vld [vmem:[%s3] sm:$0xf]
        %v451 = vld [vmem:[%s3 + $0x4] sm:$0xf]
        %v452 = vld [vmem:[%s3 + $0x8] sm:$0xf]
        %v453 = vld [vmem:[%s3 + $0xc] sm:$0xf]
        %v454 = vld [vmem:[%s4] sm:$0xf]
        %v455 = vld [vmem:[%s4 + $0x4] sm:$0xf]
        %v456 = vld [vmem:[%s4 + $0x8] sm:$0xf]
        %v457 = vld [vmem:[%s4 + $0xc] sm:$0xf]
        %v458 = vld [vmem:[%s5] sm:$0xf]
        %v459 = vld [vmem:[%s5 + $0x4] sm:$0xf]
        %v460 = vld [vmem:[%s5 + $0x8] sm:$0xf]
        %v461 = vld [vmem:[%s5 + $0xc] sm:$0xf]
        %v462 = vld [vmem:[%s5 + $0x10] sm:$0xf]
        %v463 = vld [vmem:[%s5 + $0x14] sm:$0xf]
        %v464 = vld [vmem:[%s5 + $0x18] sm:$0xf]
        %v465 = vld [vmem:[%s5 + $0x1c] sm:$0xf]
        %v466 = vld [vmem:[%s6] sm:$0x1]
        %v467 = vld [vmem:[%s7] sm:$0x1]
        %v468 = vld [vmem:[%s8] sm:$0x3f]
        %v469 = vld [vmem:[%s374] sm:$0x1]
        %v470 = vpack.c.bf16 %v431, %v430
        %v471 = vpack.c.bf16 %v433, %v432
        %v472 = vpack.c.bf16 %v435, %v434
        %v473 = vpack.c.bf16 %v437, %v436
        %v474 = vpack.c.bf16 %v439, %v438
        %v475 = vpack.c.bf16 %v441, %v440
        %v476 = vpack.c.bf16 %v443, %v442
        %v477 = vpack.c.bf16 %v445, %v444
        %v479 = vperm.slane %v466, 0
        %v485 = vunpack.c.l.b16 %v446
        %v486 = vunpack.c.l.b16 %v447
        %v487 = vunpack.c.l.b16 %v448
        %v488 = vunpack.c.l.b16 %v449
        %v489 = vpack.c.b16 %v486, %v485
        %v490 = vpack.c.b16 %v488, %v487
        %vm493 = vcmask 261120
        %v495 = vsel %vm493, %v470, 0
        %v498 = vsel %vm493, %v471, 0
        %v501 = vsel %vm493, %v472, 0
        %v504 = vsel %vm493, %v473, 0
        %v507 = vsel %vm493, %v474, 0
        %v510 = vsel %vm493, %v475, 0
        %v513 = vsel %vm493, %v476, 0
        %v516 = vsel %vm493, %v477, 0
        %518 = vmatpush.bf16.msra.mxu0 0
        %519 = vmatpush.bf16.msra.mxu0 0
        %520 = vmatpush.bf16.msra.mxu0 0
        %521 = vmatpush.bf16.msra.mxu0 0
        %522 = vmatpush.bf16.msra.mxu0 0
        %523 = vmatpush.bf16.msra.mxu0 0
        %524 = vmatpush.bf16.msra.mxu0 %v490
        %525 = vmatpush.bf16.msra.mxu0 %v489
        %526 = vmatmul.bf16.gmra.mxu0 %v495
        %v527 = vpop.f32.mrf.mxu0
        %v528 = vadd.f32 %v479, %v527
        %v529 = vpop.f32.mrf.mxu0
        %v530 = vadd.f32 %v479, %v529
        %531 = vmatmul.bf16.gmra.mxu0 %v498
        %v532 = vpop.f32.mrf.mxu0
        %v533 = vadd.f32 %v479, %v532
        %v534 = vpop.f32.mrf.mxu0
        %v535 = vadd.f32 %v479, %v534
        %536 = vmatmul.bf16.gmra.mxu0 %v501
        %v537 = vpop.f32.mrf.mxu0
        %v538 = vadd.f32 %v479, %v537
        %v539 = vpop.f32.mrf.mxu0
        %v540 = vadd.f32 %v479, %v539
        %541 = vmatmul.bf16.gmra.mxu0 %v504
        %v542 = vpop.f32.mrf.mxu0
        %v543 = vadd.f32 %v479, %v542
        %v544 = vpop.f32.mrf.mxu0
        %v545 = vadd.f32 %v479, %v544
        %546 = vmatmul.bf16.gmra.mxu0 %v507
        %v547 = vpop.f32.mrf.mxu0
        %v548 = vadd.f32 %v479, %v547
        %v549 = vpop.f32.mrf.mxu0
        %v550 = vadd.f32 %v479, %v549
        %551 = vmatmul.bf16.gmra.mxu0 %v510
        %v552 = vpop.f32.mrf.mxu0
        %v553 = vadd.f32 %v479, %v552
        %v554 = vpop.f32.mrf.mxu0
        %v555 = vadd.f32 %v479, %v554
        %556 = vmatmul.bf16.gmra.mxu0 %v513
        %v557 = vpop.f32.mrf.mxu0
        %v558 = vadd.f32 %v479, %v557
        %v559 = vpop.f32.mrf.mxu0
        %v560 = vadd.f32 %v479, %v559
        %561 = vmatmul.bf16.gmra.mxu0 %v516
        %v562 = vpop.f32.mrf.mxu0
        %v563 = vadd.f32 %v479, %v562
        %v564 = vpop.f32.mrf.mxu0
        %v565 = vadd.f32 %v479, %v564
        %566 = vdwg.mxu0
        %v567 = vmul.f32 %v528, 0.35355338
        %v568 = vmul.f32 %v530, 0.35355338
        %v569 = vmul.f32 %v533, 0.35355338
        %v570 = vmul.f32 %v535, 0.35355338
        %v571 = vmul.f32 %v538, 0.35355338
        %v572 = vmul.f32 %v540, 0.35355338
        %v573 = vmul.f32 %v543, 0.35355338
        %v574 = vmul.f32 %v545, 0.35355338
        %v575 = vmul.f32 %v548, 0.35355338
        %v576 = vmul.f32 %v550, 0.35355338
        %v577 = vmul.f32 %v553, 0.35355338
        %v578 = vmul.f32 %v555, 0.35355338
        %v579 = vmul.f32 %v558, 0.35355338
        %v580 = vmul.f32 %v560, 0.35355338
        %v581 = vmul.f32 %v563, 0.35355338
        %v582 = vmul.f32 %v565, 0.35355338
        %v583 = vpack.c.bf16 %v567, %v567
        %v584 = vpack.c.bf16 %v568, %v568
        %v585 = vpack.c.bf16 %v569, %v569
        %v586 = vpack.c.bf16 %v570, %v570
        %v587 = vpack.c.bf16 %v571, %v571
        %v588 = vpack.c.bf16 %v572, %v572
        %v589 = vpack.c.bf16 %v573, %v573
        %v590 = vpack.c.bf16 %v574, %v574
        %v591 = vpack.c.bf16 %v575, %v575
        %v592 = vpack.c.bf16 %v576, %v576
        %v593 = vpack.c.bf16 %v577, %v577
        %v594 = vpack.c.bf16 %v578, %v578
        %v595 = vpack.c.bf16 %v579, %v579
        %v596 = vpack.c.bf16 %v580, %v580
        %v597 = vpack.c.bf16 %v581, %v581
        %v598 = vpack.c.bf16 %v582, %v582
        %v599 = vpack.c.bf16 %v528, %v528
        %v600 = vpack.c.bf16 %v530, %v530
        %v601 = vpack.c.bf16 %v533, %v533
        %v602 = vpack.c.bf16 %v535, %v535
        %v603 = vpack.c.bf16 %v538, %v538
        %v604 = vpack.c.bf16 %v540, %v540
        %v605 = vpack.c.bf16 %v543, %v543
        %v606 = vpack.c.bf16 %v545, %v545
        %v607 = vpack.c.bf16 %v548, %v548
        %v608 = vpack.c.bf16 %v550, %v550
        %v609 = vpack.c.bf16 %v553, %v553
        %v610 = vpack.c.bf16 %v555, %v555
        %v611 = vpack.c.bf16 %v558, %v558
        %v612 = vpack.c.bf16 %v560, %v560
        %v613 = vpack.c.bf16 %v563, %v563
        %v614 = vpack.c.bf16 %v565, %v565
        %v616 = vperm.slane %v469, 0
        %v634 = vunpack.c.l.b16 %v583
        %v635 = vunpack.c.l.b16 %v584
        %v636 = vunpack.c.l.b16 %v585
        %v637 = vunpack.c.l.b16 %v586
        %v638 = vunpack.c.l.b16 %v587
        %v639 = vunpack.c.l.b16 %v588
        %v640 = vunpack.c.l.b16 %v589
        %v641 = vunpack.c.l.b16 %v590
        %v642 = vunpack.c.l.b16 %v591
        %v643 = vunpack.c.l.b16 %v592
        %v644 = vunpack.c.l.b16 %v593
        %v645 = vunpack.c.l.b16 %v594
        %v646 = vunpack.c.l.b16 %v595
        %v647 = vunpack.c.l.b16 %v596
        %v648 = vunpack.c.l.b16 %v597
        %v649 = vunpack.c.l.b16 %v598
        %v650 = vpack.c.b16 %v635, %v634
        %v651 = vpack.c.b16 %v637, %v636
        %v652 = vpack.c.b16 %v639, %v638
        %v653 = vpack.c.b16 %v641, %v640
        %v654 = vpack.c.b16 %v643, %v642
        %v655 = vpack.c.b16 %v645, %v644
        %v656 = vpack.c.b16 %v647, %v646
        %v657 = vpack.c.b16 %v649, %v648
        %v674 = vunpack.c.l.b16 %v599
        %v675 = vunpack.c.l.b16 %v600
        %v676 = vunpack.c.l.b16 %v601
        %v677 = vunpack.c.l.b16 %v602
        %v678 = vunpack.c.l.b16 %v603
        %v679 = vunpack.c.l.b16 %v604
        %v680 = vunpack.c.l.b16 %v605
        %v681 = vunpack.c.l.b16 %v606
        %v682 = vunpack.c.l.b16 %v607
        %v683 = vunpack.c.l.b16 %v608
        %v684 = vunpack.c.l.b16 %v609
        %v685 = vunpack.c.l.b16 %v610
        %v686 = vunpack.c.l.b16 %v611
        %v687 = vunpack.c.l.b16 %v612
        %v688 = vunpack.c.l.b16 %v613
        %v689 = vunpack.c.l.b16 %v614
        %v690 = vpack.c.b16 %v675, %v674
        %v691 = vpack.c.b16 %v677, %v676
        %v692 = vpack.c.b16 %v679, %v678
        %v693 = vpack.c.b16 %v681, %v680
        %v694 = vpack.c.b16 %v683, %v682
        %v695 = vpack.c.b16 %v685, %v684
        %v696 = vpack.c.b16 %v687, %v686
        %v697 = vpack.c.b16 %v689, %v688
        %698 = vrot.lane.b32.xlu0 %v690, 96
        %v699 = vpop.permute.xlu0 %698
        %700 = vrot.lane.b32.xlu0 %v691, 96
        %v701 = vpop.permute.xlu0 %700
        %702 = vrot.lane.b32.xlu0 %v692, 96
        %v703 = vpop.permute.xlu0 %702
        %704 = vrot.lane.b32.xlu0 %v693, 96
        %v705 = vpop.permute.xlu0 %704
        %706 = vrot.lane.b32.xlu0 %v694, 96
        %v707 = vpop.permute.xlu0 %706
        %708 = vrot.lane.b32.xlu0 %v695, 96
        %v709 = vpop.permute.xlu0 %708
        %710 = vrot.lane.b32.xlu0 %v696, 96
        %v711 = vpop.permute.xlu0 %710
        %712 = vrot.lane.b32.xlu0 %v697, 96
        %v713 = vpop.permute.xlu0 %712
        %vm714 = vcmask 64512
        %v716 = vsel %vm714, %v650, 0
        %v719 = vsel %vm714, %v651, 0
        %v722 = vsel %vm714, %v652, 0
        %v725 = vsel %vm714, %v653, 0
        %v728 = vsel %vm714, %v654, 0
        %v731 = vsel %vm714, %v655, 0
        %v734 = vsel %vm714, %v656, 0
        %v737 = vsel %vm714, %v657, 0
        %v740 = vsel %vm714, %v699, 0
        %v743 = vsel %vm714, %v701, 0
        %v746 = vsel %vm714, %v703, 0
        %v749 = vsel %vm714, %v705, 0
        %v752 = vsel %vm714, %v707, 0
        %v755 = vsel %vm714, %v709, 0
        %v758 = vsel %vm714, %v711, 0
        %v761 = vsel %vm714, %v713, 0
        %763 = vmatpush.bf16.xpose.msra.mxu0 %v761
        %764 = vmatpush.bf16.xpose.msra.mxu0 %v758
        %765 = vmatpush.bf16.xpose.msra.mxu0 %v755
        %766 = vmatpush.bf16.xpose.msra.mxu0 %v752
        %767 = vmatpush.bf16.xpose.msra.mxu0 %v749
        %768 = vmatpush.bf16.xpose.msra.mxu0 %v746
        %769 = vmatpush.bf16.xpose.msra.mxu0 %v743
        %770 = vmatpush.bf16.xpose.msra.mxu0 %v740
        %771 = vmatmul.bf16.gmra.mxu0 %v716
        %v772 = vpop.f32.mrf.mxu0
        %v773 = vadd.f32 %v616, %v772
        %v774 = vpop.f32.mrf.mxu0
        %v775 = vadd.f32 %v616, %v774
        %776 = vmatmul.bf16.gmra.mxu0 %v719
        %v777 = vpop.f32.mrf.mxu0
        %v778 = vadd.f32 %v616, %v777
        %v779 = vpop.f32.mrf.mxu0
        %v780 = vadd.f32 %v616, %v779
        %781 = vmatmul.bf16.gmra.mxu0 %v722
        %v782 = vpop.f32.mrf.mxu0
        %v783 = vadd.f32 %v616, %v782
        %v784 = vpop.f32.mrf.mxu0
        %v785 = vadd.f32 %v616, %v784
        %786 = vmatmul.bf16.gmra.mxu0 %v725
        %v787 = vpop.f32.mrf.mxu0
        %v788 = vadd.f32 %v616, %v787
        %v789 = vpop.f32.mrf.mxu0
        %v790 = vadd.f32 %v616, %v789
        %791 = vmatmul.bf16.gmra.mxu0 %v728
        %v792 = vpop.f32.mrf.mxu0
        %v793 = vadd.f32 %v616, %v792
        %v794 = vpop.f32.mrf.mxu0
        %v795 = vadd.f32 %v616, %v794
        %796 = vmatmul.bf16.gmra.mxu0 %v731
        %v797 = vpop.f32.mrf.mxu0
        %v798 = vadd.f32 %v616, %v797
        %v799 = vpop.f32.mrf.mxu0
        %v800 = vadd.f32 %v616, %v799
        %801 = vmatmul.bf16.gmra.mxu0 %v734
        %v802 = vpop.f32.mrf.mxu0
        %v803 = vadd.f32 %v616, %v802
        %v804 = vpop.f32.mrf.mxu0
        %v805 = vadd.f32 %v616, %v804
        %806 = vmatmul.bf16.gmra.mxu0 %v737
        %v807 = vpop.f32.mrf.mxu0
        %v808 = vadd.f32 %v616, %v807
        %v809 = vpop.f32.mrf.mxu0
        %v810 = vadd.f32 %v616, %v809
        %811 = vdwg.mxu0
        %812 = vmax.xlane.f32.xlu0 %v773
        %v813 = vpop.xlane.xlu0 %812
        %814 = vmax.xlane.f32.xlu0 %v775
        %v815 = vpop.xlane.xlu0 %814
        %816 = vmax.xlane.f32.xlu0 %v778
        %v817 = vpop.xlane.xlu0 %816
        %818 = vmax.xlane.f32.xlu0 %v780
        %v819 = vpop.xlane.xlu0 %818
        %820 = vmax.xlane.f32.xlu0 %v783
        %v821 = vpop.xlane.xlu0 %820
        %822 = vmax.xlane.f32.xlu0 %v785
        %v823 = vpop.xlane.xlu0 %822
        %824 = vmax.xlane.f32.xlu0 %v788
        %v825 = vpop.xlane.xlu0 %824
        %826 = vmax.xlane.f32.xlu0 %v790
        %v827 = vpop.xlane.xlu0 %826
        %828 = vmax.xlane.f32.xlu0 %v793
        %v829 = vpop.xlane.xlu0 %828
        %830 = vmax.xlane.f32.xlu0 %v795
        %v831 = vpop.xlane.xlu0 %830
        %832 = vmax.xlane.f32.xlu0 %v798
        %v833 = vpop.xlane.xlu0 %832
        %834 = vmax.xlane.f32.xlu0 %v800
        %v835 = vpop.xlane.xlu0 %834
        %836 = vmax.xlane.f32.xlu0 %v803
        %v837 = vpop.xlane.xlu0 %836
        %838 = vmax.xlane.f32.xlu0 %v805
        %v839 = vpop.xlane.xlu0 %838
        %840 = vmax.xlane.f32.xlu0 %v808
        %v841 = vpop.xlane.xlu0 %840
        %842 = vmax.xlane.f32.xlu0 %v810
        %v843 = vpop.xlane.xlu0 %842
        %v844 = vsub.f32 %v773, %v813
        %v845 = vsub.f32 %v775, %v815
        %v846 = vsub.f32 %v778, %v817
        %v847 = vsub.f32 %v780, %v819
        %v848 = vsub.f32 %v783, %v821
        %v849 = vsub.f32 %v785, %v823
        %v850 = vsub.f32 %v788, %v825
        %v851 = vsub.f32 %v790, %v827
        %v852 = vsub.f32 %v793, %v829
        %v853 = vsub.f32 %v795, %v831
        %v854 = vsub.f32 %v798, %v833
        %v855 = vsub.f32 %v800, %v835
        %v856 = vsub.f32 %v803, %v837
        %v857 = vsub.f32 %v805, %v839
        %v858 = vsub.f32 %v808, %v841
        %v859 = vsub.f32 %v810, %v843
        %v860 = vmul.f32 %v844, 1.442695
        %v861 = vpow.pop %v860
        %v862 = vmul.f32 %v845, 1.442695
        %v863 = vpow.pop %v862
        %v864 = vmul.f32 %v846, 1.442695
        %v865 = vpow.pop %v864
        %v866 = vmul.f32 %v847, 1.442695
        %v867 = vpow.pop %v866
        %v868 = vmul.f32 %v848, 1.442695
        %v869 = vpow.pop %v868
        %v870 = vmul.f32 %v849, 1.442695
        %v871 = vpow.pop %v870
        %v872 = vmul.f32 %v850, 1.442695
        %v873 = vpow.pop %v872
        %v874 = vmul.f32 %v851, 1.442695
        %v875 = vpow.pop %v874
        %v876 = vmul.f32 %v852, 1.442695
        %v877 = vpow.pop %v876
        %v878 = vmul.f32 %v853, 1.442695
        %v879 = vpow.pop %v878
        %v880 = vmul.f32 %v854, 1.442695
        %v881 = vpow.pop %v880
        %v882 = vmul.f32 %v855, 1.442695
        %v883 = vpow.pop %v882
        %v884 = vmul.f32 %v856, 1.442695
        %v885 = vpow.pop %v884
        %v886 = vmul.f32 %v857, 1.442695
        %v887 = vpow.pop %v886
        %v888 = vmul.f32 %v858, 1.442695
        %v889 = vpow.pop %v888
        %v890 = vmul.f32 %v859, 1.442695
        %v891 = vpow.pop %v890
        %892 = vadd.xlane.f32.xlu0 %v861
        %v893 = vpop.xlane.xlu0 %892
        %894 = vadd.xlane.f32.xlu0 %v863
        %v895 = vpop.xlane.xlu0 %894
        %896 = vadd.xlane.f32.xlu0 %v865
        %v897 = vpop.xlane.xlu0 %896
        %898 = vadd.xlane.f32.xlu0 %v867
        %v899 = vpop.xlane.xlu0 %898
        %900 = vadd.xlane.f32.xlu0 %v869
        %v901 = vpop.xlane.xlu0 %900
        %902 = vadd.xlane.f32.xlu0 %v871
        %v903 = vpop.xlane.xlu0 %902
        %904 = vadd.xlane.f32.xlu0 %v873
        %v905 = vpop.xlane.xlu0 %904
        %906 = vadd.xlane.f32.xlu0 %v875
        %v907 = vpop.xlane.xlu0 %906
        %908 = vadd.xlane.f32.xlu0 %v877
        %v909 = vpop.xlane.xlu0 %908
        %910 = vadd.xlane.f32.xlu0 %v879
        %v911 = vpop.xlane.xlu0 %910
        %912 = vadd.xlane.f32.xlu0 %v881
        %v913 = vpop.xlane.xlu0 %912
        %914 = vadd.xlane.f32.xlu0 %v883
        %v915 = vpop.xlane.xlu0 %914
        %916 = vadd.xlane.f32.xlu0 %v885
        %v917 = vpop.xlane.xlu0 %916
        %918 = vadd.xlane.f32.xlu0 %v887
        %v919 = vpop.xlane.xlu0 %918
        %920 = vadd.xlane.f32.xlu0 %v889
        %v921 = vpop.xlane.xlu0 %920
        %922 = vadd.xlane.f32.xlu0 %v891
        %v923 = vpop.xlane.xlu0 %922
        %v924 = vrcp.pop %v893
        %v925 = vmul.f32 %v893, %v924
        %v926 = vsub.f32 1.0, %v925
        %v927 = vmul.f32 %v924, %v926
        %v928 = vadd.f32 %v924, %v927
        %vm929 = vweird.f32 %v893
        %vm930 = vweird.f32 %v924
        %vm931 = vmor %vm929, %vm930
        %v932 = vsel %vm931, %v924, %v928
        %v933 = vand.u32 2147483647, %v893
        %vm934 = vcmp.eq.f32.partialorder %v933, 8.507059e+37
        %v935 = vand.u32 %v893, 2147483648
        %v936 = vor.u32 1.1754944e-38, %v935
        %v937 = vsel %vm934, %v936, %v932
        %v938 = vrcp.pop %v895
        %v939 = vmul.f32 %v895, %v938
        %v940 = vsub.f32 1.0, %v939
        %v941 = vmul.f32 %v938, %v940
        %v942 = vadd.f32 %v938, %v941
        %vm943 = vweird.f32 %v895
        %vm944 = vweird.f32 %v938
        %vm945 = vmor %vm943, %vm944
        %v946 = vsel %vm945, %v938, %v942
        %v947 = vand.u32 2147483647, %v895
        %vm948 = vcmp.eq.f32.partialorder %v947, 8.507059e+37
        %v949 = vand.u32 %v895, 2147483648
        %v950 = vor.u32 1.1754944e-38, %v949
        %v951 = vsel %vm948, %v950, %v946
        %v952 = vrcp.pop %v897
        %v953 = vmul.f32 %v897, %v952
        %v954 = vsub.f32 1.0, %v953
        %v955 = vmul.f32 %v952, %v954
        %v956 = vadd.f32 %v952, %v955
        %vm957 = vweird.f32 %v897
        %vm958 = vweird.f32 %v952
        %vm959 = vmor %vm957, %vm958
        %v960 = vsel %vm959, %v952, %v956
        %v961 = vand.u32 2147483647, %v897
        %vm962 = vcmp.eq.f32.partialorder %v961, 8.507059e+37
        %v963 = vand.u32 %v897, 2147483648
        %v964 = vor.u32 1.1754944e-38, %v963
        %v965 = vsel %vm962, %v964, %v960
        %v966 = vrcp.pop %v899
        %v967 = vmul.f32 %v899, %v966
        %v968 = vsub.f32 1.0, %v967
        %v969 = vmul.f32 %v966, %v968
        %v970 = vadd.f32 %v966, %v969
        %vm971 = vweird.f32 %v899
        %vm972 = vweird.f32 %v966
        %vm973 = vmor %vm971, %vm972
        %v974 = vsel %vm973, %v966, %v970
        %v975 = vand.u32 2147483647, %v899
        %vm976 = vcmp.eq.f32.partialorder %v975, 8.507059e+37
        %v977 = vand.u32 %v899, 2147483648
        %v978 = vor.u32 1.1754944e-38, %v977
        %v979 = vsel %vm976, %v978, %v974
        %v980 = vrcp.pop %v901
        %v981 = vmul.f32 %v901, %v980
        %v982 = vsub.f32 1.0, %v981
        %v983 = vmul.f32 %v980, %v982
        %v984 = vadd.f32 %v980, %v983
        %vm985 = vweird.f32 %v901
        %vm986 = vweird.f32 %v980
        %vm987 = vmor %vm985, %vm986
        %v988 = vsel %vm987, %v980, %v984
        %v989 = vand.u32 2147483647, %v901
        %vm990 = vcmp.eq.f32.partialorder %v989, 8.507059e+37
        %v991 = vand.u32 %v901, 2147483648
        %v992 = vor.u32 1.1754944e-38, %v991
        %v993 = vsel %vm990, %v992, %v988
        %v994 = vrcp.pop %v903
        %v995 = vmul.f32 %v903, %v994
        %v996 = vsub.f32 1.0, %v995
        %v997 = vmul.f32 %v994, %v996
        %v998 = vadd.f32 %v994, %v997
        %vm999 = vweird.f32 %v903
        %vm1000 = vweird.f32 %v994
        %vm1001 = vmor %vm999, %vm1000
        %v1002 = vsel %vm1001, %v994, %v998
        %v1003 = vand.u32 2147483647, %v903
        %vm1004 = vcmp.eq.f32.partialorder %v1003, 8.507059e+37
        %v1005 = vand.u32 %v903, 2147483648
        %v1006 = vor.u32 1.1754944e-38, %v1005
        %v1007 = vsel %vm1004, %v1006, %v1002
        %v1008 = vrcp.pop %v905
        %v1009 = vmul.f32 %v905, %v1008
        %v1010 = vsub.f32 1.0, %v1009
        %v1011 = vmul.f32 %v1008, %v1010
        %v1012 = vadd.f32 %v1008, %v1011
        %vm1013 = vweird.f32 %v905
        %vm1014 = vweird.f32 %v1008
        %vm1015 = vmor %vm1013, %vm1014
        %v1016 = vsel %vm1015, %v1008, %v1012
        %v1017 = vand.u32 2147483647, %v905
        %vm1018 = vcmp.eq.f32.partialorder %v1017, 8.507059e+37
        %v1019 = vand.u32 %v905, 2147483648
        %v1020 = vor.u32 1.1754944e-38, %v1019
        %v1021 = vsel %vm1018, %v1020, %v1016
        %v1022 = vrcp.pop %v907
        %v1023 = vmul.f32 %v907, %v1022
        %v1024 = vsub.f32 1.0, %v1023
        %v1025 = vmul.f32 %v1022, %v1024
        %v1026 = vadd.f32 %v1022, %v1025
        %vm1027 = vweird.f32 %v907
        %vm1028 = vweird.f32 %v1022
        %vm1029 = vmor %vm1027, %vm1028
        %v1030 = vsel %vm1029, %v1022, %v1026
        %v1031 = vand.u32 2147483647, %v907
        %vm1032 = vcmp.eq.f32.partialorder %v1031, 8.507059e+37
        %v1033 = vand.u32 %v907, 2147483648
        %v1034 = vor.u32 1.1754944e-38, %v1033
        %v1035 = vsel %vm1032, %v1034, %v1030
        %v1036 = vrcp.pop %v909
        %v1037 = vmul.f32 %v909, %v1036
        %v1038 = vsub.f32 1.0, %v1037
        %v1039 = vmul.f32 %v1036, %v1038
        %v1040 = vadd.f32 %v1036, %v1039
        %vm1041 = vweird.f32 %v909
        %vm1042 = vweird.f32 %v1036
        %vm1043 = vmor %vm1041, %vm1042
        %v1044 = vsel %vm1043, %v1036, %v1040
        %v1045 = vand.u32 2147483647, %v909
        %vm1046 = vcmp.eq.f32.partialorder %v1045, 8.507059e+37
        %v1047 = vand.u32 %v909, 2147483648
        %v1048 = vor.u32 1.1754944e-38, %v1047
        %v1049 = vsel %vm1046, %v1048, %v1044
        %v1050 = vrcp.pop %v911
        %v1051 = vmul.f32 %v911, %v1050
        %v1052 = vsub.f32 1.0, %v1051
        %v1053 = vmul.f32 %v1050, %v1052
        %v1054 = vadd.f32 %v1050, %v1053
        %vm1055 = vweird.f32 %v911
        %vm1056 = vweird.f32 %v1050
        %vm1057 = vmor %vm1055, %vm1056
        %v1058 = vsel %vm1057, %v1050, %v1054
        %v1059 = vand.u32 2147483647, %v911
        %vm1060 = vcmp.eq.f32.partialorder %v1059, 8.507059e+37
        %v1061 = vand.u32 %v911, 2147483648
        %v1062 = vor.u32 1.1754944e-38, %v1061
        %v1063 = vsel %vm1060, %v1062, %v1058
        %v1064 = vrcp.pop %v913
        %v1065 = vmul.f32 %v913, %v1064
        %v1066 = vsub.f32 1.0, %v1065
        %v1067 = vmul.f32 %v1064, %v1066
        %v1068 = vadd.f32 %v1064, %v1067
        %vm1069 = vweird.f32 %v913
        %vm1070 = vweird.f32 %v1064
        %vm1071 = vmor %vm1069, %vm1070
        %v1072 = vsel %vm1071, %v1064, %v1068
        %v1073 = vand.u32 2147483647, %v913
        %vm1074 = vcmp.eq.f32.partialorder %v1073, 8.507059e+37
        %v1075 = vand.u32 %v913, 2147483648
        %v1076 = vor.u32 1.1754944e-38, %v1075
        %v1077 = vsel %vm1074, %v1076, %v1072
        %v1078 = vrcp.pop %v915
        %v1079 = vmul.f32 %v915, %v1078
        %v1080 = vsub.f32 1.0, %v1079
        %v1081 = vmul.f32 %v1078, %v1080
        %v1082 = vadd.f32 %v1078, %v1081
        %vm1083 = vweird.f32 %v915
        %vm1084 = vweird.f32 %v1078
        %vm1085 = vmor %vm1083, %vm1084
        %v1086 = vsel %vm1085, %v1078, %v1082
        %v1087 = vand.u32 2147483647, %v915
        %vm1088 = vcmp.eq.f32.partialorder %v1087, 8.507059e+37
        %v1089 = vand.u32 %v915, 2147483648
        %v1090 = vor.u32 1.1754944e-38, %v1089
        %v1091 = vsel %vm1088, %v1090, %v1086
        %v1092 = vrcp.pop %v917
        %v1093 = vmul.f32 %v917, %v1092
        %v1094 = vsub.f32 1.0, %v1093
        %v1095 = vmul.f32 %v1092, %v1094
        %v1096 = vadd.f32 %v1092, %v1095
        %vm1097 = vweird.f32 %v917
        %vm1098 = vweird.f32 %v1092
        %vm1099 = vmor %vm1097, %vm1098
        %v1100 = vsel %vm1099, %v1092, %v1096
        %v1101 = vand.u32 2147483647, %v917
        %vm1102 = vcmp.eq.f32.partialorder %v1101, 8.507059e+37
        %v1103 = vand.u32 %v917, 2147483648
        %v1104 = vor.u32 1.1754944e-38, %v1103
        %v1105 = vsel %vm1102, %v1104, %v1100
        %v1106 = vrcp.pop %v919
        %v1107 = vmul.f32 %v919, %v1106
        %v1108 = vsub.f32 1.0, %v1107
        %v1109 = vmul.f32 %v1106, %v1108
        %v1110 = vadd.f32 %v1106, %v1109
        %vm1111 = vweird.f32 %v919
        %vm1112 = vweird.f32 %v1106
        %vm1113 = vmor %vm1111, %vm1112
        %v1114 = vsel %vm1113, %v1106, %v1110
        %v1115 = vand.u32 2147483647, %v919
        %vm1116 = vcmp.eq.f32.partialorder %v1115, 8.507059e+37
        %v1117 = vand.u32 %v919, 2147483648
        %v1118 = vor.u32 1.1754944e-38, %v1117
        %v1119 = vsel %vm1116, %v1118, %v1114
        %v1120 = vrcp.pop %v921
        %v1121 = vmul.f32 %v921, %v1120
        %v1122 = vsub.f32 1.0, %v1121
        %v1123 = vmul.f32 %v1120, %v1122
        %v1124 = vadd.f32 %v1120, %v1123
        %vm1125 = vweird.f32 %v921
        %vm1126 = vweird.f32 %v1120
        %vm1127 = vmor %vm1125, %vm1126
        %v1128 = vsel %vm1127, %v1120, %v1124
        %v1129 = vand.u32 2147483647, %v921
        %vm1130 = vcmp.eq.f32.partialorder %v1129, 8.507059e+37
        %v1131 = vand.u32 %v921, 2147483648
        %v1132 = vor.u32 1.1754944e-38, %v1131
        %v1133 = vsel %vm1130, %v1132, %v1128
        %v1134 = vrcp.pop %v923
        %v1135 = vmul.f32 %v923, %v1134
        %v1136 = vsub.f32 1.0, %v1135
        %v1137 = vmul.f32 %v1134, %v1136
        %v1138 = vadd.f32 %v1134, %v1137
        %vm1139 = vweird.f32 %v923
        %vm1140 = vweird.f32 %v1134
        %vm1141 = vmor %vm1139, %vm1140
        %v1142 = vsel %vm1141, %v1134, %v1138
        %v1143 = vand.u32 2147483647, %v923
        %vm1144 = vcmp.eq.f32.partialorder %v1143, 8.507059e+37
        %v1145 = vand.u32 %v923, 2147483648
        %v1146 = vor.u32 1.1754944e-38, %v1145
        %v1147 = vsel %vm1144, %v1146, %v1142
        %v1148 = vpack.c.bf16 %v861, %v861
        %v1149 = vpack.c.bf16 %v863, %v863
        %v1150 = vpack.c.bf16 %v865, %v865
        %v1151 = vpack.c.bf16 %v867, %v867
        %v1152 = vpack.c.bf16 %v869, %v869
        %v1153 = vpack.c.bf16 %v871, %v871
        %v1154 = vpack.c.bf16 %v873, %v873
        %v1155 = vpack.c.bf16 %v875, %v875
        %v1156 = vpack.c.bf16 %v877, %v877
        %v1157 = vpack.c.bf16 %v879, %v879
        %v1158 = vpack.c.bf16 %v881, %v881
        %v1159 = vpack.c.bf16 %v883, %v883
        %v1160 = vpack.c.bf16 %v885, %v885
        %v1161 = vpack.c.bf16 %v887, %v887
        %v1162 = vpack.c.bf16 %v889, %v889
        %v1163 = vpack.c.bf16 %v891, %v891
        %v1180 = vunpack.c.l.b16 %v1148
        %v1181 = vunpack.c.l.b16 %v1149
        %v1182 = vunpack.c.l.b16 %v1150
        %v1183 = vunpack.c.l.b16 %v1151
        %v1184 = vunpack.c.l.b16 %v1152
        %v1185 = vunpack.c.l.b16 %v1153
        %v1186 = vunpack.c.l.b16 %v1154
        %v1187 = vunpack.c.l.b16 %v1155
        %v1188 = vunpack.c.l.b16 %v1156
        %v1189 = vunpack.c.l.b16 %v1157
        %v1190 = vunpack.c.l.b16 %v1158
        %v1191 = vunpack.c.l.b16 %v1159
        %v1192 = vunpack.c.l.b16 %v1160
        %v1193 = vunpack.c.l.b16 %v1161
        %v1194 = vunpack.c.l.b16 %v1162
        %v1195 = vunpack.c.l.b16 %v1163
        %v1196 = vpack.c.b16 %v1181, %v1180
        %v1197 = vpack.c.b16 %v1183, %v1182
        %v1198 = vpack.c.b16 %v1185, %v1184
        %v1199 = vpack.c.b16 %v1187, %v1186
        %v1200 = vpack.c.b16 %v1189, %v1188
        %v1201 = vpack.c.b16 %v1191, %v1190
        %v1202 = vpack.c.b16 %v1193, %v1192
        %v1203 = vpack.c.b16 %v1195, %v1194
        %1212 = vrot.lane.b32.xlu0 %v690, 64
        %v1213 = vpop.permute.xlu0 %1212
        %1214 = vrot.lane.b32.xlu0 %v691, 64
        %v1215 = vpop.permute.xlu0 %1214
        %1216 = vrot.lane.b32.xlu0 %v692, 64
        %v1217 = vpop.permute.xlu0 %1216
        %1218 = vrot.lane.b32.xlu0 %v693, 64
        %v1219 = vpop.permute.xlu0 %1218
        %1220 = vrot.lane.b32.xlu0 %v694, 64
        %v1221 = vpop.permute.xlu0 %1220
        %1222 = vrot.lane.b32.xlu0 %v695, 64
        %v1223 = vpop.permute.xlu0 %1222
        %1224 = vrot.lane.b32.xlu0 %v696, 64
        %v1225 = vpop.permute.xlu0 %1224
        %1226 = vrot.lane.b32.xlu0 %v697, 64
        %v1227 = vpop.permute.xlu0 %1226
        %1236 = vmatpush.bf16.msra.mxu0 %v1227
        %1237 = vmatpush.bf16.msra.mxu0 %v1225
        %1238 = vmatpush.bf16.msra.mxu0 %v1223
        %1239 = vmatpush.bf16.msra.mxu0 %v1221
        %1240 = vmatpush.bf16.msra.mxu0 %v1219
        %1241 = vmatpush.bf16.msra.mxu0 %v1217
        %1242 = vmatpush.bf16.msra.mxu0 %v1215
        %1243 = vmatpush.bf16.msra.mxu0 %v1213
        %1244 = vmatmul.bf16.gmra.mxu0 %v1196
        %v1245 = vpop.f32.mrf.mxu0
        %v1246 = vadd.f32 0.0, %v1245
        %v1247 = vpop.f32.mrf.mxu0
        %v1248 = vadd.f32 0.0, %v1247
        %1249 = vmatmul.bf16.gmra.mxu0 %v1197
        %v1250 = vpop.f32.mrf.mxu0
        %v1251 = vadd.f32 0.0, %v1250
        %v1252 = vpop.f32.mrf.mxu0
        %v1253 = vadd.f32 0.0, %v1252
        %1254 = vmatmul.bf16.gmra.mxu0 %v1198
        %v1255 = vpop.f32.mrf.mxu0
        %v1256 = vadd.f32 0.0, %v1255
        %v1257 = vpop.f32.mrf.mxu0
        %v1258 = vadd.f32 0.0, %v1257
        %1259 = vmatmul.bf16.gmra.mxu0 %v1199
        %v1260 = vpop.f32.mrf.mxu0
        %v1261 = vadd.f32 0.0, %v1260
        %v1262 = vpop.f32.mrf.mxu0
        %v1263 = vadd.f32 0.0, %v1262
        %1264 = vmatmul.bf16.gmra.mxu0 %v1200
        %v1265 = vpop.f32.mrf.mxu0
        %v1266 = vadd.f32 0.0, %v1265
        %v1267 = vpop.f32.mrf.mxu0
        %v1268 = vadd.f32 0.0, %v1267
        %1269 = vmatmul.bf16.gmra.mxu0 %v1201
        %v1270 = vpop.f32.mrf.mxu0
        %v1271 = vadd.f32 0.0, %v1270
        %v1272 = vpop.f32.mrf.mxu0
        %v1273 = vadd.f32 0.0, %v1272
        %1274 = vmatmul.bf16.gmra.mxu0 %v1202
        %v1275 = vpop.f32.mrf.mxu0
        %v1276 = vadd.f32 0.0, %v1275
        %v1277 = vpop.f32.mrf.mxu0
        %v1278 = vadd.f32 0.0, %v1277
        %1279 = vmatmul.bf16.gmra.mxu0 %v1203
        %v1280 = vpop.f32.mrf.mxu0
        %v1281 = vadd.f32 0.0, %v1280
        %v1282 = vpop.f32.mrf.mxu0
        %v1283 = vadd.f32 0.0, %v1282
        %1284 = vdwg.mxu0
        %v1285 = vmul.f32 %v1246, %v937
        %v1286 = vmul.f32 %v1248, %v951
        %v1287 = vmul.f32 %v1251, %v965
        %v1288 = vmul.f32 %v1253, %v979
        %v1289 = vmul.f32 %v1256, %v993
        %v1290 = vmul.f32 %v1258, %v1007
        %v1291 = vmul.f32 %v1261, %v1021
        %v1292 = vmul.f32 %v1263, %v1035
        %v1293 = vmul.f32 %v1266, %v1049
        %v1294 = vmul.f32 %v1268, %v1063
        %v1295 = vmul.f32 %v1271, %v1077
        %v1296 = vmul.f32 %v1273, %v1091
        %v1297 = vmul.f32 %v1276, %v1105
        %v1298 = vmul.f32 %v1278, %v1119
        %v1299 = vmul.f32 %v1281, %v1133
        %v1300 = vmul.f32 %v1283, %v1147
        %v1301 = vmul.f32 %v861, %v937
        %v1302 = vmul.f32 %v863, %v951
        %v1303 = vmul.f32 %v865, %v965
        %v1304 = vmul.f32 %v867, %v979
        %v1305 = vmul.f32 %v869, %v993
        %v1306 = vmul.f32 %v871, %v1007
        %v1307 = vmul.f32 %v873, %v1021
        %v1308 = vmul.f32 %v875, %v1035
        %v1309 = vmul.f32 %v877, %v1049
        %v1310 = vmul.f32 %v879, %v1063
        %v1311 = vmul.f32 %v881, %v1077
        %v1312 = vmul.f32 %v883, %v1091
        %v1313 = vmul.f32 %v885, %v1105
        %v1314 = vmul.f32 %v887, %v1119
        %v1315 = vmul.f32 %v889, %v1133
        %v1316 = vmul.f32 %v891, %v1147
        %v1317 = vadd.f32 %v1301, 0.0
        %v1318 = vadd.f32 %v1302, 0.0
        %v1319 = vadd.f32 %v1303, 0.0
        %v1320 = vadd.f32 %v1304, 0.0
        %v1321 = vadd.f32 %v1305, 0.0
        %v1322 = vadd.f32 %v1306, 0.0
        %v1323 = vadd.f32 %v1307, 0.0
        %v1324 = vadd.f32 %v1308, 0.0
        %v1325 = vadd.f32 %v1309, 0.0
        %v1326 = vadd.f32 %v1310, 0.0
        %v1327 = vadd.f32 %v1311, 0.0
        %v1328 = vadd.f32 %v1312, 0.0
        %v1329 = vadd.f32 %v1313, 0.0
        %v1330 = vadd.f32 %v1314, 0.0
        %v1331 = vadd.f32 %v1315, 0.0
        %v1332 = vadd.f32 %v1316, 0.0
        %v1333 = vpack.c.bf16 %v1286, %v1285
        %v1334 = vpack.c.bf16 %v1288, %v1287
        %v1335 = vpack.c.bf16 %v1290, %v1289
        %v1336 = vpack.c.bf16 %v1292, %v1291
        %v1337 = vpack.c.bf16 %v1294, %v1293
        %v1338 = vpack.c.bf16 %v1296, %v1295
        %v1339 = vpack.c.bf16 %v1298, %v1297
        %v1340 = vpack.c.bf16 %v1300, %v1299
        %1341 = vrot.lane.b32.xlu0 %v650, 120
        %v1342 = vpop.permute.xlu0 %1341
        %1343 = vrot.lane.b32.xlu0 %v651, 120
        %v1344 = vpop.permute.xlu0 %1343
        %1345 = vrot.lane.b32.xlu0 %v652, 120
        %v1346 = vpop.permute.xlu0 %1345
        %1347 = vrot.lane.b32.xlu0 %v653, 120
        %v1348 = vpop.permute.xlu0 %1347
        %1349 = vrot.lane.b32.xlu0 %v654, 120
        %v1350 = vpop.permute.xlu0 %1349
        %1351 = vrot.lane.b32.xlu0 %v655, 120
        %v1352 = vpop.permute.xlu0 %1351
        %1353 = vrot.lane.b32.xlu0 %v656, 120
        %v1354 = vpop.permute.xlu0 %1353
        %1355 = vrot.lane.b32.xlu0 %v657, 120
        %v1356 = vpop.permute.xlu0 %1355
        %1357 = vrot.lane.b32.xlu0 %v690, 88
        %v1358 = vpop.permute.xlu0 %1357
        %1359 = vrot.lane.b32.xlu0 %v691, 88
        %v1360 = vpop.permute.xlu0 %1359
        %1361 = vrot.lane.b32.xlu0 %v692, 88
        %v1362 = vpop.permute.xlu0 %1361
        %1363 = vrot.lane.b32.xlu0 %v693, 88
        %v1364 = vpop.permute.xlu0 %1363
        %1365 = vrot.lane.b32.xlu0 %v694, 88
        %v1366 = vpop.permute.xlu0 %1365
        %1367 = vrot.lane.b32.xlu0 %v695, 88
        %v1368 = vpop.permute.xlu0 %1367
        %1369 = vrot.lane.b32.xlu0 %v696, 88
        %v1370 = vpop.permute.xlu0 %1369
        %1371 = vrot.lane.b32.xlu0 %v697, 88
        %v1372 = vpop.permute.xlu0 %1371
        %v1374 = vsel %vm714, %v1342, 0
        %v1377 = vsel %vm714, %v1344, 0
        %v1380 = vsel %vm714, %v1346, 0
        %v1383 = vsel %vm714, %v1348, 0
        %v1386 = vsel %vm714, %v1350, 0
        %v1389 = vsel %vm714, %v1352, 0
        %v1392 = vsel %vm714, %v1354, 0
        %v1395 = vsel %vm714, %v1356, 0
        %v1398 = vsel %vm714, %v1358, 0
        %v1401 = vsel %vm714, %v1360, 0
        %v1404 = vsel %vm714, %v1362, 0
        %v1407 = vsel %vm714, %v1364, 0
        %v1410 = vsel %vm714, %v1366, 0
        %v1413 = vsel %vm714, %v1368, 0
        %v1416 = vsel %vm714, %v1370, 0
        %v1419 = vsel %vm714, %v1372, 0
        %1421 = vmatpush.bf16.xpose.msra.mxu0 %v1419
        %1422 = vmatpush.bf16.xpose.msra.mxu0 %v1416
        %1423 = vmatpush.bf16.xpose.msra.mxu0 %v1413
        %1424 = vmatpush.bf16.xpose.msra.mxu0 %v1410
        %1425 = vmatpush.bf16.xpose.msra.mxu0 %v1407
        %1426 = vmatpush.bf16.xpose.msra.mxu0 %v1404
        %1427 = vmatpush.bf16.xpose.msra.mxu0 %v1401
        %1428 = vmatpush.bf16.xpose.msra.mxu0 %v1398
        %1429 = vmatmul.bf16.gmra.mxu0 %v1374
        %v1430 = vpop.f32.mrf.mxu0
        %v1431 = vadd.f32 %v616, %v1430
        %v1432 = vpop.f32.mrf.mxu0
        %v1433 = vadd.f32 %v616, %v1432
        %1434 = vmatmul.bf16.gmra.mxu0 %v1377
        %v1435 = vpop.f32.mrf.mxu0
        %v1436 = vadd.f32 %v616, %v1435
        %v1437 = vpop.f32.mrf.mxu0
        %v1438 = vadd.f32 %v616, %v1437
        %1439 = vmatmul.bf16.gmra.mxu0 %v1380
        %v1440 = vpop.f32.mrf.mxu0
        %v1441 = vadd.f32 %v616, %v1440
        %v1442 = vpop.f32.mrf.mxu0
        %v1443 = vadd.f32 %v616, %v1442
        %1444 = vmatmul.bf16.gmra.mxu0 %v1383
        %v1445 = vpop.f32.mrf.mxu0
        %v1446 = vadd.f32 %v616, %v1445
        %v1447 = vpop.f32.mrf.mxu0
        %v1448 = vadd.f32 %v616, %v1447
        %1449 = vmatmul.bf16.gmra.mxu0 %v1386
        %v1450 = vpop.f32.mrf.mxu0
        %v1451 = vadd.f32 %v616, %v1450
        %v1452 = vpop.f32.mrf.mxu0
        %v1453 = vadd.f32 %v616, %v1452
        %1454 = vmatmul.bf16.gmra.mxu0 %v1389
        %v1455 = vpop.f32.mrf.mxu0
        %v1456 = vadd.f32 %v616, %v1455
        %v1457 = vpop.f32.mrf.mxu0
        %v1458 = vadd.f32 %v616, %v1457
        %1459 = vmatmul.bf16.gmra.mxu0 %v1392
        %v1460 = vpop.f32.mrf.mxu0
        %v1461 = vadd.f32 %v616, %v1460
        %v1462 = vpop.f32.mrf.mxu0
        %v1463 = vadd.f32 %v616, %v1462
        %1464 = vmatmul.bf16.gmra.mxu0 %v1395
        %v1465 = vpop.f32.mrf.mxu0
        %v1466 = vadd.f32 %v616, %v1465
        %v1467 = vpop.f32.mrf.mxu0
        %v1468 = vadd.f32 %v616, %v1467
        %1469 = vdwg.mxu0
        %1470 = vmax.xlane.f32.xlu0 %v1431
        %v1471 = vpop.xlane.xlu0 %1470
        %1472 = vmax.xlane.f32.xlu0 %v1433
        %v1473 = vpop.xlane.xlu0 %1472
        %1474 = vmax.xlane.f32.xlu0 %v1436
        %v1475 = vpop.xlane.xlu0 %1474
        %1476 = vmax.xlane.f32.xlu0 %v1438
        %v1477 = vpop.xlane.xlu0 %1476
        %1478 = vmax.xlane.f32.xlu0 %v1441
        %v1479 = vpop.xlane.xlu0 %1478
        %1480 = vmax.xlane.f32.xlu0 %v1443
        %v1481 = vpop.xlane.xlu0 %1480
        %1482 = vmax.xlane.f32.xlu0 %v1446
        %v1483 = vpop.xlane.xlu0 %1482
        %1484 = vmax.xlane.f32.xlu0 %v1448
        %v1485 = vpop.xlane.xlu0 %1484
        %1486 = vmax.xlane.f32.xlu0 %v1451
        %v1487 = vpop.xlane.xlu0 %1486
        %1488 = vmax.xlane.f32.xlu0 %v1453
        %v1489 = vpop.xlane.xlu0 %1488
        %1490 = vmax.xlane.f32.xlu0 %v1456
        %v1491 = vpop.xlane.xlu0 %1490
        %1492 = vmax.xlane.f32.xlu0 %v1458
        %v1493 = vpop.xlane.xlu0 %1492
        %1494 = vmax.xlane.f32.xlu0 %v1461
        %v1495 = vpop.xlane.xlu0 %1494
        %1496 = vmax.xlane.f32.xlu0 %v1463
        %v1497 = vpop.xlane.xlu0 %1496
        %1498 = vmax.xlane.f32.xlu0 %v1466
        %v1499 = vpop.xlane.xlu0 %1498
        %1500 = vmax.xlane.f32.xlu0 %v1468
        %v1501 = vpop.xlane.xlu0 %1500
        %v1502 = vsub.f32 %v1431, %v1471
        %v1503 = vsub.f32 %v1433, %v1473
        %v1504 = vsub.f32 %v1436, %v1475
        %v1505 = vsub.f32 %v1438, %v1477
        %v1506 = vsub.f32 %v1441, %v1479
        %v1507 = vsub.f32 %v1443, %v1481
        %v1508 = vsub.f32 %v1446, %v1483
        %v1509 = vsub.f32 %v1448, %v1485
        %v1510 = vsub.f32 %v1451, %v1487
        %v1511 = vsub.f32 %v1453, %v1489
        %v1512 = vsub.f32 %v1456, %v1491
        %v1513 = vsub.f32 %v1458, %v1493
        %v1514 = vsub.f32 %v1461, %v1495
        %v1515 = vsub.f32 %v1463, %v1497
        %v1516 = vsub.f32 %v1466, %v1499
        %v1517 = vsub.f32 %v1468, %v1501
        %v1518 = vmul.f32 %v1502, 1.442695
        %v1519 = vpow.pop %v1518
        %v1520 = vmul.f32 %v1503, 1.442695
        %v1521 = vpow.pop %v1520
        %v1522 = vmul.f32 %v1504, 1.442695
        %v1523 = vpow.pop %v1522
        %v1524 = vmul.f32 %v1505, 1.442695
        %v1525 = vpow.pop %v1524
        %v1526 = vmul.f32 %v1506, 1.442695
        %v1527 = vpow.pop %v1526
        %v1528 = vmul.f32 %v1507, 1.442695
        %v1529 = vpow.pop %v1528
        %v1530 = vmul.f32 %v1508, 1.442695
        %v1531 = vpow.pop %v1530
        %v1532 = vmul.f32 %v1509, 1.442695
        %v1533 = vpow.pop %v1532
        %v1534 = vmul.f32 %v1510, 1.442695
        %v1535 = vpow.pop %v1534
        %v1536 = vmul.f32 %v1511, 1.442695
        %v1537 = vpow.pop %v1536
        %v1538 = vmul.f32 %v1512, 1.442695
        %v1539 = vpow.pop %v1538
        %v1540 = vmul.f32 %v1513, 1.442695
        %v1541 = vpow.pop %v1540
        %v1542 = vmul.f32 %v1514, 1.442695
        %v1543 = vpow.pop %v1542
        %v1544 = vmul.f32 %v1515, 1.442695
        %v1545 = vpow.pop %v1544
        %v1546 = vmul.f32 %v1516, 1.442695
        %v1547 = vpow.pop %v1546
        %v1548 = vmul.f32 %v1517, 1.442695
        %v1549 = vpow.pop %v1548
        %1550 = vadd.xlane.f32.xlu0 %v1519
        %v1551 = vpop.xlane.xlu0 %1550
        %1552 = vadd.xlane.f32.xlu0 %v1521
        %v1553 = vpop.xlane.xlu0 %1552
        %1554 = vadd.xlane.f32.xlu0 %v1523
        %v1555 = vpop.xlane.xlu0 %1554
        %1556 = vadd.xlane.f32.xlu0 %v1525
        %v1557 = vpop.xlane.xlu0 %1556
        %1558 = vadd.xlane.f32.xlu0 %v1527
        %v1559 = vpop.xlane.xlu0 %1558
        %1560 = vadd.xlane.f32.xlu0 %v1529
        %v1561 = vpop.xlane.xlu0 %1560
        %1562 = vadd.xlane.f32.xlu0 %v1531
        %v1563 = vpop.xlane.xlu0 %1562
        %1564 = vadd.xlane.f32.xlu0 %v1533
        %v1565 = vpop.xlane.xlu0 %1564
        %1566 = vadd.xlane.f32.xlu0 %v1535
        %v1567 = vpop.xlane.xlu0 %1566
        %1568 = vadd.xlane.f32.xlu0 %v1537
        %v1569 = vpop.xlane.xlu0 %1568
        %1570 = vadd.xlane.f32.xlu0 %v1539
        %v1571 = vpop.xlane.xlu0 %1570
        %1572 = vadd.xlane.f32.xlu0 %v1541
        %v1573 = vpop.xlane.xlu0 %1572
        %1574 = vadd.xlane.f32.xlu0 %v1543
        %v1575 = vpop.xlane.xlu0 %1574
        %1576 = vadd.xlane.f32.xlu0 %v1545
        %v1577 = vpop.xlane.xlu0 %1576
        %1578 = vadd.xlane.f32.xlu0 %v1547
        %v1579 = vpop.xlane.xlu0 %1578
        %1580 = vadd.xlane.f32.xlu0 %v1549
        %v1581 = vpop.xlane.xlu0 %1580
        %v1582 = vrcp.pop %v1551
        %v1583 = vmul.f32 %v1551, %v1582
        %v1584 = vsub.f32 1.0, %v1583
        %v1585 = vmul.f32 %v1582, %v1584
        %v1586 = vadd.f32 %v1582, %v1585
        %vm1587 = vweird.f32 %v1551
        %vm1588 = vweird.f32 %v1582
        %vm1589 = vmor %vm1587, %vm1588
        %v1590 = vsel %vm1589, %v1582, %v1586
        %v1591 = vand.u32 2147483647, %v1551
        %vm1592 = vcmp.eq.f32.partialorder %v1591, 8.507059e+37
        %v1593 = vand.u32 %v1551, 2147483648
        %v1594 = vor.u32 1.1754944e-38, %v1593
        %v1595 = vsel %vm1592, %v1594, %v1590
        %v1596 = vrcp.pop %v1553
        %v1597 = vmul.f32 %v1553, %v1596
        %v1598 = vsub.f32 1.0, %v1597
        %v1599 = vmul.f32 %v1596, %v1598
        %v1600 = vadd.f32 %v1596, %v1599
        %vm1601 = vweird.f32 %v1553
        %vm1602 = vweird.f32 %v1596
        %vm1603 = vmor %vm1601, %vm1602
        %v1604 = vsel %vm1603, %v1596, %v1600
        %v1605 = vand.u32 2147483647, %v1553
        %vm1606 = vcmp.eq.f32.partialorder %v1605, 8.507059e+37
        %v1607 = vand.u32 %v1553, 2147483648
        %v1608 = vor.u32 1.1754944e-38, %v1607
        %v1609 = vsel %vm1606, %v1608, %v1604
        %v1610 = vrcp.pop %v1555
        %v1611 = vmul.f32 %v1555, %v1610
        %v1612 = vsub.f32 1.0, %v1611
        %v1613 = vmul.f32 %v1610, %v1612
        %v1614 = vadd.f32 %v1610, %v1613
        %vm1615 = vweird.f32 %v1555
        %vm1616 = vweird.f32 %v1610
        %vm1617 = vmor %vm1615, %vm1616
        %v1618 = vsel %vm1617, %v1610, %v1614
        %v1619 = vand.u32 2147483647, %v1555
        %vm1620 = vcmp.eq.f32.partialorder %v1619, 8.507059e+37
        %v1621 = vand.u32 %v1555, 2147483648
        %v1622 = vor.u32 1.1754944e-38, %v1621
        %v1623 = vsel %vm1620, %v1622, %v1618
        %v1624 = vrcp.pop %v1557
        %v1625 = vmul.f32 %v1557, %v1624
        %v1626 = vsub.f32 1.0, %v1625
        %v1627 = vmul.f32 %v1624, %v1626
        %v1628 = vadd.f32 %v1624, %v1627
        %vm1629 = vweird.f32 %v1557
        %vm1630 = vweird.f32 %v1624
        %vm1631 = vmor %vm1629, %vm1630
        %v1632 = vsel %vm1631, %v1624, %v1628
        %v1633 = vand.u32 2147483647, %v1557
        %vm1634 = vcmp.eq.f32.partialorder %v1633, 8.507059e+37
        %v1635 = vand.u32 %v1557, 2147483648
        %v1636 = vor.u32 1.1754944e-38, %v1635
        %v1637 = vsel %vm1634, %v1636, %v1632
        %v1638 = vrcp.pop %v1559
        %v1639 = vmul.f32 %v1559, %v1638
        %v1640 = vsub.f32 1.0, %v1639
        %v1641 = vmul.f32 %v1638, %v1640
        %v1642 = vadd.f32 %v1638, %v1641
        %vm1643 = vweird.f32 %v1559
        %vm1644 = vweird.f32 %v1638
        %vm1645 = vmor %vm1643, %vm1644
        %v1646 = vsel %vm1645, %v1638, %v1642
        %v1647 = vand.u32 2147483647, %v1559
        %vm1648 = vcmp.eq.f32.partialorder %v1647, 8.507059e+37
        %v1649 = vand.u32 %v1559, 2147483648
        %v1650 = vor.u32 1.1754944e-38, %v1649
        %v1651 = vsel %vm1648, %v1650, %v1646
        %v1652 = vrcp.pop %v1561
        %v1653 = vmul.f32 %v1561, %v1652
        %v1654 = vsub.f32 1.0, %v1653
        %v1655 = vmul.f32 %v1652, %v1654
        %v1656 = vadd.f32 %v1652, %v1655
        %vm1657 = vweird.f32 %v1561
        %vm1658 = vweird.f32 %v1652
        %vm1659 = vmor %vm1657, %vm1658
        %v1660 = vsel %vm1659, %v1652, %v1656
        %v1661 = vand.u32 2147483647, %v1561
        %vm1662 = vcmp.eq.f32.partialorder %v1661, 8.507059e+37
        %v1663 = vand.u32 %v1561, 2147483648
        %v1664 = vor.u32 1.1754944e-38, %v1663
        %v1665 = vsel %vm1662, %v1664, %v1660
        %v1666 = vrcp.pop %v1563
        %v1667 = vmul.f32 %v1563, %v1666
        %v1668 = vsub.f32 1.0, %v1667
        %v1669 = vmul.f32 %v1666, %v1668
        %v1670 = vadd.f32 %v1666, %v1669
        %vm1671 = vweird.f32 %v1563
        %vm1672 = vweird.f32 %v1666
        %vm1673 = vmor %vm1671, %vm1672
        %v1674 = vsel %vm1673, %v1666, %v1670
        %v1675 = vand.u32 2147483647, %v1563
        %vm1676 = vcmp.eq.f32.partialorder %v1675, 8.507059e+37
        %v1677 = vand.u32 %v1563, 2147483648
        %v1678 = vor.u32 1.1754944e-38, %v1677
        %v1679 = vsel %vm1676, %v1678, %v1674
        %v1680 = vrcp.pop %v1565
        %v1681 = vmul.f32 %v1565, %v1680
        %v1682 = vsub.f32 1.0, %v1681
        %v1683 = vmul.f32 %v1680, %v1682
        %v1684 = vadd.f32 %v1680, %v1683
        %vm1685 = vweird.f32 %v1565
        %vm1686 = vweird.f32 %v1680
        %vm1687 = vmor %vm1685, %vm1686
        %v1688 = vsel %vm1687, %v1680, %v1684
        %v1689 = vand.u32 2147483647, %v1565
        %vm1690 = vcmp.eq.f32.partialorder %v1689, 8.507059e+37
        %v1691 = vand.u32 %v1565, 2147483648
        %v1692 = vor.u32 1.1754944e-38, %v1691
        %v1693 = vsel %vm1690, %v1692, %v1688
        %v1694 = vrcp.pop %v1567
        %v1695 = vmul.f32 %v1567, %v1694
        %v1696 = vsub.f32 1.0, %v1695
        %v1697 = vmul.f32 %v1694, %v1696
        %v1698 = vadd.f32 %v1694, %v1697
        %vm1699 = vweird.f32 %v1567
        %vm1700 = vweird.f32 %v1694
        %vm1701 = vmor %vm1699, %vm1700
        %v1702 = vsel %vm1701, %v1694, %v1698
        %v1703 = vand.u32 2147483647, %v1567
        %vm1704 = vcmp.eq.f32.partialorder %v1703, 8.507059e+37
        %v1705 = vand.u32 %v1567, 2147483648
        %v1706 = vor.u32 1.1754944e-38, %v1705
        %v1707 = vsel %vm1704, %v1706, %v1702
        %v1708 = vrcp.pop %v1569
        %v1709 = vmul.f32 %v1569, %v1708
        %v1710 = vsub.f32 1.0, %v1709
        %v1711 = vmul.f32 %v1708, %v1710
        %v1712 = vadd.f32 %v1708, %v1711
        %vm1713 = vweird.f32 %v1569
        %vm1714 = vweird.f32 %v1708
        %vm1715 = vmor %vm1713, %vm1714
        %v1716 = vsel %vm1715, %v1708, %v1712
        %v1717 = vand.u32 2147483647, %v1569
        %vm1718 = vcmp.eq.f32.partialorder %v1717, 8.507059e+37
        %v1719 = vand.u32 %v1569, 2147483648
        %v1720 = vor.u32 1.1754944e-38, %v1719
        %v1721 = vsel %vm1718, %v1720, %v1716
        %v1722 = vrcp.pop %v1571
        %v1723 = vmul.f32 %v1571, %v1722
        %v1724 = vsub.f32 1.0, %v1723
        %v1725 = vmul.f32 %v1722, %v1724
        %v1726 = vadd.f32 %v1722, %v1725
        %vm1727 = vweird.f32 %v1571
        %vm1728 = vweird.f32 %v1722
        %vm1729 = vmor %vm1727, %vm1728
        %v1730 = vsel %vm1729, %v1722, %v1726
        %v1731 = vand.u32 2147483647, %v1571
        %vm1732 = vcmp.eq.f32.partialorder %v1731, 8.507059e+37
        %v1733 = vand.u32 %v1571, 2147483648
        %v1734 = vor.u32 1.1754944e-38, %v1733
        %v1735 = vsel %vm1732, %v1734, %v1730
        %v1736 = vrcp.pop %v1573
        %v1737 = vmul.f32 %v1573, %v1736
        %v1738 = vsub.f32 1.0, %v1737
        %v1739 = vmul.f32 %v1736, %v1738
        %v1740 = vadd.f32 %v1736, %v1739
        %vm1741 = vweird.f32 %v1573
        %vm1742 = vweird.f32 %v1736
        %vm1743 = vmor %vm1741, %vm1742
        %v1744 = vsel %vm1743, %v1736, %v1740
        %v1745 = vand.u32 2147483647, %v1573
        %vm1746 = vcmp.eq.f32.partialorder %v1745, 8.507059e+37
        %v1747 = vand.u32 %v1573, 2147483648
        %v1748 = vor.u32 1.1754944e-38, %v1747
        %v1749 = vsel %vm1746, %v1748, %v1744
        %v1750 = vrcp.pop %v1575
        %v1751 = vmul.f32 %v1575, %v1750
        %v1752 = vsub.f32 1.0, %v1751
        %v1753 = vmul.f32 %v1750, %v1752
        %v1754 = vadd.f32 %v1750, %v1753
        %vm1755 = vweird.f32 %v1575
        %vm1756 = vweird.f32 %v1750
        %vm1757 = vmor %vm1755, %vm1756
        %v1758 = vsel %vm1757, %v1750, %v1754
        %v1759 = vand.u32 2147483647, %v1575
        %vm1760 = vcmp.eq.f32.partialorder %v1759, 8.507059e+37
        %v1761 = vand.u32 %v1575, 2147483648
        %v1762 = vor.u32 1.1754944e-38, %v1761
        %v1763 = vsel %vm1760, %v1762, %v1758
        %v1764 = vrcp.pop %v1577
        %v1765 = vmul.f32 %v1577, %v1764
        %v1766 = vsub.f32 1.0, %v1765
        %v1767 = vmul.f32 %v1764, %v1766
        %v1768 = vadd.f32 %v1764, %v1767
        %vm1769 = vweird.f32 %v1577
        %vm1770 = vweird.f32 %v1764
        %vm1771 = vmor %vm1769, %vm1770
        %v1772 = vsel %vm1771, %v1764, %v1768
        %v1773 = vand.u32 2147483647, %v1577
        %vm1774 = vcmp.eq.f32.partialorder %v1773, 8.507059e+37
        %v1775 = vand.u32 %v1577, 2147483648
        %v1776 = vor.u32 1.1754944e-38, %v1775
        %v1777 = vsel %vm1774, %v1776, %v1772
        %v1778 = vrcp.pop %v1579
        %v1779 = vmul.f32 %v1579, %v1778
        %v1780 = vsub.f32 1.0, %v1779
        %v1781 = vmul.f32 %v1778, %v1780
        %v1782 = vadd.f32 %v1778, %v1781
        %vm1783 = vweird.f32 %v1579
        %vm1784 = vweird.f32 %v1778
        %vm1785 = vmor %vm1783, %vm1784
        %v1786 = vsel %vm1785, %v1778, %v1782
        %v1787 = vand.u32 2147483647, %v1579
        %vm1788 = vcmp.eq.f32.partialorder %v1787, 8.507059e+37
        %v1789 = vand.u32 %v1579, 2147483648
        %v1790 = vor.u32 1.1754944e-38, %v1789
        %v1791 = vsel %vm1788, %v1790, %v1786
        %v1792 = vrcp.pop %v1581
        %v1793 = vmul.f32 %v1581, %v1792
        %v1794 = vsub.f32 1.0, %v1793
        %v1795 = vmul.f32 %v1792, %v1794
        %v1796 = vadd.f32 %v1792, %v1795
        %vm1797 = vweird.f32 %v1581
        %vm1798 = vweird.f32 %v1792
        %vm1799 = vmor %vm1797, %vm1798
        %v1800 = vsel %vm1799, %v1792, %v1796
        %v1801 = vand.u32 2147483647, %v1581
        %vm1802 = vcmp.eq.f32.partialorder %v1801, 8.507059e+37
        %v1803 = vand.u32 %v1581, 2147483648
        %v1804 = vor.u32 1.1754944e-38, %v1803
        %v1805 = vsel %vm1802, %v1804, %v1800
        %v1806 = vpack.c.bf16 %v1519, %v1519
        %v1807 = vpack.c.bf16 %v1521, %v1521
        %v1808 = vpack.c.bf16 %v1523, %v1523
        %v1809 = vpack.c.bf16 %v1525, %v1525
        %v1810 = vpack.c.bf16 %v1527, %v1527
        %v1811 = vpack.c.bf16 %v1529, %v1529
        %v1812 = vpack.c.bf16 %v1531, %v1531
        %v1813 = vpack.c.bf16 %v1533, %v1533
        %v1814 = vpack.c.bf16 %v1535, %v1535
        %v1815 = vpack.c.bf16 %v1537, %v1537
        %v1816 = vpack.c.bf16 %v1539, %v1539
        %v1817 = vpack.c.bf16 %v1541, %v1541
        %v1818 = vpack.c.bf16 %v1543, %v1543
        %v1819 = vpack.c.bf16 %v1545, %v1545
        %v1820 = vpack.c.bf16 %v1547, %v1547
        %v1821 = vpack.c.bf16 %v1549, %v1549
        %v1838 = vunpack.c.l.b16 %v1806
        %v1839 = vunpack.c.l.b16 %v1807
        %v1840 = vunpack.c.l.b16 %v1808
        %v1841 = vunpack.c.l.b16 %v1809
        %v1842 = vunpack.c.l.b16 %v1810
        %v1843 = vunpack.c.l.b16 %v1811
        %v1844 = vunpack.c.l.b16 %v1812
        %v1845 = vunpack.c.l.b16 %v1813
        %v1846 = vunpack.c.l.b16 %v1814
        %v1847 = vunpack.c.l.b16 %v1815
        %v1848 = vunpack.c.l.b16 %v1816
        %v1849 = vunpack.c.l.b16 %v1817
        %v1850 = vunpack.c.l.b16 %v1818
        %v1851 = vunpack.c.l.b16 %v1819
        %v1852 = vunpack.c.l.b16 %v1820
        %v1853 = vunpack.c.l.b16 %v1821
        %v1854 = vpack.c.b16 %v1839, %v1838
        %v1855 = vpack.c.b16 %v1841, %v1840
        %v1856 = vpack.c.b16 %v1843, %v1842
        %v1857 = vpack.c.b16 %v1845, %v1844
        %v1858 = vpack.c.b16 %v1847, %v1846
        %v1859 = vpack.c.b16 %v1849, %v1848
        %v1860 = vpack.c.b16 %v1851, %v1850
        %v1861 = vpack.c.b16 %v1853, %v1852
        %1870 = vrot.lane.b32.xlu0 %v690, 56
        %v1871 = vpop.permute.xlu0 %1870
        %1872 = vrot.lane.b32.xlu0 %v691, 56
        %v1873 = vpop.permute.xlu0 %1872
        %1874 = vrot.lane.b32.xlu0 %v692, 56
        %v1875 = vpop.permute.xlu0 %1874
        %1876 = vrot.lane.b32.xlu0 %v693, 56
        %v1877 = vpop.permute.xlu0 %1876
        %1878 = vrot.lane.b32.xlu0 %v694, 56
        %v1879 = vpop.permute.xlu0 %1878
        %1880 = vrot.lane.b32.xlu0 %v695, 56
        %v1881 = vpop.permute.xlu0 %1880
        %1882 = vrot.lane.b32.xlu0 %v696, 56
        %v1883 = vpop.permute.xlu0 %1882
        %1884 = vrot.lane.b32.xlu0 %v697, 56
        %v1885 = vpop.permute.xlu0 %1884
        %1894 = vmatpush.bf16.msra.mxu0 %v1885
        %1895 = vmatpush.bf16.msra.mxu0 %v1883
        %1896 = vmatpush.bf16.msra.mxu0 %v1881
        %1897 = vmatpush.bf16.msra.mxu0 %v1879
        %1898 = vmatpush.bf16.msra.mxu0 %v1877
        %1899 = vmatpush.bf16.msra.mxu0 %v1875
        %1900 = vmatpush.bf16.msra.mxu0 %v1873
        %1901 = vmatpush.bf16.msra.mxu0 %v1871
        %1902 = vmatmul.bf16.gmra.mxu0 %v1854
        %v1903 = vpop.f32.mrf.mxu0
        %v1904 = vadd.f32 0.0, %v1903
        %v1905 = vpop.f32.mrf.mxu0
        %v1906 = vadd.f32 0.0, %v1905
        %1907 = vmatmul.bf16.gmra.mxu0 %v1855
        %v1908 = vpop.f32.mrf.mxu0
        %v1909 = vadd.f32 0.0, %v1908
        %v1910 = vpop.f32.mrf.mxu0
        %v1911 = vadd.f32 0.0, %v1910
        %1912 = vmatmul.bf16.gmra.mxu0 %v1856
        %v1913 = vpop.f32.mrf.mxu0
        %v1914 = vadd.f32 0.0, %v1913
        %v1915 = vpop.f32.mrf.mxu0
        %v1916 = vadd.f32 0.0, %v1915
        %1917 = vmatmul.bf16.gmra.mxu0 %v1857
        %v1918 = vpop.f32.mrf.mxu0
        %v1919 = vadd.f32 0.0, %v1918
        %v1920 = vpop.f32.mrf.mxu0
        %v1921 = vadd.f32 0.0, %v1920
        %1922 = vmatmul.bf16.gmra.mxu0 %v1858
        %v1923 = vpop.f32.mrf.mxu0
        %v1924 = vadd.f32 0.0, %v1923
        %v1925 = vpop.f32.mrf.mxu0
        %v1926 = vadd.f32 0.0, %v1925
        %1927 = vmatmul.bf16.gmra.mxu0 %v1859
        %v1928 = vpop.f32.mrf.mxu0
        %v1929 = vadd.f32 0.0, %v1928
        %v1930 = vpop.f32.mrf.mxu0
        %v1931 = vadd.f32 0.0, %v1930
        %1932 = vmatmul.bf16.gmra.mxu0 %v1860
        %v1933 = vpop.f32.mrf.mxu0
        %v1934 = vadd.f32 0.0, %v1933
        %v1935 = vpop.f32.mrf.mxu0
        %v1936 = vadd.f32 0.0, %v1935
        %1937 = vmatmul.bf16.gmra.mxu0 %v1861
        %v1938 = vpop.f32.mrf.mxu0
        %v1939 = vadd.f32 0.0, %v1938
        %v1940 = vpop.f32.mrf.mxu0
        %v1941 = vadd.f32 0.0, %v1940
        %1942 = vdwg.mxu0
        %v1943 = vmul.f32 %v1904, %v1595
        %v1944 = vmul.f32 %v1906, %v1609
        %v1945 = vmul.f32 %v1909, %v1623
        %v1946 = vmul.f32 %v1911, %v1637
        %v1947 = vmul.f32 %v1914, %v1651
        %v1948 = vmul.f32 %v1916, %v1665
        %v1949 = vmul.f32 %v1919, %v1679
        %v1950 = vmul.f32 %v1921, %v1693
        %v1951 = vmul.f32 %v1924, %v1707
        %v1952 = vmul.f32 %v1926, %v1721
        %v1953 = vmul.f32 %v1929, %v1735
        %v1954 = vmul.f32 %v1931, %v1749
        %v1955 = vmul.f32 %v1934, %v1763
        %v1956 = vmul.f32 %v1936, %v1777
        %v1957 = vmul.f32 %v1939, %v1791
        %v1958 = vmul.f32 %v1941, %v1805
        %v1959 = vmul.f32 %v1519, %v1595
        %v1960 = vmul.f32 %v1521, %v1609
        %v1961 = vmul.f32 %v1523, %v1623
        %v1962 = vmul.f32 %v1525, %v1637
        %v1963 = vmul.f32 %v1527, %v1651
        %v1964 = vmul.f32 %v1529, %v1665
        %v1965 = vmul.f32 %v1531, %v1679
        %v1966 = vmul.f32 %v1533, %v1693
        %v1967 = vmul.f32 %v1535, %v1707
        %v1968 = vmul.f32 %v1537, %v1721
        %v1969 = vmul.f32 %v1539, %v1735
        %v1970 = vmul.f32 %v1541, %v1749
        %v1971 = vmul.f32 %v1543, %v1763
        %v1972 = vmul.f32 %v1545, %v1777
        %v1973 = vmul.f32 %v1547, %v1791
        %v1974 = vmul.f32 %v1549, %v1805
        %v1975 = vadd.f32 %v1317, %v1959
        %v1976 = vadd.f32 %v1318, %v1960
        %v1977 = vadd.f32 %v1319, %v1961
        %v1978 = vadd.f32 %v1320, %v1962
        %v1979 = vadd.f32 %v1321, %v1963
        %v1980 = vadd.f32 %v1322, %v1964
        %v1981 = vadd.f32 %v1323, %v1965
        %v1982 = vadd.f32 %v1324, %v1966
        %v1983 = vadd.f32 %v1325, %v1967
        %v1984 = vadd.f32 %v1326, %v1968
        %v1985 = vadd.f32 %v1327, %v1969
        %v1986 = vadd.f32 %v1328, %v1970
        %v1987 = vadd.f32 %v1329, %v1971
        %v1988 = vadd.f32 %v1330, %v1972
        %v1989 = vadd.f32 %v1331, %v1973
        %v1990 = vadd.f32 %v1332, %v1974
        %v1991 = vpack.c.bf16 %v1944, %v1943
        %v1992 = vpack.c.bf16 %v1946, %v1945
        %v1993 = vpack.c.bf16 %v1948, %v1947
        %v1994 = vpack.c.bf16 %v1950, %v1949
        %v1995 = vpack.c.bf16 %v1952, %v1951
        %v1996 = vpack.c.bf16 %v1954, %v1953
        %v1997 = vpack.c.bf16 %v1956, %v1955
        %v1998 = vpack.c.bf16 %v1958, %v1957
        %v2000 = vsel %vm714, %v1991, 0
        %v2003 = vsel %vm714, %v1992, 0
        %v2006 = vsel %vm714, %v1993, 0
        %v2009 = vsel %vm714, %v1994, 0
        %v2012 = vsel %vm714, %v1995, 0
        %v2015 = vsel %vm714, %v1996, 0
        %v2018 = vsel %vm714, %v1997, 0
        %v2021 = vsel %vm714, %v1998, 0
        %vm2023 = vcmask 1043456
        %v2025 = vsel %vm2023, %v451, 0
        %2027 = vmatpush.bf16.msra.mxu0 0
        %2028 = vmatpush.bf16.msra.mxu0 0
        %2029 = vmatpush.bf16.msra.mxu0 0
        %2030 = vmatpush.bf16.msra.mxu0 0
        %2031 = vmatpush.bf16.msra.mxu0 0
        %2032 = vmatpush.bf16.msra.mxu0 0
        %2033 = vmatpush.bf16.msra.mxu0 0
        %2034 = vmatpush.bf16.msra.mxu0 %v2025
        %2035 = vmatmul.bf16.gmra.mxu0 %v2000
        %v2036 = vpop.f32.mrf.mxu0
        %v2037 = vadd.f32 0.0, %v2036
        %v2038 = vpop.f32.mrf.mxu0
        %v2039 = vadd.f32 0.0, %v2038
        %2040 = vmatmul.bf16.gmra.mxu0 %v2003
        %v2041 = vpop.f32.mrf.mxu0
        %v2042 = vadd.f32 0.0, %v2041
        %v2043 = vpop.f32.mrf.mxu0
        %v2044 = vadd.f32 0.0, %v2043
        %2045 = vmatmul.bf16.gmra.mxu0 %v2006
        %v2046 = vpop.f32.mrf.mxu0
        %v2047 = vadd.f32 0.0, %v2046
        %v2048 = vpop.f32.mrf.mxu0
        %v2049 = vadd.f32 0.0, %v2048
        %2050 = vmatmul.bf16.gmra.mxu0 %v2009
        %v2051 = vpop.f32.mrf.mxu0
        %v2052 = vadd.f32 0.0, %v2051
        %v2053 = vpop.f32.mrf.mxu0
        %v2054 = vadd.f32 0.0, %v2053
        %2055 = vmatmul.bf16.gmra.mxu0 %v2012
        %v2056 = vpop.f32.mrf.mxu0
        %v2057 = vadd.f32 0.0, %v2056
        %v2058 = vpop.f32.mrf.mxu0
        %v2059 = vadd.f32 0.0, %v2058
        %2060 = vmatmul.bf16.gmra.mxu0 %v2015
        %v2061 = vpop.f32.mrf.mxu0
        %v2062 = vadd.f32 0.0, %v2061
        %v2063 = vpop.f32.mrf.mxu0
        %v2064 = vadd.f32 0.0, %v2063
        %2065 = vmatmul.bf16.gmra.mxu0 %v2018
        %v2066 = vpop.f32.mrf.mxu0
        %v2067 = vadd.f32 0.0, %v2066
        %v2068 = vpop.f32.mrf.mxu0
        %v2069 = vadd.f32 0.0, %v2068
        %2070 = vmatmul.bf16.gmra.mxu0 %v2021
        %v2071 = vpop.f32.mrf.mxu0
        %v2072 = vadd.f32 0.0, %v2071
        %v2073 = vpop.f32.mrf.mxu0
        %v2074 = vadd.f32 0.0, %v2073
        %2075 = vdwg.mxu0
        %v2077 = vsel %vm714, %v1333, 0
        %v2080 = vsel %vm714, %v1334, 0
        %v2083 = vsel %vm714, %v1335, 0
        %v2086 = vsel %vm714, %v1336, 0
        %v2089 = vsel %vm714, %v1337, 0
        %v2092 = vsel %vm714, %v1338, 0
        %v2095 = vsel %vm714, %v1339, 0
        %v2098 = vsel %vm714, %v1340, 0
        %v2101 = vsel %vm2023, %v450, 0
        %2103 = vmatpush.bf16.msra.mxu0 0
        %2104 = vmatpush.bf16.msra.mxu0 0
        %2105 = vmatpush.bf16.msra.mxu0 0
        %2106 = vmatpush.bf16.msra.mxu0 0
        %2107 = vmatpush.bf16.msra.mxu0 0
        %2108 = vmatpush.bf16.msra.mxu0 0
        %2109 = vmatpush.bf16.msra.mxu0 0
        %2110 = vmatpush.bf16.msra.mxu0 %v2101
        %2111 = vmatmul.bf16.gmra.mxu0 %v2077
        %v2112 = vpop.f32.mrf.mxu0
        %v2113 = vadd.f32 %v2037, %v2112
        %v2114 = vpop.f32.mrf.mxu0
        %v2115 = vadd.f32 %v2039, %v2114
        %2116 = vmatmul.bf16.gmra.mxu0 %v2080
        %v2117 = vpop.f32.mrf.mxu0
        %v2118 = vadd.f32 %v2042, %v2117
        %v2119 = vpop.f32.mrf.mxu0
        %v2120 = vadd.f32 %v2044, %v2119
        %2121 = vmatmul.bf16.gmra.mxu0 %v2083
        %v2122 = vpop.f32.mrf.mxu0
        %v2123 = vadd.f32 %v2047, %v2122
        %v2124 = vpop.f32.mrf.mxu0
        %v2125 = vadd.f32 %v2049, %v2124
        %2126 = vmatmul.bf16.gmra.mxu0 %v2086
        %v2127 = vpop.f32.mrf.mxu0
        %v2128 = vadd.f32 %v2052, %v2127
        %v2129 = vpop.f32.mrf.mxu0
        %v2130 = vadd.f32 %v2054, %v2129
        %2131 = vmatmul.bf16.gmra.mxu0 %v2089
        %v2132 = vpop.f32.mrf.mxu0
        %v2133 = vadd.f32 %v2057, %v2132
        %v2134 = vpop.f32.mrf.mxu0
        %v2135 = vadd.f32 %v2059, %v2134
        %2136 = vmatmul.bf16.gmra.mxu0 %v2092
        %v2137 = vpop.f32.mrf.mxu0
        %v2138 = vadd.f32 %v2062, %v2137
        %v2139 = vpop.f32.mrf.mxu0
        %v2140 = vadd.f32 %v2064, %v2139
        %2141 = vmatmul.bf16.gmra.mxu0 %v2095
        %v2142 = vpop.f32.mrf.mxu0
        %v2143 = vadd.f32 %v2067, %v2142
        %v2144 = vpop.f32.mrf.mxu0
        %v2145 = vadd.f32 %v2069, %v2144
        %2146 = vmatmul.bf16.gmra.mxu0 %v2098
        %v2147 = vpop.f32.mrf.mxu0
        %v2148 = vadd.f32 %v2072, %v2147
        %v2149 = vpop.f32.mrf.mxu0
        %v2150 = vadd.f32 %v2074, %v2149
        %2151 = vdwg.mxu0
        %2152 = vrot.lane.b32.xlu0 %v650, 112
        %v2153 = vpop.permute.xlu0 %2152
        %2154 = vrot.lane.b32.xlu0 %v651, 112
        %v2155 = vpop.permute.xlu0 %2154
        %2156 = vrot.lane.b32.xlu0 %v652, 112
        %v2157 = vpop.permute.xlu0 %2156
        %2158 = vrot.lane.b32.xlu0 %v653, 112
        %v2159 = vpop.permute.xlu0 %2158
        %2160 = vrot.lane.b32.xlu0 %v654, 112
        %v2161 = vpop.permute.xlu0 %2160
        %2162 = vrot.lane.b32.xlu0 %v655, 112
        %v2163 = vpop.permute.xlu0 %2162
        %2164 = vrot.lane.b32.xlu0 %v656, 112
        %v2165 = vpop.permute.xlu0 %2164
        %2166 = vrot.lane.b32.xlu0 %v657, 112
        %v2167 = vpop.permute.xlu0 %2166
        %2168 = vrot.lane.b32.xlu0 %v690, 80
        %v2169 = vpop.permute.xlu0 %2168
        %2170 = vrot.lane.b32.xlu0 %v691, 80
        %v2171 = vpop.permute.xlu0 %2170
        %2172 = vrot.lane.b32.xlu0 %v692, 80
        %v2173 = vpop.permute.xlu0 %2172
        %2174 = vrot.lane.b32.xlu0 %v693, 80
        %v2175 = vpop.permute.xlu0 %2174
        %2176 = vrot.lane.b32.xlu0 %v694, 80
        %v2177 = vpop.permute.xlu0 %2176
        %2178 = vrot.lane.b32.xlu0 %v695, 80
        %v2179 = vpop.permute.xlu0 %2178
        %2180 = vrot.lane.b32.xlu0 %v696, 80
        %v2181 = vpop.permute.xlu0 %2180
        %2182 = vrot.lane.b32.xlu0 %v697, 80
        %v2183 = vpop.permute.xlu0 %2182
        %v2185 = vsel %vm714, %v2153, 0
        %v2188 = vsel %vm714, %v2155, 0
        %v2191 = vsel %vm714, %v2157, 0
        %v2194 = vsel %vm714, %v2159, 0
        %v2197 = vsel %vm714, %v2161, 0
        %v2200 = vsel %vm714, %v2163, 0
        %v2203 = vsel %vm714, %v2165, 0
        %v2206 = vsel %vm714, %v2167, 0
        %v2209 = vsel %vm714, %v2169, 0
        %v2212 = vsel %vm714, %v2171, 0
        %v2215 = vsel %vm714, %v2173, 0
        %v2218 = vsel %vm714, %v2175, 0
        %v2221 = vsel %vm714, %v2177, 0
        %v2224 = vsel %vm714, %v2179, 0
        %v2227 = vsel %vm714, %v2181, 0
        %v2230 = vsel %vm714, %v2183, 0
        %2232 = vmatpush.bf16.xpose.msra.mxu0 %v2230
        %2233 = vmatpush.bf16.xpose.msra.mxu0 %v2227
        %2234 = vmatpush.bf16.xpose.msra.mxu0 %v2224
        %2235 = vmatpush.bf16.xpose.msra.mxu0 %v2221
        %2236 = vmatpush.bf16.xpose.msra.mxu0 %v2218
        %2237 = vmatpush.bf16.xpose.msra.mxu0 %v2215
        %2238 = vmatpush.bf16.xpose.msra.mxu0 %v2212
        %2239 = vmatpush.bf16.xpose.msra.mxu0 %v2209
        %2240 = vmatmul.bf16.gmra.mxu0 %v2185
        %v2241 = vpop.f32.mrf.mxu0
        %v2242 = vadd.f32 %v616, %v2241
        %v2243 = vpop.f32.mrf.mxu0
        %v2244 = vadd.f32 %v616, %v2243
        %2245 = vmatmul.bf16.gmra.mxu0 %v2188
        %v2246 = vpop.f32.mrf.mxu0
        %v2247 = vadd.f32 %v616, %v2246
        %v2248 = vpop.f32.mrf.mxu0
        %v2249 = vadd.f32 %v616, %v2248
        %2250 = vmatmul.bf16.gmra.mxu0 %v2191
        %v2251 = vpop.f32.mrf.mxu0
        %v2252 = vadd.f32 %v616, %v2251
        %v2253 = vpop.f32.mrf.mxu0
        %v2254 = vadd.f32 %v616, %v2253
        %2255 = vmatmul.bf16.gmra.mxu0 %v2194
        %v2256 = vpop.f32.mrf.mxu0
        %v2257 = vadd.f32 %v616, %v2256
        %v2258 = vpop.f32.mrf.mxu0
        %v2259 = vadd.f32 %v616, %v2258
        %2260 = vmatmul.bf16.gmra.mxu0 %v2197
        %v2261 = vpop.f32.mrf.mxu0
        %v2262 = vadd.f32 %v616, %v2261
        %v2263 = vpop.f32.mrf.mxu0
        %v2264 = vadd.f32 %v616, %v2263
        %2265 = vmatmul.bf16.gmra.mxu0 %v2200
        %v2266 = vpop.f32.mrf.mxu0
        %v2267 = vadd.f32 %v616, %v2266
        %v2268 = vpop.f32.mrf.mxu0
        %v2269 = vadd.f32 %v616, %v2268
        %2270 = vmatmul.bf16.gmra.mxu0 %v2203
        %v2271 = vpop.f32.mrf.mxu0
        %v2272 = vadd.f32 %v616, %v2271
        %v2273 = vpop.f32.mrf.mxu0
        %v2274 = vadd.f32 %v616, %v2273
        %2275 = vmatmul.bf16.gmra.mxu0 %v2206
        %v2276 = vpop.f32.mrf.mxu0
        %v2277 = vadd.f32 %v616, %v2276
        %v2278 = vpop.f32.mrf.mxu0
        %v2279 = vadd.f32 %v616, %v2278
        %2280 = vdwg.mxu0
        %2281 = vmax.xlane.f32.xlu0 %v2242
        %v2282 = vpop.xlane.xlu0 %2281
        %2283 = vmax.xlane.f32.xlu0 %v2244
        %v2284 = vpop.xlane.xlu0 %2283
        %2285 = vmax.xlane.f32.xlu0 %v2247
        %v2286 = vpop.xlane.xlu0 %2285
        %2287 = vmax.xlane.f32.xlu0 %v2249
        %v2288 = vpop.xlane.xlu0 %2287
        %2289 = vmax.xlane.f32.xlu0 %v2252
        %v2290 = vpop.xlane.xlu0 %2289
        %2291 = vmax.xlane.f32.xlu0 %v2254
        %v2292 = vpop.xlane.xlu0 %2291
        %2293 = vmax.xlane.f32.xlu0 %v2257
        %v2294 = vpop.xlane.xlu0 %2293
        %2295 = vmax.xlane.f32.xlu0 %v2259
        %v2296 = vpop.xlane.xlu0 %2295
        %2297 = vmax.xlane.f32.xlu0 %v2262
        %v2298 = vpop.xlane.xlu0 %2297
        %2299 = vmax.xlane.f32.xlu0 %v2264
        %v2300 = vpop.xlane.xlu0 %2299
        %2301 = vmax.xlane.f32.xlu0 %v2267
        %v2302 = vpop.xlane.xlu0 %2301
        %2303 = vmax.xlane.f32.xlu0 %v2269
        %v2304 = vpop.xlane.xlu0 %2303
        %2305 = vmax.xlane.f32.xlu0 %v2272
        %v2306 = vpop.xlane.xlu0 %2305
        %2307 = vmax.xlane.f32.xlu0 %v2274
        %v2308 = vpop.xlane.xlu0 %2307
        %2309 = vmax.xlane.f32.xlu0 %v2277
        %v2310 = vpop.xlane.xlu0 %2309
        %2311 = vmax.xlane.f32.xlu0 %v2279
        %v2312 = vpop.xlane.xlu0 %2311
        %v2313 = vsub.f32 %v2242, %v2282
        %v2314 = vsub.f32 %v2244, %v2284
        %v2315 = vsub.f32 %v2247, %v2286
        %v2316 = vsub.f32 %v2249, %v2288
        %v2317 = vsub.f32 %v2252, %v2290
        %v2318 = vsub.f32 %v2254, %v2292
        %v2319 = vsub.f32 %v2257, %v2294
        %v2320 = vsub.f32 %v2259, %v2296
        %v2321 = vsub.f32 %v2262, %v2298
        %v2322 = vsub.f32 %v2264, %v2300
        %v2323 = vsub.f32 %v2267, %v2302
        %v2324 = vsub.f32 %v2269, %v2304
        %v2325 = vsub.f32 %v2272, %v2306
        %v2326 = vsub.f32 %v2274, %v2308
        %v2327 = vsub.f32 %v2277, %v2310
        %v2328 = vsub.f32 %v2279, %v2312
        %v2329 = vmul.f32 %v2313, 1.442695
        %v2330 = vpow.pop %v2329
        %v2331 = vmul.f32 %v2314, 1.442695
        %v2332 = vpow.pop %v2331
        %v2333 = vmul.f32 %v2315, 1.442695
        %v2334 = vpow.pop %v2333
        %v2335 = vmul.f32 %v2316, 1.442695
        %v2336 = vpow.pop %v2335
        %v2337 = vmul.f32 %v2317, 1.442695
        %v2338 = vpow.pop %v2337
        %v2339 = vmul.f32 %v2318, 1.442695
        %v2340 = vpow.pop %v2339
        %v2341 = vmul.f32 %v2319, 1.442695
        %v2342 = vpow.pop %v2341
        %v2343 = vmul.f32 %v2320, 1.442695
        %v2344 = vpow.pop %v2343
        %v2345 = vmul.f32 %v2321, 1.442695
        %v2346 = vpow.pop %v2345
        %v2347 = vmul.f32 %v2322, 1.442695
        %v2348 = vpow.pop %v2347
        %v2349 = vmul.f32 %v2323, 1.442695
        %v2350 = vpow.pop %v2349
        %v2351 = vmul.f32 %v2324, 1.442695
        %v2352 = vpow.pop %v2351
        %v2353 = vmul.f32 %v2325, 1.442695
        %v2354 = vpow.pop %v2353
        %v2355 = vmul.f32 %v2326, 1.442695
        %v2356 = vpow.pop %v2355
        %v2357 = vmul.f32 %v2327, 1.442695
        %v2358 = vpow.pop %v2357
        %v2359 = vmul.f32 %v2328, 1.442695
        %v2360 = vpow.pop %v2359
        %2361 = vadd.xlane.f32.xlu0 %v2330
        %v2362 = vpop.xlane.xlu0 %2361
        %2363 = vadd.xlane.f32.xlu0 %v2332
        %v2364 = vpop.xlane.xlu0 %2363
        %2365 = vadd.xlane.f32.xlu0 %v2334
        %v2366 = vpop.xlane.xlu0 %2365
        %2367 = vadd.xlane.f32.xlu0 %v2336
        %v2368 = vpop.xlane.xlu0 %2367
        %2369 = vadd.xlane.f32.xlu0 %v2338
        %v2370 = vpop.xlane.xlu0 %2369
        %2371 = vadd.xlane.f32.xlu0 %v2340
        %v2372 = vpop.xlane.xlu0 %2371
        %2373 = vadd.xlane.f32.xlu0 %v2342
        %v2374 = vpop.xlane.xlu0 %2373
        %2375 = vadd.xlane.f32.xlu0 %v2344
        %v2376 = vpop.xlane.xlu0 %2375
        %2377 = vadd.xlane.f32.xlu0 %v2346
        %v2378 = vpop.xlane.xlu0 %2377
        %2379 = vadd.xlane.f32.xlu0 %v2348
        %v2380 = vpop.xlane.xlu0 %2379
        %2381 = vadd.xlane.f32.xlu0 %v2350
        %v2382 = vpop.xlane.xlu0 %2381
        %2383 = vadd.xlane.f32.xlu0 %v2352
        %v2384 = vpop.xlane.xlu0 %2383
        %2385 = vadd.xlane.f32.xlu0 %v2354
        %v2386 = vpop.xlane.xlu0 %2385
        %2387 = vadd.xlane.f32.xlu0 %v2356
        %v2388 = vpop.xlane.xlu0 %2387
        %2389 = vadd.xlane.f32.xlu0 %v2358
        %v2390 = vpop.xlane.xlu0 %2389
        %2391 = vadd.xlane.f32.xlu0 %v2360
        %v2392 = vpop.xlane.xlu0 %2391
        %v2393 = vrcp.pop %v2362
        %v2394 = vmul.f32 %v2362, %v2393
        %v2395 = vsub.f32 1.0, %v2394
        %v2396 = vmul.f32 %v2393, %v2395
        %v2397 = vadd.f32 %v2393, %v2396
        %vm2398 = vweird.f32 %v2362
        %vm2399 = vweird.f32 %v2393
        %vm2400 = vmor %vm2398, %vm2399
        %v2401 = vsel %vm2400, %v2393, %v2397
        %v2402 = vand.u32 2147483647, %v2362
        %vm2403 = vcmp.eq.f32.partialorder %v2402, 8.507059e+37
        %v2404 = vand.u32 %v2362, 2147483648
        %v2405 = vor.u32 1.1754944e-38, %v2404
        %v2406 = vsel %vm2403, %v2405, %v2401
        %v2407 = vrcp.pop %v2364
        %v2408 = vmul.f32 %v2364, %v2407
        %v2409 = vsub.f32 1.0, %v2408
        %v2410 = vmul.f32 %v2407, %v2409
        %v2411 = vadd.f32 %v2407, %v2410
        %vm2412 = vweird.f32 %v2364
        %vm2413 = vweird.f32 %v2407
        %vm2414 = vmor %vm2412, %vm2413
        %v2415 = vsel %vm2414, %v2407, %v2411
        %v2416 = vand.u32 2147483647, %v2364
        %vm2417 = vcmp.eq.f32.partialorder %v2416, 8.507059e+37
        %v2418 = vand.u32 %v2364, 2147483648
        %v2419 = vor.u32 1.1754944e-38, %v2418
        %v2420 = vsel %vm2417, %v2419, %v2415
        %v2421 = vrcp.pop %v2366
        %v2422 = vmul.f32 %v2366, %v2421
        %v2423 = vsub.f32 1.0, %v2422
        %v2424 = vmul.f32 %v2421, %v2423
        %v2425 = vadd.f32 %v2421, %v2424
        %vm2426 = vweird.f32 %v2366
        %vm2427 = vweird.f32 %v2421
        %vm2428 = vmor %vm2426, %vm2427
        %v2429 = vsel %vm2428, %v2421, %v2425
        %v2430 = vand.u32 2147483647, %v2366
        %vm2431 = vcmp.eq.f32.partialorder %v2430, 8.507059e+37
        %v2432 = vand.u32 %v2366, 2147483648
        %v2433 = vor.u32 1.1754944e-38, %v2432
        %v2434 = vsel %vm2431, %v2433, %v2429
        %v2435 = vrcp.pop %v2368
        %v2436 = vmul.f32 %v2368, %v2435
        %v2437 = vsub.f32 1.0, %v2436
        %v2438 = vmul.f32 %v2435, %v2437
        %v2439 = vadd.f32 %v2435, %v2438
        %vm2440 = vweird.f32 %v2368
        %vm2441 = vweird.f32 %v2435
        %vm2442 = vmor %vm2440, %vm2441
        %v2443 = vsel %vm2442, %v2435, %v2439
        %v2444 = vand.u32 2147483647, %v2368
        %vm2445 = vcmp.eq.f32.partialorder %v2444, 8.507059e+37
        %v2446 = vand.u32 %v2368, 2147483648
        %v2447 = vor.u32 1.1754944e-38, %v2446
        %v2448 = vsel %vm2445, %v2447, %v2443
        %v2449 = vrcp.pop %v2370
        %v2450 = vmul.f32 %v2370, %v2449
        %v2451 = vsub.f32 1.0, %v2450
        %v2452 = vmul.f32 %v2449, %v2451
        %v2453 = vadd.f32 %v2449, %v2452
        %vm2454 = vweird.f32 %v2370
        %vm2455 = vweird.f32 %v2449
        %vm2456 = vmor %vm2454, %vm2455
        %v2457 = vsel %vm2456, %v2449, %v2453
        %v2458 = vand.u32 2147483647, %v2370
        %vm2459 = vcmp.eq.f32.partialorder %v2458, 8.507059e+37
        %v2460 = vand.u32 %v2370, 2147483648
        %v2461 = vor.u32 1.1754944e-38, %v2460
        %v2462 = vsel %vm2459, %v2461, %v2457
        %v2463 = vrcp.pop %v2372
        %v2464 = vmul.f32 %v2372, %v2463
        %v2465 = vsub.f32 1.0, %v2464
        %v2466 = vmul.f32 %v2463, %v2465
        %v2467 = vadd.f32 %v2463, %v2466
        %vm2468 = vweird.f32 %v2372
        %vm2469 = vweird.f32 %v2463
        %vm2470 = vmor %vm2468, %vm2469
        %v2471 = vsel %vm2470, %v2463, %v2467
        %v2472 = vand.u32 2147483647, %v2372
        %vm2473 = vcmp.eq.f32.partialorder %v2472, 8.507059e+37
        %v2474 = vand.u32 %v2372, 2147483648
        %v2475 = vor.u32 1.1754944e-38, %v2474
        %v2476 = vsel %vm2473, %v2475, %v2471
        %v2477 = vrcp.pop %v2374
        %v2478 = vmul.f32 %v2374, %v2477
        %v2479 = vsub.f32 1.0, %v2478
        %v2480 = vmul.f32 %v2477, %v2479
        %v2481 = vadd.f32 %v2477, %v2480
        %vm2482 = vweird.f32 %v2374
        %vm2483 = vweird.f32 %v2477
        %vm2484 = vmor %vm2482, %vm2483
        %v2485 = vsel %vm2484, %v2477, %v2481
        %v2486 = vand.u32 2147483647, %v2374
        %vm2487 = vcmp.eq.f32.partialorder %v2486, 8.507059e+37
        %v2488 = vand.u32 %v2374, 2147483648
        %v2489 = vor.u32 1.1754944e-38, %v2488
        %v2490 = vsel %vm2487, %v2489, %v2485
        %v2491 = vrcp.pop %v2376
        %v2492 = vmul.f32 %v2376, %v2491
        %v2493 = vsub.f32 1.0, %v2492
        %v2494 = vmul.f32 %v2491, %v2493
        %v2495 = vadd.f32 %v2491, %v2494
        %vm2496 = vweird.f32 %v2376
        %vm2497 = vweird.f32 %v2491
        %vm2498 = vmor %vm2496, %vm2497
        %v2499 = vsel %vm2498, %v2491, %v2495
        %v2500 = vand.u32 2147483647, %v2376
        %vm2501 = vcmp.eq.f32.partialorder %v2500, 8.507059e+37
        %v2502 = vand.u32 %v2376, 2147483648
        %v2503 = vor.u32 1.1754944e-38, %v2502
        %v2504 = vsel %vm2501, %v2503, %v2499
        %v2505 = vrcp.pop %v2378
        %v2506 = vmul.f32 %v2378, %v2505
        %v2507 = vsub.f32 1.0, %v2506
        %v2508 = vmul.f32 %v2505, %v2507
        %v2509 = vadd.f32 %v2505, %v2508
        %vm2510 = vweird.f32 %v2378
        %vm2511 = vweird.f32 %v2505
        %vm2512 = vmor %vm2510, %vm2511
        %v2513 = vsel %vm2512, %v2505, %v2509
        %v2514 = vand.u32 2147483647, %v2378
        %vm2515 = vcmp.eq.f32.partialorder %v2514, 8.507059e+37
        %v2516 = vand.u32 %v2378, 2147483648
        %v2517 = vor.u32 1.1754944e-38, %v2516
        %v2518 = vsel %vm2515, %v2517, %v2513
        %v2519 = vrcp.pop %v2380
        %v2520 = vmul.f32 %v2380, %v2519
        %v2521 = vsub.f32 1.0, %v2520
        %v2522 = vmul.f32 %v2519, %v2521
        %v2523 = vadd.f32 %v2519, %v2522
        %vm2524 = vweird.f32 %v2380
        %vm2525 = vweird.f32 %v2519
        %vm2526 = vmor %vm2524, %vm2525
        %v2527 = vsel %vm2526, %v2519, %v2523
        %v2528 = vand.u32 2147483647, %v2380
        %vm2529 = vcmp.eq.f32.partialorder %v2528, 8.507059e+37
        %v2530 = vand.u32 %v2380, 2147483648
        %v2531 = vor.u32 1.1754944e-38, %v2530
        %v2532 = vsel %vm2529, %v2531, %v2527
        %v2533 = vrcp.pop %v2382
        %v2534 = vmul.f32 %v2382, %v2533
        %v2535 = vsub.f32 1.0, %v2534
        %v2536 = vmul.f32 %v2533, %v2535
        %v2537 = vadd.f32 %v2533, %v2536
        %vm2538 = vweird.f32 %v2382
        %vm2539 = vweird.f32 %v2533
        %vm2540 = vmor %vm2538, %vm2539
        %v2541 = vsel %vm2540, %v2533, %v2537
        %v2542 = vand.u32 2147483647, %v2382
        %vm2543 = vcmp.eq.f32.partialorder %v2542, 8.507059e+37
        %v2544 = vand.u32 %v2382, 2147483648
        %v2545 = vor.u32 1.1754944e-38, %v2544
        %v2546 = vsel %vm2543, %v2545, %v2541
        %v2547 = vrcp.pop %v2384
        %v2548 = vmul.f32 %v2384, %v2547
        %v2549 = vsub.f32 1.0, %v2548
        %v2550 = vmul.f32 %v2547, %v2549
        %v2551 = vadd.f32 %v2547, %v2550
        %vm2552 = vweird.f32 %v2384
        %vm2553 = vweird.f32 %v2547
        %vm2554 = vmor %vm2552, %vm2553
        %v2555 = vsel %vm2554, %v2547, %v2551
        %v2556 = vand.u32 2147483647, %v2384
        %vm2557 = vcmp.eq.f32.partialorder %v2556, 8.507059e+37
        %v2558 = vand.u32 %v2384, 2147483648
        %v2559 = vor.u32 1.1754944e-38, %v2558
        %v2560 = vsel %vm2557, %v2559, %v2555
        %v2561 = vrcp.pop %v2386
        %v2562 = vmul.f32 %v2386, %v2561
        %v2563 = vsub.f32 1.0, %v2562
        %v2564 = vmul.f32 %v2561, %v2563
        %v2565 = vadd.f32 %v2561, %v2564
        %vm2566 = vweird.f32 %v2386
        %vm2567 = vweird.f32 %v2561
        %vm2568 = vmor %vm2566, %vm2567
        %v2569 = vsel %vm2568, %v2561, %v2565
        %v2570 = vand.u32 2147483647, %v2386
        %vm2571 = vcmp.eq.f32.partialorder %v2570, 8.507059e+37
        %v2572 = vand.u32 %v2386, 2147483648
        %v2573 = vor.u32 1.1754944e-38, %v2572
        %v2574 = vsel %vm2571, %v2573, %v2569
        %v2575 = vrcp.pop %v2388
        %v2576 = vmul.f32 %v2388, %v2575
        %v2577 = vsub.f32 1.0, %v2576
        %v2578 = vmul.f32 %v2575, %v2577
        %v2579 = vadd.f32 %v2575, %v2578
        %vm2580 = vweird.f32 %v2388
        %vm2581 = vweird.f32 %v2575
        %vm2582 = vmor %vm2580, %vm2581
        %v2583 = vsel %vm2582, %v2575, %v2579
        %v2584 = vand.u32 2147483647, %v2388
        %vm2585 = vcmp.eq.f32.partialorder %v2584, 8.507059e+37
        %v2586 = vand.u32 %v2388, 2147483648
        %v2587 = vor.u32 1.1754944e-38, %v2586
        %v2588 = vsel %vm2585, %v2587, %v2583
        %v2589 = vrcp.pop %v2390
        %v2590 = vmul.f32 %v2390, %v2589
        %v2591 = vsub.f32 1.0, %v2590
        %v2592 = vmul.f32 %v2589, %v2591
        %v2593 = vadd.f32 %v2589, %v2592
        %vm2594 = vweird.f32 %v2390
        %vm2595 = vweird.f32 %v2589
        %vm2596 = vmor %vm2594, %vm2595
        %v2597 = vsel %vm2596, %v2589, %v2593
        %v2598 = vand.u32 2147483647, %v2390
        %vm2599 = vcmp.eq.f32.partialorder %v2598, 8.507059e+37
        %v2600 = vand.u32 %v2390, 2147483648
        %v2601 = vor.u32 1.1754944e-38, %v2600
        %v2602 = vsel %vm2599, %v2601, %v2597
        %v2603 = vrcp.pop %v2392
        %v2604 = vmul.f32 %v2392, %v2603
        %v2605 = vsub.f32 1.0, %v2604
        %v2606 = vmul.f32 %v2603, %v2605
        %v2607 = vadd.f32 %v2603, %v2606
        %vm2608 = vweird.f32 %v2392
        %vm2609 = vweird.f32 %v2603
        %vm2610 = vmor %vm2608, %vm2609
        %v2611 = vsel %vm2610, %v2603, %v2607
        %v2612 = vand.u32 2147483647, %v2392
        %vm2613 = vcmp.eq.f32.partialorder %v2612, 8.507059e+37
        %v2614 = vand.u32 %v2392, 2147483648
        %v2615 = vor.u32 1.1754944e-38, %v2614
        %v2616 = vsel %vm2613, %v2615, %v2611
        %v2617 = vpack.c.bf16 %v2330, %v2330
        %v2618 = vpack.c.bf16 %v2332, %v2332
        %v2619 = vpack.c.bf16 %v2334, %v2334
        %v2620 = vpack.c.bf16 %v2336, %v2336
        %v2621 = vpack.c.bf16 %v2338, %v2338
        %v2622 = vpack.c.bf16 %v2340, %v2340
        %v2623 = vpack.c.bf16 %v2342, %v2342
        %v2624 = vpack.c.bf16 %v2344, %v2344
        %v2625 = vpack.c.bf16 %v2346, %v2346
        %v2626 = vpack.c.bf16 %v2348, %v2348
        %v2627 = vpack.c.bf16 %v2350, %v2350
        %v2628 = vpack.c.bf16 %v2352, %v2352
        %v2629 = vpack.c.bf16 %v2354, %v2354
        %v2630 = vpack.c.bf16 %v2356, %v2356
        %v2631 = vpack.c.bf16 %v2358, %v2358
        %v2632 = vpack.c.bf16 %v2360, %v2360
        %v2649 = vunpack.c.l.b16 %v2617
        %v2650 = vunpack.c.l.b16 %v2618
        %v2651 = vunpack.c.l.b16 %v2619
        %v2652 = vunpack.c.l.b16 %v2620
        %v2653 = vunpack.c.l.b16 %v2621
        %v2654 = vunpack.c.l.b16 %v2622
        %v2655 = vunpack.c.l.b16 %v2623
        %v2656 = vunpack.c.l.b16 %v2624
        %v2657 = vunpack.c.l.b16 %v2625
        %v2658 = vunpack.c.l.b16 %v2626
        %v2659 = vunpack.c.l.b16 %v2627
        %v2660 = vunpack.c.l.b16 %v2628
        %v2661 = vunpack.c.l.b16 %v2629
        %v2662 = vunpack.c.l.b16 %v2630
        %v2663 = vunpack.c.l.b16 %v2631
        %v2664 = vunpack.c.l.b16 %v2632
        %v2665 = vpack.c.b16 %v2650, %v2649
        %v2666 = vpack.c.b16 %v2652, %v2651
        %v2667 = vpack.c.b16 %v2654, %v2653
        %v2668 = vpack.c.b16 %v2656, %v2655
        %v2669 = vpack.c.b16 %v2658, %v2657
        %v2670 = vpack.c.b16 %v2660, %v2659
        %v2671 = vpack.c.b16 %v2662, %v2661
        %v2672 = vpack.c.b16 %v2664, %v2663
        %2681 = vrot.lane.b32.xlu0 %v690, 48
        %v2682 = vpop.permute.xlu0 %2681
        %2683 = vrot.lane.b32.xlu0 %v691, 48
        %v2684 = vpop.permute.xlu0 %2683
        %2685 = vrot.lane.b32.xlu0 %v692, 48
        %v2686 = vpop.permute.xlu0 %2685
        %2687 = vrot.lane.b32.xlu0 %v693, 48
        %v2688 = vpop.permute.xlu0 %2687
        %2689 = vrot.lane.b32.xlu0 %v694, 48
        %v2690 = vpop.permute.xlu0 %2689
        %2691 = vrot.lane.b32.xlu0 %v695, 48
        %v2692 = vpop.permute.xlu0 %2691
        %2693 = vrot.lane.b32.xlu0 %v696, 48
        %v2694 = vpop.permute.xlu0 %2693
        %2695 = vrot.lane.b32.xlu0 %v697, 48
        %v2696 = vpop.permute.xlu0 %2695
        %2705 = vmatpush.bf16.msra.mxu0 %v2696
        %2706 = vmatpush.bf16.msra.mxu0 %v2694
        %2707 = vmatpush.bf16.msra.mxu0 %v2692
        %2708 = vmatpush.bf16.msra.mxu0 %v2690
        %2709 = vmatpush.bf16.msra.mxu0 %v2688
        %2710 = vmatpush.bf16.msra.mxu0 %v2686
        %2711 = vmatpush.bf16.msra.mxu0 %v2684
        %2712 = vmatpush.bf16.msra.mxu0 %v2682
        %2713 = vmatmul.bf16.gmra.mxu0 %v2665
        %v2714 = vpop.f32.mrf.mxu0
        %v2715 = vadd.f32 0.0, %v2714
        %v2716 = vpop.f32.mrf.mxu0
        %v2717 = vadd.f32 0.0, %v2716
        %2718 = vmatmul.bf16.gmra.mxu0 %v2666
        %v2719 = vpop.f32.mrf.mxu0
        %v2720 = vadd.f32 0.0, %v2719
        %v2721 = vpop.f32.mrf.mxu0
        %v2722 = vadd.f32 0.0, %v2721
        %2723 = vmatmul.bf16.gmra.mxu0 %v2667
        %v2724 = vpop.f32.mrf.mxu0
        %v2725 = vadd.f32 0.0, %v2724
        %v2726 = vpop.f32.mrf.mxu0
        %v2727 = vadd.f32 0.0, %v2726
        %2728 = vmatmul.bf16.gmra.mxu0 %v2668
        %v2729 = vpop.f32.mrf.mxu0
        %v2730 = vadd.f32 0.0, %v2729
        %v2731 = vpop.f32.mrf.mxu0
        %v2732 = vadd.f32 0.0, %v2731
        %2733 = vmatmul.bf16.gmra.mxu0 %v2669
        %v2734 = vpop.f32.mrf.mxu0
        %v2735 = vadd.f32 0.0, %v2734
        %v2736 = vpop.f32.mrf.mxu0
        %v2737 = vadd.f32 0.0, %v2736
        %2738 = vmatmul.bf16.gmra.mxu0 %v2670
        %v2739 = vpop.f32.mrf.mxu0
        %v2740 = vadd.f32 0.0, %v2739
        %v2741 = vpop.f32.mrf.mxu0
        %v2742 = vadd.f32 0.0, %v2741
        %2743 = vmatmul.bf16.gmra.mxu0 %v2671
        %v2744 = vpop.f32.mrf.mxu0
        %v2745 = vadd.f32 0.0, %v2744
        %v2746 = vpop.f32.mrf.mxu0
        %v2747 = vadd.f32 0.0, %v2746
        %2748 = vmatmul.bf16.gmra.mxu0 %v2672
        %v2749 = vpop.f32.mrf.mxu0
        %v2750 = vadd.f32 0.0, %v2749
        %v2751 = vpop.f32.mrf.mxu0
        %v2752 = vadd.f32 0.0, %v2751
        %2753 = vdwg.mxu0
        %v2754 = vmul.f32 %v2715, %v2406
        %v2755 = vmul.f32 %v2717, %v2420
        %v2756 = vmul.f32 %v2720, %v2434
        %v2757 = vmul.f32 %v2722, %v2448
        %v2758 = vmul.f32 %v2725, %v2462
        %v2759 = vmul.f32 %v2727, %v2476
        %v2760 = vmul.f32 %v2730, %v2490
        %v2761 = vmul.f32 %v2732, %v2504
        %v2762 = vmul.f32 %v2735, %v2518
        %v2763 = vmul.f32 %v2737, %v2532
        %v2764 = vmul.f32 %v2740, %v2546
        %v2765 = vmul.f32 %v2742, %v2560
        %v2766 = vmul.f32 %v2745, %v2574
        %v2767 = vmul.f32 %v2747, %v2588
        %v2768 = vmul.f32 %v2750, %v2602
        %v2769 = vmul.f32 %v2752, %v2616
        %v2770 = vmul.f32 %v2330, %v2406
        %v2771 = vmul.f32 %v2332, %v2420
        %v2772 = vmul.f32 %v2334, %v2434
        %v2773 = vmul.f32 %v2336, %v2448
        %v2774 = vmul.f32 %v2338, %v2462
        %v2775 = vmul.f32 %v2340, %v2476
        %v2776 = vmul.f32 %v2342, %v2490
        %v2777 = vmul.f32 %v2344, %v2504
        %v2778 = vmul.f32 %v2346, %v2518
        %v2779 = vmul.f32 %v2348, %v2532
        %v2780 = vmul.f32 %v2350, %v2546
        %v2781 = vmul.f32 %v2352, %v2560
        %v2782 = vmul.f32 %v2354, %v2574
        %v2783 = vmul.f32 %v2356, %v2588
        %v2784 = vmul.f32 %v2358, %v2602
        %v2785 = vmul.f32 %v2360, %v2616
        %v2786 = vadd.f32 %v1975, %v2770
        %v2787 = vadd.f32 %v1976, %v2771
        %v2788 = vadd.f32 %v1977, %v2772
        %v2789 = vadd.f32 %v1978, %v2773
        %v2790 = vadd.f32 %v1979, %v2774
        %v2791 = vadd.f32 %v1980, %v2775
        %v2792 = vadd.f32 %v1981, %v2776
        %v2793 = vadd.f32 %v1982, %v2777
        %v2794 = vadd.f32 %v1983, %v2778
        %v2795 = vadd.f32 %v1984, %v2779
        %v2796 = vadd.f32 %v1985, %v2780
        %v2797 = vadd.f32 %v1986, %v2781
        %v2798 = vadd.f32 %v1987, %v2782
        %v2799 = vadd.f32 %v1988, %v2783
        %v2800 = vadd.f32 %v1989, %v2784
        %v2801 = vadd.f32 %v1990, %v2785
        %v2802 = vpack.c.bf16 %v2755, %v2754
        %v2803 = vpack.c.bf16 %v2757, %v2756
        %v2804 = vpack.c.bf16 %v2759, %v2758
        %v2805 = vpack.c.bf16 %v2761, %v2760
        %v2806 = vpack.c.bf16 %v2763, %v2762
        %v2807 = vpack.c.bf16 %v2765, %v2764
        %v2808 = vpack.c.bf16 %v2767, %v2766
        %v2809 = vpack.c.bf16 %v2769, %v2768
        %v2811 = vsel %vm714, %v2802, 0
        %v2814 = vsel %vm714, %v2803, 0
        %v2817 = vsel %vm714, %v2804, 0
        %v2820 = vsel %vm714, %v2805, 0
        %v2823 = vsel %vm714, %v2806, 0
        %v2826 = vsel %vm714, %v2807, 0
        %v2829 = vsel %vm714, %v2808, 0
        %v2832 = vsel %vm714, %v2809, 0
        %v2835 = vsel %vm2023, %v452, 0
        %2837 = vmatpush.bf16.msra.mxu0 0
        %2838 = vmatpush.bf16.msra.mxu0 0
        %2839 = vmatpush.bf16.msra.mxu0 0
        %2840 = vmatpush.bf16.msra.mxu0 0
        %2841 = vmatpush.bf16.msra.mxu0 0
        %2842 = vmatpush.bf16.msra.mxu0 0
        %2843 = vmatpush.bf16.msra.mxu0 0
        %2844 = vmatpush.bf16.msra.mxu0 %v2835
        %2845 = vmatmul.bf16.gmra.mxu0 %v2811
        %v2846 = vpop.f32.mrf.mxu0
        %v2847 = vadd.f32 0.0, %v2846
        %v2848 = vpop.f32.mrf.mxu0
        %v2849 = vadd.f32 0.0, %v2848
        %2850 = vmatmul.bf16.gmra.mxu0 %v2814
        %v2851 = vpop.f32.mrf.mxu0
        %v2852 = vadd.f32 0.0, %v2851
        %v2853 = vpop.f32.mrf.mxu0
        %v2854 = vadd.f32 0.0, %v2853
        %2855 = vmatmul.bf16.gmra.mxu0 %v2817
        %v2856 = vpop.f32.mrf.mxu0
        %v2857 = vadd.f32 0.0, %v2856
        %v2858 = vpop.f32.mrf.mxu0
        %v2859 = vadd.f32 0.0, %v2858
        %2860 = vmatmul.bf16.gmra.mxu0 %v2820
        %v2861 = vpop.f32.mrf.mxu0
        %v2862 = vadd.f32 0.0, %v2861
        %v2863 = vpop.f32.mrf.mxu0
        %v2864 = vadd.f32 0.0, %v2863
        %2865 = vmatmul.bf16.gmra.mxu0 %v2823
        %v2866 = vpop.f32.mrf.mxu0
        %v2867 = vadd.f32 0.0, %v2866
        %v2868 = vpop.f32.mrf.mxu0
        %v2869 = vadd.f32 0.0, %v2868
        %2870 = vmatmul.bf16.gmra.mxu0 %v2826
        %v2871 = vpop.f32.mrf.mxu0
        %v2872 = vadd.f32 0.0, %v2871
        %v2873 = vpop.f32.mrf.mxu0
        %v2874 = vadd.f32 0.0, %v2873
        %2875 = vmatmul.bf16.gmra.mxu0 %v2829
        %v2876 = vpop.f32.mrf.mxu0
        %v2877 = vadd.f32 0.0, %v2876
        %v2878 = vpop.f32.mrf.mxu0
        %v2879 = vadd.f32 0.0, %v2878
        %2880 = vmatmul.bf16.gmra.mxu0 %v2832
        %v2881 = vpop.f32.mrf.mxu0
        %v2882 = vadd.f32 0.0, %v2881
        %v2883 = vpop.f32.mrf.mxu0
        %v2884 = vadd.f32 0.0, %v2883
        %2885 = vdwg.mxu0
        %v2886 = vadd.f32 %v2113, %v2847
        %v2887 = vadd.f32 %v2115, %v2849
        %v2888 = vadd.f32 %v2118, %v2852
        %v2889 = vadd.f32 %v2120, %v2854
        %v2890 = vadd.f32 %v2123, %v2857
        %v2891 = vadd.f32 %v2125, %v2859
        %v2892 = vadd.f32 %v2128, %v2862
        %v2893 = vadd.f32 %v2130, %v2864
        %v2894 = vadd.f32 %v2133, %v2867
        %v2895 = vadd.f32 %v2135, %v2869
        %v2896 = vadd.f32 %v2138, %v2872
        %v2897 = vadd.f32 %v2140, %v2874
        %v2898 = vadd.f32 %v2143, %v2877
        %v2899 = vadd.f32 %v2145, %v2879
        %v2900 = vadd.f32 %v2148, %v2882
        %v2901 = vadd.f32 %v2150, %v2884
        %2902 = vrot.lane.b32.xlu0 %v650, 104
        %v2903 = vpop.permute.xlu0 %2902
        %2904 = vrot.lane.b32.xlu0 %v651, 104
        %v2905 = vpop.permute.xlu0 %2904
        %2906 = vrot.lane.b32.xlu0 %v652, 104
        %v2907 = vpop.permute.xlu0 %2906
        %2908 = vrot.lane.b32.xlu0 %v653, 104
        %v2909 = vpop.permute.xlu0 %2908
        %2910 = vrot.lane.b32.xlu0 %v654, 104
        %v2911 = vpop.permute.xlu0 %2910
        %2912 = vrot.lane.b32.xlu0 %v655, 104
        %v2913 = vpop.permute.xlu0 %2912
        %2914 = vrot.lane.b32.xlu0 %v656, 104
        %v2915 = vpop.permute.xlu0 %2914
        %2916 = vrot.lane.b32.xlu0 %v657, 104
        %v2917 = vpop.permute.xlu0 %2916
        %2918 = vrot.lane.b32.xlu0 %v690, 72
        %v2919 = vpop.permute.xlu0 %2918
        %2920 = vrot.lane.b32.xlu0 %v691, 72
        %v2921 = vpop.permute.xlu0 %2920
        %2922 = vrot.lane.b32.xlu0 %v692, 72
        %v2923 = vpop.permute.xlu0 %2922
        %2924 = vrot.lane.b32.xlu0 %v693, 72
        %v2925 = vpop.permute.xlu0 %2924
        %2926 = vrot.lane.b32.xlu0 %v694, 72
        %v2927 = vpop.permute.xlu0 %2926
        %2928 = vrot.lane.b32.xlu0 %v695, 72
        %v2929 = vpop.permute.xlu0 %2928
        %2930 = vrot.lane.b32.xlu0 %v696, 72
        %v2931 = vpop.permute.xlu0 %2930
        %2932 = vrot.lane.b32.xlu0 %v697, 72
        %v2933 = vpop.permute.xlu0 %2932
        %v2935 = vsel %vm714, %v2903, 0
        %v2938 = vsel %vm714, %v2905, 0
        %v2941 = vsel %vm714, %v2907, 0
        %v2944 = vsel %vm714, %v2909, 0
        %v2947 = vsel %vm714, %v2911, 0
        %v2950 = vsel %vm714, %v2913, 0
        %v2953 = vsel %vm714, %v2915, 0
        %v2956 = vsel %vm714, %v2917, 0
        %v2959 = vsel %vm714, %v2919, 0
        %v2962 = vsel %vm714, %v2921, 0
        %v2965 = vsel %vm714, %v2923, 0
        %v2968 = vsel %vm714, %v2925, 0
        %v2971 = vsel %vm714, %v2927, 0
        %v2974 = vsel %vm714, %v2929, 0
        %v2977 = vsel %vm714, %v2931, 0
        %v2980 = vsel %vm714, %v2933, 0
        %2982 = vmatpush.bf16.xpose.msra.mxu0 %v2980
        %2983 = vmatpush.bf16.xpose.msra.mxu0 %v2977
        %2984 = vmatpush.bf16.xpose.msra.mxu0 %v2974
        %2985 = vmatpush.bf16.xpose.msra.mxu0 %v2971
        %2986 = vmatpush.bf16.xpose.msra.mxu0 %v2968
        %2987 = vmatpush.bf16.xpose.msra.mxu0 %v2965
        %2988 = vmatpush.bf16.xpose.msra.mxu0 %v2962
        %2989 = vmatpush.bf16.xpose.msra.mxu0 %v2959
        %2990 = vmatmul.bf16.gmra.mxu0 %v2935
        %v2991 = vpop.f32.mrf.mxu0
        %v2992 = vadd.f32 %v616, %v2991
        %v2993 = vpop.f32.mrf.mxu0
        %v2994 = vadd.f32 %v616, %v2993
        %2995 = vmatmul.bf16.gmra.mxu0 %v2938
        %v2996 = vpop.f32.mrf.mxu0
        %v2997 = vadd.f32 %v616, %v2996
        %v2998 = vpop.f32.mrf.mxu0
        %v2999 = vadd.f32 %v616, %v2998
        %3000 = vmatmul.bf16.gmra.mxu0 %v2941
        %v3001 = vpop.f32.mrf.mxu0
        %v3002 = vadd.f32 %v616, %v3001
        %v3003 = vpop.f32.mrf.mxu0
        %v3004 = vadd.f32 %v616, %v3003
        %3005 = vmatmul.bf16.gmra.mxu0 %v2944
        %v3006 = vpop.f32.mrf.mxu0
        %v3007 = vadd.f32 %v616, %v3006
        %v3008 = vpop.f32.mrf.mxu0
        %v3009 = vadd.f32 %v616, %v3008
        %3010 = vmatmul.bf16.gmra.mxu0 %v2947
        %v3011 = vpop.f32.mrf.mxu0
        %v3012 = vadd.f32 %v616, %v3011
        %v3013 = vpop.f32.mrf.mxu0
        %v3014 = vadd.f32 %v616, %v3013
        %3015 = vmatmul.bf16.gmra.mxu0 %v2950
        %v3016 = vpop.f32.mrf.mxu0
        %v3017 = vadd.f32 %v616, %v3016
        %v3018 = vpop.f32.mrf.mxu0
        %v3019 = vadd.f32 %v616, %v3018
        %3020 = vmatmul.bf16.gmra.mxu0 %v2953
        %v3021 = vpop.f32.mrf.mxu0
        %v3022 = vadd.f32 %v616, %v3021
        %v3023 = vpop.f32.mrf.mxu0
        %v3024 = vadd.f32 %v616, %v3023
        %3025 = vmatmul.bf16.gmra.mxu0 %v2956
        %v3026 = vpop.f32.mrf.mxu0
        %v3027 = vadd.f32 %v616, %v3026
        %v3028 = vpop.f32.mrf.mxu0
        %v3029 = vadd.f32 %v616, %v3028
        %3030 = vdwg.mxu0
        %3031 = vmax.xlane.f32.xlu0 %v2992
        %v3032 = vpop.xlane.xlu0 %3031
        %3033 = vmax.xlane.f32.xlu0 %v2994
        %v3034 = vpop.xlane.xlu0 %3033
        %3035 = vmax.xlane.f32.xlu0 %v2997
        %v3036 = vpop.xlane.xlu0 %3035
        %3037 = vmax.xlane.f32.xlu0 %v2999
        %v3038 = vpop.xlane.xlu0 %3037
        %3039 = vmax.xlane.f32.xlu0 %v3002
        %v3040 = vpop.xlane.xlu0 %3039
        %3041 = vmax.xlane.f32.xlu0 %v3004
        %v3042 = vpop.xlane.xlu0 %3041
        %3043 = vmax.xlane.f32.xlu0 %v3007
        %v3044 = vpop.xlane.xlu0 %3043
        %3045 = vmax.xlane.f32.xlu0 %v3009
        %v3046 = vpop.xlane.xlu0 %3045
        %3047 = vmax.xlane.f32.xlu0 %v3012
        %v3048 = vpop.xlane.xlu0 %3047
        %3049 = vmax.xlane.f32.xlu0 %v3014
        %v3050 = vpop.xlane.xlu0 %3049
        %3051 = vmax.xlane.f32.xlu0 %v3017
        %v3052 = vpop.xlane.xlu0 %3051
        %3053 = vmax.xlane.f32.xlu0 %v3019
        %v3054 = vpop.xlane.xlu0 %3053
        %3055 = vmax.xlane.f32.xlu0 %v3022
        %v3056 = vpop.xlane.xlu0 %3055
        %3057 = vmax.xlane.f32.xlu0 %v3024
        %v3058 = vpop.xlane.xlu0 %3057
        %3059 = vmax.xlane.f32.xlu0 %v3027
        %v3060 = vpop.xlane.xlu0 %3059
        %3061 = vmax.xlane.f32.xlu0 %v3029
        %v3062 = vpop.xlane.xlu0 %3061
        %v3063 = vsub.f32 %v2992, %v3032
        %v3064 = vsub.f32 %v2994, %v3034
        %v3065 = vsub.f32 %v2997, %v3036
        %v3066 = vsub.f32 %v2999, %v3038
        %v3067 = vsub.f32 %v3002, %v3040
        %v3068 = vsub.f32 %v3004, %v3042
        %v3069 = vsub.f32 %v3007, %v3044
        %v3070 = vsub.f32 %v3009, %v3046
        %v3071 = vsub.f32 %v3012, %v3048
        %v3072 = vsub.f32 %v3014, %v3050
        %v3073 = vsub.f32 %v3017, %v3052
        %v3074 = vsub.f32 %v3019, %v3054
        %v3075 = vsub.f32 %v3022, %v3056
        %v3076 = vsub.f32 %v3024, %v3058
        %v3077 = vsub.f32 %v3027, %v3060
        %v3078 = vsub.f32 %v3029, %v3062
        %v3079 = vmul.f32 %v3063, 1.442695
        %v3080 = vpow.pop %v3079
        %v3081 = vmul.f32 %v3064, 1.442695
        %v3082 = vpow.pop %v3081
        %v3083 = vmul.f32 %v3065, 1.442695
        %v3084 = vpow.pop %v3083
        %v3085 = vmul.f32 %v3066, 1.442695
        %v3086 = vpow.pop %v3085
        %v3087 = vmul.f32 %v3067, 1.442695
        %v3088 = vpow.pop %v3087
        %v3089 = vmul.f32 %v3068, 1.442695
        %v3090 = vpow.pop %v3089
        %v3091 = vmul.f32 %v3069, 1.442695
        %v3092 = vpow.pop %v3091
        %v3093 = vmul.f32 %v3070, 1.442695
        %v3094 = vpow.pop %v3093
        %v3095 = vmul.f32 %v3071, 1.442695
        %v3096 = vpow.pop %v3095
        %v3097 = vmul.f32 %v3072, 1.442695
        %v3098 = vpow.pop %v3097
        %v3099 = vmul.f32 %v3073, 1.442695
        %v3100 = vpow.pop %v3099
        %v3101 = vmul.f32 %v3074, 1.442695
        %v3102 = vpow.pop %v3101
        %v3103 = vmul.f32 %v3075, 1.442695
        %v3104 = vpow.pop %v3103
        %v3105 = vmul.f32 %v3076, 1.442695
        %v3106 = vpow.pop %v3105
        %v3107 = vmul.f32 %v3077, 1.442695
        %v3108 = vpow.pop %v3107
        %v3109 = vmul.f32 %v3078, 1.442695
        %v3110 = vpow.pop %v3109
        %3111 = vadd.xlane.f32.xlu0 %v3080
        %v3112 = vpop.xlane.xlu0 %3111
        %3113 = vadd.xlane.f32.xlu0 %v3082
        %v3114 = vpop.xlane.xlu0 %3113
        %3115 = vadd.xlane.f32.xlu0 %v3084
        %v3116 = vpop.xlane.xlu0 %3115
        %3117 = vadd.xlane.f32.xlu0 %v3086
        %v3118 = vpop.xlane.xlu0 %3117
        %3119 = vadd.xlane.f32.xlu0 %v3088
        %v3120 = vpop.xlane.xlu0 %3119
        %3121 = vadd.xlane.f32.xlu0 %v3090
        %v3122 = vpop.xlane.xlu0 %3121
        %3123 = vadd.xlane.f32.xlu0 %v3092
        %v3124 = vpop.xlane.xlu0 %3123
        %3125 = vadd.xlane.f32.xlu0 %v3094
        %v3126 = vpop.xlane.xlu0 %3125
        %3127 = vadd.xlane.f32.xlu0 %v3096
        %v3128 = vpop.xlane.xlu0 %3127
        %3129 = vadd.xlane.f32.xlu0 %v3098
        %v3130 = vpop.xlane.xlu0 %3129
        %3131 = vadd.xlane.f32.xlu0 %v3100
        %v3132 = vpop.xlane.xlu0 %3131
        %3133 = vadd.xlane.f32.xlu0 %v3102
        %v3134 = vpop.xlane.xlu0 %3133
        %3135 = vadd.xlane.f32.xlu0 %v3104
        %v3136 = vpop.xlane.xlu0 %3135
        %3137 = vadd.xlane.f32.xlu0 %v3106
        %v3138 = vpop.xlane.xlu0 %3137
        %3139 = vadd.xlane.f32.xlu0 %v3108
        %v3140 = vpop.xlane.xlu0 %3139
        %3141 = vadd.xlane.f32.xlu0 %v3110
        %v3142 = vpop.xlane.xlu0 %3141
        %v3143 = vrcp.pop %v3112
        %v3144 = vmul.f32 %v3112, %v3143
        %v3145 = vsub.f32 1.0, %v3144
        %v3146 = vmul.f32 %v3143, %v3145
        %v3147 = vadd.f32 %v3143, %v3146
        %vm3148 = vweird.f32 %v3112
        %vm3149 = vweird.f32 %v3143
        %vm3150 = vmor %vm3148, %vm3149
        %v3151 = vsel %vm3150, %v3143, %v3147
        %v3152 = vand.u32 2147483647, %v3112
        %vm3153 = vcmp.eq.f32.partialorder %v3152, 8.507059e+37
        %v3154 = vand.u32 %v3112, 2147483648
        %v3155 = vor.u32 1.1754944e-38, %v3154
        %v3156 = vsel %vm3153, %v3155, %v3151
        %v3157 = vrcp.pop %v3114
        %v3158 = vmul.f32 %v3114, %v3157
        %v3159 = vsub.f32 1.0, %v3158
        %v3160 = vmul.f32 %v3157, %v3159
        %v3161 = vadd.f32 %v3157, %v3160
        %vm3162 = vweird.f32 %v3114
        %vm3163 = vweird.f32 %v3157
        %vm3164 = vmor %vm3162, %vm3163
        %v3165 = vsel %vm3164, %v3157, %v3161
        %v3166 = vand.u32 2147483647, %v3114
        %vm3167 = vcmp.eq.f32.partialorder %v3166, 8.507059e+37
        %v3168 = vand.u32 %v3114, 2147483648
        %v3169 = vor.u32 1.1754944e-38, %v3168
        %v3170 = vsel %vm3167, %v3169, %v3165
        %v3171 = vrcp.pop %v3116
        %v3172 = vmul.f32 %v3116, %v3171
        %v3173 = vsub.f32 1.0, %v3172
        %v3174 = vmul.f32 %v3171, %v3173
        %v3175 = vadd.f32 %v3171, %v3174
        %vm3176 = vweird.f32 %v3116
        %vm3177 = vweird.f32 %v3171
        %vm3178 = vmor %vm3176, %vm3177
        %v3179 = vsel %vm3178, %v3171, %v3175
        %v3180 = vand.u32 2147483647, %v3116
        %vm3181 = vcmp.eq.f32.partialorder %v3180, 8.507059e+37
        %v3182 = vand.u32 %v3116, 2147483648
        %v3183 = vor.u32 1.1754944e-38, %v3182
        %v3184 = vsel %vm3181, %v3183, %v3179
        %v3185 = vrcp.pop %v3118
        %v3186 = vmul.f32 %v3118, %v3185
        %v3187 = vsub.f32 1.0, %v3186
        %v3188 = vmul.f32 %v3185, %v3187
        %v3189 = vadd.f32 %v3185, %v3188
        %vm3190 = vweird.f32 %v3118
        %vm3191 = vweird.f32 %v3185
        %vm3192 = vmor %vm3190, %vm3191
        %v3193 = vsel %vm3192, %v3185, %v3189
        %v3194 = vand.u32 2147483647, %v3118
        %vm3195 = vcmp.eq.f32.partialorder %v3194, 8.507059e+37
        %v3196 = vand.u32 %v3118, 2147483648
        %v3197 = vor.u32 1.1754944e-38, %v3196
        %v3198 = vsel %vm3195, %v3197, %v3193
        %v3199 = vrcp.pop %v3120
        %v3200 = vmul.f32 %v3120, %v3199
        %v3201 = vsub.f32 1.0, %v3200
        %v3202 = vmul.f32 %v3199, %v3201
        %v3203 = vadd.f32 %v3199, %v3202
        %vm3204 = vweird.f32 %v3120
        %vm3205 = vweird.f32 %v3199
        %vm3206 = vmor %vm3204, %vm3205
        %v3207 = vsel %vm3206, %v3199, %v3203
        %v3208 = vand.u32 2147483647, %v3120
        %vm3209 = vcmp.eq.f32.partialorder %v3208, 8.507059e+37
        %v3210 = vand.u32 %v3120, 2147483648
        %v3211 = vor.u32 1.1754944e-38, %v3210
        %v3212 = vsel %vm3209, %v3211, %v3207
        %v3213 = vrcp.pop %v3122
        %v3214 = vmul.f32 %v3122, %v3213
        %v3215 = vsub.f32 1.0, %v3214
        %v3216 = vmul.f32 %v3213, %v3215
        %v3217 = vadd.f32 %v3213, %v3216
        %vm3218 = vweird.f32 %v3122
        %vm3219 = vweird.f32 %v3213
        %vm3220 = vmor %vm3218, %vm3219
        %v3221 = vsel %vm3220, %v3213, %v3217
        %v3222 = vand.u32 2147483647, %v3122
        %vm3223 = vcmp.eq.f32.partialorder %v3222, 8.507059e+37
        %v3224 = vand.u32 %v3122, 2147483648
        %v3225 = vor.u32 1.1754944e-38, %v3224
        %v3226 = vsel %vm3223, %v3225, %v3221
        %v3227 = vrcp.pop %v3124
        %v3228 = vmul.f32 %v3124, %v3227
        %v3229 = vsub.f32 1.0, %v3228
        %v3230 = vmul.f32 %v3227, %v3229
        %v3231 = vadd.f32 %v3227, %v3230
        %vm3232 = vweird.f32 %v3124
        %vm3233 = vweird.f32 %v3227
        %vm3234 = vmor %vm3232, %vm3233
        %v3235 = vsel %vm3234, %v3227, %v3231
        %v3236 = vand.u32 2147483647, %v3124
        %vm3237 = vcmp.eq.f32.partialorder %v3236, 8.507059e+37
        %v3238 = vand.u32 %v3124, 2147483648
        %v3239 = vor.u32 1.1754944e-38, %v3238
        %v3240 = vsel %vm3237, %v3239, %v3235
        %v3241 = vrcp.pop %v3126
        %v3242 = vmul.f32 %v3126, %v3241
        %v3243 = vsub.f32 1.0, %v3242
        %v3244 = vmul.f32 %v3241, %v3243
        %v3245 = vadd.f32 %v3241, %v3244
        %vm3246 = vweird.f32 %v3126
        %vm3247 = vweird.f32 %v3241
        %vm3248 = vmor %vm3246, %vm3247
        %v3249 = vsel %vm3248, %v3241, %v3245
        %v3250 = vand.u32 2147483647, %v3126
        %vm3251 = vcmp.eq.f32.partialorder %v3250, 8.507059e+37
        %v3252 = vand.u32 %v3126, 2147483648
        %v3253 = vor.u32 1.1754944e-38, %v3252
        %v3254 = vsel %vm3251, %v3253, %v3249
        %v3255 = vrcp.pop %v3128
        %v3256 = vmul.f32 %v3128, %v3255
        %v3257 = vsub.f32 1.0, %v3256
        %v3258 = vmul.f32 %v3255, %v3257
        %v3259 = vadd.f32 %v3255, %v3258
        %vm3260 = vweird.f32 %v3128
        %vm3261 = vweird.f32 %v3255
        %vm3262 = vmor %vm3260, %vm3261
        %v3263 = vsel %vm3262, %v3255, %v3259
        %v3264 = vand.u32 2147483647, %v3128
        %vm3265 = vcmp.eq.f32.partialorder %v3264, 8.507059e+37
        %v3266 = vand.u32 %v3128, 2147483648
        %v3267 = vor.u32 1.1754944e-38, %v3266
        %v3268 = vsel %vm3265, %v3267, %v3263
        %v3269 = vrcp.pop %v3130
        %v3270 = vmul.f32 %v3130, %v3269
        %v3271 = vsub.f32 1.0, %v3270
        %v3272 = vmul.f32 %v3269, %v3271
        %v3273 = vadd.f32 %v3269, %v3272
        %vm3274 = vweird.f32 %v3130
        %vm3275 = vweird.f32 %v3269
        %vm3276 = vmor %vm3274, %vm3275
        %v3277 = vsel %vm3276, %v3269, %v3273
        %v3278 = vand.u32 2147483647, %v3130
        %vm3279 = vcmp.eq.f32.partialorder %v3278, 8.507059e+37
        %v3280 = vand.u32 %v3130, 2147483648
        %v3281 = vor.u32 1.1754944e-38, %v3280
        %v3282 = vsel %vm3279, %v3281, %v3277
        %v3283 = vrcp.pop %v3132
        %v3284 = vmul.f32 %v3132, %v3283
        %v3285 = vsub.f32 1.0, %v3284
        %v3286 = vmul.f32 %v3283, %v3285
        %v3287 = vadd.f32 %v3283, %v3286
        %vm3288 = vweird.f32 %v3132
        %vm3289 = vweird.f32 %v3283
        %vm3290 = vmor %vm3288, %vm3289
        %v3291 = vsel %vm3290, %v3283, %v3287
        %v3292 = vand.u32 2147483647, %v3132
        %vm3293 = vcmp.eq.f32.partialorder %v3292, 8.507059e+37
        %v3294 = vand.u32 %v3132, 2147483648
        %v3295 = vor.u32 1.1754944e-38, %v3294
        %v3296 = vsel %vm3293, %v3295, %v3291
        %v3297 = vrcp.pop %v3134
        %v3298 = vmul.f32 %v3134, %v3297
        %v3299 = vsub.f32 1.0, %v3298
        %v3300 = vmul.f32 %v3297, %v3299
        %v3301 = vadd.f32 %v3297, %v3300
        %vm3302 = vweird.f32 %v3134
        %vm3303 = vweird.f32 %v3297
        %vm3304 = vmor %vm3302, %vm3303
        %v3305 = vsel %vm3304, %v3297, %v3301
        %v3306 = vand.u32 2147483647, %v3134
        %vm3307 = vcmp.eq.f32.partialorder %v3306, 8.507059e+37
        %v3308 = vand.u32 %v3134, 2147483648
        %v3309 = vor.u32 1.1754944e-38, %v3308
        %v3310 = vsel %vm3307, %v3309, %v3305
        %v3311 = vrcp.pop %v3136
        %v3312 = vmul.f32 %v3136, %v3311
        %v3313 = vsub.f32 1.0, %v3312
        %v3314 = vmul.f32 %v3311, %v3313
        %v3315 = vadd.f32 %v3311, %v3314
        %vm3316 = vweird.f32 %v3136
        %vm3317 = vweird.f32 %v3311
        %vm3318 = vmor %vm3316, %vm3317
        %v3319 = vsel %vm3318, %v3311, %v3315
        %v3320 = vand.u32 2147483647, %v3136
        %vm3321 = vcmp.eq.f32.partialorder %v3320, 8.507059e+37
        %v3322 = vand.u32 %v3136, 2147483648
        %v3323 = vor.u32 1.1754944e-38, %v3322
        %v3324 = vsel %vm3321, %v3323, %v3319
        %v3325 = vrcp.pop %v3138
        %v3326 = vmul.f32 %v3138, %v3325
        %v3327 = vsub.f32 1.0, %v3326
        %v3328 = vmul.f32 %v3325, %v3327
        %v3329 = vadd.f32 %v3325, %v3328
        %vm3330 = vweird.f32 %v3138
        %vm3331 = vweird.f32 %v3325
        %vm3332 = vmor %vm3330, %vm3331
        %v3333 = vsel %vm3332, %v3325, %v3329
        %v3334 = vand.u32 2147483647, %v3138
        %vm3335 = vcmp.eq.f32.partialorder %v3334, 8.507059e+37
        %v3336 = vand.u32 %v3138, 2147483648
        %v3337 = vor.u32 1.1754944e-38, %v3336
        %v3338 = vsel %vm3335, %v3337, %v3333
        %v3339 = vrcp.pop %v3140
        %v3340 = vmul.f32 %v3140, %v3339
        %v3341 = vsub.f32 1.0, %v3340
        %v3342 = vmul.f32 %v3339, %v3341
        %v3343 = vadd.f32 %v3339, %v3342
        %vm3344 = vweird.f32 %v3140
        %vm3345 = vweird.f32 %v3339
        %vm3346 = vmor %vm3344, %vm3345
        %v3347 = vsel %vm3346, %v3339, %v3343
        %v3348 = vand.u32 2147483647, %v3140
        %vm3349 = vcmp.eq.f32.partialorder %v3348, 8.507059e+37
        %v3350 = vand.u32 %v3140, 2147483648
        %v3351 = vor.u32 1.1754944e-38, %v3350
        %v3352 = vsel %vm3349, %v3351, %v3347
        %v3353 = vrcp.pop %v3142
        %v3354 = vmul.f32 %v3142, %v3353
        %v3355 = vsub.f32 1.0, %v3354
        %v3356 = vmul.f32 %v3353, %v3355
        %v3357 = vadd.f32 %v3353, %v3356
        %vm3358 = vweird.f32 %v3142
        %vm3359 = vweird.f32 %v3353
        %vm3360 = vmor %vm3358, %vm3359
        %v3361 = vsel %vm3360, %v3353, %v3357
        %v3362 = vand.u32 2147483647, %v3142
        %vm3363 = vcmp.eq.f32.partialorder %v3362, 8.507059e+37
        %v3364 = vand.u32 %v3142, 2147483648
        %v3365 = vor.u32 1.1754944e-38, %v3364
        %v3366 = vsel %vm3363, %v3365, %v3361
        %v3367 = vpack.c.bf16 %v3080, %v3080
        %v3368 = vpack.c.bf16 %v3082, %v3082
        %v3369 = vpack.c.bf16 %v3084, %v3084
        %v3370 = vpack.c.bf16 %v3086, %v3086
        %v3371 = vpack.c.bf16 %v3088, %v3088
        %v3372 = vpack.c.bf16 %v3090, %v3090
        %v3373 = vpack.c.bf16 %v3092, %v3092
        %v3374 = vpack.c.bf16 %v3094, %v3094
        %v3375 = vpack.c.bf16 %v3096, %v3096
        %v3376 = vpack.c.bf16 %v3098, %v3098
        %v3377 = vpack.c.bf16 %v3100, %v3100
        %v3378 = vpack.c.bf16 %v3102, %v3102
        %v3379 = vpack.c.bf16 %v3104, %v3104
        %v3380 = vpack.c.bf16 %v3106, %v3106
        %v3381 = vpack.c.bf16 %v3108, %v3108
        %v3382 = vpack.c.bf16 %v3110, %v3110
        %v3399 = vunpack.c.l.b16 %v3367
        %v3400 = vunpack.c.l.b16 %v3368
        %v3401 = vunpack.c.l.b16 %v3369
        %v3402 = vunpack.c.l.b16 %v3370
        %v3403 = vunpack.c.l.b16 %v3371
        %v3404 = vunpack.c.l.b16 %v3372
        %v3405 = vunpack.c.l.b16 %v3373
        %v3406 = vunpack.c.l.b16 %v3374
        %v3407 = vunpack.c.l.b16 %v3375
        %v3408 = vunpack.c.l.b16 %v3376
        %v3409 = vunpack.c.l.b16 %v3377
        %v3410 = vunpack.c.l.b16 %v3378
        %v3411 = vunpack.c.l.b16 %v3379
        %v3412 = vunpack.c.l.b16 %v3380
        %v3413 = vunpack.c.l.b16 %v3381
        %v3414 = vunpack.c.l.b16 %v3382
        %v3415 = vpack.c.b16 %v3400, %v3399
        %v3416 = vpack.c.b16 %v3402, %v3401
        %v3417 = vpack.c.b16 %v3404, %v3403
        %v3418 = vpack.c.b16 %v3406, %v3405
        %v3419 = vpack.c.b16 %v3408, %v3407
        %v3420 = vpack.c.b16 %v3410, %v3409
        %v3421 = vpack.c.b16 %v3412, %v3411
        %v3422 = vpack.c.b16 %v3414, %v3413
        %3431 = vrot.lane.b32.xlu0 %v690, 40
        %v3432 = vpop.permute.xlu0 %3431
        %3433 = vrot.lane.b32.xlu0 %v691, 40
        %v3434 = vpop.permute.xlu0 %3433
        %3435 = vrot.lane.b32.xlu0 %v692, 40
        %v3436 = vpop.permute.xlu0 %3435
        %3437 = vrot.lane.b32.xlu0 %v693, 40
        %v3438 = vpop.permute.xlu0 %3437
        %3439 = vrot.lane.b32.xlu0 %v694, 40
        %v3440 = vpop.permute.xlu0 %3439
        %3441 = vrot.lane.b32.xlu0 %v695, 40
        %v3442 = vpop.permute.xlu0 %3441
        %3443 = vrot.lane.b32.xlu0 %v696, 40
        %v3444 = vpop.permute.xlu0 %3443
        %3445 = vrot.lane.b32.xlu0 %v697, 40
        %v3446 = vpop.permute.xlu0 %3445
        %3455 = vmatpush.bf16.msra.mxu0 %v3446
        %3456 = vmatpush.bf16.msra.mxu0 %v3444
        %3457 = vmatpush.bf16.msra.mxu0 %v3442
        %3458 = vmatpush.bf16.msra.mxu0 %v3440
        %3459 = vmatpush.bf16.msra.mxu0 %v3438
        %3460 = vmatpush.bf16.msra.mxu0 %v3436
        %3461 = vmatpush.bf16.msra.mxu0 %v3434
        %3462 = vmatpush.bf16.msra.mxu0 %v3432
        %3463 = vmatmul.bf16.gmra.mxu0 %v3415
        %v3464 = vpop.f32.mrf.mxu0
        %v3465 = vadd.f32 0.0, %v3464
        %v3466 = vpop.f32.mrf.mxu0
        %v3467 = vadd.f32 0.0, %v3466
        %3468 = vmatmul.bf16.gmra.mxu0 %v3416
        %v3469 = vpop.f32.mrf.mxu0
        %v3470 = vadd.f32 0.0, %v3469
        %v3471 = vpop.f32.mrf.mxu0
        %v3472 = vadd.f32 0.0, %v3471
        %3473 = vmatmul.bf16.gmra.mxu0 %v3417
        %v3474 = vpop.f32.mrf.mxu0
        %v3475 = vadd.f32 0.0, %v3474
        %v3476 = vpop.f32.mrf.mxu0
        %v3477 = vadd.f32 0.0, %v3476
        %3478 = vmatmul.bf16.gmra.mxu0 %v3418
        %v3479 = vpop.f32.mrf.mxu0
        %v3480 = vadd.f32 0.0, %v3479
        %v3481 = vpop.f32.mrf.mxu0
        %v3482 = vadd.f32 0.0, %v3481
        %3483 = vmatmul.bf16.gmra.mxu0 %v3419
        %v3484 = vpop.f32.mrf.mxu0
        %v3485 = vadd.f32 0.0, %v3484
        %v3486 = vpop.f32.mrf.mxu0
        %v3487 = vadd.f32 0.0, %v3486
        %3488 = vmatmul.bf16.gmra.mxu0 %v3420
        %v3489 = vpop.f32.mrf.mxu0
        %v3490 = vadd.f32 0.0, %v3489
        %v3491 = vpop.f32.mrf.mxu0
        %v3492 = vadd.f32 0.0, %v3491
        %3493 = vmatmul.bf16.gmra.mxu0 %v3421
        %v3494 = vpop.f32.mrf.mxu0
        %v3495 = vadd.f32 0.0, %v3494
        %v3496 = vpop.f32.mrf.mxu0
        %v3497 = vadd.f32 0.0, %v3496
        %3498 = vmatmul.bf16.gmra.mxu0 %v3422
        %v3499 = vpop.f32.mrf.mxu0
        %v3500 = vadd.f32 0.0, %v3499
        %v3501 = vpop.f32.mrf.mxu0
        %v3502 = vadd.f32 0.0, %v3501
        %3503 = vdwg.mxu0
        %v3504 = vmul.f32 %v3465, %v3156
        %v3505 = vmul.f32 %v3467, %v3170
        %v3506 = vmul.f32 %v3470, %v3184
        %v3507 = vmul.f32 %v3472, %v3198
        %v3508 = vmul.f32 %v3475, %v3212
        %v3509 = vmul.f32 %v3477, %v3226
        %v3510 = vmul.f32 %v3480, %v3240
        %v3511 = vmul.f32 %v3482, %v3254
        %v3512 = vmul.f32 %v3485, %v3268
        %v3513 = vmul.f32 %v3487, %v3282
        %v3514 = vmul.f32 %v3490, %v3296
        %v3515 = vmul.f32 %v3492, %v3310
        %v3516 = vmul.f32 %v3495, %v3324
        %v3517 = vmul.f32 %v3497, %v3338
        %v3518 = vmul.f32 %v3500, %v3352
        %v3519 = vmul.f32 %v3502, %v3366
        %v3520 = vmul.f32 %v3080, %v3156
        %v3521 = vmul.f32 %v3082, %v3170
        %v3522 = vmul.f32 %v3084, %v3184
        %v3523 = vmul.f32 %v3086, %v3198
        %v3524 = vmul.f32 %v3088, %v3212
        %v3525 = vmul.f32 %v3090, %v3226
        %v3526 = vmul.f32 %v3092, %v3240
        %v3527 = vmul.f32 %v3094, %v3254
        %v3528 = vmul.f32 %v3096, %v3268
        %v3529 = vmul.f32 %v3098, %v3282
        %v3530 = vmul.f32 %v3100, %v3296
        %v3531 = vmul.f32 %v3102, %v3310
        %v3532 = vmul.f32 %v3104, %v3324
        %v3533 = vmul.f32 %v3106, %v3338
        %v3534 = vmul.f32 %v3108, %v3352
        %v3535 = vmul.f32 %v3110, %v3366
        %v3536 = vadd.f32 %v2786, %v3520
        %v3537 = vadd.f32 %v2787, %v3521
        %v3538 = vadd.f32 %v2788, %v3522
        %v3539 = vadd.f32 %v2789, %v3523
        %v3540 = vadd.f32 %v2790, %v3524
        %v3541 = vadd.f32 %v2791, %v3525
        %v3542 = vadd.f32 %v2792, %v3526
        %v3543 = vadd.f32 %v2793, %v3527
        %v3544 = vadd.f32 %v2794, %v3528
        %v3545 = vadd.f32 %v2795, %v3529
        %v3546 = vadd.f32 %v2796, %v3530
        %v3547 = vadd.f32 %v2797, %v3531
        %v3548 = vadd.f32 %v2798, %v3532
        %v3549 = vadd.f32 %v2799, %v3533
        %v3550 = vadd.f32 %v2800, %v3534
        %v3551 = vadd.f32 %v2801, %v3535
        %v3552 = vpack.c.bf16 %v3505, %v3504
        %v3553 = vpack.c.bf16 %v3507, %v3506
        %v3554 = vpack.c.bf16 %v3509, %v3508
        %v3555 = vpack.c.bf16 %v3511, %v3510
        %v3556 = vpack.c.bf16 %v3513, %v3512
        %v3557 = vpack.c.bf16 %v3515, %v3514
        %v3558 = vpack.c.bf16 %v3517, %v3516
        %v3559 = vpack.c.bf16 %v3519, %v3518
        %v3561 = vsel %vm714, %v3552, 0
        %v3564 = vsel %vm714, %v3553, 0
        %v3567 = vsel %vm714, %v3554, 0
        %v3570 = vsel %vm714, %v3555, 0
        %v3573 = vsel %vm714, %v3556, 0
        %v3576 = vsel %vm714, %v3557, 0
        %v3579 = vsel %vm714, %v3558, 0
        %v3582 = vsel %vm714, %v3559, 0
        %v3585 = vsel %vm2023, %v453, 0
        %3587 = vmatpush.bf16.msra.mxu0 0
        %3588 = vmatpush.bf16.msra.mxu0 0
        %3589 = vmatpush.bf16.msra.mxu0 0
        %3590 = vmatpush.bf16.msra.mxu0 0
        %3591 = vmatpush.bf16.msra.mxu0 0
        %3592 = vmatpush.bf16.msra.mxu0 0
        %3593 = vmatpush.bf16.msra.mxu0 0
        %3594 = vmatpush.bf16.msra.mxu0 %v3585
        %3595 = vmatmul.bf16.gmra.mxu0 %v3561
        %v3596 = vpop.f32.mrf.mxu0
        %v3597 = vadd.f32 0.0, %v3596
        %v3598 = vpop.f32.mrf.mxu0
        %v3599 = vadd.f32 0.0, %v3598
        %3600 = vmatmul.bf16.gmra.mxu0 %v3564
        %v3601 = vpop.f32.mrf.mxu0
        %v3602 = vadd.f32 0.0, %v3601
        %v3603 = vpop.f32.mrf.mxu0
        %v3604 = vadd.f32 0.0, %v3603
        %3605 = vmatmul.bf16.gmra.mxu0 %v3567
        %v3606 = vpop.f32.mrf.mxu0
        %v3607 = vadd.f32 0.0, %v3606
        %v3608 = vpop.f32.mrf.mxu0
        %v3609 = vadd.f32 0.0, %v3608
        %3610 = vmatmul.bf16.gmra.mxu0 %v3570
        %v3611 = vpop.f32.mrf.mxu0
        %v3612 = vadd.f32 0.0, %v3611
        %v3613 = vpop.f32.mrf.mxu0
        %v3614 = vadd.f32 0.0, %v3613
        %3615 = vmatmul.bf16.gmra.mxu0 %v3573
        %v3616 = vpop.f32.mrf.mxu0
        %v3617 = vadd.f32 0.0, %v3616
        %v3618 = vpop.f32.mrf.mxu0
        %v3619 = vadd.f32 0.0, %v3618
        %3620 = vmatmul.bf16.gmra.mxu0 %v3576
        %v3621 = vpop.f32.mrf.mxu0
        %v3622 = vadd.f32 0.0, %v3621
        %v3623 = vpop.f32.mrf.mxu0
        %v3624 = vadd.f32 0.0, %v3623
        %3625 = vmatmul.bf16.gmra.mxu0 %v3579
        %v3626 = vpop.f32.mrf.mxu0
        %v3627 = vadd.f32 0.0, %v3626
        %v3628 = vpop.f32.mrf.mxu0
        %v3629 = vadd.f32 0.0, %v3628
        %3630 = vmatmul.bf16.gmra.mxu0 %v3582
        %v3631 = vpop.f32.mrf.mxu0
        %v3632 = vadd.f32 0.0, %v3631
        %v3633 = vpop.f32.mrf.mxu0
        %v3634 = vadd.f32 0.0, %v3633
        %3635 = vdwg.mxu0
        %v3636 = vadd.f32 %v2886, %v3597
        %v3637 = vadd.f32 %v2887, %v3599
        %v3638 = vadd.f32 %v2888, %v3602
        %v3639 = vadd.f32 %v2889, %v3604
        %v3640 = vadd.f32 %v2890, %v3607
        %v3641 = vadd.f32 %v2891, %v3609
        %v3642 = vadd.f32 %v2892, %v3612
        %v3643 = vadd.f32 %v2893, %v3614
        %v3644 = vadd.f32 %v2894, %v3617
        %v3645 = vadd.f32 %v2895, %v3619
        %v3646 = vadd.f32 %v2896, %v3622
        %v3647 = vadd.f32 %v2897, %v3624
        %v3648 = vadd.f32 %v2898, %v3627
        %v3649 = vadd.f32 %v2899, %v3629
        %v3650 = vadd.f32 %v2900, %v3632
        %v3651 = vadd.f32 %v2901, %v3634
        %v3652 = vmul.f32 %v3536, 0.25
        %v3653 = vmul.f32 %v3537, 0.25
        %v3654 = vmul.f32 %v3538, 0.25
        %v3655 = vmul.f32 %v3539, 0.25
        %v3656 = vmul.f32 %v3540, 0.25
        %v3657 = vmul.f32 %v3541, 0.25
        %v3658 = vmul.f32 %v3542, 0.25
        %v3659 = vmul.f32 %v3543, 0.25
        %v3660 = vmul.f32 %v3544, 0.25
        %v3661 = vmul.f32 %v3545, 0.25
        %v3662 = vmul.f32 %v3546, 0.25
        %v3663 = vmul.f32 %v3547, 0.25
        %v3664 = vmul.f32 %v3548, 0.25
        %v3665 = vmul.f32 %v3549, 0.25
        %v3666 = vmul.f32 %v3550, 0.25
        %v3667 = vmul.f32 %v3551, 0.25
        %3668 = vst [vmem:[%s418] sm:$0xff] %v3652
        %3669 = vst [vmem:[%s418 + $0x8] sm:$0xff] %v3653
        %3670 = vst [vmem:[%s418 + $0x10] sm:$0xff] %v3654
        %3671 = vst [vmem:[%s418 + $0x18] sm:$0xff] %v3655
        %3672 = vst [vmem:[%s418 + $0x20] sm:$0xff] %v3656
        %3673 = vst [vmem:[%s418 + $0x28] sm:$0xff] %v3657
        %3674 = vst [vmem:[%s418 + $0x30] sm:$0xff] %v3658
        %3675 = vst [vmem:[%s418 + $0x38] sm:$0xff] %v3659
        %3676 = vst [vmem:[%s418 + $0x40] sm:$0xff] %v3660
        %3677 = vst [vmem:[%s418 + $0x48] sm:$0xff] %v3661
        %3678 = vst [vmem:[%s418 + $0x50] sm:$0xff] %v3662
        %3679 = vst [vmem:[%s418 + $0x58] sm:$0xff] %v3663
        %3680 = vst [vmem:[%s418 + $0x60] sm:$0xff] %v3664
        %3681 = vst [vmem:[%s418 + $0x68] sm:$0xff] %v3665
        %3682 = vst [vmem:[%s418 + $0x70] sm:$0xff] %v3666
        %3683 = vst [vmem:[%s418 + $0x78] sm:$0xff] %v3667
        %v3684 = vadd.f32 %v430, %v3636
        %v3685 = vadd.f32 %v431, %v3637
        %v3686 = vadd.f32 %v432, %v3638
        %v3687 = vadd.f32 %v433, %v3639
        %v3688 = vadd.f32 %v434, %v3640
        %v3689 = vadd.f32 %v435, %v3641
        %v3690 = vadd.f32 %v436, %v3642
        %v3691 = vadd.f32 %v437, %v3643
        %v3692 = vadd.f32 %v438, %v3644
        %v3693 = vadd.f32 %v439, %v3645
        %v3694 = vadd.f32 %v440, %v3646
        %v3695 = vadd.f32 %v441, %v3647
        %v3696 = vadd.f32 %v442, %v3648
        %v3697 = vadd.f32 %v443, %v3649
        %v3698 = vadd.f32 %v444, %v3650
        %v3699 = vadd.f32 %v445, %v3651
        %v3700 = vperm.slane %v468, 0
        %v3701 = vadd.f32 %v3684, %v3700
        %v3702 = vadd.f32 %v3685, %v3700
        %v3703 = vadd.f32 %v3686, %v3700
        %v3704 = vadd.f32 %v3687, %v3700
        %v3705 = vadd.f32 %v3688, %v3700
        %v3706 = vadd.f32 %v3689, %v3700
        %v3707 = vadd.f32 %v3690, %v3700
        %v3708 = vadd.f32 %v3691, %v3700
        %v3709 = vadd.f32 %v3692, %v3700
        %v3710 = vadd.f32 %v3693, %v3700
        %v3711 = vadd.f32 %v3694, %v3700
        %v3712 = vadd.f32 %v3695, %v3700
        %v3713 = vadd.f32 %v3696, %v3700
        %v3714 = vadd.f32 %v3697, %v3700
        %v3715 = vadd.f32 %v3698, %v3700
        %v3716 = vadd.f32 %v3699, %v3700
        %v3717 = vsel %vm493, %v3701, 0.0
        %3718 = vadd.xlane.f32.xlu0 %v3717
        %v3719 = vpop.xlane.xlu0 %3718
        %v3720 = vsel %vm493, %v3702, 0.0
        %3721 = vadd.xlane.f32.xlu0 %v3720
        %v3722 = vpop.xlane.xlu0 %3721
        %v3723 = vsel %vm493, %v3703, 0.0
        %3724 = vadd.xlane.f32.xlu0 %v3723
        %v3725 = vpop.xlane.xlu0 %3724
        %v3726 = vsel %vm493, %v3704, 0.0
        %3727 = vadd.xlane.f32.xlu0 %v3726
        %v3728 = vpop.xlane.xlu0 %3727
        %v3729 = vsel %vm493, %v3705, 0.0
        %3730 = vadd.xlane.f32.xlu0 %v3729
        %v3731 = vpop.xlane.xlu0 %3730
        %v3732 = vsel %vm493, %v3706, 0.0
        %3733 = vadd.xlane.f32.xlu0 %v3732
        %v3734 = vpop.xlane.xlu0 %3733
        %v3735 = vsel %vm493, %v3707, 0.0
        %3736 = vadd.xlane.f32.xlu0 %v3735
        %v3737 = vpop.xlane.xlu0 %3736
        %v3738 = vsel %vm493, %v3708, 0.0
        %3739 = vadd.xlane.f32.xlu0 %v3738
        %v3740 = vpop.xlane.xlu0 %3739
        %v3741 = vsel %vm493, %v3709, 0.0
        %3742 = vadd.xlane.f32.xlu0 %v3741
        %v3743 = vpop.xlane.xlu0 %3742
        %v3744 = vsel %vm493, %v3710, 0.0
        %3745 = vadd.xlane.f32.xlu0 %v3744
        %v3746 = vpop.xlane.xlu0 %3745
        %v3747 = vsel %vm493, %v3711, 0.0
        %3748 = vadd.xlane.f32.xlu0 %v3747
        %v3749 = vpop.xlane.xlu0 %3748
        %v3750 = vsel %vm493, %v3712, 0.0
        %3751 = vadd.xlane.f32.xlu0 %v3750
        %v3752 = vpop.xlane.xlu0 %3751
        %v3753 = vsel %vm493, %v3713, 0.0
        %3754 = vadd.xlane.f32.xlu0 %v3753
        %v3755 = vpop.xlane.xlu0 %3754
        %v3756 = vsel %vm493, %v3714, 0.0
        %3757 = vadd.xlane.f32.xlu0 %v3756
        %v3758 = vpop.xlane.xlu0 %3757
        %v3759 = vsel %vm493, %v3715, 0.0
        %3760 = vadd.xlane.f32.xlu0 %v3759
        %v3761 = vpop.xlane.xlu0 %3760
        %v3762 = vsel %vm493, %v3716, 0.0
        %3763 = vadd.xlane.f32.xlu0 %v3762
        %v3764 = vpop.xlane.xlu0 %3763
        %v3765 = vrcp.pop 32.0
        %v3766 = vmul.f32 32.0, %v3765
        %v3767 = vsub.f32 1.0, %v3766
        %v3768 = vmul.f32 %v3765, %v3767
        %v3769 = vadd.f32 %v3765, %v3768
        %vm3770 = vweird.f32 %v3765
        %v3771 = vsel %vm3770, %v3765, %v3769
        %v3772 = vmul.f32 %v3719, %v3771
        %v3773 = vmul.f32 %v3722, %v3771
        %v3774 = vmul.f32 %v3725, %v3771
        %v3775 = vmul.f32 %v3728, %v3771
        %v3776 = vmul.f32 %v3731, %v3771
        %v3777 = vmul.f32 %v3734, %v3771
        %v3778 = vmul.f32 %v3737, %v3771
        %v3779 = vmul.f32 %v3740, %v3771
        %v3780 = vmul.f32 %v3743, %v3771
        %v3781 = vmul.f32 %v3746, %v3771
        %v3782 = vmul.f32 %v3749, %v3771
        %v3783 = vmul.f32 %v3752, %v3771
        %v3784 = vmul.f32 %v3755, %v3771
        %v3785 = vmul.f32 %v3758, %v3771
        %v3786 = vmul.f32 %v3761, %v3771
        %v3787 = vmul.f32 %v3764, %v3771
        %v3788 = vsub.f32 %v3701, %v3772
        %v3789 = vsub.f32 %v3702, %v3773
        %v3790 = vsub.f32 %v3703, %v3774
        %v3791 = vsub.f32 %v3704, %v3775
        %v3792 = vsub.f32 %v3705, %v3776
        %v3793 = vsub.f32 %v3706, %v3777
        %v3794 = vsub.f32 %v3707, %v3778
        %v3795 = vsub.f32 %v3708, %v3779
        %v3796 = vsub.f32 %v3709, %v3780
        %v3797 = vsub.f32 %v3710, %v3781
        %v3798 = vsub.f32 %v3711, %v3782
        %v3799 = vsub.f32 %v3712, %v3783
        %v3800 = vsub.f32 %v3713, %v3784
        %v3801 = vsub.f32 %v3714, %v3785
        %v3802 = vsub.f32 %v3715, %v3786
        %v3803 = vsub.f32 %v3716, %v3787
        %v3804 = vmul.f32 %v3788, %v3788
        %v3805 = vmul.f32 %v3789, %v3789
        %v3806 = vmul.f32 %v3790, %v3790
        %v3807 = vmul.f32 %v3791, %v3791
        %v3808 = vmul.f32 %v3792, %v3792
        %v3809 = vmul.f32 %v3793, %v3793
        %v3810 = vmul.f32 %v3794, %v3794
        %v3811 = vmul.f32 %v3795, %v3795
        %v3812 = vmul.f32 %v3796, %v3796
        %v3813 = vmul.f32 %v3797, %v3797
        %v3814 = vmul.f32 %v3798, %v3798
        %v3815 = vmul.f32 %v3799, %v3799
        %v3816 = vmul.f32 %v3800, %v3800
        %v3817 = vmul.f32 %v3801, %v3801
        %v3818 = vmul.f32 %v3802, %v3802
        %v3819 = vmul.f32 %v3803, %v3803
        %v3820 = vsel %vm493, %v3804, 0.0
        %3821 = vadd.xlane.f32.xlu0 %v3820
        %v3822 = vpop.xlane.xlu0 %3821
        %v3823 = vsel %vm493, %v3805, 0.0
        %3824 = vadd.xlane.f32.xlu0 %v3823
        %v3825 = vpop.xlane.xlu0 %3824
        %v3826 = vsel %vm493, %v3806, 0.0
        %3827 = vadd.xlane.f32.xlu0 %v3826
        %v3828 = vpop.xlane.xlu0 %3827
        %v3829 = vsel %vm493, %v3807, 0.0
        %3830 = vadd.xlane.f32.xlu0 %v3829
        %v3831 = vpop.xlane.xlu0 %3830
        %v3832 = vsel %vm493, %v3808, 0.0
        %3833 = vadd.xlane.f32.xlu0 %v3832
        %v3834 = vpop.xlane.xlu0 %3833
        %v3835 = vsel %vm493, %v3809, 0.0
        %3836 = vadd.xlane.f32.xlu0 %v3835
        %v3837 = vpop.xlane.xlu0 %3836
        %v3838 = vsel %vm493, %v3810, 0.0
        %3839 = vadd.xlane.f32.xlu0 %v3838
        %v3840 = vpop.xlane.xlu0 %3839
        %v3841 = vsel %vm493, %v3811, 0.0
        %3842 = vadd.xlane.f32.xlu0 %v3841
        %v3843 = vpop.xlane.xlu0 %3842
        %v3844 = vsel %vm493, %v3812, 0.0
        %3845 = vadd.xlane.f32.xlu0 %v3844
        %v3846 = vpop.xlane.xlu0 %3845
        %v3847 = vsel %vm493, %v3813, 0.0
        %3848 = vadd.xlane.f32.xlu0 %v3847
        %v3849 = vpop.xlane.xlu0 %3848
        %v3850 = vsel %vm493, %v3814, 0.0
        %3851 = vadd.xlane.f32.xlu0 %v3850
        %v3852 = vpop.xlane.xlu0 %3851
        %v3853 = vsel %vm493, %v3815, 0.0
        %3854 = vadd.xlane.f32.xlu0 %v3853
        %v3855 = vpop.xlane.xlu0 %3854
        %v3856 = vsel %vm493, %v3816, 0.0
        %3857 = vadd.xlane.f32.xlu0 %v3856
        %v3858 = vpop.xlane.xlu0 %3857
        %v3859 = vsel %vm493, %v3817, 0.0
        %3860 = vadd.xlane.f32.xlu0 %v3859
        %v3861 = vpop.xlane.xlu0 %3860
        %v3862 = vsel %vm493, %v3818, 0.0
        %3863 = vadd.xlane.f32.xlu0 %v3862
        %v3864 = vpop.xlane.xlu0 %3863
        %v3865 = vsel %vm493, %v3819, 0.0
        %3866 = vadd.xlane.f32.xlu0 %v3865
        %v3867 = vpop.xlane.xlu0 %3866
        %v3868 = vmul.f32 %v3822, %v3771
        %v3869 = vmul.f32 %v3825, %v3771
        %v3870 = vmul.f32 %v3828, %v3771
        %v3871 = vmul.f32 %v3831, %v3771
        %v3872 = vmul.f32 %v3834, %v3771
        %v3873 = vmul.f32 %v3837, %v3771
        %v3874 = vmul.f32 %v3840, %v3771
        %v3875 = vmul.f32 %v3843, %v3771
        %v3876 = vmul.f32 %v3846, %v3771
        %v3877 = vmul.f32 %v3849, %v3771
        %v3878 = vmul.f32 %v3852, %v3771
        %v3879 = vmul.f32 %v3855, %v3771
        %v3880 = vmul.f32 %v3858, %v3771
        %v3881 = vmul.f32 %v3861, %v3771
        %v3882 = vmul.f32 %v3864, %v3771
        %v3883 = vmul.f32 %v3867, %v3771
        %v3884 = vadd.f32 %v3868, 1e-05
        %v3885 = vadd.f32 %v3869, 1e-05
        %v3886 = vadd.f32 %v3870, 1e-05
        %v3887 = vadd.f32 %v3871, 1e-05
        %v3888 = vadd.f32 %v3872, 1e-05
        %v3889 = vadd.f32 %v3873, 1e-05
        %v3890 = vadd.f32 %v3874, 1e-05
        %v3891 = vadd.f32 %v3875, 1e-05
        %v3892 = vadd.f32 %v3876, 1e-05
        %v3893 = vadd.f32 %v3877, 1e-05
        %v3894 = vadd.f32 %v3878, 1e-05
        %v3895 = vadd.f32 %v3879, 1e-05
        %v3896 = vadd.f32 %v3880, 1e-05
        %v3897 = vadd.f32 %v3881, 1e-05
        %v3898 = vadd.f32 %v3882, 1e-05
        %v3899 = vadd.f32 %v3883, 1e-05
        %v3900 = vrsqrt.pop %v3884
        %v3901 = vmul.f32 %v3900, %v3884
        %v3902 = vmul.f32 %v3901, %v3900
        %v3903 = vmul.f32 0.5, %v3902
        %v3904 = vsub.f32 1.5, %v3903
        %v3905 = vmul.f32 %v3900, %v3904
        %vm3906 = vweird.f32 %v3884
        %vm3907 = vweird.f32 %v3900
        %vm3908 = vmor %vm3906, %vm3907
        %v3909 = vsel %vm3908, %v3900, %v3905
        %v3910 = vrsqrt.pop %v3885
        %v3911 = vmul.f32 %v3910, %v3885
        %v3912 = vmul.f32 %v3911, %v3910
        %v3913 = vmul.f32 0.5, %v3912
        %v3914 = vsub.f32 1.5, %v3913
        %v3915 = vmul.f32 %v3910, %v3914
        %vm3916 = vweird.f32 %v3885
        %vm3917 = vweird.f32 %v3910
        %vm3918 = vmor %vm3916, %vm3917
        %v3919 = vsel %vm3918, %v3910, %v3915
        %v3920 = vrsqrt.pop %v3886
        %v3921 = vmul.f32 %v3920, %v3886
        %v3922 = vmul.f32 %v3921, %v3920
        %v3923 = vmul.f32 0.5, %v3922
        %v3924 = vsub.f32 1.5, %v3923
        %v3925 = vmul.f32 %v3920, %v3924
        %vm3926 = vweird.f32 %v3886
        %vm3927 = vweird.f32 %v3920
        %vm3928 = vmor %vm3926, %vm3927
        %v3929 = vsel %vm3928, %v3920, %v3925
        %v3930 = vrsqrt.pop %v3887
        %v3931 = vmul.f32 %v3930, %v3887
        %v3932 = vmul.f32 %v3931, %v3930
        %v3933 = vmul.f32 0.5, %v3932
        %v3934 = vsub.f32 1.5, %v3933
        %v3935 = vmul.f32 %v3930, %v3934
        %vm3936 = vweird.f32 %v3887
        %vm3937 = vweird.f32 %v3930
        %vm3938 = vmor %vm3936, %vm3937
        %v3939 = vsel %vm3938, %v3930, %v3935
        %v3940 = vrsqrt.pop %v3888
        %v3941 = vmul.f32 %v3940, %v3888
        %v3942 = vmul.f32 %v3941, %v3940
        %v3943 = vmul.f32 0.5, %v3942
        %v3944 = vsub.f32 1.5, %v3943
        %v3945 = vmul.f32 %v3940, %v3944
        %vm3946 = vweird.f32 %v3888
        %vm3947 = vweird.f32 %v3940
        %vm3948 = vmor %vm3946, %vm3947
        %v3949 = vsel %vm3948, %v3940, %v3945
        %v3950 = vrsqrt.pop %v3889
        %v3951 = vmul.f32 %v3950, %v3889
        %v3952 = vmul.f32 %v3951, %v3950
        %v3953 = vmul.f32 0.5, %v3952
        %v3954 = vsub.f32 1.5, %v3953
        %v3955 = vmul.f32 %v3950, %v3954
        %vm3956 = vweird.f32 %v3889
        %vm3957 = vweird.f32 %v3950
        %vm3958 = vmor %vm3956, %vm3957
        %v3959 = vsel %vm3958, %v3950, %v3955
        %v3960 = vrsqrt.pop %v3890
        %v3961 = vmul.f32 %v3960, %v3890
        %v3962 = vmul.f32 %v3961, %v3960
        %v3963 = vmul.f32 0.5, %v3962
        %v3964 = vsub.f32 1.5, %v3963
        %v3965 = vmul.f32 %v3960, %v3964
        %vm3966 = vweird.f32 %v3890
        %vm3967 = vweird.f32 %v3960
        %vm3968 = vmor %vm3966, %vm3967
        %v3969 = vsel %vm3968, %v3960, %v3965
        %v3970 = vrsqrt.pop %v3891
        %v3971 = vmul.f32 %v3970, %v3891
        %v3972 = vmul.f32 %v3971, %v3970
        %v3973 = vmul.f32 0.5, %v3972
        %v3974 = vsub.f32 1.5, %v3973
        %v3975 = vmul.f32 %v3970, %v3974
        %vm3976 = vweird.f32 %v3891
        %vm3977 = vweird.f32 %v3970
        %vm3978 = vmor %vm3976, %vm3977
        %v3979 = vsel %vm3978, %v3970, %v3975
        %v3980 = vrsqrt.pop %v3892
        %v3981 = vmul.f32 %v3980, %v3892
        %v3982 = vmul.f32 %v3981, %v3980
        %v3983 = vmul.f32 0.5, %v3982
        %v3984 = vsub.f32 1.5, %v3983
        %v3985 = vmul.f32 %v3980, %v3984
        %vm3986 = vweird.f32 %v3892
        %vm3987 = vweird.f32 %v3980
        %vm3988 = vmor %vm3986, %vm3987
        %v3989 = vsel %vm3988, %v3980, %v3985
        %v3990 = vrsqrt.pop %v3893
        %v3991 = vmul.f32 %v3990, %v3893
        %v3992 = vmul.f32 %v3991, %v3990
        %v3993 = vmul.f32 0.5, %v3992
        %v3994 = vsub.f32 1.5, %v3993
        %v3995 = vmul.f32 %v3990, %v3994
        %vm3996 = vweird.f32 %v3893
        %vm3997 = vweird.f32 %v3990
        %vm3998 = vmor %vm3996, %vm3997
        %v3999 = vsel %vm3998, %v3990, %v3995
        %v4000 = vrsqrt.pop %v3894
        %v4001 = vmul.f32 %v4000, %v3894
        %v4002 = vmul.f32 %v4001, %v4000
        %v4003 = vmul.f32 0.5, %v4002
        %v4004 = vsub.f32 1.5, %v4003
        %v4005 = vmul.f32 %v4000, %v4004
        %vm4006 = vweird.f32 %v3894
        %vm4007 = vweird.f32 %v4000
        %vm4008 = vmor %vm4006, %vm4007
        %v4009 = vsel %vm4008, %v4000, %v4005
        %v4010 = vrsqrt.pop %v3895
        %v4011 = vmul.f32 %v4010, %v3895
        %v4012 = vmul.f32 %v4011, %v4010
        %v4013 = vmul.f32 0.5, %v4012
        %v4014 = vsub.f32 1.5, %v4013
        %v4015 = vmul.f32 %v4010, %v4014
        %vm4016 = vweird.f32 %v3895
        %vm4017 = vweird.f32 %v4010
        %vm4018 = vmor %vm4016, %vm4017
        %v4019 = vsel %vm4018, %v4010, %v4015
        %v4020 = vrsqrt.pop %v3896
        %v4021 = vmul.f32 %v4020, %v3896
        %v4022 = vmul.f32 %v4021, %v4020
        %v4023 = vmul.f32 0.5, %v4022
        %v4024 = vsub.f32 1.5, %v4023
        %v4025 = vmul.f32 %v4020, %v4024
        %vm4026 = vweird.f32 %v3896
        %vm4027 = vweird.f32 %v4020
        %vm4028 = vmor %vm4026, %vm4027
        %v4029 = vsel %vm4028, %v4020, %v4025
        %v4030 = vrsqrt.pop %v3897
        %v4031 = vmul.f32 %v4030, %v3897
        %v4032 = vmul.f32 %v4031, %v4030
        %v4033 = vmul.f32 0.5, %v4032
        %v4034 = vsub.f32 1.5, %v4033
        %v4035 = vmul.f32 %v4030, %v4034
        %vm4036 = vweird.f32 %v3897
        %vm4037 = vweird.f32 %v4030
        %vm4038 = vmor %vm4036, %vm4037
        %v4039 = vsel %vm4038, %v4030, %v4035
        %v4040 = vrsqrt.pop %v3898
        %v4041 = vmul.f32 %v4040, %v3898
        %v4042 = vmul.f32 %v4041, %v4040
        %v4043 = vmul.f32 0.5, %v4042
        %v4044 = vsub.f32 1.5, %v4043
        %v4045 = vmul.f32 %v4040, %v4044
        %vm4046 = vweird.f32 %v3898
        %vm4047 = vweird.f32 %v4040
        %vm4048 = vmor %vm4046, %vm4047
        %v4049 = vsel %vm4048, %v4040, %v4045
        %v4050 = vrsqrt.pop %v3899
        %v4051 = vmul.f32 %v4050, %v3899
        %v4052 = vmul.f32 %v4051, %v4050
        %v4053 = vmul.f32 0.5, %v4052
        %v4054 = vsub.f32 1.5, %v4053
        %v4055 = vmul.f32 %v4050, %v4054
        %vm4056 = vweird.f32 %v3899
        %vm4057 = vweird.f32 %v4050
        %vm4058 = vmor %vm4056, %vm4057
        %v4059 = vsel %vm4058, %v4050, %v4055
        %v4060 = vmul.f32 %v3788, %v3909
        %v4061 = vmul.f32 %v3789, %v3919
        %v4062 = vmul.f32 %v3790, %v3929
        %v4063 = vmul.f32 %v3791, %v3939
        %v4064 = vmul.f32 %v3792, %v3949
        %v4065 = vmul.f32 %v3793, %v3959
        %v4066 = vmul.f32 %v3794, %v3969
        %v4067 = vmul.f32 %v3795, %v3979
        %v4068 = vmul.f32 %v3796, %v3989
        %v4069 = vmul.f32 %v3797, %v3999
        %v4070 = vmul.f32 %v3798, %v4009
        %v4071 = vmul.f32 %v3799, %v4019
        %v4072 = vmul.f32 %v3800, %v4029
        %v4073 = vmul.f32 %v3801, %v4039
        %v4074 = vmul.f32 %v3802, %v4049
        %v4075 = vmul.f32 %v3803, %v4059
        %v4076 = vperm.slane %v468, 2
        %v4077 = vmul.f32 %v4060, %v4076
        %v4078 = vmul.f32 %v4061, %v4076
        %v4079 = vmul.f32 %v4062, %v4076
        %v4080 = vmul.f32 %v4063, %v4076
        %v4081 = vmul.f32 %v4064, %v4076
        %v4082 = vmul.f32 %v4065, %v4076
        %v4083 = vmul.f32 %v4066, %v4076
        %v4084 = vmul.f32 %v4067, %v4076
        %v4085 = vmul.f32 %v4068, %v4076
        %v4086 = vmul.f32 %v4069, %v4076
        %v4087 = vmul.f32 %v4070, %v4076
        %v4088 = vmul.f32 %v4071, %v4076
        %v4089 = vmul.f32 %v4072, %v4076
        %v4090 = vmul.f32 %v4073, %v4076
        %v4091 = vmul.f32 %v4074, %v4076
        %v4092 = vmul.f32 %v4075, %v4076
        %v4093 = vperm.slane %v468, 3
        %v4094 = vadd.f32 %v4077, %v4093
        %v4095 = vadd.f32 %v4078, %v4093
        %v4096 = vadd.f32 %v4079, %v4093
        %v4097 = vadd.f32 %v4080, %v4093
        %v4098 = vadd.f32 %v4081, %v4093
        %v4099 = vadd.f32 %v4082, %v4093
        %v4100 = vadd.f32 %v4083, %v4093
        %v4101 = vadd.f32 %v4084, %v4093
        %v4102 = vadd.f32 %v4085, %v4093
        %v4103 = vadd.f32 %v4086, %v4093
        %v4104 = vadd.f32 %v4087, %v4093
        %v4105 = vadd.f32 %v4088, %v4093
        %v4106 = vadd.f32 %v4089, %v4093
        %v4107 = vadd.f32 %v4090, %v4093
        %v4108 = vadd.f32 %v4091, %v4093
        %v4109 = vadd.f32 %v4092, %v4093
        %v4110 = vpack.c.bf16 %v4095, %v4094
        %v4111 = vpack.c.bf16 %v4097, %v4096
        %v4112 = vpack.c.bf16 %v4099, %v4098
        %v4113 = vpack.c.bf16 %v4101, %v4100
        %v4114 = vpack.c.bf16 %v4103, %v4102
        %v4115 = vpack.c.bf16 %v4105, %v4104
        %v4116 = vpack.c.bf16 %v4107, %v4106
        %v4117 = vpack.c.bf16 %v4109, %v4108
        %v4119 = vperm.slane %v467, 0
        %v4125 = vunpack.c.l.b16 %v454
        %v4126 = vunpack.c.l.b16 %v455
        %v4127 = vunpack.c.l.b16 %v456
        %v4128 = vunpack.c.l.b16 %v457
        %v4129 = vpack.c.b16 %v4126, %v4125
        %v4130 = vpack.c.b16 %v4128, %v4127
        %v4134 = vsel %vm493, %v4110, 0
        %v4137 = vsel %vm493, %v4111, 0
        %v4140 = vsel %vm493, %v4112, 0
        %v4143 = vsel %vm493, %v4113, 0
        %v4146 = vsel %vm493, %v4114, 0
        %v4149 = vsel %vm493, %v4115, 0
        %v4152 = vsel %vm493, %v4116, 0
        %v4155 = vsel %vm493, %v4117, 0
        %4157 = vmatpush.bf16.msra.mxu0 0
        %4158 = vmatpush.bf16.msra.mxu0 0
        %4159 = vmatpush.bf16.msra.mxu0 0
        %4160 = vmatpush.bf16.msra.mxu0 0
        %4161 = vmatpush.bf16.msra.mxu0 0
        %4162 = vmatpush.bf16.msra.mxu0 0
        %4163 = vmatpush.bf16.msra.mxu0 %v4130
        %4164 = vmatpush.bf16.msra.mxu0 %v4129
        %4165 = vmatmul.bf16.gmra.mxu0 %v4134
        %v4166 = vpop.f32.mrf.mxu0
        %v4167 = vadd.f32 %v4119, %v4166
        %v4168 = vpop.f32.mrf.mxu0
        %v4169 = vadd.f32 %v4119, %v4168
        %4170 = vmatmul.bf16.gmra.mxu0 %v4137
        %v4171 = vpop.f32.mrf.mxu0
        %v4172 = vadd.f32 %v4119, %v4171
        %v4173 = vpop.f32.mrf.mxu0
        %v4174 = vadd.f32 %v4119, %v4173
        %4175 = vmatmul.bf16.gmra.mxu0 %v4140
        %v4176 = vpop.f32.mrf.mxu0
        %v4177 = vadd.f32 %v4119, %v4176
        %v4178 = vpop.f32.mrf.mxu0
        %v4179 = vadd.f32 %v4119, %v4178
        %4180 = vmatmul.bf16.gmra.mxu0 %v4143
        %v4181 = vpop.f32.mrf.mxu0
        %v4182 = vadd.f32 %v4119, %v4181
        %v4183 = vpop.f32.mrf.mxu0
        %v4184 = vadd.f32 %v4119, %v4183
        %4185 = vmatmul.bf16.gmra.mxu0 %v4146
        %v4186 = vpop.f32.mrf.mxu0
        %v4187 = vadd.f32 %v4119, %v4186
        %v4188 = vpop.f32.mrf.mxu0
        %v4189 = vadd.f32 %v4119, %v4188
        %4190 = vmatmul.bf16.gmra.mxu0 %v4149
        %v4191 = vpop.f32.mrf.mxu0
        %v4192 = vadd.f32 %v4119, %v4191
        %v4193 = vpop.f32.mrf.mxu0
        %v4194 = vadd.f32 %v4119, %v4193
        %4195 = vmatmul.bf16.gmra.mxu0 %v4152
        %v4196 = vpop.f32.mrf.mxu0
        %v4197 = vadd.f32 %v4119, %v4196
        %v4198 = vpop.f32.mrf.mxu0
        %v4199 = vadd.f32 %v4119, %v4198
        %4200 = vmatmul.bf16.gmra.mxu0 %v4155
        %v4201 = vpop.f32.mrf.mxu0
        %v4202 = vadd.f32 %v4119, %v4201
        %v4203 = vpop.f32.mrf.mxu0
        %v4204 = vadd.f32 %v4119, %v4203
        %4205 = vdwg.mxu0
        %v4206 = vmax.f32 %v4167, 0.0
        %v4207 = vmax.f32 %v4169, 0.0
        %v4208 = vmax.f32 %v4172, 0.0
        %v4209 = vmax.f32 %v4174, 0.0
        %v4210 = vmax.f32 %v4177, 0.0
        %v4211 = vmax.f32 %v4179, 0.0
        %v4212 = vmax.f32 %v4182, 0.0
        %v4213 = vmax.f32 %v4184, 0.0
        %v4214 = vmax.f32 %v4187, 0.0
        %v4215 = vmax.f32 %v4189, 0.0
        %v4216 = vmax.f32 %v4192, 0.0
        %v4217 = vmax.f32 %v4194, 0.0
        %v4218 = vmax.f32 %v4197, 0.0
        %v4219 = vmax.f32 %v4199, 0.0
        %v4220 = vmax.f32 %v4202, 0.0
        %v4221 = vmax.f32 %v4204, 0.0
        %v4222 = vpack.c.bf16 %v4207, %v4206
        %v4223 = vpack.c.bf16 %v4209, %v4208
        %v4224 = vpack.c.bf16 %v4211, %v4210
        %v4225 = vpack.c.bf16 %v4213, %v4212
        %v4226 = vpack.c.bf16 %v4215, %v4214
        %v4227 = vpack.c.bf16 %v4217, %v4216
        %v4228 = vpack.c.bf16 %v4219, %v4218
        %v4229 = vpack.c.bf16 %v4221, %v4220
        %v4230 = vperm.slane %v468, 1
        %v4239 = vunpack.c.l.b16 %v458
        %v4240 = vunpack.c.l.b16 %v459
        %v4241 = vunpack.c.l.b16 %v460
        %v4242 = vunpack.c.l.b16 %v461
        %v4243 = vunpack.c.l.b16 %v462
        %v4244 = vunpack.c.l.b16 %v463
        %v4245 = vunpack.c.l.b16 %v464
        %v4246 = vunpack.c.l.b16 %v465
        %v4247 = vpack.c.b16 %v4240, %v4239
        %v4248 = vpack.c.b16 %v4242, %v4241
        %v4249 = vpack.c.b16 %v4244, %v4243
        %v4250 = vpack.c.b16 %v4246, %v4245
        %vm4255 = vcmask 523264
        %v4257 = vsel %vm4255, %v4222, 0
        %v4260 = vsel %vm4255, %v4223, 0
        %v4263 = vsel %vm4255, %v4224, 0
        %v4266 = vsel %vm4255, %v4225, 0
        %v4269 = vsel %vm4255, %v4226, 0
        %v4272 = vsel %vm4255, %v4227, 0
        %v4275 = vsel %vm4255, %v4228, 0
        %v4278 = vsel %vm4255, %v4229, 0
        %4280 = vmatpush.bf16.msra.mxu0 0
        %4281 = vmatpush.bf16.msra.mxu0 0
        %4282 = vmatpush.bf16.msra.mxu0 0
        %4283 = vmatpush.bf16.msra.mxu0 0
        %4284 = vmatpush.bf16.msra.mxu0 %v4250
        %4285 = vmatpush.bf16.msra.mxu0 %v4249
        %4286 = vmatpush.bf16.msra.mxu0 %v4248
        %4287 = vmatpush.bf16.msra.mxu0 %v4247
        %4288 = vmatmul.bf16.gmra.mxu0 %v4257
        %v4289 = vpop.f32.mrf.mxu0
        %v4290 = vadd.f32 %v4230, %v4289
        %v4291 = vpop.f32.mrf.mxu0
        %v4292 = vadd.f32 %v4230, %v4291
        %4293 = vmatmul.bf16.gmra.mxu0 %v4260
        %v4294 = vpop.f32.mrf.mxu0
        %v4295 = vadd.f32 %v4230, %v4294
        %v4296 = vpop.f32.mrf.mxu0
        %v4297 = vadd.f32 %v4230, %v4296
        %4298 = vmatmul.bf16.gmra.mxu0 %v4263
        %v4299 = vpop.f32.mrf.mxu0
        %v4300 = vadd.f32 %v4230, %v4299
        %v4301 = vpop.f32.mrf.mxu0
        %v4302 = vadd.f32 %v4230, %v4301
        %4303 = vmatmul.bf16.gmra.mxu0 %v4266
        %v4304 = vpop.f32.mrf.mxu0
        %v4305 = vadd.f32 %v4230, %v4304
        %v4306 = vpop.f32.mrf.mxu0
        %v4307 = vadd.f32 %v4230, %v4306
        %4308 = vmatmul.bf16.gmra.mxu0 %v4269
        %v4309 = vpop.f32.mrf.mxu0
        %v4310 = vadd.f32 %v4230, %v4309
        %v4311 = vpop.f32.mrf.mxu0
        %v4312 = vadd.f32 %v4230, %v4311
        %4313 = vmatmul.bf16.gmra.mxu0 %v4272
        %v4314 = vpop.f32.mrf.mxu0
        %v4315 = vadd.f32 %v4230, %v4314
        %v4316 = vpop.f32.mrf.mxu0
        %v4317 = vadd.f32 %v4230, %v4316
        %4318 = vmatmul.bf16.gmra.mxu0 %v4275
        %v4319 = vpop.f32.mrf.mxu0
        %v4320 = vadd.f32 %v4230, %v4319
        %v4321 = vpop.f32.mrf.mxu0
        %v4322 = vadd.f32 %v4230, %v4321
        %4323 = vmatmul.bf16.gmra.mxu0 %v4278
        %v4324 = vpop.f32.mrf.mxu0
        %v4325 = vadd.f32 %v4230, %v4324
        %v4326 = vpop.f32.mrf.mxu0
        %v4327 = vadd.f32 %v4230, %v4326
        %4328 = vdwg.mxu0
        %v4329 = vadd.f32 %v4094, %v4290
        %v4330 = vadd.f32 %v4095, %v4292
        %v4331 = vadd.f32 %v4096, %v4295
        %v4332 = vadd.f32 %v4097, %v4297
        %v4333 = vadd.f32 %v4098, %v4300
        %v4334 = vadd.f32 %v4099, %v4302
        %v4335 = vadd.f32 %v4100, %v4305
        %v4336 = vadd.f32 %v4101, %v4307
        %v4337 = vadd.f32 %v4102, %v4310
        %v4338 = vadd.f32 %v4103, %v4312
        %v4339 = vadd.f32 %v4104, %v4315
        %v4340 = vadd.f32 %v4105, %v4317
        %v4341 = vadd.f32 %v4106, %v4320
        %v4342 = vadd.f32 %v4107, %v4322
        %v4343 = vadd.f32 %v4108, %v4325
        %v4344 = vadd.f32 %v4109, %v4327
        %v4345 = vsel %vm493, %v4329, 0.0
        %4346 = vadd.xlane.f32.xlu0 %v4345
        %v4347 = vpop.xlane.xlu0 %4346
        %v4348 = vsel %vm493, %v4330, 0.0
        %4349 = vadd.xlane.f32.xlu0 %v4348
        %v4350 = vpop.xlane.xlu0 %4349
        %v4351 = vsel %vm493, %v4331, 0.0
        %4352 = vadd.xlane.f32.xlu0 %v4351
        %v4353 = vpop.xlane.xlu0 %4352
        %v4354 = vsel %vm493, %v4332, 0.0
        %4355 = vadd.xlane.f32.xlu0 %v4354
        %v4356 = vpop.xlane.xlu0 %4355
        %v4357 = vsel %vm493, %v4333, 0.0
        %4358 = vadd.xlane.f32.xlu0 %v4357
        %v4359 = vpop.xlane.xlu0 %4358
        %v4360 = vsel %vm493, %v4334, 0.0
        %4361 = vadd.xlane.f32.xlu0 %v4360
        %v4362 = vpop.xlane.xlu0 %4361
        %v4363 = vsel %vm493, %v4335, 0.0
        %4364 = vadd.xlane.f32.xlu0 %v4363
        %v4365 = vpop.xlane.xlu0 %4364
        %v4366 = vsel %vm493, %v4336, 0.0
        %4367 = vadd.xlane.f32.xlu0 %v4366
        %v4368 = vpop.xlane.xlu0 %4367
        %v4369 = vsel %vm493, %v4337, 0.0
        %4370 = vadd.xlane.f32.xlu0 %v4369
        %v4371 = vpop.xlane.xlu0 %4370
        %v4372 = vsel %vm493, %v4338, 0.0
        %4373 = vadd.xlane.f32.xlu0 %v4372
        %v4374 = vpop.xlane.xlu0 %4373
        %v4375 = vsel %vm493, %v4339, 0.0
        %4376 = vadd.xlane.f32.xlu0 %v4375
        %v4377 = vpop.xlane.xlu0 %4376
        %v4378 = vsel %vm493, %v4340, 0.0
        %4379 = vadd.xlane.f32.xlu0 %v4378
        %v4380 = vpop.xlane.xlu0 %4379
        %v4381 = vsel %vm493, %v4341, 0.0
        %4382 = vadd.xlane.f32.xlu0 %v4381
        %v4383 = vpop.xlane.xlu0 %4382
        %v4384 = vsel %vm493, %v4342, 0.0
        %4385 = vadd.xlane.f32.xlu0 %v4384
        %v4386 = vpop.xlane.xlu0 %4385
        %v4387 = vsel %vm493, %v4343, 0.0
        %4388 = vadd.xlane.f32.xlu0 %v4387
        %v4389 = vpop.xlane.xlu0 %4388
        %v4390 = vsel %vm493, %v4344, 0.0
        %4391 = vadd.xlane.f32.xlu0 %v4390
        %v4392 = vpop.xlane.xlu0 %4391
        %v4393 = vmul.f32 %v4347, %v3771
        %v4394 = vmul.f32 %v4350, %v3771
        %v4395 = vmul.f32 %v4353, %v3771
        %v4396 = vmul.f32 %v4356, %v3771
        %v4397 = vmul.f32 %v4359, %v3771
        %v4398 = vmul.f32 %v4362, %v3771
        %v4399 = vmul.f32 %v4365, %v3771
        %v4400 = vmul.f32 %v4368, %v3771
        %v4401 = vmul.f32 %v4371, %v3771
        %v4402 = vmul.f32 %v4374, %v3771
        %v4403 = vmul.f32 %v4377, %v3771
        %v4404 = vmul.f32 %v4380, %v3771
        %v4405 = vmul.f32 %v4383, %v3771
        %v4406 = vmul.f32 %v4386, %v3771
        %v4407 = vmul.f32 %v4389, %v3771
        %v4408 = vmul.f32 %v4392, %v3771
        %v4409 = vsub.f32 %v4329, %v4393
        %v4410 = vsub.f32 %v4330, %v4394
        %v4411 = vsub.f32 %v4331, %v4395
        %v4412 = vsub.f32 %v4332, %v4396
        %v4413 = vsub.f32 %v4333, %v4397
        %v4414 = vsub.f32 %v4334, %v4398
        %v4415 = vsub.f32 %v4335, %v4399
        %v4416 = vsub.f32 %v4336, %v4400
        %v4417 = vsub.f32 %v4337, %v4401
        %v4418 = vsub.f32 %v4338, %v4402
        %v4419 = vsub.f32 %v4339, %v4403
        %v4420 = vsub.f32 %v4340, %v4404
        %v4421 = vsub.f32 %v4341, %v4405
        %v4422 = vsub.f32 %v4342, %v4406
        %v4423 = vsub.f32 %v4343, %v4407
        %v4424 = vsub.f32 %v4344, %v4408
        %v4425 = vmul.f32 %v4409, %v4409
        %v4426 = vmul.f32 %v4410, %v4410
        %v4427 = vmul.f32 %v4411, %v4411
        %v4428 = vmul.f32 %v4412, %v4412
        %v4429 = vmul.f32 %v4413, %v4413
        %v4430 = vmul.f32 %v4414, %v4414
        %v4431 = vmul.f32 %v4415, %v4415
        %v4432 = vmul.f32 %v4416, %v4416
        %v4433 = vmul.f32 %v4417, %v4417
        %v4434 = vmul.f32 %v4418, %v4418
        %v4435 = vmul.f32 %v4419, %v4419
        %v4436 = vmul.f32 %v4420, %v4420
        %v4437 = vmul.f32 %v4421, %v4421
        %v4438 = vmul.f32 %v4422, %v4422
        %v4439 = vmul.f32 %v4423, %v4423
        %v4440 = vmul.f32 %v4424, %v4424
        %v4441 = vsel %vm493, %v4425, 0.0
        %4442 = vadd.xlane.f32.xlu0 %v4441
        %v4443 = vpop.xlane.xlu0 %4442
        %v4444 = vsel %vm493, %v4426, 0.0
        %4445 = vadd.xlane.f32.xlu0 %v4444
        %v4446 = vpop.xlane.xlu0 %4445
        %v4447 = vsel %vm493, %v4427, 0.0
        %4448 = vadd.xlane.f32.xlu0 %v4447
        %v4449 = vpop.xlane.xlu0 %4448
        %v4450 = vsel %vm493, %v4428, 0.0
        %4451 = vadd.xlane.f32.xlu0 %v4450
        %v4452 = vpop.xlane.xlu0 %4451
        %v4453 = vsel %vm493, %v4429, 0.0
        %4454 = vadd.xlane.f32.xlu0 %v4453
        %v4455 = vpop.xlane.xlu0 %4454
        %v4456 = vsel %vm493, %v4430, 0.0
        %4457 = vadd.xlane.f32.xlu0 %v4456
        %v4458 = vpop.xlane.xlu0 %4457
        %v4459 = vsel %vm493, %v4431, 0.0
        %4460 = vadd.xlane.f32.xlu0 %v4459
        %v4461 = vpop.xlane.xlu0 %4460
        %v4462 = vsel %vm493, %v4432, 0.0
        %4463 = vadd.xlane.f32.xlu0 %v4462
        %v4464 = vpop.xlane.xlu0 %4463
        %v4465 = vsel %vm493, %v4433, 0.0
        %4466 = vadd.xlane.f32.xlu0 %v4465
        %v4467 = vpop.xlane.xlu0 %4466
        %v4468 = vsel %vm493, %v4434, 0.0
        %4469 = vadd.xlane.f32.xlu0 %v4468
        %v4470 = vpop.xlane.xlu0 %4469
        %v4471 = vsel %vm493, %v4435, 0.0
        %4472 = vadd.xlane.f32.xlu0 %v4471
        %v4473 = vpop.xlane.xlu0 %4472
        %v4474 = vsel %vm493, %v4436, 0.0
        %4475 = vadd.xlane.f32.xlu0 %v4474
        %v4476 = vpop.xlane.xlu0 %4475
        %v4477 = vsel %vm493, %v4437, 0.0
        %4478 = vadd.xlane.f32.xlu0 %v4477
        %v4479 = vpop.xlane.xlu0 %4478
        %v4480 = vsel %vm493, %v4438, 0.0
        %4481 = vadd.xlane.f32.xlu0 %v4480
        %v4482 = vpop.xlane.xlu0 %4481
        %v4483 = vsel %vm493, %v4439, 0.0
        %4484 = vadd.xlane.f32.xlu0 %v4483
        %v4485 = vpop.xlane.xlu0 %4484
        %v4486 = vsel %vm493, %v4440, 0.0
        %4487 = vadd.xlane.f32.xlu0 %v4486
        %v4488 = vpop.xlane.xlu0 %4487
        %v4489 = vmul.f32 %v4443, %v3771
        %v4490 = vmul.f32 %v4446, %v3771
        %v4491 = vmul.f32 %v4449, %v3771
        %v4492 = vmul.f32 %v4452, %v3771
        %v4493 = vmul.f32 %v4455, %v3771
        %v4494 = vmul.f32 %v4458, %v3771
        %v4495 = vmul.f32 %v4461, %v3771
        %v4496 = vmul.f32 %v4464, %v3771
        %v4497 = vmul.f32 %v4467, %v3771
        %v4498 = vmul.f32 %v4470, %v3771
        %v4499 = vmul.f32 %v4473, %v3771
        %v4500 = vmul.f32 %v4476, %v3771
        %v4501 = vmul.f32 %v4479, %v3771
        %v4502 = vmul.f32 %v4482, %v3771
        %v4503 = vmul.f32 %v4485, %v3771
        %v4504 = vmul.f32 %v4488, %v3771
        %v4505 = vadd.f32 %v4489, 1e-05
        %v4506 = vadd.f32 %v4490, 1e-05
        %v4507 = vadd.f32 %v4491, 1e-05
        %v4508 = vadd.f32 %v4492, 1e-05
        %v4509 = vadd.f32 %v4493, 1e-05
        %v4510 = vadd.f32 %v4494, 1e-05
        %v4511 = vadd.f32 %v4495, 1e-05
        %v4512 = vadd.f32 %v4496, 1e-05
        %v4513 = vadd.f32 %v4497, 1e-05
        %v4514 = vadd.f32 %v4498, 1e-05
        %v4515 = vadd.f32 %v4499, 1e-05
        %v4516 = vadd.f32 %v4500, 1e-05
        %v4517 = vadd.f32 %v4501, 1e-05
        %v4518 = vadd.f32 %v4502, 1e-05
        %v4519 = vadd.f32 %v4503, 1e-05
        %v4520 = vadd.f32 %v4504, 1e-05
        %v4521 = vrsqrt.pop %v4505
        %v4522 = vmul.f32 %v4521, %v4505
        %v4523 = vmul.f32 %v4522, %v4521
        %v4524 = vmul.f32 0.5, %v4523
        %v4525 = vsub.f32 1.5, %v4524
        %v4526 = vmul.f32 %v4521, %v4525
        %vm4527 = vweird.f32 %v4505
        %vm4528 = vweird.f32 %v4521
        %vm4529 = vmor %vm4527, %vm4528
        %v4530 = vsel %vm4529, %v4521, %v4526
        %v4531 = vrsqrt.pop %v4506
        %v4532 = vmul.f32 %v4531, %v4506
        %v4533 = vmul.f32 %v4532, %v4531
        %v4534 = vmul.f32 0.5, %v4533
        %v4535 = vsub.f32 1.5, %v4534
        %v4536 = vmul.f32 %v4531, %v4535
        %vm4537 = vweird.f32 %v4506
        %vm4538 = vweird.f32 %v4531
        %vm4539 = vmor %vm4537, %vm4538
        %v4540 = vsel %vm4539, %v4531, %v4536
        %v4541 = vrsqrt.pop %v4507
        %v4542 = vmul.f32 %v4541, %v4507
        %v4543 = vmul.f32 %v4542, %v4541
        %v4544 = vmul.f32 0.5, %v4543
        %v4545 = vsub.f32 1.5, %v4544
        %v4546 = vmul.f32 %v4541, %v4545
        %vm4547 = vweird.f32 %v4507
        %vm4548 = vweird.f32 %v4541
        %vm4549 = vmor %vm4547, %vm4548
        %v4550 = vsel %vm4549, %v4541, %v4546
        %v4551 = vrsqrt.pop %v4508
        %v4552 = vmul.f32 %v4551, %v4508
        %v4553 = vmul.f32 %v4552, %v4551
        %v4554 = vmul.f32 0.5, %v4553
        %v4555 = vsub.f32 1.5, %v4554
        %v4556 = vmul.f32 %v4551, %v4555
        %vm4557 = vweird.f32 %v4508
        %vm4558 = vweird.f32 %v4551
        %vm4559 = vmor %vm4557, %vm4558
        %v4560 = vsel %vm4559, %v4551, %v4556
        %v4561 = vrsqrt.pop %v4509
        %v4562 = vmul.f32 %v4561, %v4509
        %v4563 = vmul.f32 %v4562, %v4561
        %v4564 = vmul.f32 0.5, %v4563
        %v4565 = vsub.f32 1.5, %v4564
        %v4566 = vmul.f32 %v4561, %v4565
        %vm4567 = vweird.f32 %v4509
        %vm4568 = vweird.f32 %v4561
        %vm4569 = vmor %vm4567, %vm4568
        %v4570 = vsel %vm4569, %v4561, %v4566
        %v4571 = vrsqrt.pop %v4510
        %v4572 = vmul.f32 %v4571, %v4510
        %v4573 = vmul.f32 %v4572, %v4571
        %v4574 = vmul.f32 0.5, %v4573
        %v4575 = vsub.f32 1.5, %v4574
        %v4576 = vmul.f32 %v4571, %v4575
        %vm4577 = vweird.f32 %v4510
        %vm4578 = vweird.f32 %v4571
        %vm4579 = vmor %vm4577, %vm4578
        %v4580 = vsel %vm4579, %v4571, %v4576
        %v4581 = vrsqrt.pop %v4511
        %v4582 = vmul.f32 %v4581, %v4511
        %v4583 = vmul.f32 %v4582, %v4581
        %v4584 = vmul.f32 0.5, %v4583
        %v4585 = vsub.f32 1.5, %v4584
        %v4586 = vmul.f32 %v4581, %v4585
        %vm4587 = vweird.f32 %v4511
        %vm4588 = vweird.f32 %v4581
        %vm4589 = vmor %vm4587, %vm4588
        %v4590 = vsel %vm4589, %v4581, %v4586
        %v4591 = vrsqrt.pop %v4512
        %v4592 = vmul.f32 %v4591, %v4512
        %v4593 = vmul.f32 %v4592, %v4591
        %v4594 = vmul.f32 0.5, %v4593
        %v4595 = vsub.f32 1.5, %v4594
        %v4596 = vmul.f32 %v4591, %v4595
        %vm4597 = vweird.f32 %v4512
        %vm4598 = vweird.f32 %v4591
        %vm4599 = vmor %vm4597, %vm4598
        %v4600 = vsel %vm4599, %v4591, %v4596
        %v4601 = vrsqrt.pop %v4513
        %v4602 = vmul.f32 %v4601, %v4513
        %v4603 = vmul.f32 %v4602, %v4601
        %v4604 = vmul.f32 0.5, %v4603
        %v4605 = vsub.f32 1.5, %v4604
        %v4606 = vmul.f32 %v4601, %v4605
        %vm4607 = vweird.f32 %v4513
        %vm4608 = vweird.f32 %v4601
        %vm4609 = vmor %vm4607, %vm4608
        %v4610 = vsel %vm4609, %v4601, %v4606
        %v4611 = vrsqrt.pop %v4514
        %v4612 = vmul.f32 %v4611, %v4514
        %v4613 = vmul.f32 %v4612, %v4611
        %v4614 = vmul.f32 0.5, %v4613
        %v4615 = vsub.f32 1.5, %v4614
        %v4616 = vmul.f32 %v4611, %v4615
        %vm4617 = vweird.f32 %v4514
        %vm4618 = vweird.f32 %v4611
        %vm4619 = vmor %vm4617, %vm4618
        %v4620 = vsel %vm4619, %v4611, %v4616
        %v4621 = vrsqrt.pop %v4515
        %v4622 = vmul.f32 %v4621, %v4515
        %v4623 = vmul.f32 %v4622, %v4621
        %v4624 = vmul.f32 0.5, %v4623
        %v4625 = vsub.f32 1.5, %v4624
        %v4626 = vmul.f32 %v4621, %v4625
        %vm4627 = vweird.f32 %v4515
        %vm4628 = vweird.f32 %v4621
        %vm4629 = vmor %vm4627, %vm4628
        %v4630 = vsel %vm4629, %v4621, %v4626
        %v4631 = vrsqrt.pop %v4516
        %v4632 = vmul.f32 %v4631, %v4516
        %v4633 = vmul.f32 %v4632, %v4631
        %v4634 = vmul.f32 0.5, %v4633
        %v4635 = vsub.f32 1.5, %v4634
        %v4636 = vmul.f32 %v4631, %v4635
        %vm4637 = vweird.f32 %v4516
        %vm4638 = vweird.f32 %v4631
        %vm4639 = vmor %vm4637, %vm4638
        %v4640 = vsel %vm4639, %v4631, %v4636
        %v4641 = vrsqrt.pop %v4517
        %v4642 = vmul.f32 %v4641, %v4517
        %v4643 = vmul.f32 %v4642, %v4641
        %v4644 = vmul.f32 0.5, %v4643
        %v4645 = vsub.f32 1.5, %v4644
        %v4646 = vmul.f32 %v4641, %v4645
        %vm4647 = vweird.f32 %v4517
        %vm4648 = vweird.f32 %v4641
        %vm4649 = vmor %vm4647, %vm4648
        %v4650 = vsel %vm4649, %v4641, %v4646
        %v4651 = vrsqrt.pop %v4518
        %v4652 = vmul.f32 %v4651, %v4518
        %v4653 = vmul.f32 %v4652, %v4651
        %v4654 = vmul.f32 0.5, %v4653
        %v4655 = vsub.f32 1.5, %v4654
        %v4656 = vmul.f32 %v4651, %v4655
        %vm4657 = vweird.f32 %v4518
        %vm4658 = vweird.f32 %v4651
        %vm4659 = vmor %vm4657, %vm4658
        %v4660 = vsel %vm4659, %v4651, %v4656
        %v4661 = vrsqrt.pop %v4519
        %v4662 = vmul.f32 %v4661, %v4519
        %v4663 = vmul.f32 %v4662, %v4661
        %v4664 = vmul.f32 0.5, %v4663
        %v4665 = vsub.f32 1.5, %v4664
        %v4666 = vmul.f32 %v4661, %v4665
        %vm4667 = vweird.f32 %v4519
        %vm4668 = vweird.f32 %v4661
        %vm4669 = vmor %vm4667, %vm4668
        %v4670 = vsel %vm4669, %v4661, %v4666
        %v4671 = vrsqrt.pop %v4520
        %v4672 = vmul.f32 %v4671, %v4520
        %v4673 = vmul.f32 %v4672, %v4671
        %v4674 = vmul.f32 0.5, %v4673
        %v4675 = vsub.f32 1.5, %v4674
        %v4676 = vmul.f32 %v4671, %v4675
        %vm4677 = vweird.f32 %v4520
        %vm4678 = vweird.f32 %v4671
        %vm4679 = vmor %vm4677, %vm4678
        %v4680 = vsel %vm4679, %v4671, %v4676
        %v4681 = vmul.f32 %v4409, %v4530
        %v4682 = vmul.f32 %v4410, %v4540
        %v4683 = vmul.f32 %v4411, %v4550
        %v4684 = vmul.f32 %v4412, %v4560
        %v4685 = vmul.f32 %v4413, %v4570
        %v4686 = vmul.f32 %v4414, %v4580
        %v4687 = vmul.f32 %v4415, %v4590
        %v4688 = vmul.f32 %v4416, %v4600
        %v4689 = vmul.f32 %v4417, %v4610
        %v4690 = vmul.f32 %v4418, %v4620
        %v4691 = vmul.f32 %v4419, %v4630
        %v4692 = vmul.f32 %v4420, %v4640
        %v4693 = vmul.f32 %v4421, %v4650
        %v4694 = vmul.f32 %v4422, %v4660
        %v4695 = vmul.f32 %v4423, %v4670
        %v4696 = vmul.f32 %v4424, %v4680
        %v4697 = vperm.slane %v468, 4
        %v4698 = vmul.f32 %v4681, %v4697
        %v4699 = vmul.f32 %v4682, %v4697
        %v4700 = vmul.f32 %v4683, %v4697
        %v4701 = vmul.f32 %v4684, %v4697
        %v4702 = vmul.f32 %v4685, %v4697
        %v4703 = vmul.f32 %v4686, %v4697
        %v4704 = vmul.f32 %v4687, %v4697
        %v4705 = vmul.f32 %v4688, %v4697
        %v4706 = vmul.f32 %v4689, %v4697
        %v4707 = vmul.f32 %v4690, %v4697
        %v4708 = vmul.f32 %v4691, %v4697
        %v4709 = vmul.f32 %v4692, %v4697
        %v4710 = vmul.f32 %v4693, %v4697
        %v4711 = vmul.f32 %v4694, %v4697
        %v4712 = vmul.f32 %v4695, %v4697
        %v4713 = vmul.f32 %v4696, %v4697
        %v4714 = vperm.slane %v468, 5
        %v4715 = vadd.f32 %v4698, %v4714
        %v4716 = vadd.f32 %v4699, %v4714
        %v4717 = vadd.f32 %v4700, %v4714
        %v4718 = vadd.f32 %v4701, %v4714
        %v4719 = vadd.f32 %v4702, %v4714
        %v4720 = vadd.f32 %v4703, %v4714
        %v4721 = vadd.f32 %v4704, %v4714
        %v4722 = vadd.f32 %v4705, %v4714
        %v4723 = vadd.f32 %v4706, %v4714
        %v4724 = vadd.f32 %v4707, %v4714
        %v4725 = vadd.f32 %v4708, %v4714
        %v4726 = vadd.f32 %v4709, %v4714
        %v4727 = vadd.f32 %v4710, %v4714
        %v4728 = vadd.f32 %v4711, %v4714
        %v4729 = vadd.f32 %v4712, %v4714
        %v4730 = vadd.f32 %v4713, %v4714
        %s4731 = scalar_lea.vmem %s2, 16
        %v4732 = vld [vmem:[%s4731] sm:$0xf]
        %v4733 = vld [vmem:[%s4731 + $0x4] sm:$0xf]
        %v4734 = vld [vmem:[%s4731 + $0x8] sm:$0xf]
        %v4735 = vld [vmem:[%s4731 + $0xc] sm:$0xf]
        %s4736 = scalar_lea.vmem %s3, 16
        %v4737 = vld [vmem:[%s4736] sm:$0xf]
        %v4738 = vld [vmem:[%s4736 + $0x4] sm:$0xf]
        %v4739 = vld [vmem:[%s4736 + $0x8] sm:$0xf]
        %v4740 = vld [vmem:[%s4736 + $0xc] sm:$0xf]
        %s4741 = scalar_lea.vmem %s4, 16
        %v4742 = vld [vmem:[%s4741] sm:$0xf]
        %v4743 = vld [vmem:[%s4741 + $0x4] sm:$0xf]
        %v4744 = vld [vmem:[%s4741 + $0x8] sm:$0xf]
        %v4745 = vld [vmem:[%s4741 + $0xc] sm:$0xf]
        %s4746 = scalar_lea.vmem %s5, 32
        %v4747 = vld [vmem:[%s4746] sm:$0xf]
        %v4748 = vld [vmem:[%s4746 + $0x4] sm:$0xf]
        %v4749 = vld [vmem:[%s4746 + $0x8] sm:$0xf]
        %v4750 = vld [vmem:[%s4746 + $0xc] sm:$0xf]
        %v4751 = vld [vmem:[%s4746 + $0x10] sm:$0xf]
        %v4752 = vld [vmem:[%s4746 + $0x14] sm:$0xf]
        %v4753 = vld [vmem:[%s4746 + $0x18] sm:$0xf]
        %v4754 = vld [vmem:[%s4746 + $0x1c] sm:$0xf]
        %s4755 = scalar_lea.vmem %s6, 1
        %v4756 = vld [vmem:[%s4755] sm:$0x1]
        %s4757 = scalar_lea.vmem %s7, 1
        %v4758 = vld [vmem:[%s4757] sm:$0x1]
        %s4759 = scalar_lea.vmem %s8, 8
        %v4760 = vld [vmem:[%s4759] sm:$0x3f]
        %s4761 = scalar_lea.vmem %s374, 1 [#allocation2]
        %v4762 = vld [vmem:[%s4761] sm:$0x1]
        %v4763 = vpack.c.bf16 %v4716, %v4715
        %v4764 = vpack.c.bf16 %v4718, %v4717
        %v4765 = vpack.c.bf16 %v4720, %v4719
        %v4766 = vpack.c.bf16 %v4722, %v4721
        %v4767 = vpack.c.bf16 %v4724, %v4723
        %v4768 = vpack.c.bf16 %v4726, %v4725
        %v4769 = vpack.c.bf16 %v4728, %v4727
        %v4770 = vpack.c.bf16 %v4730, %v4729
        %v4772 = vperm.slane %v4756, 0
        %v4778 = vunpack.c.l.b16 %v4732
        %v4779 = vunpack.c.l.b16 %v4733
        %v4780 = vunpack.c.l.b16 %v4734
        %v4781 = vunpack.c.l.b16 %v4735
        %v4782 = vpack.c.b16 %v4779, %v4778
        %v4783 = vpack.c.b16 %v4781, %v4780
        %v4787 = vsel %vm493, %v4763, 0
        %v4790 = vsel %vm493, %v4764, 0
        %v4793 = vsel %vm493, %v4765, 0
        %v4796 = vsel %vm493, %v4766, 0
        %v4799 = vsel %vm493, %v4767, 0
        %v4802 = vsel %vm493, %v4768, 0
        %v4805 = vsel %vm493, %v4769, 0
        %v4808 = vsel %vm493, %v4770, 0
        %4810 = vmatpush.bf16.msra.mxu0 0
        %4811 = vmatpush.bf16.msra.mxu0 0
        %4812 = vmatpush.bf16.msra.mxu0 0
        %4813 = vmatpush.bf16.msra.mxu0 0
        %4814 = vmatpush.bf16.msra.mxu0 0
        %4815 = vmatpush.bf16.msra.mxu0 0
        %4816 = vmatpush.bf16.msra.mxu0 %v4783
        %4817 = vmatpush.bf16.msra.mxu0 %v4782
        %4818 = vmatmul.bf16.gmra.mxu0 %v4787
        %v4819 = vpop.f32.mrf.mxu0
        %v4820 = vadd.f32 %v4772, %v4819
        %v4821 = vpop.f32.mrf.mxu0
        %v4822 = vadd.f32 %v4772, %v4821
        %4823 = vmatmul.bf16.gmra.mxu0 %v4790
        %v4824 = vpop.f32.mrf.mxu0
        %v4825 = vadd.f32 %v4772, %v4824
        %v4826 = vpop.f32.mrf.mxu0
        %v4827 = vadd.f32 %v4772, %v4826
        %4828 = vmatmul.bf16.gmra.mxu0 %v4793
        %v4829 = vpop.f32.mrf.mxu0
        %v4830 = vadd.f32 %v4772, %v4829
        %v4831 = vpop.f32.mrf.mxu0
        %v4832 = vadd.f32 %v4772, %v4831
        %4833 = vmatmul.bf16.gmra.mxu0 %v4796
        %v4834 = vpop.f32.mrf.mxu0
        %v4835 = vadd.f32 %v4772, %v4834
        %v4836 = vpop.f32.mrf.mxu0
        %v4837 = vadd.f32 %v4772, %v4836
        %4838 = vmatmul.bf16.gmra.mxu0 %v4799
        %v4839 = vpop.f32.mrf.mxu0
        %v4840 = vadd.f32 %v4772, %v4839
        %v4841 = vpop.f32.mrf.mxu0
        %v4842 = vadd.f32 %v4772, %v4841
        %4843 = vmatmul.bf16.gmra.mxu0 %v4802
        %v4844 = vpop.f32.mrf.mxu0
        %v4845 = vadd.f32 %v4772, %v4844
        %v4846 = vpop.f32.mrf.mxu0
        %v4847 = vadd.f32 %v4772, %v4846
        %4848 = vmatmul.bf16.gmra.mxu0 %v4805
        %v4849 = vpop.f32.mrf.mxu0
        %v4850 = vadd.f32 %v4772, %v4849
        %v4851 = vpop.f32.mrf.mxu0
        %v4852 = vadd.f32 %v4772, %v4851
        %4853 = vmatmul.bf16.gmra.mxu0 %v4808
        %v4854 = vpop.f32.mrf.mxu0
        %v4855 = vadd.f32 %v4772, %v4854
        %v4856 = vpop.f32.mrf.mxu0
        %v4857 = vadd.f32 %v4772, %v4856
        %4858 = vdwg.mxu0
        %v4859 = vmul.f32 %v4820, 0.35355338
        %v4860 = vmul.f32 %v4822, 0.35355338
        %v4861 = vmul.f32 %v4825, 0.35355338
        %v4862 = vmul.f32 %v4827, 0.35355338
        %v4863 = vmul.f32 %v4830, 0.35355338
        %v4864 = vmul.f32 %v4832, 0.35355338
        %v4865 = vmul.f32 %v4835, 0.35355338
        %v4866 = vmul.f32 %v4837, 0.35355338
        %v4867 = vmul.f32 %v4840, 0.35355338
        %v4868 = vmul.f32 %v4842, 0.35355338
        %v4869 = vmul.f32 %v4845, 0.35355338
        %v4870 = vmul.f32 %v4847, 0.35355338
        %v4871 = vmul.f32 %v4850, 0.35355338
        %v4872 = vmul.f32 %v4852, 0.35355338
        %v4873 = vmul.f32 %v4855, 0.35355338
        %v4874 = vmul.f32 %v4857, 0.35355338
        %v4875 = vpack.c.bf16 %v4859, %v4859
        %v4876 = vpack.c.bf16 %v4860, %v4860
        %v4877 = vpack.c.bf16 %v4861, %v4861
        %v4878 = vpack.c.bf16 %v4862, %v4862
        %v4879 = vpack.c.bf16 %v4863, %v4863
        %v4880 = vpack.c.bf16 %v4864, %v4864
        %v4881 = vpack.c.bf16 %v4865, %v4865
        %v4882 = vpack.c.bf16 %v4866, %v4866
        %v4883 = vpack.c.bf16 %v4867, %v4867
        %v4884 = vpack.c.bf16 %v4868, %v4868
        %v4885 = vpack.c.bf16 %v4869, %v4869
        %v4886 = vpack.c.bf16 %v4870, %v4870
        %v4887 = vpack.c.bf16 %v4871, %v4871
        %v4888 = vpack.c.bf16 %v4872, %v4872
        %v4889 = vpack.c.bf16 %v4873, %v4873
        %v4890 = vpack.c.bf16 %v4874, %v4874
        %v4891 = vpack.c.bf16 %v4820, %v4820
        %v4892 = vpack.c.bf16 %v4822, %v4822
        %v4893 = vpack.c.bf16 %v4825, %v4825
        %v4894 = vpack.c.bf16 %v4827, %v4827
        %v4895 = vpack.c.bf16 %v4830, %v4830
        %v4896 = vpack.c.bf16 %v4832, %v4832
        %v4897 = vpack.c.bf16 %v4835, %v4835
        %v4898 = vpack.c.bf16 %v4837, %v4837
        %v4899 = vpack.c.bf16 %v4840, %v4840
        %v4900 = vpack.c.bf16 %v4842, %v4842
        %v4901 = vpack.c.bf16 %v4845, %v4845
        %v4902 = vpack.c.bf16 %v4847, %v4847
        %v4903 = vpack.c.bf16 %v4850, %v4850
        %v4904 = vpack.c.bf16 %v4852, %v4852
        %v4905 = vpack.c.bf16 %v4855, %v4855
        %v4906 = vpack.c.bf16 %v4857, %v4857
        %v4908 = vperm.slane %v4762, 0
        %v4926 = vunpack.c.l.b16 %v4875
        %v4927 = vunpack.c.l.b16 %v4876
        %v4928 = vunpack.c.l.b16 %v4877
        %v4929 = vunpack.c.l.b16 %v4878
        %v4930 = vunpack.c.l.b16 %v4879
        %v4931 = vunpack.c.l.b16 %v4880
        %v4932 = vunpack.c.l.b16 %v4881
        %v4933 = vunpack.c.l.b16 %v4882
        %v4934 = vunpack.c.l.b16 %v4883
        %v4935 = vunpack.c.l.b16 %v4884
        %v4936 = vunpack.c.l.b16 %v4885
        %v4937 = vunpack.c.l.b16 %v4886
        %v4938 = vunpack.c.l.b16 %v4887
        %v4939 = vunpack.c.l.b16 %v4888
        %v4940 = vunpack.c.l.b16 %v4889
        %v4941 = vunpack.c.l.b16 %v4890
        %v4942 = vpack.c.b16 %v4927, %v4926
        %v4943 = vpack.c.b16 %v4929, %v4928
        %v4944 = vpack.c.b16 %v4931, %v4930
        %v4945 = vpack.c.b16 %v4933, %v4932
        %v4946 = vpack.c.b16 %v4935, %v4934
        %v4947 = vpack.c.b16 %v4937, %v4936
        %v4948 = vpack.c.b16 %v4939, %v4938
        %v4949 = vpack.c.b16 %v4941, %v4940
        %v4966 = vunpack.c.l.b16 %v4891
        %v4967 = vunpack.c.l.b16 %v4892
        %v4968 = vunpack.c.l.b16 %v4893
        %v4969 = vunpack.c.l.b16 %v4894
        %v4970 = vunpack.c.l.b16 %v4895
        %v4971 = vunpack.c.l.b16 %v4896
        %v4972 = vunpack.c.l.b16 %v4897
        %v4973 = vunpack.c.l.b16 %v4898
        %v4974 = vunpack.c.l.b16 %v4899
        %v4975 = vunpack.c.l.b16 %v4900
        %v4976 = vunpack.c.l.b16 %v4901
        %v4977 = vunpack.c.l.b16 %v4902
        %v4978 = vunpack.c.l.b16 %v4903
        %v4979 = vunpack.c.l.b16 %v4904
        %v4980 = vunpack.c.l.b16 %v4905
        %v4981 = vunpack.c.l.b16 %v4906
        %v4982 = vpack.c.b16 %v4967, %v4966
        %v4983 = vpack.c.b16 %v4969, %v4968
        %v4984 = vpack.c.b16 %v4971, %v4970
        %v4985 = vpack.c.b16 %v4973, %v4972
        %v4986 = vpack.c.b16 %v4975, %v4974
        %v4987 = vpack.c.b16 %v4977, %v4976
        %v4988 = vpack.c.b16 %v4979, %v4978
        %v4989 = vpack.c.b16 %v4981, %v4980
        %4990 = vrot.lane.b32.xlu0 %v4982, 96
        %v4991 = vpop.permute.xlu0 %4990
        %4992 = vrot.lane.b32.xlu0 %v4983, 96
        %v4993 = vpop.permute.xlu0 %4992
        %4994 = vrot.lane.b32.xlu0 %v4984, 96
        %v4995 = vpop.permute.xlu0 %4994
        %4996 = vrot.lane.b32.xlu0 %v4985, 96
        %v4997 = vpop.permute.xlu0 %4996
        %4998 = vrot.lane.b32.xlu0 %v4986, 96
        %v4999 = vpop.permute.xlu0 %4998
        %5000 = vrot.lane.b32.xlu0 %v4987, 96
        %v5001 = vpop.permute.xlu0 %5000
        %5002 = vrot.lane.b32.xlu0 %v4988, 96
        %v5003 = vpop.permute.xlu0 %5002
        %5004 = vrot.lane.b32.xlu0 %v4989, 96
        %v5005 = vpop.permute.xlu0 %5004
        %v5007 = vsel %vm714, %v4942, 0
        %v5010 = vsel %vm714, %v4943, 0
        %v5013 = vsel %vm714, %v4944, 0
        %v5016 = vsel %vm714, %v4945, 0
        %v5019 = vsel %vm714, %v4946, 0
        %v5022 = vsel %vm714, %v4947, 0
        %v5025 = vsel %vm714, %v4948, 0
        %v5028 = vsel %vm714, %v4949, 0
        %v5031 = vsel %vm714, %v4991, 0
        %v5034 = vsel %vm714, %v4993, 0
        %v5037 = vsel %vm714, %v4995, 0
        %v5040 = vsel %vm714, %v4997, 0
        %v5043 = vsel %vm714, %v4999, 0
        %v5046 = vsel %vm714, %v5001, 0
        %v5049 = vsel %vm714, %v5003, 0
        %v5052 = vsel %vm714, %v5005, 0
        %5054 = vmatpush.bf16.xpose.msra.mxu0 %v5052
        %5055 = vmatpush.bf16.xpose.msra.mxu0 %v5049
        %5056 = vmatpush.bf16.xpose.msra.mxu0 %v5046
        %5057 = vmatpush.bf16.xpose.msra.mxu0 %v5043
        %5058 = vmatpush.bf16.xpose.msra.mxu0 %v5040
        %5059 = vmatpush.bf16.xpose.msra.mxu0 %v5037
        %5060 = vmatpush.bf16.xpose.msra.mxu0 %v5034
        %5061 = vmatpush.bf16.xpose.msra.mxu0 %v5031
        %5062 = vmatmul.bf16.gmra.mxu0 %v5007
        %v5063 = vpop.f32.mrf.mxu0
        %v5064 = vadd.f32 %v4908, %v5063
        %v5065 = vpop.f32.mrf.mxu0
        %v5066 = vadd.f32 %v4908, %v5065
        %5067 = vmatmul.bf16.gmra.mxu0 %v5010
        %v5068 = vpop.f32.mrf.mxu0
        %v5069 = vadd.f32 %v4908, %v5068
        %v5070 = vpop.f32.mrf.mxu0
        %v5071 = vadd.f32 %v4908, %v5070
        %5072 = vmatmul.bf16.gmra.mxu0 %v5013
        %v5073 = vpop.f32.mrf.mxu0
        %v5074 = vadd.f32 %v4908, %v5073
        %v5075 = vpop.f32.mrf.mxu0
        %v5076 = vadd.f32 %v4908, %v5075
        %5077 = vmatmul.bf16.gmra.mxu0 %v5016
        %v5078 = vpop.f32.mrf.mxu0
        %v5079 = vadd.f32 %v4908, %v5078
        %v5080 = vpop.f32.mrf.mxu0
        %v5081 = vadd.f32 %v4908, %v5080
        %5082 = vmatmul.bf16.gmra.mxu0 %v5019
        %v5083 = vpop.f32.mrf.mxu0
        %v5084 = vadd.f32 %v4908, %v5083
        %v5085 = vpop.f32.mrf.mxu0
        %v5086 = vadd.f32 %v4908, %v5085
        %5087 = vmatmul.bf16.gmra.mxu0 %v5022
        %v5088 = vpop.f32.mrf.mxu0
        %v5089 = vadd.f32 %v4908, %v5088
        %v5090 = vpop.f32.mrf.mxu0
        %v5091 = vadd.f32 %v4908, %v5090
        %5092 = vmatmul.bf16.gmra.mxu0 %v5025
        %v5093 = vpop.f32.mrf.mxu0
        %v5094 = vadd.f32 %v4908, %v5093
        %v5095 = vpop.f32.mrf.mxu0
        %v5096 = vadd.f32 %v4908, %v5095
        %5097 = vmatmul.bf16.gmra.mxu0 %v5028
        %v5098 = vpop.f32.mrf.mxu0
        %v5099 = vadd.f32 %v4908, %v5098
        %v5100 = vpop.f32.mrf.mxu0
        %v5101 = vadd.f32 %v4908, %v5100
        %5102 = vdwg.mxu0
        %5103 = vmax.xlane.f32.xlu0 %v5064
        %v5104 = vpop.xlane.xlu0 %5103
        %5105 = vmax.xlane.f32.xlu0 %v5066
        %v5106 = vpop.xlane.xlu0 %5105
        %5107 = vmax.xlane.f32.xlu0 %v5069
        %v5108 = vpop.xlane.xlu0 %5107
        %5109 = vmax.xlane.f32.xlu0 %v5071
        %v5110 = vpop.xlane.xlu0 %5109
        %5111 = vmax.xlane.f32.xlu0 %v5074
        %v5112 = vpop.xlane.xlu0 %5111
        %5113 = vmax.xlane.f32.xlu0 %v5076
        %v5114 = vpop.xlane.xlu0 %5113
        %5115 = vmax.xlane.f32.xlu0 %v5079
        %v5116 = vpop.xlane.xlu0 %5115
        %5117 = vmax.xlane.f32.xlu0 %v5081
        %v5118 = vpop.xlane.xlu0 %5117
        %5119 = vmax.xlane.f32.xlu0 %v5084
        %v5120 = vpop.xlane.xlu0 %5119
        %5121 = vmax.xlane.f32.xlu0 %v5086
        %v5122 = vpop.xlane.xlu0 %5121
        %5123 = vmax.xlane.f32.xlu0 %v5089
        %v5124 = vpop.xlane.xlu0 %5123
        %5125 = vmax.xlane.f32.xlu0 %v5091
        %v5126 = vpop.xlane.xlu0 %5125
        %5127 = vmax.xlane.f32.xlu0 %v5094
        %v5128 = vpop.xlane.xlu0 %5127
        %5129 = vmax.xlane.f32.xlu0 %v5096
        %v5130 = vpop.xlane.xlu0 %5129
        %5131 = vmax.xlane.f32.xlu0 %v5099
        %v5132 = vpop.xlane.xlu0 %5131
        %5133 = vmax.xlane.f32.xlu0 %v5101
        %v5134 = vpop.xlane.xlu0 %5133
        %v5135 = vsub.f32 %v5064, %v5104
        %v5136 = vsub.f32 %v5066, %v5106
        %v5137 = vsub.f32 %v5069, %v5108
        %v5138 = vsub.f32 %v5071, %v5110
        %v5139 = vsub.f32 %v5074, %v5112
        %v5140 = vsub.f32 %v5076, %v5114
        %v5141 = vsub.f32 %v5079, %v5116
        %v5142 = vsub.f32 %v5081, %v5118
        %v5143 = vsub.f32 %v5084, %v5120
        %v5144 = vsub.f32 %v5086, %v5122
        %v5145 = vsub.f32 %v5089, %v5124
        %v5146 = vsub.f32 %v5091, %v5126
        %v5147 = vsub.f32 %v5094, %v5128
        %v5148 = vsub.f32 %v5096, %v5130
        %v5149 = vsub.f32 %v5099, %v5132
        %v5150 = vsub.f32 %v5101, %v5134
        %v5151 = vmul.f32 %v5135, 1.442695
        %v5152 = vpow.pop %v5151
        %v5153 = vmul.f32 %v5136, 1.442695
        %v5154 = vpow.pop %v5153
        %v5155 = vmul.f32 %v5137, 1.442695
        %v5156 = vpow.pop %v5155
        %v5157 = vmul.f32 %v5138, 1.442695
        %v5158 = vpow.pop %v5157
        %v5159 = vmul.f32 %v5139, 1.442695
        %v5160 = vpow.pop %v5159
        %v5161 = vmul.f32 %v5140, 1.442695
        %v5162 = vpow.pop %v5161
        %v5163 = vmul.f32 %v5141, 1.442695
        %v5164 = vpow.pop %v5163
        %v5165 = vmul.f32 %v5142, 1.442695
        %v5166 = vpow.pop %v5165
        %v5167 = vmul.f32 %v5143, 1.442695
        %v5168 = vpow.pop %v5167
        %v5169 = vmul.f32 %v5144, 1.442695
        %v5170 = vpow.pop %v5169
        %v5171 = vmul.f32 %v5145, 1.442695
        %v5172 = vpow.pop %v5171
        %v5173 = vmul.f32 %v5146, 1.442695
        %v5174 = vpow.pop %v5173
        %v5175 = vmul.f32 %v5147, 1.442695
        %v5176 = vpow.pop %v5175
        %v5177 = vmul.f32 %v5148, 1.442695
        %v5178 = vpow.pop %v5177
        %v5179 = vmul.f32 %v5149, 1.442695
        %v5180 = vpow.pop %v5179
        %v5181 = vmul.f32 %v5150, 1.442695
        %v5182 = vpow.pop %v5181
        %5183 = vadd.xlane.f32.xlu0 %v5152
        %v5184 = vpop.xlane.xlu0 %5183
        %5185 = vadd.xlane.f32.xlu0 %v5154
        %v5186 = vpop.xlane.xlu0 %5185
        %5187 = vadd.xlane.f32.xlu0 %v5156
        %v5188 = vpop.xlane.xlu0 %5187
        %5189 = vadd.xlane.f32.xlu0 %v5158
        %v5190 = vpop.xlane.xlu0 %5189
        %5191 = vadd.xlane.f32.xlu0 %v5160
        %v5192 = vpop.xlane.xlu0 %5191
        %5193 = vadd.xlane.f32.xlu0 %v5162
        %v5194 = vpop.xlane.xlu0 %5193
        %5195 = vadd.xlane.f32.xlu0 %v5164
        %v5196 = vpop.xlane.xlu0 %5195
        %5197 = vadd.xlane.f32.xlu0 %v5166
        %v5198 = vpop.xlane.xlu0 %5197
        %5199 = vadd.xlane.f32.xlu0 %v5168
        %v5200 = vpop.xlane.xlu0 %5199
        %5201 = vadd.xlane.f32.xlu0 %v5170
        %v5202 = vpop.xlane.xlu0 %5201
        %5203 = vadd.xlane.f32.xlu0 %v5172
        %v5204 = vpop.xlane.xlu0 %5203
        %5205 = vadd.xlane.f32.xlu0 %v5174
        %v5206 = vpop.xlane.xlu0 %5205
        %5207 = vadd.xlane.f32.xlu0 %v5176
        %v5208 = vpop.xlane.xlu0 %5207
        %5209 = vadd.xlane.f32.xlu0 %v5178
        %v5210 = vpop.xlane.xlu0 %5209
        %5211 = vadd.xlane.f32.xlu0 %v5180
        %v5212 = vpop.xlane.xlu0 %5211
        %5213 = vadd.xlane.f32.xlu0 %v5182
        %v5214 = vpop.xlane.xlu0 %5213
        %v5215 = vrcp.pop %v5184
        %v5216 = vmul.f32 %v5184, %v5215
        %v5217 = vsub.f32 1.0, %v5216
        %v5218 = vmul.f32 %v5215, %v5217
        %v5219 = vadd.f32 %v5215, %v5218
        %vm5220 = vweird.f32 %v5184
        %vm5221 = vweird.f32 %v5215
        %vm5222 = vmor %vm5220, %vm5221
        %v5223 = vsel %vm5222, %v5215, %v5219
        %v5224 = vand.u32 2147483647, %v5184
        %vm5225 = vcmp.eq.f32.partialorder %v5224, 8.507059e+37
        %v5226 = vand.u32 %v5184, 2147483648
        %v5227 = vor.u32 1.1754944e-38, %v5226
        %v5228 = vsel %vm5225, %v5227, %v5223
        %v5229 = vrcp.pop %v5186
        %v5230 = vmul.f32 %v5186, %v5229
        %v5231 = vsub.f32 1.0, %v5230
        %v5232 = vmul.f32 %v5229, %v5231
        %v5233 = vadd.f32 %v5229, %v5232
        %vm5234 = vweird.f32 %v5186
        %vm5235 = vweird.f32 %v5229
        %vm5236 = vmor %vm5234, %vm5235
        %v5237 = vsel %vm5236, %v5229, %v5233
        %v5238 = vand.u32 2147483647, %v5186
        %vm5239 = vcmp.eq.f32.partialorder %v5238, 8.507059e+37
        %v5240 = vand.u32 %v5186, 2147483648
        %v5241 = vor.u32 1.1754944e-38, %v5240
        %v5242 = vsel %vm5239, %v5241, %v5237
        %v5243 = vrcp.pop %v5188
        %v5244 = vmul.f32 %v5188, %v5243
        %v5245 = vsub.f32 1.0, %v5244
        %v5246 = vmul.f32 %v5243, %v5245
        %v5247 = vadd.f32 %v5243, %v5246
        %vm5248 = vweird.f32 %v5188
        %vm5249 = vweird.f32 %v5243
        %vm5250 = vmor %vm5248, %vm5249
        %v5251 = vsel %vm5250, %v5243, %v5247
        %v5252 = vand.u32 2147483647, %v5188
        %vm5253 = vcmp.eq.f32.partialorder %v5252, 8.507059e+37
        %v5254 = vand.u32 %v5188, 2147483648
        %v5255 = vor.u32 1.1754944e-38, %v5254
        %v5256 = vsel %vm5253, %v5255, %v5251
        %v5257 = vrcp.pop %v5190
        %v5258 = vmul.f32 %v5190, %v5257
        %v5259 = vsub.f32 1.0, %v5258
        %v5260 = vmul.f32 %v5257, %v5259
        %v5261 = vadd.f32 %v5257, %v5260
        %vm5262 = vweird.f32 %v5190
        %vm5263 = vweird.f32 %v5257
        %vm5264 = vmor %vm5262, %vm5263
        %v5265 = vsel %vm5264, %v5257, %v5261
        %v5266 = vand.u32 2147483647, %v5190
        %vm5267 = vcmp.eq.f32.partialorder %v5266, 8.507059e+37
        %v5268 = vand.u32 %v5190, 2147483648
        %v5269 = vor.u32 1.1754944e-38, %v5268
        %v5270 = vsel %vm5267, %v5269, %v5265
        %v5271 = vrcp.pop %v5192
        %v5272 = vmul.f32 %v5192, %v5271
        %v5273 = vsub.f32 1.0, %v5272
        %v5274 = vmul.f32 %v5271, %v5273
        %v5275 = vadd.f32 %v5271, %v5274
        %vm5276 = vweird.f32 %v5192
        %vm5277 = vweird.f32 %v5271
        %vm5278 = vmor %vm5276, %vm5277
        %v5279 = vsel %vm5278, %v5271, %v5275
        %v5280 = vand.u32 2147483647, %v5192
        %vm5281 = vcmp.eq.f32.partialorder %v5280, 8.507059e+37
        %v5282 = vand.u32 %v5192, 2147483648
        %v5283 = vor.u32 1.1754944e-38, %v5282
        %v5284 = vsel %vm5281, %v5283, %v5279
        %v5285 = vrcp.pop %v5194
        %v5286 = vmul.f32 %v5194, %v5285
        %v5287 = vsub.f32 1.0, %v5286
        %v5288 = vmul.f32 %v5285, %v5287
        %v5289 = vadd.f32 %v5285, %v5288
        %vm5290 = vweird.f32 %v5194
        %vm5291 = vweird.f32 %v5285
        %vm5292 = vmor %vm5290, %vm5291
        %v5293 = vsel %vm5292, %v5285, %v5289
        %v5294 = vand.u32 2147483647, %v5194
        %vm5295 = vcmp.eq.f32.partialorder %v5294, 8.507059e+37
        %v5296 = vand.u32 %v5194, 2147483648
        %v5297 = vor.u32 1.1754944e-38, %v5296
        %v5298 = vsel %vm5295, %v5297, %v5293
        %v5299 = vrcp.pop %v5196
        %v5300 = vmul.f32 %v5196, %v5299
        %v5301 = vsub.f32 1.0, %v5300
        %v5302 = vmul.f32 %v5299, %v5301
        %v5303 = vadd.f32 %v5299, %v5302
        %vm5304 = vweird.f32 %v5196
        %vm5305 = vweird.f32 %v5299
        %vm5306 = vmor %vm5304, %vm5305
        %v5307 = vsel %vm5306, %v5299, %v5303
        %v5308 = vand.u32 2147483647, %v5196
        %vm5309 = vcmp.eq.f32.partialorder %v5308, 8.507059e+37
        %v5310 = vand.u32 %v5196, 2147483648
        %v5311 = vor.u32 1.1754944e-38, %v5310
        %v5312 = vsel %vm5309, %v5311, %v5307
        %v5313 = vrcp.pop %v5198
        %v5314 = vmul.f32 %v5198, %v5313
        %v5315 = vsub.f32 1.0, %v5314
        %v5316 = vmul.f32 %v5313, %v5315
        %v5317 = vadd.f32 %v5313, %v5316
        %vm5318 = vweird.f32 %v5198
        %vm5319 = vweird.f32 %v5313
        %vm5320 = vmor %vm5318, %vm5319
        %v5321 = vsel %vm5320, %v5313, %v5317
        %v5322 = vand.u32 2147483647, %v5198
        %vm5323 = vcmp.eq.f32.partialorder %v5322, 8.507059e+37
        %v5324 = vand.u32 %v5198, 2147483648
        %v5325 = vor.u32 1.1754944e-38, %v5324
        %v5326 = vsel %vm5323, %v5325, %v5321
        %v5327 = vrcp.pop %v5200
        %v5328 = vmul.f32 %v5200, %v5327
        %v5329 = vsub.f32 1.0, %v5328
        %v5330 = vmul.f32 %v5327, %v5329
        %v5331 = vadd.f32 %v5327, %v5330
        %vm5332 = vweird.f32 %v5200
        %vm5333 = vweird.f32 %v5327
        %vm5334 = vmor %vm5332, %vm5333
        %v5335 = vsel %vm5334, %v5327, %v5331
        %v5336 = vand.u32 2147483647, %v5200
        %vm5337 = vcmp.eq.f32.partialorder %v5336, 8.507059e+37
        %v5338 = vand.u32 %v5200, 2147483648
        %v5339 = vor.u32 1.1754944e-38, %v5338
        %v5340 = vsel %vm5337, %v5339, %v5335
        %v5341 = vrcp.pop %v5202
        %v5342 = vmul.f32 %v5202, %v5341
        %v5343 = vsub.f32 1.0, %v5342
        %v5344 = vmul.f32 %v5341, %v5343
        %v5345 = vadd.f32 %v5341, %v5344
        %vm5346 = vweird.f32 %v5202
        %vm5347 = vweird.f32 %v5341
        %vm5348 = vmor %vm5346, %vm5347
        %v5349 = vsel %vm5348, %v5341, %v5345
        %v5350 = vand.u32 2147483647, %v5202
        %vm5351 = vcmp.eq.f32.partialorder %v5350, 8.507059e+37
        %v5352 = vand.u32 %v5202, 2147483648
        %v5353 = vor.u32 1.1754944e-38, %v5352
        %v5354 = vsel %vm5351, %v5353, %v5349
        %v5355 = vrcp.pop %v5204
        %v5356 = vmul.f32 %v5204, %v5355
        %v5357 = vsub.f32 1.0, %v5356
        %v5358 = vmul.f32 %v5355, %v5357
        %v5359 = vadd.f32 %v5355, %v5358
        %vm5360 = vweird.f32 %v5204
        %vm5361 = vweird.f32 %v5355
        %vm5362 = vmor %vm5360, %vm5361
        %v5363 = vsel %vm5362, %v5355, %v5359
        %v5364 = vand.u32 2147483647, %v5204
        %vm5365 = vcmp.eq.f32.partialorder %v5364, 8.507059e+37
        %v5366 = vand.u32 %v5204, 2147483648
        %v5367 = vor.u32 1.1754944e-38, %v5366
        %v5368 = vsel %vm5365, %v5367, %v5363
        %v5369 = vrcp.pop %v5206
        %v5370 = vmul.f32 %v5206, %v5369
        %v5371 = vsub.f32 1.0, %v5370
        %v5372 = vmul.f32 %v5369, %v5371
        %v5373 = vadd.f32 %v5369, %v5372
        %vm5374 = vweird.f32 %v5206
        %vm5375 = vweird.f32 %v5369
        %vm5376 = vmor %vm5374, %vm5375
        %v5377 = vsel %vm5376, %v5369, %v5373
        %v5378 = vand.u32 2147483647, %v5206
        %vm5379 = vcmp.eq.f32.partialorder %v5378, 8.507059e+37
        %v5380 = vand.u32 %v5206, 2147483648
        %v5381 = vor.u32 1.1754944e-38, %v5380
        %v5382 = vsel %vm5379, %v5381, %v5377
        %v5383 = vrcp.pop %v5208
        %v5384 = vmul.f32 %v5208, %v5383
        %v5385 = vsub.f32 1.0, %v5384
        %v5386 = vmul.f32 %v5383, %v5385
        %v5387 = vadd.f32 %v5383, %v5386
        %vm5388 = vweird.f32 %v5208
        %vm5389 = vweird.f32 %v5383
        %vm5390 = vmor %vm5388, %vm5389
        %v5391 = vsel %vm5390, %v5383, %v5387
        %v5392 = vand.u32 2147483647, %v5208
        %vm5393 = vcmp.eq.f32.partialorder %v5392, 8.507059e+37
        %v5394 = vand.u32 %v5208, 2147483648
        %v5395 = vor.u32 1.1754944e-38, %v5394
        %v5396 = vsel %vm5393, %v5395, %v5391
        %v5397 = vrcp.pop %v5210
        %v5398 = vmul.f32 %v5210, %v5397
        %v5399 = vsub.f32 1.0, %v5398
        %v5400 = vmul.f32 %v5397, %v5399
        %v5401 = vadd.f32 %v5397, %v5400
        %vm5402 = vweird.f32 %v5210
        %vm5403 = vweird.f32 %v5397
        %vm5404 = vmor %vm5402, %vm5403
        %v5405 = vsel %vm5404, %v5397, %v5401
        %v5406 = vand.u32 2147483647, %v5210
        %vm5407 = vcmp.eq.f32.partialorder %v5406, 8.507059e+37
        %v5408 = vand.u32 %v5210, 2147483648
        %v5409 = vor.u32 1.1754944e-38, %v5408
        %v5410 = vsel %vm5407, %v5409, %v5405
        %v5411 = vrcp.pop %v5212
        %v5412 = vmul.f32 %v5212, %v5411
        %v5413 = vsub.f32 1.0, %v5412
        %v5414 = vmul.f32 %v5411, %v5413
        %v5415 = vadd.f32 %v5411, %v5414
        %vm5416 = vweird.f32 %v5212
        %vm5417 = vweird.f32 %v5411
        %vm5418 = vmor %vm5416, %vm5417
        %v5419 = vsel %vm5418, %v5411, %v5415
        %v5420 = vand.u32 2147483647, %v5212
        %vm5421 = vcmp.eq.f32.partialorder %v5420, 8.507059e+37
        %v5422 = vand.u32 %v5212, 2147483648
        %v5423 = vor.u32 1.1754944e-38, %v5422
        %v5424 = vsel %vm5421, %v5423, %v5419
        %v5425 = vrcp.pop %v5214
        %v5426 = vmul.f32 %v5214, %v5425
        %v5427 = vsub.f32 1.0, %v5426
        %v5428 = vmul.f32 %v5425, %v5427
        %v5429 = vadd.f32 %v5425, %v5428
        %vm5430 = vweird.f32 %v5214
        %vm5431 = vweird.f32 %v5425
        %vm5432 = vmor %vm5430, %vm5431
        %v5433 = vsel %vm5432, %v5425, %v5429
        %v5434 = vand.u32 2147483647, %v5214
        %vm5435 = vcmp.eq.f32.partialorder %v5434, 8.507059e+37
        %v5436 = vand.u32 %v5214, 2147483648
        %v5437 = vor.u32 1.1754944e-38, %v5436
        %v5438 = vsel %vm5435, %v5437, %v5433
        %v5439 = vpack.c.bf16 %v5152, %v5152
        %v5440 = vpack.c.bf16 %v5154, %v5154
        %v5441 = vpack.c.bf16 %v5156, %v5156
        %v5442 = vpack.c.bf16 %v5158, %v5158
        %v5443 = vpack.c.bf16 %v5160, %v5160
        %v5444 = vpack.c.bf16 %v5162, %v5162
        %v5445 = vpack.c.bf16 %v5164, %v5164
        %v5446 = vpack.c.bf16 %v5166, %v5166
        %v5447 = vpack.c.bf16 %v5168, %v5168
        %v5448 = vpack.c.bf16 %v5170, %v5170
        %v5449 = vpack.c.bf16 %v5172, %v5172
        %v5450 = vpack.c.bf16 %v5174, %v5174
        %v5451 = vpack.c.bf16 %v5176, %v5176
        %v5452 = vpack.c.bf16 %v5178, %v5178
        %v5453 = vpack.c.bf16 %v5180, %v5180
        %v5454 = vpack.c.bf16 %v5182, %v5182
        %v5471 = vunpack.c.l.b16 %v5439
        %v5472 = vunpack.c.l.b16 %v5440
        %v5473 = vunpack.c.l.b16 %v5441
        %v5474 = vunpack.c.l.b16 %v5442
        %v5475 = vunpack.c.l.b16 %v5443
        %v5476 = vunpack.c.l.b16 %v5444
        %v5477 = vunpack.c.l.b16 %v5445
        %v5478 = vunpack.c.l.b16 %v5446
        %v5479 = vunpack.c.l.b16 %v5447
        %v5480 = vunpack.c.l.b16 %v5448
        %v5481 = vunpack.c.l.b16 %v5449
        %v5482 = vunpack.c.l.b16 %v5450
        %v5483 = vunpack.c.l.b16 %v5451
        %v5484 = vunpack.c.l.b16 %v5452
        %v5485 = vunpack.c.l.b16 %v5453
        %v5486 = vunpack.c.l.b16 %v5454
        %v5487 = vpack.c.b16 %v5472, %v5471
        %v5488 = vpack.c.b16 %v5474, %v5473
        %v5489 = vpack.c.b16 %v5476, %v5475
        %v5490 = vpack.c.b16 %v5478, %v5477
        %v5491 = vpack.c.b16 %v5480, %v5479
        %v5492 = vpack.c.b16 %v5482, %v5481
        %v5493 = vpack.c.b16 %v5484, %v5483
        %v5494 = vpack.c.b16 %v5486, %v5485
        %5503 = vrot.lane.b32.xlu0 %v4982, 64
        %v5504 = vpop.permute.xlu0 %5503
        %5505 = vrot.lane.b32.xlu0 %v4983, 64
        %v5506 = vpop.permute.xlu0 %5505
        %5507 = vrot.lane.b32.xlu0 %v4984, 64
        %v5508 = vpop.permute.xlu0 %5507
        %5509 = vrot.lane.b32.xlu0 %v4985, 64
        %v5510 = vpop.permute.xlu0 %5509
        %5511 = vrot.lane.b32.xlu0 %v4986, 64
        %v5512 = vpop.permute.xlu0 %5511
        %5513 = vrot.lane.b32.xlu0 %v4987, 64
        %v5514 = vpop.permute.xlu0 %5513
        %5515 = vrot.lane.b32.xlu0 %v4988, 64
        %v5516 = vpop.permute.xlu0 %5515
        %5517 = vrot.lane.b32.xlu0 %v4989, 64
        %v5518 = vpop.permute.xlu0 %5517
        %5527 = vmatpush.bf16.msra.mxu0 %v5518
        %5528 = vmatpush.bf16.msra.mxu0 %v5516
        %5529 = vmatpush.bf16.msra.mxu0 %v5514
        %5530 = vmatpush.bf16.msra.mxu0 %v5512
        %5531 = vmatpush.bf16.msra.mxu0 %v5510
        %5532 = vmatpush.bf16.msra.mxu0 %v5508
        %5533 = vmatpush.bf16.msra.mxu0 %v5506
        %5534 = vmatpush.bf16.msra.mxu0 %v5504
        %5535 = vmatmul.bf16.gmra.mxu0 %v5487
        %v5536 = vpop.f32.mrf.mxu0
        %v5537 = vadd.f32 0.0, %v5536
        %v5538 = vpop.f32.mrf.mxu0
        %v5539 = vadd.f32 0.0, %v5538
        %5540 = vmatmul.bf16.gmra.mxu0 %v5488
        %v5541 = vpop.f32.mrf.mxu0
        %v5542 = vadd.f32 0.0, %v5541
        %v5543 = vpop.f32.mrf.mxu0
        %v5544 = vadd.f32 0.0, %v5543
        %5545 = vmatmul.bf16.gmra.mxu0 %v5489
        %v5546 = vpop.f32.mrf.mxu0
        %v5547 = vadd.f32 0.0, %v5546
        %v5548 = vpop.f32.mrf.mxu0
        %v5549 = vadd.f32 0.0, %v5548
        %5550 = vmatmul.bf16.gmra.mxu0 %v5490
        %v5551 = vpop.f32.mrf.mxu0
        %v5552 = vadd.f32 0.0, %v5551
        %v5553 = vpop.f32.mrf.mxu0
        %v5554 = vadd.f32 0.0, %v5553
        %5555 = vmatmul.bf16.gmra.mxu0 %v5491
        %v5556 = vpop.f32.mrf.mxu0
        %v5557 = vadd.f32 0.0, %v5556
        %v5558 = vpop.f32.mrf.mxu0
        %v5559 = vadd.f32 0.0, %v5558
        %5560 = vmatmul.bf16.gmra.mxu0 %v5492
        %v5561 = vpop.f32.mrf.mxu0
        %v5562 = vadd.f32 0.0, %v5561
        %v5563 = vpop.f32.mrf.mxu0
        %v5564 = vadd.f32 0.0, %v5563
        %5565 = vmatmul.bf16.gmra.mxu0 %v5493
        %v5566 = vpop.f32.mrf.mxu0
        %v5567 = vadd.f32 0.0, %v5566
        %v5568 = vpop.f32.mrf.mxu0
        %v5569 = vadd.f32 0.0, %v5568
        %5570 = vmatmul.bf16.gmra.mxu0 %v5494
        %v5571 = vpop.f32.mrf.mxu0
        %v5572 = vadd.f32 0.0, %v5571
        %v5573 = vpop.f32.mrf.mxu0
        %v5574 = vadd.f32 0.0, %v5573
        %5575 = vdwg.mxu0
        %v5576 = vmul.f32 %v5537, %v5228
        %v5577 = vmul.f32 %v5539, %v5242
        %v5578 = vmul.f32 %v5542, %v5256
        %v5579 = vmul.f32 %v5544, %v5270
        %v5580 = vmul.f32 %v5547, %v5284
        %v5581 = vmul.f32 %v5549, %v5298
        %v5582 = vmul.f32 %v5552, %v5312
        %v5583 = vmul.f32 %v5554, %v5326
        %v5584 = vmul.f32 %v5557, %v5340
        %v5585 = vmul.f32 %v5559, %v5354
        %v5586 = vmul.f32 %v5562, %v5368
        %v5587 = vmul.f32 %v5564, %v5382
        %v5588 = vmul.f32 %v5567, %v5396
        %v5589 = vmul.f32 %v5569, %v5410
        %v5590 = vmul.f32 %v5572, %v5424
        %v5591 = vmul.f32 %v5574, %v5438
        %v5592 = vmul.f32 %v5152, %v5228
        %v5593 = vmul.f32 %v5154, %v5242
        %v5594 = vmul.f32 %v5156, %v5256
        %v5595 = vmul.f32 %v5158, %v5270
        %v5596 = vmul.f32 %v5160, %v5284
        %v5597 = vmul.f32 %v5162, %v5298
        %v5598 = vmul.f32 %v5164, %v5312
        %v5599 = vmul.f32 %v5166, %v5326
        %v5600 = vmul.f32 %v5168, %v5340
        %v5601 = vmul.f32 %v5170, %v5354
        %v5602 = vmul.f32 %v5172, %v5368
        %v5603 = vmul.f32 %v5174, %v5382
        %v5604 = vmul.f32 %v5176, %v5396
        %v5605 = vmul.f32 %v5178, %v5410
        %v5606 = vmul.f32 %v5180, %v5424
        %v5607 = vmul.f32 %v5182, %v5438
        %v5608 = vadd.f32 %v5592, 0.0
        %v5609 = vadd.f32 %v5593, 0.0
        %v5610 = vadd.f32 %v5594, 0.0
        %v5611 = vadd.f32 %v5595, 0.0
        %v5612 = vadd.f32 %v5596, 0.0
        %v5613 = vadd.f32 %v5597, 0.0
        %v5614 = vadd.f32 %v5598, 0.0
        %v5615 = vadd.f32 %v5599, 0.0
        %v5616 = vadd.f32 %v5600, 0.0
        %v5617 = vadd.f32 %v5601, 0.0
        %v5618 = vadd.f32 %v5602, 0.0
        %v5619 = vadd.f32 %v5603, 0.0
        %v5620 = vadd.f32 %v5604, 0.0
        %v5621 = vadd.f32 %v5605, 0.0
        %v5622 = vadd.f32 %v5606, 0.0
        %v5623 = vadd.f32 %v5607, 0.0
        %v5624 = vpack.c.bf16 %v5577, %v5576
        %v5625 = vpack.c.bf16 %v5579, %v5578
        %v5626 = vpack.c.bf16 %v5581, %v5580
        %v5627 = vpack.c.bf16 %v5583, %v5582
        %v5628 = vpack.c.bf16 %v5585, %v5584
        %v5629 = vpack.c.bf16 %v5587, %v5586
        %v5630 = vpack.c.bf16 %v5589, %v5588
        %v5631 = vpack.c.bf16 %v5591, %v5590
        %5632 = vrot.lane.b32.xlu0 %v4942, 120
        %v5633 = vpop.permute.xlu0 %5632
        %5634 = vrot.lane.b32.xlu0 %v4943, 120
        %v5635 = vpop.permute.xlu0 %5634
        %5636 = vrot.lane.b32.xlu0 %v4944, 120
        %v5637 = vpop.permute.xlu0 %5636
        %5638 = vrot.lane.b32.xlu0 %v4945, 120
        %v5639 = vpop.permute.xlu0 %5638
        %5640 = vrot.lane.b32.xlu0 %v4946, 120
        %v5641 = vpop.permute.xlu0 %5640
        %5642 = vrot.lane.b32.xlu0 %v4947, 120
        %v5643 = vpop.permute.xlu0 %5642
        %5644 = vrot.lane.b32.xlu0 %v4948, 120
        %v5645 = vpop.permute.xlu0 %5644
        %5646 = vrot.lane.b32.xlu0 %v4949, 120
        %v5647 = vpop.permute.xlu0 %5646
        %5648 = vrot.lane.b32.xlu0 %v4982, 88
        %v5649 = vpop.permute.xlu0 %5648
        %5650 = vrot.lane.b32.xlu0 %v4983, 88
        %v5651 = vpop.permute.xlu0 %5650
        %5652 = vrot.lane.b32.xlu0 %v4984, 88
        %v5653 = vpop.permute.xlu0 %5652
        %5654 = vrot.lane.b32.xlu0 %v4985, 88
        %v5655 = vpop.permute.xlu0 %5654
        %5656 = vrot.lane.b32.xlu0 %v4986, 88
        %v5657 = vpop.permute.xlu0 %5656
        %5658 = vrot.lane.b32.xlu0 %v4987, 88
        %v5659 = vpop.permute.xlu0 %5658
        %5660 = vrot.lane.b32.xlu0 %v4988, 88
        %v5661 = vpop.permute.xlu0 %5660
        %5662 = vrot.lane.b32.xlu0 %v4989, 88
        %v5663 = vpop.permute.xlu0 %5662
        %v5665 = vsel %vm714, %v5633, 0
        %v5668 = vsel %vm714, %v5635, 0
        %v5671 = vsel %vm714, %v5637, 0
        %v5674 = vsel %vm714, %v5639, 0
        %v5677 = vsel %vm714, %v5641, 0
        %v5680 = vsel %vm714, %v5643, 0
        %v5683 = vsel %vm714, %v5645, 0
        %v5686 = vsel %vm714, %v5647, 0
        %v5689 = vsel %vm714, %v5649, 0
        %v5692 = vsel %vm714, %v5651, 0
        %v5695 = vsel %vm714, %v5653, 0
        %v5698 = vsel %vm714, %v5655, 0
        %v5701 = vsel %vm714, %v5657, 0
        %v5704 = vsel %vm714, %v5659, 0
        %v5707 = vsel %vm714, %v5661, 0
        %v5710 = vsel %vm714, %v5663, 0
        %5712 = vmatpush.bf16.xpose.msra.mxu0 %v5710
        %5713 = vmatpush.bf16.xpose.msra.mxu0 %v5707
        %5714 = vmatpush.bf16.xpose.msra.mxu0 %v5704
        %5715 = vmatpush.bf16.xpose.msra.mxu0 %v5701
        %5716 = vmatpush.bf16.xpose.msra.mxu0 %v5698
        %5717 = vmatpush.bf16.xpose.msra.mxu0 %v5695
        %5718 = vmatpush.bf16.xpose.msra.mxu0 %v5692
        %5719 = vmatpush.bf16.xpose.msra.mxu0 %v5689
        %5720 = vmatmul.bf16.gmra.mxu0 %v5665
        %v5721 = vpop.f32.mrf.mxu0
        %v5722 = vadd.f32 %v4908, %v5721
        %v5723 = vpop.f32.mrf.mxu0
        %v5724 = vadd.f32 %v4908, %v5723
        %5725 = vmatmul.bf16.gmra.mxu0 %v5668
        %v5726 = vpop.f32.mrf.mxu0
        %v5727 = vadd.f32 %v4908, %v5726
        %v5728 = vpop.f32.mrf.mxu0
        %v5729 = vadd.f32 %v4908, %v5728
        %5730 = vmatmul.bf16.gmra.mxu0 %v5671
        %v5731 = vpop.f32.mrf.mxu0
        %v5732 = vadd.f32 %v4908, %v5731
        %v5733 = vpop.f32.mrf.mxu0
        %v5734 = vadd.f32 %v4908, %v5733
        %5735 = vmatmul.bf16.gmra.mxu0 %v5674
        %v5736 = vpop.f32.mrf.mxu0
        %v5737 = vadd.f32 %v4908, %v5736
        %v5738 = vpop.f32.mrf.mxu0
        %v5739 = vadd.f32 %v4908, %v5738
        %5740 = vmatmul.bf16.gmra.mxu0 %v5677
        %v5741 = vpop.f32.mrf.mxu0
        %v5742 = vadd.f32 %v4908, %v5741
        %v5743 = vpop.f32.mrf.mxu0
        %v5744 = vadd.f32 %v4908, %v5743
        %5745 = vmatmul.bf16.gmra.mxu0 %v5680
        %v5746 = vpop.f32.mrf.mxu0
        %v5747 = vadd.f32 %v4908, %v5746
        %v5748 = vpop.f32.mrf.mxu0
        %v5749 = vadd.f32 %v4908, %v5748
        %5750 = vmatmul.bf16.gmra.mxu0 %v5683
        %v5751 = vpop.f32.mrf.mxu0
        %v5752 = vadd.f32 %v4908, %v5751
        %v5753 = vpop.f32.mrf.mxu0
        %v5754 = vadd.f32 %v4908, %v5753
        %5755 = vmatmul.bf16.gmra.mxu0 %v5686
        %v5756 = vpop.f32.mrf.mxu0
        %v5757 = vadd.f32 %v4908, %v5756
        %v5758 = vpop.f32.mrf.mxu0
        %v5759 = vadd.f32 %v4908, %v5758
        %5760 = vdwg.mxu0
        %5761 = vmax.xlane.f32.xlu0 %v5722
        %v5762 = vpop.xlane.xlu0 %5761
        %5763 = vmax.xlane.f32.xlu0 %v5724
        %v5764 = vpop.xlane.xlu0 %5763
        %5765 = vmax.xlane.f32.xlu0 %v5727
        %v5766 = vpop.xlane.xlu0 %5765
        %5767 = vmax.xlane.f32.xlu0 %v5729
        %v5768 = vpop.xlane.xlu0 %5767
        %5769 = vmax.xlane.f32.xlu0 %v5732
        %v5770 = vpop.xlane.xlu0 %5769
        %5771 = vmax.xlane.f32.xlu0 %v5734
        %v5772 = vpop.xlane.xlu0 %5771
        %5773 = vmax.xlane.f32.xlu0 %v5737
        %v5774 = vpop.xlane.xlu0 %5773
        %5775 = vmax.xlane.f32.xlu0 %v5739
        %v5776 = vpop.xlane.xlu0 %5775
        %5777 = vmax.xlane.f32.xlu0 %v5742
        %v5778 = vpop.xlane.xlu0 %5777
        %5779 = vmax.xlane.f32.xlu0 %v5744
        %v5780 = vpop.xlane.xlu0 %5779
        %5781 = vmax.xlane.f32.xlu0 %v5747
        %v5782 = vpop.xlane.xlu0 %5781
        %5783 = vmax.xlane.f32.xlu0 %v5749
        %v5784 = vpop.xlane.xlu0 %5783
        %5785 = vmax.xlane.f32.xlu0 %v5752
        %v5786 = vpop.xlane.xlu0 %5785
        %5787 = vmax.xlane.f32.xlu0 %v5754
        %v5788 = vpop.xlane.xlu0 %5787
        %5789 = vmax.xlane.f32.xlu0 %v5757
        %v5790 = vpop.xlane.xlu0 %5789
        %5791 = vmax.xlane.f32.xlu0 %v5759
        %v5792 = vpop.xlane.xlu0 %5791
        %v5793 = vsub.f32 %v5722, %v5762
        %v5794 = vsub.f32 %v5724, %v5764
        %v5795 = vsub.f32 %v5727, %v5766
        %v5796 = vsub.f32 %v5729, %v5768
        %v5797 = vsub.f32 %v5732, %v5770
        %v5798 = vsub.f32 %v5734, %v5772
        %v5799 = vsub.f32 %v5737, %v5774
        %v5800 = vsub.f32 %v5739, %v5776
        %v5801 = vsub.f32 %v5742, %v5778
        %v5802 = vsub.f32 %v5744, %v5780
        %v5803 = vsub.f32 %v5747, %v5782
        %v5804 = vsub.f32 %v5749, %v5784
        %v5805 = vsub.f32 %v5752, %v5786
        %v5806 = vsub.f32 %v5754, %v5788
        %v5807 = vsub.f32 %v5757, %v5790
        %v5808 = vsub.f32 %v5759, %v5792
        %v5809 = vmul.f32 %v5793, 1.442695
        %v5810 = vpow.pop %v5809
        %v5811 = vmul.f32 %v5794, 1.442695
        %v5812 = vpow.pop %v5811
        %v5813 = vmul.f32 %v5795, 1.442695
        %v5814 = vpow.pop %v5813
        %v5815 = vmul.f32 %v5796, 1.442695
        %v5816 = vpow.pop %v5815
        %v5817 = vmul.f32 %v5797, 1.442695
        %v5818 = vpow.pop %v5817
        %v5819 = vmul.f32 %v5798, 1.442695
        %v5820 = vpow.pop %v5819
        %v5821 = vmul.f32 %v5799, 1.442695
        %v5822 = vpow.pop %v5821
        %v5823 = vmul.f32 %v5800, 1.442695
        %v5824 = vpow.pop %v5823
        %v5825 = vmul.f32 %v5801, 1.442695
        %v5826 = vpow.pop %v5825
        %v5827 = vmul.f32 %v5802, 1.442695
        %v5828 = vpow.pop %v5827
        %v5829 = vmul.f32 %v5803, 1.442695
        %v5830 = vpow.pop %v5829
        %v5831 = vmul.f32 %v5804, 1.442695
        %v5832 = vpow.pop %v5831
        %v5833 = vmul.f32 %v5805, 1.442695
        %v5834 = vpow.pop %v5833
        %v5835 = vmul.f32 %v5806, 1.442695
        %v5836 = vpow.pop %v5835
        %v5837 = vmul.f32 %v5807, 1.442695
        %v5838 = vpow.pop %v5837
        %v5839 = vmul.f32 %v5808, 1.442695
        %v5840 = vpow.pop %v5839
        %5841 = vadd.xlane.f32.xlu0 %v5810
        %v5842 = vpop.xlane.xlu0 %5841
        %5843 = vadd.xlane.f32.xlu0 %v5812
        %v5844 = vpop.xlane.xlu0 %5843
        %5845 = vadd.xlane.f32.xlu0 %v5814
        %v5846 = vpop.xlane.xlu0 %5845
        %5847 = vadd.xlane.f32.xlu0 %v5816
        %v5848 = vpop.xlane.xlu0 %5847
        %5849 = vadd.xlane.f32.xlu0 %v5818
        %v5850 = vpop.xlane.xlu0 %5849
        %5851 = vadd.xlane.f32.xlu0 %v5820
        %v5852 = vpop.xlane.xlu0 %5851
        %5853 = vadd.xlane.f32.xlu0 %v5822
        %v5854 = vpop.xlane.xlu0 %5853
        %5855 = vadd.xlane.f32.xlu0 %v5824
        %v5856 = vpop.xlane.xlu0 %5855
        %5857 = vadd.xlane.f32.xlu0 %v5826
        %v5858 = vpop.xlane.xlu0 %5857
        %5859 = vadd.xlane.f32.xlu0 %v5828
        %v5860 = vpop.xlane.xlu0 %5859
        %5861 = vadd.xlane.f32.xlu0 %v5830
        %v5862 = vpop.xlane.xlu0 %5861
        %5863 = vadd.xlane.f32.xlu0 %v5832
        %v5864 = vpop.xlane.xlu0 %5863
        %5865 = vadd.xlane.f32.xlu0 %v5834
        %v5866 = vpop.xlane.xlu0 %5865
        %5867 = vadd.xlane.f32.xlu0 %v5836
        %v5868 = vpop.xlane.xlu0 %5867
        %5869 = vadd.xlane.f32.xlu0 %v5838
        %v5870 = vpop.xlane.xlu0 %5869
        %5871 = vadd.xlane.f32.xlu0 %v5840
        %v5872 = vpop.xlane.xlu0 %5871
        %v5873 = vrcp.pop %v5842
        %v5874 = vmul.f32 %v5842, %v5873
        %v5875 = vsub.f32 1.0, %v5874
        %v5876 = vmul.f32 %v5873, %v5875
        %v5877 = vadd.f32 %v5873, %v5876
        %vm5878 = vweird.f32 %v5842
        %vm5879 = vweird.f32 %v5873
        %vm5880 = vmor %vm5878, %vm5879
        %v5881 = vsel %vm5880, %v5873, %v5877
        %v5882 = vand.u32 2147483647, %v5842
        %vm5883 = vcmp.eq.f32.partialorder %v5882, 8.507059e+37
        %v5884 = vand.u32 %v5842, 2147483648
        %v5885 = vor.u32 1.1754944e-38, %v5884
        %v5886 = vsel %vm5883, %v5885, %v5881
        %v5887 = vrcp.pop %v5844
        %v5888 = vmul.f32 %v5844, %v5887
        %v5889 = vsub.f32 1.0, %v5888
        %v5890 = vmul.f32 %v5887, %v5889
        %v5891 = vadd.f32 %v5887, %v5890
        %vm5892 = vweird.f32 %v5844
        %vm5893 = vweird.f32 %v5887
        %vm5894 = vmor %vm5892, %vm5893
        %v5895 = vsel %vm5894, %v5887, %v5891
        %v5896 = vand.u32 2147483647, %v5844
        %vm5897 = vcmp.eq.f32.partialorder %v5896, 8.507059e+37
        %v5898 = vand.u32 %v5844, 2147483648
        %v5899 = vor.u32 1.1754944e-38, %v5898
        %v5900 = vsel %vm5897, %v5899, %v5895
        %v5901 = vrcp.pop %v5846
        %v5902 = vmul.f32 %v5846, %v5901
        %v5903 = vsub.f32 1.0, %v5902
        %v5904 = vmul.f32 %v5901, %v5903
        %v5905 = vadd.f32 %v5901, %v5904
        %vm5906 = vweird.f32 %v5846
        %vm5907 = vweird.f32 %v5901
        %vm5908 = vmor %vm5906, %vm5907
        %v5909 = vsel %vm5908, %v5901, %v5905
        %v5910 = vand.u32 2147483647, %v5846
        %vm5911 = vcmp.eq.f32.partialorder %v5910, 8.507059e+37
        %v5912 = vand.u32 %v5846, 2147483648
        %v5913 = vor.u32 1.1754944e-38, %v5912
        %v5914 = vsel %vm5911, %v5913, %v5909
        %v5915 = vrcp.pop %v5848
        %v5916 = vmul.f32 %v5848, %v5915
        %v5917 = vsub.f32 1.0, %v5916
        %v5918 = vmul.f32 %v5915, %v5917
        %v5919 = vadd.f32 %v5915, %v5918
        %vm5920 = vweird.f32 %v5848
        %vm5921 = vweird.f32 %v5915
        %vm5922 = vmor %vm5920, %vm5921
        %v5923 = vsel %vm5922, %v5915, %v5919
        %v5924 = vand.u32 2147483647, %v5848
        %vm5925 = vcmp.eq.f32.partialorder %v5924, 8.507059e+37
        %v5926 = vand.u32 %v5848, 2147483648
        %v5927 = vor.u32 1.1754944e-38, %v5926
        %v5928 = vsel %vm5925, %v5927, %v5923
        %v5929 = vrcp.pop %v5850
        %v5930 = vmul.f32 %v5850, %v5929
        %v5931 = vsub.f32 1.0, %v5930
        %v5932 = vmul.f32 %v5929, %v5931
        %v5933 = vadd.f32 %v5929, %v5932
        %vm5934 = vweird.f32 %v5850
        %vm5935 = vweird.f32 %v5929
        %vm5936 = vmor %vm5934, %vm5935
        %v5937 = vsel %vm5936, %v5929, %v5933
        %v5938 = vand.u32 2147483647, %v5850
        %vm5939 = vcmp.eq.f32.partialorder %v5938, 8.507059e+37
        %v5940 = vand.u32 %v5850, 2147483648
        %v5941 = vor.u32 1.1754944e-38, %v5940
        %v5942 = vsel %vm5939, %v5941, %v5937
        %v5943 = vrcp.pop %v5852
        %v5944 = vmul.f32 %v5852, %v5943
        %v5945 = vsub.f32 1.0, %v5944
        %v5946 = vmul.f32 %v5943, %v5945
        %v5947 = vadd.f32 %v5943, %v5946
        %vm5948 = vweird.f32 %v5852
        %vm5949 = vweird.f32 %v5943
        %vm5950 = vmor %vm5948, %vm5949
        %v5951 = vsel %vm5950, %v5943, %v5947
        %v5952 = vand.u32 2147483647, %v5852
        %vm5953 = vcmp.eq.f32.partialorder %v5952, 8.507059e+37
        %v5954 = vand.u32 %v5852, 2147483648
        %v5955 = vor.u32 1.1754944e-38, %v5954
        %v5956 = vsel %vm5953, %v5955, %v5951
        %v5957 = vrcp.pop %v5854
        %v5958 = vmul.f32 %v5854, %v5957
        %v5959 = vsub.f32 1.0, %v5958
        %v5960 = vmul.f32 %v5957, %v5959
        %v5961 = vadd.f32 %v5957, %v5960
        %vm5962 = vweird.f32 %v5854
        %vm5963 = vweird.f32 %v5957
        %vm5964 = vmor %vm5962, %vm5963
        %v5965 = vsel %vm5964, %v5957, %v5961
        %v5966 = vand.u32 2147483647, %v5854
        %vm5967 = vcmp.eq.f32.partialorder %v5966, 8.507059e+37
        %v5968 = vand.u32 %v5854, 2147483648
        %v5969 = vor.u32 1.1754944e-38, %v5968
        %v5970 = vsel %vm5967, %v5969, %v5965
        %v5971 = vrcp.pop %v5856
        %v5972 = vmul.f32 %v5856, %v5971
        %v5973 = vsub.f32 1.0, %v5972
        %v5974 = vmul.f32 %v5971, %v5973
        %v5975 = vadd.f32 %v5971, %v5974
        %vm5976 = vweird.f32 %v5856
        %vm5977 = vweird.f32 %v5971
        %vm5978 = vmor %vm5976, %vm5977
        %v5979 = vsel %vm5978, %v5971, %v5975
        %v5980 = vand.u32 2147483647, %v5856
        %vm5981 = vcmp.eq.f32.partialorder %v5980, 8.507059e+37
        %v5982 = vand.u32 %v5856, 2147483648
        %v5983 = vor.u32 1.1754944e-38, %v5982
        %v5984 = vsel %vm5981, %v5983, %v5979
        %v5985 = vrcp.pop %v5858
        %v5986 = vmul.f32 %v5858, %v5985
        %v5987 = vsub.f32 1.0, %v5986
        %v5988 = vmul.f32 %v5985, %v5987
        %v5989 = vadd.f32 %v5985, %v5988
        %vm5990 = vweird.f32 %v5858
        %vm5991 = vweird.f32 %v5985
        %vm5992 = vmor %vm5990, %vm5991
        %v5993 = vsel %vm5992, %v5985, %v5989
        %v5994 = vand.u32 2147483647, %v5858
        %vm5995 = vcmp.eq.f32.partialorder %v5994, 8.507059e+37
        %v5996 = vand.u32 %v5858, 2147483648
        %v5997 = vor.u32 1.1754944e-38, %v5996
        %v5998 = vsel %vm5995, %v5997, %v5993
        %v5999 = vrcp.pop %v5860
        %v6000 = vmul.f32 %v5860, %v5999
        %v6001 = vsub.f32 1.0, %v6000
        %v6002 = vmul.f32 %v5999, %v6001
        %v6003 = vadd.f32 %v5999, %v6002
        %vm6004 = vweird.f32 %v5860
        %vm6005 = vweird.f32 %v5999
        %vm6006 = vmor %vm6004, %vm6005
        %v6007 = vsel %vm6006, %v5999, %v6003
        %v6008 = vand.u32 2147483647, %v5860
        %vm6009 = vcmp.eq.f32.partialorder %v6008, 8.507059e+37
        %v6010 = vand.u32 %v5860, 2147483648
        %v6011 = vor.u32 1.1754944e-38, %v6010
        %v6012 = vsel %vm6009, %v6011, %v6007
        %v6013 = vrcp.pop %v5862
        %v6014 = vmul.f32 %v5862, %v6013
        %v6015 = vsub.f32 1.0, %v6014
        %v6016 = vmul.f32 %v6013, %v6015
        %v6017 = vadd.f32 %v6013, %v6016
        %vm6018 = vweird.f32 %v5862
        %vm6019 = vweird.f32 %v6013
        %vm6020 = vmor %vm6018, %vm6019
        %v6021 = vsel %vm6020, %v6013, %v6017
        %v6022 = vand.u32 2147483647, %v5862
        %vm6023 = vcmp.eq.f32.partialorder %v6022, 8.507059e+37
        %v6024 = vand.u32 %v5862, 2147483648
        %v6025 = vor.u32 1.1754944e-38, %v6024
        %v6026 = vsel %vm6023, %v6025, %v6021
        %v6027 = vrcp.pop %v5864
        %v6028 = vmul.f32 %v5864, %v6027
        %v6029 = vsub.f32 1.0, %v6028
        %v6030 = vmul.f32 %v6027, %v6029
        %v6031 = vadd.f32 %v6027, %v6030
        %vm6032 = vweird.f32 %v5864
        %vm6033 = vweird.f32 %v6027
        %vm6034 = vmor %vm6032, %vm6033
        %v6035 = vsel %vm6034, %v6027, %v6031
        %v6036 = vand.u32 2147483647, %v5864
        %vm6037 = vcmp.eq.f32.partialorder %v6036, 8.507059e+37
        %v6038 = vand.u32 %v5864, 2147483648
        %v6039 = vor.u32 1.1754944e-38, %v6038
        %v6040 = vsel %vm6037, %v6039, %v6035
        %v6041 = vrcp.pop %v5866
        %v6042 = vmul.f32 %v5866, %v6041
        %v6043 = vsub.f32 1.0, %v6042
        %v6044 = vmul.f32 %v6041, %v6043
        %v6045 = vadd.f32 %v6041, %v6044
        %vm6046 = vweird.f32 %v5866
        %vm6047 = vweird.f32 %v6041
        %vm6048 = vmor %vm6046, %vm6047
        %v6049 = vsel %vm6048, %v6041, %v6045
        %v6050 = vand.u32 2147483647, %v5866
        %vm6051 = vcmp.eq.f32.partialorder %v6050, 8.507059e+37
        %v6052 = vand.u32 %v5866, 2147483648
        %v6053 = vor.u32 1.1754944e-38, %v6052
        %v6054 = vsel %vm6051, %v6053, %v6049
        %v6055 = vrcp.pop %v5868
        %v6056 = vmul.f32 %v5868, %v6055
        %v6057 = vsub.f32 1.0, %v6056
        %v6058 = vmul.f32 %v6055, %v6057
        %v6059 = vadd.f32 %v6055, %v6058
        %vm6060 = vweird.f32 %v5868
        %vm6061 = vweird.f32 %v6055
        %vm6062 = vmor %vm6060, %vm6061
        %v6063 = vsel %vm6062, %v6055, %v6059
        %v6064 = vand.u32 2147483647, %v5868
        %vm6065 = vcmp.eq.f32.partialorder %v6064, 8.507059e+37
        %v6066 = vand.u32 %v5868, 2147483648
        %v6067 = vor.u32 1.1754944e-38, %v6066
        %v6068 = vsel %vm6065, %v6067, %v6063
        %v6069 = vrcp.pop %v5870
        %v6070 = vmul.f32 %v5870, %v6069
        %v6071 = vsub.f32 1.0, %v6070
        %v6072 = vmul.f32 %v6069, %v6071
        %v6073 = vadd.f32 %v6069, %v6072
        %vm6074 = vweird.f32 %v5870
        %vm6075 = vweird.f32 %v6069
        %vm6076 = vmor %vm6074, %vm6075
        %v6077 = vsel %vm6076, %v6069, %v6073
        %v6078 = vand.u32 2147483647, %v5870
        %vm6079 = vcmp.eq.f32.partialorder %v6078, 8.507059e+37
        %v6080 = vand.u32 %v5870, 2147483648
        %v6081 = vor.u32 1.1754944e-38, %v6080
        %v6082 = vsel %vm6079, %v6081, %v6077
        %v6083 = vrcp.pop %v5872
        %v6084 = vmul.f32 %v5872, %v6083
        %v6085 = vsub.f32 1.0, %v6084
        %v6086 = vmul.f32 %v6083, %v6085
        %v6087 = vadd.f32 %v6083, %v6086
        %vm6088 = vweird.f32 %v5872
        %vm6089 = vweird.f32 %v6083
        %vm6090 = vmor %vm6088, %vm6089
        %v6091 = vsel %vm6090, %v6083, %v6087
        %v6092 = vand.u32 2147483647, %v5872
        %vm6093 = vcmp.eq.f32.partialorder %v6092, 8.507059e+37
        %v6094 = vand.u32 %v5872, 2147483648
        %v6095 = vor.u32 1.1754944e-38, %v6094
        %v6096 = vsel %vm6093, %v6095, %v6091
        %v6097 = vpack.c.bf16 %v5810, %v5810
        %v6098 = vpack.c.bf16 %v5812, %v5812
        %v6099 = vpack.c.bf16 %v5814, %v5814
        %v6100 = vpack.c.bf16 %v5816, %v5816
        %v6101 = vpack.c.bf16 %v5818, %v5818
        %v6102 = vpack.c.bf16 %v5820, %v5820
        %v6103 = vpack.c.bf16 %v5822, %v5822
        %v6104 = vpack.c.bf16 %v5824, %v5824
        %v6105 = vpack.c.bf16 %v5826, %v5826
        %v6106 = vpack.c.bf16 %v5828, %v5828
        %v6107 = vpack.c.bf16 %v5830, %v5830
        %v6108 = vpack.c.bf16 %v5832, %v5832
        %v6109 = vpack.c.bf16 %v5834, %v5834
        %v6110 = vpack.c.bf16 %v5836, %v5836
        %v6111 = vpack.c.bf16 %v5838, %v5838
        %v6112 = vpack.c.bf16 %v5840, %v5840
        %v6129 = vunpack.c.l.b16 %v6097
        %v6130 = vunpack.c.l.b16 %v6098
        %v6131 = vunpack.c.l.b16 %v6099
        %v6132 = vunpack.c.l.b16 %v6100
        %v6133 = vunpack.c.l.b16 %v6101
        %v6134 = vunpack.c.l.b16 %v6102
        %v6135 = vunpack.c.l.b16 %v6103
        %v6136 = vunpack.c.l.b16 %v6104
        %v6137 = vunpack.c.l.b16 %v6105
        %v6138 = vunpack.c.l.b16 %v6106
        %v6139 = vunpack.c.l.b16 %v6107
        %v6140 = vunpack.c.l.b16 %v6108
        %v6141 = vunpack.c.l.b16 %v6109
        %v6142 = vunpack.c.l.b16 %v6110
        %v6143 = vunpack.c.l.b16 %v6111
        %v6144 = vunpack.c.l.b16 %v6112
        %v6145 = vpack.c.b16 %v6130, %v6129
        %v6146 = vpack.c.b16 %v6132, %v6131
        %v6147 = vpack.c.b16 %v6134, %v6133
        %v6148 = vpack.c.b16 %v6136, %v6135
        %v6149 = vpack.c.b16 %v6138, %v6137
        %v6150 = vpack.c.b16 %v6140, %v6139
        %v6151 = vpack.c.b16 %v6142, %v6141
        %v6152 = vpack.c.b16 %v6144, %v6143
        %6161 = vrot.lane.b32.xlu0 %v4982, 56
        %v6162 = vpop.permute.xlu0 %6161
        %6163 = vrot.lane.b32.xlu0 %v4983, 56
        %v6164 = vpop.permute.xlu0 %6163
        %6165 = vrot.lane.b32.xlu0 %v4984, 56
        %v6166 = vpop.permute.xlu0 %6165
        %6167 = vrot.lane.b32.xlu0 %v4985, 56
        %v6168 = vpop.permute.xlu0 %6167
        %6169 = vrot.lane.b32.xlu0 %v4986, 56
        %v6170 = vpop.permute.xlu0 %6169
        %6171 = vrot.lane.b32.xlu0 %v4987, 56
        %v6172 = vpop.permute.xlu0 %6171
        %6173 = vrot.lane.b32.xlu0 %v4988, 56
        %v6174 = vpop.permute.xlu0 %6173
        %6175 = vrot.lane.b32.xlu0 %v4989, 56
        %v6176 = vpop.permute.xlu0 %6175
        %6185 = vmatpush.bf16.msra.mxu0 %v6176
        %6186 = vmatpush.bf16.msra.mxu0 %v6174
        %6187 = vmatpush.bf16.msra.mxu0 %v6172
        %6188 = vmatpush.bf16.msra.mxu0 %v6170
        %6189 = vmatpush.bf16.msra.mxu0 %v6168
        %6190 = vmatpush.bf16.msra.mxu0 %v6166
        %6191 = vmatpush.bf16.msra.mxu0 %v6164
        %6192 = vmatpush.bf16.msra.mxu0 %v6162
        %6193 = vmatmul.bf16.gmra.mxu0 %v6145
        %v6194 = vpop.f32.mrf.mxu0
        %v6195 = vadd.f32 0.0, %v6194
        %v6196 = vpop.f32.mrf.mxu0
        %v6197 = vadd.f32 0.0, %v6196
        %6198 = vmatmul.bf16.gmra.mxu0 %v6146
        %v6199 = vpop.f32.mrf.mxu0
        %v6200 = vadd.f32 0.0, %v6199
        %v6201 = vpop.f32.mrf.mxu0
        %v6202 = vadd.f32 0.0, %v6201
        %6203 = vmatmul.bf16.gmra.mxu0 %v6147
        %v6204 = vpop.f32.mrf.mxu0
        %v6205 = vadd.f32 0.0, %v6204
        %v6206 = vpop.f32.mrf.mxu0
        %v6207 = vadd.f32 0.0, %v6206
        %6208 = vmatmul.bf16.gmra.mxu0 %v6148
        %v6209 = vpop.f32.mrf.mxu0
        %v6210 = vadd.f32 0.0, %v6209
        %v6211 = vpop.f32.mrf.mxu0
        %v6212 = vadd.f32 0.0, %v6211
        %6213 = vmatmul.bf16.gmra.mxu0 %v6149
        %v6214 = vpop.f32.mrf.mxu0
        %v6215 = vadd.f32 0.0, %v6214
        %v6216 = vpop.f32.mrf.mxu0
        %v6217 = vadd.f32 0.0, %v6216
        %6218 = vmatmul.bf16.gmra.mxu0 %v6150
        %v6219 = vpop.f32.mrf.mxu0
        %v6220 = vadd.f32 0.0, %v6219
        %v6221 = vpop.f32.mrf.mxu0
        %v6222 = vadd.f32 0.0, %v6221
        %6223 = vmatmul.bf16.gmra.mxu0 %v6151
        %v6224 = vpop.f32.mrf.mxu0
        %v6225 = vadd.f32 0.0, %v6224
        %v6226 = vpop.f32.mrf.mxu0
        %v6227 = vadd.f32 0.0, %v6226
        %6228 = vmatmul.bf16.gmra.mxu0 %v6152
        %v6229 = vpop.f32.mrf.mxu0
        %v6230 = vadd.f32 0.0, %v6229
        %v6231 = vpop.f32.mrf.mxu0
        %v6232 = vadd.f32 0.0, %v6231
        %6233 = vdwg.mxu0
        %v6234 = vmul.f32 %v6195, %v5886
        %v6235 = vmul.f32 %v6197, %v5900
        %v6236 = vmul.f32 %v6200, %v5914
        %v6237 = vmul.f32 %v6202, %v5928
        %v6238 = vmul.f32 %v6205, %v5942
        %v6239 = vmul.f32 %v6207, %v5956
        %v6240 = vmul.f32 %v6210, %v5970
        %v6241 = vmul.f32 %v6212, %v5984
        %v6242 = vmul.f32 %v6215, %v5998
        %v6243 = vmul.f32 %v6217, %v6012
        %v6244 = vmul.f32 %v6220, %v6026
        %v6245 = vmul.f32 %v6222, %v6040
        %v6246 = vmul.f32 %v6225, %v6054
        %v6247 = vmul.f32 %v6227, %v6068
        %v6248 = vmul.f32 %v6230, %v6082
        %v6249 = vmul.f32 %v6232, %v6096
        %v6250 = vmul.f32 %v5810, %v5886
        %v6251 = vmul.f32 %v5812, %v5900
        %v6252 = vmul.f32 %v5814, %v5914
        %v6253 = vmul.f32 %v5816, %v5928
        %v6254 = vmul.f32 %v5818, %v5942
        %v6255 = vmul.f32 %v5820, %v5956
        %v6256 = vmul.f32 %v5822, %v5970
        %v6257 = vmul.f32 %v5824, %v5984
        %v6258 = vmul.f32 %v5826, %v5998
        %v6259 = vmul.f32 %v5828, %v6012
        %v6260 = vmul.f32 %v5830, %v6026
        %v6261 = vmul.f32 %v5832, %v6040
        %v6262 = vmul.f32 %v5834, %v6054
        %v6263 = vmul.f32 %v5836, %v6068
        %v6264 = vmul.f32 %v5838, %v6082
        %v6265 = vmul.f32 %v5840, %v6096
        %v6266 = vadd.f32 %v5608, %v6250
        %v6267 = vadd.f32 %v5609, %v6251
        %v6268 = vadd.f32 %v5610, %v6252
        %v6269 = vadd.f32 %v5611, %v6253
        %v6270 = vadd.f32 %v5612, %v6254
        %v6271 = vadd.f32 %v5613, %v6255
        %v6272 = vadd.f32 %v5614, %v6256
        %v6273 = vadd.f32 %v5615, %v6257
        %v6274 = vadd.f32 %v5616, %v6258
        %v6275 = vadd.f32 %v5617, %v6259
        %v6276 = vadd.f32 %v5618, %v6260
        %v6277 = vadd.f32 %v5619, %v6261
        %v6278 = vadd.f32 %v5620, %v6262
        %v6279 = vadd.f32 %v5621, %v6263
        %v6280 = vadd.f32 %v5622, %v6264
        %v6281 = vadd.f32 %v5623, %v6265
        %v6282 = vpack.c.bf16 %v6235, %v6234
        %v6283 = vpack.c.bf16 %v6237, %v6236
        %v6284 = vpack.c.bf16 %v6239, %v6238
        %v6285 = vpack.c.bf16 %v6241, %v6240
        %v6286 = vpack.c.bf16 %v6243, %v6242
        %v6287 = vpack.c.bf16 %v6245, %v6244
        %v6288 = vpack.c.bf16 %v6247, %v6246
        %v6289 = vpack.c.bf16 %v6249, %v6248
        %v6291 = vsel %vm714, %v6282, 0
        %v6294 = vsel %vm714, %v6283, 0
        %v6297 = vsel %vm714, %v6284, 0
        %v6300 = vsel %vm714, %v6285, 0
        %v6303 = vsel %vm714, %v6286, 0
        %v6306 = vsel %vm714, %v6287, 0
        %v6309 = vsel %vm714, %v6288, 0
        %v6312 = vsel %vm714, %v6289, 0
        %v6315 = vsel %vm2023, %v4738, 0
        %6317 = vmatpush.bf16.msra.mxu0 0
        %6318 = vmatpush.bf16.msra.mxu0 0
        %6319 = vmatpush.bf16.msra.mxu0 0
        %6320 = vmatpush.bf16.msra.mxu0 0
        %6321 = vmatpush.bf16.msra.mxu0 0
        %6322 = vmatpush.bf16.msra.mxu0 0
        %6323 = vmatpush.bf16.msra.mxu0 0
        %6324 = vmatpush.bf16.msra.mxu0 %v6315
        %6325 = vmatmul.bf16.gmra.mxu0 %v6291
        %v6326 = vpop.f32.mrf.mxu0
        %v6327 = vadd.f32 0.0, %v6326
        %v6328 = vpop.f32.mrf.mxu0
        %v6329 = vadd.f32 0.0, %v6328
        %6330 = vmatmul.bf16.gmra.mxu0 %v6294
        %v6331 = vpop.f32.mrf.mxu0
        %v6332 = vadd.f32 0.0, %v6331
        %v6333 = vpop.f32.mrf.mxu0
        %v6334 = vadd.f32 0.0, %v6333
        %6335 = vmatmul.bf16.gmra.mxu0 %v6297
        %v6336 = vpop.f32.mrf.mxu0
        %v6337 = vadd.f32 0.0, %v6336
        %v6338 = vpop.f32.mrf.mxu0
        %v6339 = vadd.f32 0.0, %v6338
        %6340 = vmatmul.bf16.gmra.mxu0 %v6300
        %v6341 = vpop.f32.mrf.mxu0
        %v6342 = vadd.f32 0.0, %v6341
        %v6343 = vpop.f32.mrf.mxu0
        %v6344 = vadd.f32 0.0, %v6343
        %6345 = vmatmul.bf16.gmra.mxu0 %v6303
        %v6346 = vpop.f32.mrf.mxu0
        %v6347 = vadd.f32 0.0, %v6346
        %v6348 = vpop.f32.mrf.mxu0
        %v6349 = vadd.f32 0.0, %v6348
        %6350 = vmatmul.bf16.gmra.mxu0 %v6306
        %v6351 = vpop.f32.mrf.mxu0
        %v6352 = vadd.f32 0.0, %v6351
        %v6353 = vpop.f32.mrf.mxu0
        %v6354 = vadd.f32 0.0, %v6353
        %6355 = vmatmul.bf16.gmra.mxu0 %v6309
        %v6356 = vpop.f32.mrf.mxu0
        %v6357 = vadd.f32 0.0, %v6356
        %v6358 = vpop.f32.mrf.mxu0
        %v6359 = vadd.f32 0.0, %v6358
        %6360 = vmatmul.bf16.gmra.mxu0 %v6312
        %v6361 = vpop.f32.mrf.mxu0
        %v6362 = vadd.f32 0.0, %v6361
        %v6363 = vpop.f32.mrf.mxu0
        %v6364 = vadd.f32 0.0, %v6363
        %6365 = vdwg.mxu0
        %v6367 = vsel %vm714, %v5624, 0
        %v6370 = vsel %vm714, %v5625, 0
        %v6373 = vsel %vm714, %v5626, 0
        %v6376 = vsel %vm714, %v5627, 0
        %v6379 = vsel %vm714, %v5628, 0
        %v6382 = vsel %vm714, %v5629, 0
        %v6385 = vsel %vm714, %v5630, 0
        %v6388 = vsel %vm714, %v5631, 0
        %v6391 = vsel %vm2023, %v4737, 0
        %6393 = vmatpush.bf16.msra.mxu0 0
        %6394 = vmatpush.bf16.msra.mxu0 0
        %6395 = vmatpush.bf16.msra.mxu0 0
        %6396 = vmatpush.bf16.msra.mxu0 0
        %6397 = vmatpush.bf16.msra.mxu0 0
        %6398 = vmatpush.bf16.msra.mxu0 0
        %6399 = vmatpush.bf16.msra.mxu0 0
        %6400 = vmatpush.bf16.msra.mxu0 %v6391
        %6401 = vmatmul.bf16.gmra.mxu0 %v6367
        %v6402 = vpop.f32.mrf.mxu0
        %v6403 = vadd.f32 %v6327, %v6402
        %v6404 = vpop.f32.mrf.mxu0
        %v6405 = vadd.f32 %v6329, %v6404
        %6406 = vmatmul.bf16.gmra.mxu0 %v6370
        %v6407 = vpop.f32.mrf.mxu0
        %v6408 = vadd.f32 %v6332, %v6407
        %v6409 = vpop.f32.mrf.mxu0
        %v6410 = vadd.f32 %v6334, %v6409
        %6411 = vmatmul.bf16.gmra.mxu0 %v6373
        %v6412 = vpop.f32.mrf.mxu0
        %v6413 = vadd.f32 %v6337, %v6412
        %v6414 = vpop.f32.mrf.mxu0
        %v6415 = vadd.f32 %v6339, %v6414
        %6416 = vmatmul.bf16.gmra.mxu0 %v6376
        %v6417 = vpop.f32.mrf.mxu0
        %v6418 = vadd.f32 %v6342, %v6417
        %v6419 = vpop.f32.mrf.mxu0
        %v6420 = vadd.f32 %v6344, %v6419
        %6421 = vmatmul.bf16.gmra.mxu0 %v6379
        %v6422 = vpop.f32.mrf.mxu0
        %v6423 = vadd.f32 %v6347, %v6422
        %v6424 = vpop.f32.mrf.mxu0
        %v6425 = vadd.f32 %v6349, %v6424
        %6426 = vmatmul.bf16.gmra.mxu0 %v6382
        %v6427 = vpop.f32.mrf.mxu0
        %v6428 = vadd.f32 %v6352, %v6427
        %v6429 = vpop.f32.mrf.mxu0
        %v6430 = vadd.f32 %v6354, %v6429
        %6431 = vmatmul.bf16.gmra.mxu0 %v6385
        %v6432 = vpop.f32.mrf.mxu0
        %v6433 = vadd.f32 %v6357, %v6432
        %v6434 = vpop.f32.mrf.mxu0
        %v6435 = vadd.f32 %v6359, %v6434
        %6436 = vmatmul.bf16.gmra.mxu0 %v6388
        %v6437 = vpop.f32.mrf.mxu0
        %v6438 = vadd.f32 %v6362, %v6437
        %v6439 = vpop.f32.mrf.mxu0
        %v6440 = vadd.f32 %v6364, %v6439
        %6441 = vdwg.mxu0
        %6442 = vrot.lane.b32.xlu0 %v4942, 112
        %v6443 = vpop.permute.xlu0 %6442
        %6444 = vrot.lane.b32.xlu0 %v4943, 112
        %v6445 = vpop.permute.xlu0 %6444
        %6446 = vrot.lane.b32.xlu0 %v4944, 112
        %v6447 = vpop.permute.xlu0 %6446
        %6448 = vrot.lane.b32.xlu0 %v4945, 112
        %v6449 = vpop.permute.xlu0 %6448
        %6450 = vrot.lane.b32.xlu0 %v4946, 112
        %v6451 = vpop.permute.xlu0 %6450
        %6452 = vrot.lane.b32.xlu0 %v4947, 112
        %v6453 = vpop.permute.xlu0 %6452
        %6454 = vrot.lane.b32.xlu0 %v4948, 112
        %v6455 = vpop.permute.xlu0 %6454
        %6456 = vrot.lane.b32.xlu0 %v4949, 112
        %v6457 = vpop.permute.xlu0 %6456
        %6458 = vrot.lane.b32.xlu0 %v4982, 80
        %v6459 = vpop.permute.xlu0 %6458
        %6460 = vrot.lane.b32.xlu0 %v4983, 80
        %v6461 = vpop.permute.xlu0 %6460
        %6462 = vrot.lane.b32.xlu0 %v4984, 80
        %v6463 = vpop.permute.xlu0 %6462
        %6464 = vrot.lane.b32.xlu0 %v4985, 80
        %v6465 = vpop.permute.xlu0 %6464
        %6466 = vrot.lane.b32.xlu0 %v4986, 80
        %v6467 = vpop.permute.xlu0 %6466
        %6468 = vrot.lane.b32.xlu0 %v4987, 80
        %v6469 = vpop.permute.xlu0 %6468
        %6470 = vrot.lane.b32.xlu0 %v4988, 80
        %v6471 = vpop.permute.xlu0 %6470
        %6472 = vrot.lane.b32.xlu0 %v4989, 80
        %v6473 = vpop.permute.xlu0 %6472
        %v6475 = vsel %vm714, %v6443, 0
        %v6478 = vsel %vm714, %v6445, 0
        %v6481 = vsel %vm714, %v6447, 0
        %v6484 = vsel %vm714, %v6449, 0
        %v6487 = vsel %vm714, %v6451, 0
        %v6490 = vsel %vm714, %v6453, 0
        %v6493 = vsel %vm714, %v6455, 0
        %v6496 = vsel %vm714, %v6457, 0
        %v6499 = vsel %vm714, %v6459, 0
        %v6502 = vsel %vm714, %v6461, 0
        %v6505 = vsel %vm714, %v6463, 0
        %v6508 = vsel %vm714, %v6465, 0
        %v6511 = vsel %vm714, %v6467, 0
        %v6514 = vsel %vm714, %v6469, 0
        %v6517 = vsel %vm714, %v6471, 0
        %v6520 = vsel %vm714, %v6473, 0
        %6522 = vmatpush.bf16.xpose.msra.mxu0 %v6520
        %6523 = vmatpush.bf16.xpose.msra.mxu0 %v6517
        %6524 = vmatpush.bf16.xpose.msra.mxu0 %v6514
        %6525 = vmatpush.bf16.xpose.msra.mxu0 %v6511
        %6526 = vmatpush.bf16.xpose.msra.mxu0 %v6508
        %6527 = vmatpush.bf16.xpose.msra.mxu0 %v6505
        %6528 = vmatpush.bf16.xpose.msra.mxu0 %v6502
        %6529 = vmatpush.bf16.xpose.msra.mxu0 %v6499
        %6530 = vmatmul.bf16.gmra.mxu0 %v6475
        %v6531 = vpop.f32.mrf.mxu0
        %v6532 = vadd.f32 %v4908, %v6531
        %v6533 = vpop.f32.mrf.mxu0
        %v6534 = vadd.f32 %v4908, %v6533
        %6535 = vmatmul.bf16.gmra.mxu0 %v6478
        %v6536 = vpop.f32.mrf.mxu0
        %v6537 = vadd.f32 %v4908, %v6536
        %v6538 = vpop.f32.mrf.mxu0
        %v6539 = vadd.f32 %v4908, %v6538
        %6540 = vmatmul.bf16.gmra.mxu0 %v6481
        %v6541 = vpop.f32.mrf.mxu0
        %v6542 = vadd.f32 %v4908, %v6541
        %v6543 = vpop.f32.mrf.mxu0
        %v6544 = vadd.f32 %v4908, %v6543
        %6545 = vmatmul.bf16.gmra.mxu0 %v6484
        %v6546 = vpop.f32.mrf.mxu0
        %v6547 = vadd.f32 %v4908, %v6546
        %v6548 = vpop.f32.mrf.mxu0
        %v6549 = vadd.f32 %v4908, %v6548
        %6550 = vmatmul.bf16.gmra.mxu0 %v6487
        %v6551 = vpop.f32.mrf.mxu0
        %v6552 = vadd.f32 %v4908, %v6551
        %v6553 = vpop.f32.mrf.mxu0
        %v6554 = vadd.f32 %v4908, %v6553
        %6555 = vmatmul.bf16.gmra.mxu0 %v6490
        %v6556 = vpop.f32.mrf.mxu0
        %v6557 = vadd.f32 %v4908, %v6556
        %v6558 = vpop.f32.mrf.mxu0
        %v6559 = vadd.f32 %v4908, %v6558
        %6560 = vmatmul.bf16.gmra.mxu0 %v6493
        %v6561 = vpop.f32.mrf.mxu0
        %v6562 = vadd.f32 %v4908, %v6561
        %v6563 = vpop.f32.mrf.mxu0
        %v6564 = vadd.f32 %v4908, %v6563
        %6565 = vmatmul.bf16.gmra.mxu0 %v6496
        %v6566 = vpop.f32.mrf.mxu0
        %v6567 = vadd.f32 %v4908, %v6566
        %v6568 = vpop.f32.mrf.mxu0
        %v6569 = vadd.f32 %v4908, %v6568
        %6570 = vdwg.mxu0
        %6571 = vmax.xlane.f32.xlu0 %v6532
        %v6572 = vpop.xlane.xlu0 %6571
        %6573 = vmax.xlane.f32.xlu0 %v6534
        %v6574 = vpop.xlane.xlu0 %6573
        %6575 = vmax.xlane.f32.xlu0 %v6537
        %v6576 = vpop.xlane.xlu0 %6575
        %6577 = vmax.xlane.f32.xlu0 %v6539
        %v6578 = vpop.xlane.xlu0 %6577
        %6579 = vmax.xlane.f32.xlu0 %v6542
        %v6580 = vpop.xlane.xlu0 %6579
        %6581 = vmax.xlane.f32.xlu0 %v6544
        %v6582 = vpop.xlane.xlu0 %6581
        %6583 = vmax.xlane.f32.xlu0 %v6547
        %v6584 = vpop.xlane.xlu0 %6583
        %6585 = vmax.xlane.f32.xlu0 %v6549
        %v6586 = vpop.xlane.xlu0 %6585
        %6587 = vmax.xlane.f32.xlu0 %v6552
        %v6588 = vpop.xlane.xlu0 %6587
        %6589 = vmax.xlane.f32.xlu0 %v6554
        %v6590 = vpop.xlane.xlu0 %6589
        %6591 = vmax.xlane.f32.xlu0 %v6557
        %v6592 = vpop.xlane.xlu0 %6591
        %6593 = vmax.xlane.f32.xlu0 %v6559
        %v6594 = vpop.xlane.xlu0 %6593
        %6595 = vmax.xlane.f32.xlu0 %v6562
        %v6596 = vpop.xlane.xlu0 %6595
        %6597 = vmax.xlane.f32.xlu0 %v6564
        %v6598 = vpop.xlane.xlu0 %6597
        %6599 = vmax.xlane.f32.xlu0 %v6567
        %v6600 = vpop.xlane.xlu0 %6599
        %6601 = vmax.xlane.f32.xlu0 %v6569
        %v6602 = vpop.xlane.xlu0 %6601
        %v6603 = vsub.f32 %v6532, %v6572
        %v6604 = vsub.f32 %v6534, %v6574
        %v6605 = vsub.f32 %v6537, %v6576
        %v6606 = vsub.f32 %v6539, %v6578
        %v6607 = vsub.f32 %v6542, %v6580
        %v6608 = vsub.f32 %v6544, %v6582
        %v6609 = vsub.f32 %v6547, %v6584
        %v6610 = vsub.f32 %v6549, %v6586
        %v6611 = vsub.f32 %v6552, %v6588
        %v6612 = vsub.f32 %v6554, %v6590
        %v6613 = vsub.f32 %v6557, %v6592
        %v6614 = vsub.f32 %v6559, %v6594
        %v6615 = vsub.f32 %v6562, %v6596
        %v6616 = vsub.f32 %v6564, %v6598
        %v6617 = vsub.f32 %v6567, %v6600
        %v6618 = vsub.f32 %v6569, %v6602
        %v6619 = vmul.f32 %v6603, 1.442695
        %v6620 = vpow.pop %v6619
        %v6621 = vmul.f32 %v6604, 1.442695
        %v6622 = vpow.pop %v6621
        %v6623 = vmul.f32 %v6605, 1.442695
        %v6624 = vpow.pop %v6623
        %v6625 = vmul.f32 %v6606, 1.442695
        %v6626 = vpow.pop %v6625
        %v6627 = vmul.f32 %v6607, 1.442695
        %v6628 = vpow.pop %v6627
        %v6629 = vmul.f32 %v6608, 1.442695
        %v6630 = vpow.pop %v6629
        %v6631 = vmul.f32 %v6609, 1.442695
        %v6632 = vpow.pop %v6631
        %v6633 = vmul.f32 %v6610, 1.442695
        %v6634 = vpow.pop %v6633
        %v6635 = vmul.f32 %v6611, 1.442695
        %v6636 = vpow.pop %v6635
        %v6637 = vmul.f32 %v6612, 1.442695
        %v6638 = vpow.pop %v6637
        %v6639 = vmul.f32 %v6613, 1.442695
        %v6640 = vpow.pop %v6639
        %v6641 = vmul.f32 %v6614, 1.442695
        %v6642 = vpow.pop %v6641
        %v6643 = vmul.f32 %v6615, 1.442695
        %v6644 = vpow.pop %v6643
        %v6645 = vmul.f32 %v6616, 1.442695
        %v6646 = vpow.pop %v6645
        %v6647 = vmul.f32 %v6617, 1.442695
        %v6648 = vpow.pop %v6647
        %v6649 = vmul.f32 %v6618, 1.442695
        %v6650 = vpow.pop %v6649
        %6651 = vadd.xlane.f32.xlu0 %v6620
        %v6652 = vpop.xlane.xlu0 %6651
        %6653 = vadd.xlane.f32.xlu0 %v6622
        %v6654 = vpop.xlane.xlu0 %6653
        %6655 = vadd.xlane.f32.xlu0 %v6624
        %v6656 = vpop.xlane.xlu0 %6655
        %6657 = vadd.xlane.f32.xlu0 %v6626
        %v6658 = vpop.xlane.xlu0 %6657
        %6659 = vadd.xlane.f32.xlu0 %v6628
        %v6660 = vpop.xlane.xlu0 %6659
        %6661 = vadd.xlane.f32.xlu0 %v6630
        %v6662 = vpop.xlane.xlu0 %6661
        %6663 = vadd.xlane.f32.xlu0 %v6632
        %v6664 = vpop.xlane.xlu0 %6663
        %6665 = vadd.xlane.f32.xlu0 %v6634
        %v6666 = vpop.xlane.xlu0 %6665
        %6667 = vadd.xlane.f32.xlu0 %v6636
        %v6668 = vpop.xlane.xlu0 %6667
        %6669 = vadd.xlane.f32.xlu0 %v6638
        %v6670 = vpop.xlane.xlu0 %6669
        %6671 = vadd.xlane.f32.xlu0 %v6640
        %v6672 = vpop.xlane.xlu0 %6671
        %6673 = vadd.xlane.f32.xlu0 %v6642
        %v6674 = vpop.xlane.xlu0 %6673
        %6675 = vadd.xlane.f32.xlu0 %v6644
        %v6676 = vpop.xlane.xlu0 %6675
        %6677 = vadd.xlane.f32.xlu0 %v6646
        %v6678 = vpop.xlane.xlu0 %6677
        %6679 = vadd.xlane.f32.xlu0 %v6648
        %v6680 = vpop.xlane.xlu0 %6679
        %6681 = vadd.xlane.f32.xlu0 %v6650
        %v6682 = vpop.xlane.xlu0 %6681
        %v6683 = vrcp.pop %v6652
        %v6684 = vmul.f32 %v6652, %v6683
        %v6685 = vsub.f32 1.0, %v6684
        %v6686 = vmul.f32 %v6683, %v6685
        %v6687 = vadd.f32 %v6683, %v6686
        %vm6688 = vweird.f32 %v6652
        %vm6689 = vweird.f32 %v6683
        %vm6690 = vmor %vm6688, %vm6689
        %v6691 = vsel %vm6690, %v6683, %v6687
        %v6692 = vand.u32 2147483647, %v6652
        %vm6693 = vcmp.eq.f32.partialorder %v6692, 8.507059e+37
        %v6694 = vand.u32 %v6652, 2147483648
        %v6695 = vor.u32 1.1754944e-38, %v6694
        %v6696 = vsel %vm6693, %v6695, %v6691
        %v6697 = vrcp.pop %v6654
        %v6698 = vmul.f32 %v6654, %v6697
        %v6699 = vsub.f32 1.0, %v6698
        %v6700 = vmul.f32 %v6697, %v6699
        %v6701 = vadd.f32 %v6697, %v6700
        %vm6702 = vweird.f32 %v6654
        %vm6703 = vweird.f32 %v6697
        %vm6704 = vmor %vm6702, %vm6703
        %v6705 = vsel %vm6704, %v6697, %v6701
        %v6706 = vand.u32 2147483647, %v6654
        %vm6707 = vcmp.eq.f32.partialorder %v6706, 8.507059e+37
        %v6708 = vand.u32 %v6654, 2147483648
        %v6709 = vor.u32 1.1754944e-38, %v6708
        %v6710 = vsel %vm6707, %v6709, %v6705
        %v6711 = vrcp.pop %v6656
        %v6712 = vmul.f32 %v6656, %v6711
        %v6713 = vsub.f32 1.0, %v6712
        %v6714 = vmul.f32 %v6711, %v6713
        %v6715 = vadd.f32 %v6711, %v6714
        %vm6716 = vweird.f32 %v6656
        %vm6717 = vweird.f32 %v6711
        %vm6718 = vmor %vm6716, %vm6717
        %v6719 = vsel %vm6718, %v6711, %v6715
        %v6720 = vand.u32 2147483647, %v6656
        %vm6721 = vcmp.eq.f32.partialorder %v6720, 8.507059e+37
        %v6722 = vand.u32 %v6656, 2147483648
        %v6723 = vor.u32 1.1754944e-38, %v6722
        %v6724 = vsel %vm6721, %v6723, %v6719
        %v6725 = vrcp.pop %v6658
        %v6726 = vmul.f32 %v6658, %v6725
        %v6727 = vsub.f32 1.0, %v6726
        %v6728 = vmul.f32 %v6725, %v6727
        %v6729 = vadd.f32 %v6725, %v6728
        %vm6730 = vweird.f32 %v6658
        %vm6731 = vweird.f32 %v6725
        %vm6732 = vmor %vm6730, %vm6731
        %v6733 = vsel %vm6732, %v6725, %v6729
        %v6734 = vand.u32 2147483647, %v6658
        %vm6735 = vcmp.eq.f32.partialorder %v6734, 8.507059e+37
        %v6736 = vand.u32 %v6658, 2147483648
        %v6737 = vor.u32 1.1754944e-38, %v6736
        %v6738 = vsel %vm6735, %v6737, %v6733
        %v6739 = vrcp.pop %v6660
        %v6740 = vmul.f32 %v6660, %v6739
        %v6741 = vsub.f32 1.0, %v6740
        %v6742 = vmul.f32 %v6739, %v6741
        %v6743 = vadd.f32 %v6739, %v6742
        %vm6744 = vweird.f32 %v6660
        %vm6745 = vweird.f32 %v6739
        %vm6746 = vmor %vm6744, %vm6745
        %v6747 = vsel %vm6746, %v6739, %v6743
        %v6748 = vand.u32 2147483647, %v6660
        %vm6749 = vcmp.eq.f32.partialorder %v6748, 8.507059e+37
        %v6750 = vand.u32 %v6660, 2147483648
        %v6751 = vor.u32 1.1754944e-38, %v6750
        %v6752 = vsel %vm6749, %v6751, %v6747
        %v6753 = vrcp.pop %v6662
        %v6754 = vmul.f32 %v6662, %v6753
        %v6755 = vsub.f32 1.0, %v6754
        %v6756 = vmul.f32 %v6753, %v6755
        %v6757 = vadd.f32 %v6753, %v6756
        %vm6758 = vweird.f32 %v6662
        %vm6759 = vweird.f32 %v6753
        %vm6760 = vmor %vm6758, %vm6759
        %v6761 = vsel %vm6760, %v6753, %v6757
        %v6762 = vand.u32 2147483647, %v6662
        %vm6763 = vcmp.eq.f32.partialorder %v6762, 8.507059e+37
        %v6764 = vand.u32 %v6662, 2147483648
        %v6765 = vor.u32 1.1754944e-38, %v6764
        %v6766 = vsel %vm6763, %v6765, %v6761
        %v6767 = vrcp.pop %v6664
        %v6768 = vmul.f32 %v6664, %v6767
        %v6769 = vsub.f32 1.0, %v6768
        %v6770 = vmul.f32 %v6767, %v6769
        %v6771 = vadd.f32 %v6767, %v6770
        %vm6772 = vweird.f32 %v6664
        %vm6773 = vweird.f32 %v6767
        %vm6774 = vmor %vm6772, %vm6773
        %v6775 = vsel %vm6774, %v6767, %v6771
        %v6776 = vand.u32 2147483647, %v6664
        %vm6777 = vcmp.eq.f32.partialorder %v6776, 8.507059e+37
        %v6778 = vand.u32 %v6664, 2147483648
        %v6779 = vor.u32 1.1754944e-38, %v6778
        %v6780 = vsel %vm6777, %v6779, %v6775
        %v6781 = vrcp.pop %v6666
        %v6782 = vmul.f32 %v6666, %v6781
        %v6783 = vsub.f32 1.0, %v6782
        %v6784 = vmul.f32 %v6781, %v6783
        %v6785 = vadd.f32 %v6781, %v6784
        %vm6786 = vweird.f32 %v6666
        %vm6787 = vweird.f32 %v6781
        %vm6788 = vmor %vm6786, %vm6787
        %v6789 = vsel %vm6788, %v6781, %v6785
        %v6790 = vand.u32 2147483647, %v6666
        %vm6791 = vcmp.eq.f32.partialorder %v6790, 8.507059e+37
        %v6792 = vand.u32 %v6666, 2147483648
        %v6793 = vor.u32 1.1754944e-38, %v6792
        %v6794 = vsel %vm6791, %v6793, %v6789
        %v6795 = vrcp.pop %v6668
        %v6796 = vmul.f32 %v6668, %v6795
        %v6797 = vsub.f32 1.0, %v6796
        %v6798 = vmul.f32 %v6795, %v6797
        %v6799 = vadd.f32 %v6795, %v6798
        %vm6800 = vweird.f32 %v6668
        %vm6801 = vweird.f32 %v6795
        %vm6802 = vmor %vm6800, %vm6801
        %v6803 = vsel %vm6802, %v6795, %v6799
        %v6804 = vand.u32 2147483647, %v6668
        %vm6805 = vcmp.eq.f32.partialorder %v6804, 8.507059e+37
        %v6806 = vand.u32 %v6668, 2147483648
        %v6807 = vor.u32 1.1754944e-38, %v6806
        %v6808 = vsel %vm6805, %v6807, %v6803
        %v6809 = vrcp.pop %v6670
        %v6810 = vmul.f32 %v6670, %v6809
        %v6811 = vsub.f32 1.0, %v6810
        %v6812 = vmul.f32 %v6809, %v6811
        %v6813 = vadd.f32 %v6809, %v6812
        %vm6814 = vweird.f32 %v6670
        %vm6815 = vweird.f32 %v6809
        %vm6816 = vmor %vm6814, %vm6815
        %v6817 = vsel %vm6816, %v6809, %v6813
        %v6818 = vand.u32 2147483647, %v6670
        %vm6819 = vcmp.eq.f32.partialorder %v6818, 8.507059e+37
        %v6820 = vand.u32 %v6670, 2147483648
        %v6821 = vor.u32 1.1754944e-38, %v6820
        %v6822 = vsel %vm6819, %v6821, %v6817
        %v6823 = vrcp.pop %v6672
        %v6824 = vmul.f32 %v6672, %v6823
        %v6825 = vsub.f32 1.0, %v6824
        %v6826 = vmul.f32 %v6823, %v6825
        %v6827 = vadd.f32 %v6823, %v6826
        %vm6828 = vweird.f32 %v6672
        %vm6829 = vweird.f32 %v6823
        %vm6830 = vmor %vm6828, %vm6829
        %v6831 = vsel %vm6830, %v6823, %v6827
        %v6832 = vand.u32 2147483647, %v6672
        %vm6833 = vcmp.eq.f32.partialorder %v6832, 8.507059e+37
        %v6834 = vand.u32 %v6672, 2147483648
        %v6835 = vor.u32 1.1754944e-38, %v6834
        %v6836 = vsel %vm6833, %v6835, %v6831
        %v6837 = vrcp.pop %v6674
        %v6838 = vmul.f32 %v6674, %v6837
        %v6839 = vsub.f32 1.0, %v6838
        %v6840 = vmul.f32 %v6837, %v6839
        %v6841 = vadd.f32 %v6837, %v6840
        %vm6842 = vweird.f32 %v6674
        %vm6843 = vweird.f32 %v6837
        %vm6844 = vmor %vm6842, %vm6843
        %v6845 = vsel %vm6844, %v6837, %v6841
        %v6846 = vand.u32 2147483647, %v6674
        %vm6847 = vcmp.eq.f32.partialorder %v6846, 8.507059e+37
        %v6848 = vand.u32 %v6674, 2147483648
        %v6849 = vor.u32 1.1754944e-38, %v6848
        %v6850 = vsel %vm6847, %v6849, %v6845
        %v6851 = vrcp.pop %v6676
        %v6852 = vmul.f32 %v6676, %v6851
        %v6853 = vsub.f32 1.0, %v6852
        %v6854 = vmul.f32 %v6851, %v6853
        %v6855 = vadd.f32 %v6851, %v6854
        %vm6856 = vweird.f32 %v6676
        %vm6857 = vweird.f32 %v6851
        %vm6858 = vmor %vm6856, %vm6857
        %v6859 = vsel %vm6858, %v6851, %v6855
        %v6860 = vand.u32 2147483647, %v6676
        %vm6861 = vcmp.eq.f32.partialorder %v6860, 8.507059e+37
        %v6862 = vand.u32 %v6676, 2147483648
        %v6863 = vor.u32 1.1754944e-38, %v6862
        %v6864 = vsel %vm6861, %v6863, %v6859
        %v6865 = vrcp.pop %v6678
        %v6866 = vmul.f32 %v6678, %v6865
        %v6867 = vsub.f32 1.0, %v6866
        %v6868 = vmul.f32 %v6865, %v6867
        %v6869 = vadd.f32 %v6865, %v6868
        %vm6870 = vweird.f32 %v6678
        %vm6871 = vweird.f32 %v6865
        %vm6872 = vmor %vm6870, %vm6871
        %v6873 = vsel %vm6872, %v6865, %v6869
        %v6874 = vand.u32 2147483647, %v6678
        %vm6875 = vcmp.eq.f32.partialorder %v6874, 8.507059e+37
        %v6876 = vand.u32 %v6678, 2147483648
        %v6877 = vor.u32 1.1754944e-38, %v6876
        %v6878 = vsel %vm6875, %v6877, %v6873
        %v6879 = vrcp.pop %v6680
        %v6880 = vmul.f32 %v6680, %v6879
        %v6881 = vsub.f32 1.0, %v6880
        %v6882 = vmul.f32 %v6879, %v6881
        %v6883 = vadd.f32 %v6879, %v6882
        %vm6884 = vweird.f32 %v6680
        %vm6885 = vweird.f32 %v6879
        %vm6886 = vmor %vm6884, %vm6885
        %v6887 = vsel %vm6886, %v6879, %v6883
        %v6888 = vand.u32 2147483647, %v6680
        %vm6889 = vcmp.eq.f32.partialorder %v6888, 8.507059e+37
        %v6890 = vand.u32 %v6680, 2147483648
        %v6891 = vor.u32 1.1754944e-38, %v6890
        %v6892 = vsel %vm6889, %v6891, %v6887
        %v6893 = vrcp.pop %v6682
        %v6894 = vmul.f32 %v6682, %v6893
        %v6895 = vsub.f32 1.0, %v6894
        %v6896 = vmul.f32 %v6893, %v6895
        %v6897 = vadd.f32 %v6893, %v6896
        %vm6898 = vweird.f32 %v6682
        %vm6899 = vweird.f32 %v6893
        %vm6900 = vmor %vm6898, %vm6899
        %v6901 = vsel %vm6900, %v6893, %v6897
        %v6902 = vand.u32 2147483647, %v6682
        %vm6903 = vcmp.eq.f32.partialorder %v6902, 8.507059e+37
        %v6904 = vand.u32 %v6682, 2147483648
        %v6905 = vor.u32 1.1754944e-38, %v6904
        %v6906 = vsel %vm6903, %v6905, %v6901
        %v6907 = vpack.c.bf16 %v6620, %v6620
        %v6908 = vpack.c.bf16 %v6622, %v6622
        %v6909 = vpack.c.bf16 %v6624, %v6624
        %v6910 = vpack.c.bf16 %v6626, %v6626
        %v6911 = vpack.c.bf16 %v6628, %v6628
        %v6912 = vpack.c.bf16 %v6630, %v6630
        %v6913 = vpack.c.bf16 %v6632, %v6632
        %v6914 = vpack.c.bf16 %v6634, %v6634
        %v6915 = vpack.c.bf16 %v6636, %v6636
        %v6916 = vpack.c.bf16 %v6638, %v6638
        %v6917 = vpack.c.bf16 %v6640, %v6640
        %v6918 = vpack.c.bf16 %v6642, %v6642
        %v6919 = vpack.c.bf16 %v6644, %v6644
        %v6920 = vpack.c.bf16 %v6646, %v6646
        %v6921 = vpack.c.bf16 %v6648, %v6648
        %v6922 = vpack.c.bf16 %v6650, %v6650
        %v6939 = vunpack.c.l.b16 %v6907
        %v6940 = vunpack.c.l.b16 %v6908
        %v6941 = vunpack.c.l.b16 %v6909
        %v6942 = vunpack.c.l.b16 %v6910
        %v6943 = vunpack.c.l.b16 %v6911
        %v6944 = vunpack.c.l.b16 %v6912
        %v6945 = vunpack.c.l.b16 %v6913
        %v6946 = vunpack.c.l.b16 %v6914
        %v6947 = vunpack.c.l.b16 %v6915
        %v6948 = vunpack.c.l.b16 %v6916
        %v6949 = vunpack.c.l.b16 %v6917
        %v6950 = vunpack.c.l.b16 %v6918
        %v6951 = vunpack.c.l.b16 %v6919
        %v6952 = vunpack.c.l.b16 %v6920
        %v6953 = vunpack.c.l.b16 %v6921
        %v6954 = vunpack.c.l.b16 %v6922
        %v6955 = vpack.c.b16 %v6940, %v6939
        %v6956 = vpack.c.b16 %v6942, %v6941
        %v6957 = vpack.c.b16 %v6944, %v6943
        %v6958 = vpack.c.b16 %v6946, %v6945
        %v6959 = vpack.c.b16 %v6948, %v6947
        %v6960 = vpack.c.b16 %v6950, %v6949
        %v6961 = vpack.c.b16 %v6952, %v6951
        %v6962 = vpack.c.b16 %v6954, %v6953
        %6971 = vrot.lane.b32.xlu0 %v4982, 48
        %v6972 = vpop.permute.xlu0 %6971
        %6973 = vrot.lane.b32.xlu0 %v4983, 48
        %v6974 = vpop.permute.xlu0 %6973
        %6975 = vrot.lane.b32.xlu0 %v4984, 48
        %v6976 = vpop.permute.xlu0 %6975
        %6977 = vrot.lane.b32.xlu0 %v4985, 48
        %v6978 = vpop.permute.xlu0 %6977
        %6979 = vrot.lane.b32.xlu0 %v4986, 48
        %v6980 = vpop.permute.xlu0 %6979
        %6981 = vrot.lane.b32.xlu0 %v4987, 48
        %v6982 = vpop.permute.xlu0 %6981
        %6983 = vrot.lane.b32.xlu0 %v4988, 48
        %v6984 = vpop.permute.xlu0 %6983
        %6985 = vrot.lane.b32.xlu0 %v4989, 48
        %v6986 = vpop.permute.xlu0 %6985
        %6995 = vmatpush.bf16.msra.mxu0 %v6986
        %6996 = vmatpush.bf16.msra.mxu0 %v6984
        %6997 = vmatpush.bf16.msra.mxu0 %v6982
        %6998 = vmatpush.bf16.msra.mxu0 %v6980
        %6999 = vmatpush.bf16.msra.mxu0 %v6978
        %7000 = vmatpush.bf16.msra.mxu0 %v6976
        %7001 = vmatpush.bf16.msra.mxu0 %v6974
        %7002 = vmatpush.bf16.msra.mxu0 %v6972
        %7003 = vmatmul.bf16.gmra.mxu0 %v6955
        %v7004 = vpop.f32.mrf.mxu0
        %v7005 = vadd.f32 0.0, %v7004
        %v7006 = vpop.f32.mrf.mxu0
        %v7007 = vadd.f32 0.0, %v7006
        %7008 = vmatmul.bf16.gmra.mxu0 %v6956
        %v7009 = vpop.f32.mrf.mxu0
        %v7010 = vadd.f32 0.0, %v7009
        %v7011 = vpop.f32.mrf.mxu0
        %v7012 = vadd.f32 0.0, %v7011
        %7013 = vmatmul.bf16.gmra.mxu0 %v6957
        %v7014 = vpop.f32.mrf.mxu0
        %v7015 = vadd.f32 0.0, %v7014
        %v7016 = vpop.f32.mrf.mxu0
        %v7017 = vadd.f32 0.0, %v7016
        %7018 = vmatmul.bf16.gmra.mxu0 %v6958
        %v7019 = vpop.f32.mrf.mxu0
        %v7020 = vadd.f32 0.0, %v7019
        %v7021 = vpop.f32.mrf.mxu0
        %v7022 = vadd.f32 0.0, %v7021
        %7023 = vmatmul.bf16.gmra.mxu0 %v6959
        %v7024 = vpop.f32.mrf.mxu0
        %v7025 = vadd.f32 0.0, %v7024
        %v7026 = vpop.f32.mrf.mxu0
        %v7027 = vadd.f32 0.0, %v7026
        %7028 = vmatmul.bf16.gmra.mxu0 %v6960
        %v7029 = vpop.f32.mrf.mxu0
        %v7030 = vadd.f32 0.0, %v7029
        %v7031 = vpop.f32.mrf.mxu0
        %v7032 = vadd.f32 0.0, %v7031
        %7033 = vmatmul.bf16.gmra.mxu0 %v6961
        %v7034 = vpop.f32.mrf.mxu0
        %v7035 = vadd.f32 0.0, %v7034
        %v7036 = vpop.f32.mrf.mxu0
        %v7037 = vadd.f32 0.0, %v7036
        %7038 = vmatmul.bf16.gmra.mxu0 %v6962
        %v7039 = vpop.f32.mrf.mxu0
        %v7040 = vadd.f32 0.0, %v7039
        %v7041 = vpop.f32.mrf.mxu0
        %v7042 = vadd.f32 0.0, %v7041
        %7043 = vdwg.mxu0
        %v7044 = vmul.f32 %v7005, %v6696
        %v7045 = vmul.f32 %v7007, %v6710
        %v7046 = vmul.f32 %v7010, %v6724
        %v7047 = vmul.f32 %v7012, %v6738
        %v7048 = vmul.f32 %v7015, %v6752
        %v7049 = vmul.f32 %v7017, %v6766
        %v7050 = vmul.f32 %v7020, %v6780
        %v7051 = vmul.f32 %v7022, %v6794
        %v7052 = vmul.f32 %v7025, %v6808
        %v7053 = vmul.f32 %v7027, %v6822
        %v7054 = vmul.f32 %v7030, %v6836
        %v7055 = vmul.f32 %v7032, %v6850
        %v7056 = vmul.f32 %v7035, %v6864
        %v7057 = vmul.f32 %v7037, %v6878
        %v7058 = vmul.f32 %v7040, %v6892
        %v7059 = vmul.f32 %v7042, %v6906
        %v7060 = vmul.f32 %v6620, %v6696
        %v7061 = vmul.f32 %v6622, %v6710
        %v7062 = vmul.f32 %v6624, %v6724
        %v7063 = vmul.f32 %v6626, %v6738
        %v7064 = vmul.f32 %v6628, %v6752
        %v7065 = vmul.f32 %v6630, %v6766
        %v7066 = vmul.f32 %v6632, %v6780
        %v7067 = vmul.f32 %v6634, %v6794
        %v7068 = vmul.f32 %v6636, %v6808
        %v7069 = vmul.f32 %v6638, %v6822
        %v7070 = vmul.f32 %v6640, %v6836
        %v7071 = vmul.f32 %v6642, %v6850
        %v7072 = vmul.f32 %v6644, %v6864
        %v7073 = vmul.f32 %v6646, %v6878
        %v7074 = vmul.f32 %v6648, %v6892
        %v7075 = vmul.f32 %v6650, %v6906
        %v7076 = vadd.f32 %v6266, %v7060
        %v7077 = vadd.f32 %v6267, %v7061
        %v7078 = vadd.f32 %v6268, %v7062
        %v7079 = vadd.f32 %v6269, %v7063
        %v7080 = vadd.f32 %v6270, %v7064
        %v7081 = vadd.f32 %v6271, %v7065
        %v7082 = vadd.f32 %v6272, %v7066
        %v7083 = vadd.f32 %v6273, %v7067
        %v7084 = vadd.f32 %v6274, %v7068
        %v7085 = vadd.f32 %v6275, %v7069
        %v7086 = vadd.f32 %v6276, %v7070
        %v7087 = vadd.f32 %v6277, %v7071
        %v7088 = vadd.f32 %v6278, %v7072
        %v7089 = vadd.f32 %v6279, %v7073
        %v7090 = vadd.f32 %v6280, %v7074
        %v7091 = vadd.f32 %v6281, %v7075
        %v7092 = vpack.c.bf16 %v7045, %v7044
        %v7093 = vpack.c.bf16 %v7047, %v7046
        %v7094 = vpack.c.bf16 %v7049, %v7048
        %v7095 = vpack.c.bf16 %v7051, %v7050
        %v7096 = vpack.c.bf16 %v7053, %v7052
        %v7097 = vpack.c.bf16 %v7055, %v7054
        %v7098 = vpack.c.bf16 %v7057, %v7056
        %v7099 = vpack.c.bf16 %v7059, %v7058
        %v7101 = vsel %vm714, %v7092, 0
        %v7104 = vsel %vm714, %v7093, 0
        %v7107 = vsel %vm714, %v7094, 0
        %v7110 = vsel %vm714, %v7095, 0
        %v7113 = vsel %vm714, %v7096, 0
        %v7116 = vsel %vm714, %v7097, 0
        %v7119 = vsel %vm714, %v7098, 0
        %v7122 = vsel %vm714, %v7099, 0
        %v7125 = vsel %vm2023, %v4739, 0
        %7127 = vmatpush.bf16.msra.mxu0 0
        %7128 = vmatpush.bf16.msra.mxu0 0
        %7129 = vmatpush.bf16.msra.mxu0 0
        %7130 = vmatpush.bf16.msra.mxu0 0
        %7131 = vmatpush.bf16.msra.mxu0 0
        %7132 = vmatpush.bf16.msra.mxu0 0
        %7133 = vmatpush.bf16.msra.mxu0 0
        %7134 = vmatpush.bf16.msra.mxu0 %v7125
        %7135 = vmatmul.bf16.gmra.mxu0 %v7101
        %v7136 = vpop.f32.mrf.mxu0
        %v7137 = vadd.f32 0.0, %v7136
        %v7138 = vpop.f32.mrf.mxu0
        %v7139 = vadd.f32 0.0, %v7138
        %7140 = vmatmul.bf16.gmra.mxu0 %v7104
        %v7141 = vpop.f32.mrf.mxu0
        %v7142 = vadd.f32 0.0, %v7141
        %v7143 = vpop.f32.mrf.mxu0
        %v7144 = vadd.f32 0.0, %v7143
        %7145 = vmatmul.bf16.gmra.mxu0 %v7107
        %v7146 = vpop.f32.mrf.mxu0
        %v7147 = vadd.f32 0.0, %v7146
        %v7148 = vpop.f32.mrf.mxu0
        %v7149 = vadd.f32 0.0, %v7148
        %7150 = vmatmul.bf16.gmra.mxu0 %v7110
        %v7151 = vpop.f32.mrf.mxu0
        %v7152 = vadd.f32 0.0, %v7151
        %v7153 = vpop.f32.mrf.mxu0
        %v7154 = vadd.f32 0.0, %v7153
        %7155 = vmatmul.bf16.gmra.mxu0 %v7113
        %v7156 = vpop.f32.mrf.mxu0
        %v7157 = vadd.f32 0.0, %v7156
        %v7158 = vpop.f32.mrf.mxu0
        %v7159 = vadd.f32 0.0, %v7158
        %7160 = vmatmul.bf16.gmra.mxu0 %v7116
        %v7161 = vpop.f32.mrf.mxu0
        %v7162 = vadd.f32 0.0, %v7161
        %v7163 = vpop.f32.mrf.mxu0
        %v7164 = vadd.f32 0.0, %v7163
        %7165 = vmatmul.bf16.gmra.mxu0 %v7119
        %v7166 = vpop.f32.mrf.mxu0
        %v7167 = vadd.f32 0.0, %v7166
        %v7168 = vpop.f32.mrf.mxu0
        %v7169 = vadd.f32 0.0, %v7168
        %7170 = vmatmul.bf16.gmra.mxu0 %v7122
        %v7171 = vpop.f32.mrf.mxu0
        %v7172 = vadd.f32 0.0, %v7171
        %v7173 = vpop.f32.mrf.mxu0
        %v7174 = vadd.f32 0.0, %v7173
        %7175 = vdwg.mxu0
        %v7176 = vadd.f32 %v6403, %v7137
        %v7177 = vadd.f32 %v6405, %v7139
        %v7178 = vadd.f32 %v6408, %v7142
        %v7179 = vadd.f32 %v6410, %v7144
        %v7180 = vadd.f32 %v6413, %v7147
        %v7181 = vadd.f32 %v6415, %v7149
        %v7182 = vadd.f32 %v6418, %v7152
        %v7183 = vadd.f32 %v6420, %v7154
        %v7184 = vadd.f32 %v6423, %v7157
        %v7185 = vadd.f32 %v6425, %v7159
        %v7186 = vadd.f32 %v6428, %v7162
        %v7187 = vadd.f32 %v6430, %v7164
        %v7188 = vadd.f32 %v6433, %v7167
        %v7189 = vadd.f32 %v6435, %v7169
        %v7190 = vadd.f32 %v6438, %v7172
        %v7191 = vadd.f32 %v6440, %v7174
        %7192 = vrot.lane.b32.xlu0 %v4942, 104
        %v7193 = vpop.permute.xlu0 %7192
        %7194 = vrot.lane.b32.xlu0 %v4943, 104
        %v7195 = vpop.permute.xlu0 %7194
        %7196 = vrot.lane.b32.xlu0 %v4944, 104
        %v7197 = vpop.permute.xlu0 %7196
        %7198 = vrot.lane.b32.xlu0 %v4945, 104
        %v7199 = vpop.permute.xlu0 %7198
        %7200 = vrot.lane.b32.xlu0 %v4946, 104
        %v7201 = vpop.permute.xlu0 %7200
        %7202 = vrot.lane.b32.xlu0 %v4947, 104
        %v7203 = vpop.permute.xlu0 %7202
        %7204 = vrot.lane.b32.xlu0 %v4948, 104
        %v7205 = vpop.permute.xlu0 %7204
        %7206 = vrot.lane.b32.xlu0 %v4949, 104
        %v7207 = vpop.permute.xlu0 %7206
        %7208 = vrot.lane.b32.xlu0 %v4982, 72
        %v7209 = vpop.permute.xlu0 %7208
        %7210 = vrot.lane.b32.xlu0 %v4983, 72
        %v7211 = vpop.permute.xlu0 %7210
        %7212 = vrot.lane.b32.xlu0 %v4984, 72
        %v7213 = vpop.permute.xlu0 %7212
        %7214 = vrot.lane.b32.xlu0 %v4985, 72
        %v7215 = vpop.permute.xlu0 %7214
        %7216 = vrot.lane.b32.xlu0 %v4986, 72
        %v7217 = vpop.permute.xlu0 %7216
        %7218 = vrot.lane.b32.xlu0 %v4987, 72
        %v7219 = vpop.permute.xlu0 %7218
        %7220 = vrot.lane.b32.xlu0 %v4988, 72
        %v7221 = vpop.permute.xlu0 %7220
        %7222 = vrot.lane.b32.xlu0 %v4989, 72
        %v7223 = vpop.permute.xlu0 %7222
        %v7225 = vsel %vm714, %v7193, 0
        %v7228 = vsel %vm714, %v7195, 0
        %v7231 = vsel %vm714, %v7197, 0
        %v7234 = vsel %vm714, %v7199, 0
        %v7237 = vsel %vm714, %v7201, 0
        %v7240 = vsel %vm714, %v7203, 0
        %v7243 = vsel %vm714, %v7205, 0
        %v7246 = vsel %vm714, %v7207, 0
        %v7249 = vsel %vm714, %v7209, 0
        %v7252 = vsel %vm714, %v7211, 0
        %v7255 = vsel %vm714, %v7213, 0
        %v7258 = vsel %vm714, %v7215, 0
        %v7261 = vsel %vm714, %v7217, 0
        %v7264 = vsel %vm714, %v7219, 0
        %v7267 = vsel %vm714, %v7221, 0
        %v7270 = vsel %vm714, %v7223, 0
        %7272 = vmatpush.bf16.xpose.msra.mxu0 %v7270
        %7273 = vmatpush.bf16.xpose.msra.mxu0 %v7267
        %7274 = vmatpush.bf16.xpose.msra.mxu0 %v7264
        %7275 = vmatpush.bf16.xpose.msra.mxu0 %v7261
        %7276 = vmatpush.bf16.xpose.msra.mxu0 %v7258
        %7277 = vmatpush.bf16.xpose.msra.mxu0 %v7255
        %7278 = vmatpush.bf16.xpose.msra.mxu0 %v7252
        %7279 = vmatpush.bf16.xpose.msra.mxu0 %v7249
        %7280 = vmatmul.bf16.gmra.mxu0 %v7225
        %v7281 = vpop.f32.mrf.mxu0
        %v7282 = vadd.f32 %v4908, %v7281
        %v7283 = vpop.f32.mrf.mxu0
        %v7284 = vadd.f32 %v4908, %v7283
        %7285 = vmatmul.bf16.gmra.mxu0 %v7228
        %v7286 = vpop.f32.mrf.mxu0
        %v7287 = vadd.f32 %v4908, %v7286
        %v7288 = vpop.f32.mrf.mxu0
        %v7289 = vadd.f32 %v4908, %v7288
        %7290 = vmatmul.bf16.gmra.mxu0 %v7231
        %v7291 = vpop.f32.mrf.mxu0
        %v7292 = vadd.f32 %v4908, %v7291
        %v7293 = vpop.f32.mrf.mxu0
        %v7294 = vadd.f32 %v4908, %v7293
        %7295 = vmatmul.bf16.gmra.mxu0 %v7234
        %v7296 = vpop.f32.mrf.mxu0
        %v7297 = vadd.f32 %v4908, %v7296
        %v7298 = vpop.f32.mrf.mxu0
        %v7299 = vadd.f32 %v4908, %v7298
        %7300 = vmatmul.bf16.gmra.mxu0 %v7237
        %v7301 = vpop.f32.mrf.mxu0
        %v7302 = vadd.f32 %v4908, %v7301
        %v7303 = vpop.f32.mrf.mxu0
        %v7304 = vadd.f32 %v4908, %v7303
        %7305 = vmatmul.bf16.gmra.mxu0 %v7240
        %v7306 = vpop.f32.mrf.mxu0
        %v7307 = vadd.f32 %v4908, %v7306
        %v7308 = vpop.f32.mrf.mxu0
        %v7309 = vadd.f32 %v4908, %v7308
        %7310 = vmatmul.bf16.gmra.mxu0 %v7243
        %v7311 = vpop.f32.mrf.mxu0
        %v7312 = vadd.f32 %v4908, %v7311
        %v7313 = vpop.f32.mrf.mxu0
        %v7314 = vadd.f32 %v4908, %v7313
        %7315 = vmatmul.bf16.gmra.mxu0 %v7246
        %v7316 = vpop.f32.mrf.mxu0
        %v7317 = vadd.f32 %v4908, %v7316
        %v7318 = vpop.f32.mrf.mxu0
        %v7319 = vadd.f32 %v4908, %v7318
        %7320 = vdwg.mxu0
        %7321 = vmax.xlane.f32.xlu0 %v7282
        %v7322 = vpop.xlane.xlu0 %7321
        %7323 = vmax.xlane.f32.xlu0 %v7284
        %v7324 = vpop.xlane.xlu0 %7323
        %7325 = vmax.xlane.f32.xlu0 %v7287
        %v7326 = vpop.xlane.xlu0 %7325
        %7327 = vmax.xlane.f32.xlu0 %v7289
        %v7328 = vpop.xlane.xlu0 %7327
        %7329 = vmax.xlane.f32.xlu0 %v7292
        %v7330 = vpop.xlane.xlu0 %7329
        %7331 = vmax.xlane.f32.xlu0 %v7294
        %v7332 = vpop.xlane.xlu0 %7331
        %7333 = vmax.xlane.f32.xlu0 %v7297
        %v7334 = vpop.xlane.xlu0 %7333
        %7335 = vmax.xlane.f32.xlu0 %v7299
        %v7336 = vpop.xlane.xlu0 %7335
        %7337 = vmax.xlane.f32.xlu0 %v7302
        %v7338 = vpop.xlane.xlu0 %7337
        %7339 = vmax.xlane.f32.xlu0 %v7304
        %v7340 = vpop.xlane.xlu0 %7339
        %7341 = vmax.xlane.f32.xlu0 %v7307
        %v7342 = vpop.xlane.xlu0 %7341
        %7343 = vmax.xlane.f32.xlu0 %v7309
        %v7344 = vpop.xlane.xlu0 %7343
        %7345 = vmax.xlane.f32.xlu0 %v7312
        %v7346 = vpop.xlane.xlu0 %7345
        %7347 = vmax.xlane.f32.xlu0 %v7314
        %v7348 = vpop.xlane.xlu0 %7347
        %7349 = vmax.xlane.f32.xlu0 %v7317
        %v7350 = vpop.xlane.xlu0 %7349
        %7351 = vmax.xlane.f32.xlu0 %v7319
        %v7352 = vpop.xlane.xlu0 %7351
        %v7353 = vsub.f32 %v7282, %v7322
        %v7354 = vsub.f32 %v7284, %v7324
        %v7355 = vsub.f32 %v7287, %v7326
        %v7356 = vsub.f32 %v7289, %v7328
        %v7357 = vsub.f32 %v7292, %v7330
        %v7358 = vsub.f32 %v7294, %v7332
        %v7359 = vsub.f32 %v7297, %v7334
        %v7360 = vsub.f32 %v7299, %v7336
        %v7361 = vsub.f32 %v7302, %v7338
        %v7362 = vsub.f32 %v7304, %v7340
        %v7363 = vsub.f32 %v7307, %v7342
        %v7364 = vsub.f32 %v7309, %v7344
        %v7365 = vsub.f32 %v7312, %v7346
        %v7366 = vsub.f32 %v7314, %v7348
        %v7367 = vsub.f32 %v7317, %v7350
        %v7368 = vsub.f32 %v7319, %v7352
        %v7369 = vmul.f32 %v7353, 1.442695
        %v7370 = vpow.pop %v7369
        %v7371 = vmul.f32 %v7354, 1.442695
        %v7372 = vpow.pop %v7371
        %v7373 = vmul.f32 %v7355, 1.442695
        %v7374 = vpow.pop %v7373
        %v7375 = vmul.f32 %v7356, 1.442695
        %v7376 = vpow.pop %v7375
        %v7377 = vmul.f32 %v7357, 1.442695
        %v7378 = vpow.pop %v7377
        %v7379 = vmul.f32 %v7358, 1.442695
        %v7380 = vpow.pop %v7379
        %v7381 = vmul.f32 %v7359, 1.442695
        %v7382 = vpow.pop %v7381
        %v7383 = vmul.f32 %v7360, 1.442695
        %v7384 = vpow.pop %v7383
        %v7385 = vmul.f32 %v7361, 1.442695
        %v7386 = vpow.pop %v7385
        %v7387 = vmul.f32 %v7362, 1.442695
        %v7388 = vpow.pop %v7387
        %v7389 = vmul.f32 %v7363, 1.442695
        %v7390 = vpow.pop %v7389
        %v7391 = vmul.f32 %v7364, 1.442695
        %v7392 = vpow.pop %v7391
        %v7393 = vmul.f32 %v7365, 1.442695
        %v7394 = vpow.pop %v7393
        %v7395 = vmul.f32 %v7366, 1.442695
        %v7396 = vpow.pop %v7395
        %v7397 = vmul.f32 %v7367, 1.442695
        %v7398 = vpow.pop %v7397
        %v7399 = vmul.f32 %v7368, 1.442695
        %v7400 = vpow.pop %v7399
        %7401 = vadd.xlane.f32.xlu0 %v7370
        %v7402 = vpop.xlane.xlu0 %7401
        %7403 = vadd.xlane.f32.xlu0 %v7372
        %v7404 = vpop.xlane.xlu0 %7403
        %7405 = vadd.xlane.f32.xlu0 %v7374
        %v7406 = vpop.xlane.xlu0 %7405
        %7407 = vadd.xlane.f32.xlu0 %v7376
        %v7408 = vpop.xlane.xlu0 %7407
        %7409 = vadd.xlane.f32.xlu0 %v7378
        %v7410 = vpop.xlane.xlu0 %7409
        %7411 = vadd.xlane.f32.xlu0 %v7380
        %v7412 = vpop.xlane.xlu0 %7411
        %7413 = vadd.xlane.f32.xlu0 %v7382
        %v7414 = vpop.xlane.xlu0 %7413
        %7415 = vadd.xlane.f32.xlu0 %v7384
        %v7416 = vpop.xlane.xlu0 %7415
        %7417 = vadd.xlane.f32.xlu0 %v7386
        %v7418 = vpop.xlane.xlu0 %7417
        %7419 = vadd.xlane.f32.xlu0 %v7388
        %v7420 = vpop.xlane.xlu0 %7419
        %7421 = vadd.xlane.f32.xlu0 %v7390
        %v7422 = vpop.xlane.xlu0 %7421
        %7423 = vadd.xlane.f32.xlu0 %v7392
        %v7424 = vpop.xlane.xlu0 %7423
        %7425 = vadd.xlane.f32.xlu0 %v7394
        %v7426 = vpop.xlane.xlu0 %7425
        %7427 = vadd.xlane.f32.xlu0 %v7396
        %v7428 = vpop.xlane.xlu0 %7427
        %7429 = vadd.xlane.f32.xlu0 %v7398
        %v7430 = vpop.xlane.xlu0 %7429
        %7431 = vadd.xlane.f32.xlu0 %v7400
        %v7432 = vpop.xlane.xlu0 %7431
        %v7433 = vrcp.pop %v7402
        %v7434 = vmul.f32 %v7402, %v7433
        %v7435 = vsub.f32 1.0, %v7434
        %v7436 = vmul.f32 %v7433, %v7435
        %v7437 = vadd.f32 %v7433, %v7436
        %vm7438 = vweird.f32 %v7402
        %vm7439 = vweird.f32 %v7433
        %vm7440 = vmor %vm7438, %vm7439
        %v7441 = vsel %vm7440, %v7433, %v7437
        %v7442 = vand.u32 2147483647, %v7402
        %vm7443 = vcmp.eq.f32.partialorder %v7442, 8.507059e+37
        %v7444 = vand.u32 %v7402, 2147483648
        %v7445 = vor.u32 1.1754944e-38, %v7444
        %v7446 = vsel %vm7443, %v7445, %v7441
        %v7447 = vrcp.pop %v7404
        %v7448 = vmul.f32 %v7404, %v7447
        %v7449 = vsub.f32 1.0, %v7448
        %v7450 = vmul.f32 %v7447, %v7449
        %v7451 = vadd.f32 %v7447, %v7450
        %vm7452 = vweird.f32 %v7404
        %vm7453 = vweird.f32 %v7447
        %vm7454 = vmor %vm7452, %vm7453
        %v7455 = vsel %vm7454, %v7447, %v7451
        %v7456 = vand.u32 2147483647, %v7404
        %vm7457 = vcmp.eq.f32.partialorder %v7456, 8.507059e+37
        %v7458 = vand.u32 %v7404, 2147483648
        %v7459 = vor.u32 1.1754944e-38, %v7458
        %v7460 = vsel %vm7457, %v7459, %v7455
        %v7461 = vrcp.pop %v7406
        %v7462 = vmul.f32 %v7406, %v7461
        %v7463 = vsub.f32 1.0, %v7462
        %v7464 = vmul.f32 %v7461, %v7463
        %v7465 = vadd.f32 %v7461, %v7464
        %vm7466 = vweird.f32 %v7406
        %vm7467 = vweird.f32 %v7461
        %vm7468 = vmor %vm7466, %vm7467
        %v7469 = vsel %vm7468, %v7461, %v7465
        %v7470 = vand.u32 2147483647, %v7406
        %vm7471 = vcmp.eq.f32.partialorder %v7470, 8.507059e+37
        %v7472 = vand.u32 %v7406, 2147483648
        %v7473 = vor.u32 1.1754944e-38, %v7472
        %v7474 = vsel %vm7471, %v7473, %v7469
        %v7475 = vrcp.pop %v7408
        %v7476 = vmul.f32 %v7408, %v7475
        %v7477 = vsub.f32 1.0, %v7476
        %v7478 = vmul.f32 %v7475, %v7477
        %v7479 = vadd.f32 %v7475, %v7478
        %vm7480 = vweird.f32 %v7408
        %vm7481 = vweird.f32 %v7475
        %vm7482 = vmor %vm7480, %vm7481
        %v7483 = vsel %vm7482, %v7475, %v7479
        %v7484 = vand.u32 2147483647, %v7408
        %vm7485 = vcmp.eq.f32.partialorder %v7484, 8.507059e+37
        %v7486 = vand.u32 %v7408, 2147483648
        %v7487 = vor.u32 1.1754944e-38, %v7486
        %v7488 = vsel %vm7485, %v7487, %v7483
        %v7489 = vrcp.pop %v7410
        %v7490 = vmul.f32 %v7410, %v7489
        %v7491 = vsub.f32 1.0, %v7490
        %v7492 = vmul.f32 %v7489, %v7491
        %v7493 = vadd.f32 %v7489, %v7492
        %vm7494 = vweird.f32 %v7410
        %vm7495 = vweird.f32 %v7489
        %vm7496 = vmor %vm7494, %vm7495
        %v7497 = vsel %vm7496, %v7489, %v7493
        %v7498 = vand.u32 2147483647, %v7410
        %vm7499 = vcmp.eq.f32.partialorder %v7498, 8.507059e+37
        %v7500 = vand.u32 %v7410, 2147483648
        %v7501 = vor.u32 1.1754944e-38, %v7500
        %v7502 = vsel %vm7499, %v7501, %v7497
        %v7503 = vrcp.pop %v7412
        %v7504 = vmul.f32 %v7412, %v7503
        %v7505 = vsub.f32 1.0, %v7504
        %v7506 = vmul.f32 %v7503, %v7505
        %v7507 = vadd.f32 %v7503, %v7506
        %vm7508 = vweird.f32 %v7412
        %vm7509 = vweird.f32 %v7503
        %vm7510 = vmor %vm7508, %vm7509
        %v7511 = vsel %vm7510, %v7503, %v7507
        %v7512 = vand.u32 2147483647, %v7412
        %vm7513 = vcmp.eq.f32.partialorder %v7512, 8.507059e+37
        %v7514 = vand.u32 %v7412, 2147483648
        %v7515 = vor.u32 1.1754944e-38, %v7514
        %v7516 = vsel %vm7513, %v7515, %v7511
        %v7517 = vrcp.pop %v7414
        %v7518 = vmul.f32 %v7414, %v7517
        %v7519 = vsub.f32 1.0, %v7518
        %v7520 = vmul.f32 %v7517, %v7519
        %v7521 = vadd.f32 %v7517, %v7520
        %vm7522 = vweird.f32 %v7414
        %vm7523 = vweird.f32 %v7517
        %vm7524 = vmor %vm7522, %vm7523
        %v7525 = vsel %vm7524, %v7517, %v7521
        %v7526 = vand.u32 2147483647, %v7414
        %vm7527 = vcmp.eq.f32.partialorder %v7526, 8.507059e+37
        %v7528 = vand.u32 %v7414, 2147483648
        %v7529 = vor.u32 1.1754944e-38, %v7528
        %v7530 = vsel %vm7527, %v7529, %v7525
        %v7531 = vrcp.pop %v7416
        %v7532 = vmul.f32 %v7416, %v7531
        %v7533 = vsub.f32 1.0, %v7532
        %v7534 = vmul.f32 %v7531, %v7533
        %v7535 = vadd.f32 %v7531, %v7534
        %vm7536 = vweird.f32 %v7416
        %vm7537 = vweird.f32 %v7531
        %vm7538 = vmor %vm7536, %vm7537
        %v7539 = vsel %vm7538, %v7531, %v7535
        %v7540 = vand.u32 2147483647, %v7416
        %vm7541 = vcmp.eq.f32.partialorder %v7540, 8.507059e+37
        %v7542 = vand.u32 %v7416, 2147483648
        %v7543 = vor.u32 1.1754944e-38, %v7542
        %v7544 = vsel %vm7541, %v7543, %v7539
        %v7545 = vrcp.pop %v7418
        %v7546 = vmul.f32 %v7418, %v7545
        %v7547 = vsub.f32 1.0, %v7546
        %v7548 = vmul.f32 %v7545, %v7547
        %v7549 = vadd.f32 %v7545, %v7548
        %vm7550 = vweird.f32 %v7418
        %vm7551 = vweird.f32 %v7545
        %vm7552 = vmor %vm7550, %vm7551
        %v7553 = vsel %vm7552, %v7545, %v7549
        %v7554 = vand.u32 2147483647, %v7418
        %vm7555 = vcmp.eq.f32.partialorder %v7554, 8.507059e+37
        %v7556 = vand.u32 %v7418, 2147483648
        %v7557 = vor.u32 1.1754944e-38, %v7556
        %v7558 = vsel %vm7555, %v7557, %v7553
        %v7559 = vrcp.pop %v7420
        %v7560 = vmul.f32 %v7420, %v7559
        %v7561 = vsub.f32 1.0, %v7560
        %v7562 = vmul.f32 %v7559, %v7561
        %v7563 = vadd.f32 %v7559, %v7562
        %vm7564 = vweird.f32 %v7420
        %vm7565 = vweird.f32 %v7559
        %vm7566 = vmor %vm7564, %vm7565
        %v7567 = vsel %vm7566, %v7559, %v7563
        %v7568 = vand.u32 2147483647, %v7420
        %vm7569 = vcmp.eq.f32.partialorder %v7568, 8.507059e+37
        %v7570 = vand.u32 %v7420, 2147483648
        %v7571 = vor.u32 1.1754944e-38, %v7570
        %v7572 = vsel %vm7569, %v7571, %v7567
        %v7573 = vrcp.pop %v7422
        %v7574 = vmul.f32 %v7422, %v7573
        %v7575 = vsub.f32 1.0, %v7574
        %v7576 = vmul.f32 %v7573, %v7575
        %v7577 = vadd.f32 %v7573, %v7576
        %vm7578 = vweird.f32 %v7422
        %vm7579 = vweird.f32 %v7573
        %vm7580 = vmor %vm7578, %vm7579
        %v7581 = vsel %vm7580, %v7573, %v7577
        %v7582 = vand.u32 2147483647, %v7422
        %vm7583 = vcmp.eq.f32.partialorder %v7582, 8.507059e+37
        %v7584 = vand.u32 %v7422, 2147483648
        %v7585 = vor.u32 1.1754944e-38, %v7584
        %v7586 = vsel %vm7583, %v7585, %v7581
        %v7587 = vrcp.pop %v7424
        %v7588 = vmul.f32 %v7424, %v7587
        %v7589 = vsub.f32 1.0, %v7588
        %v7590 = vmul.f32 %v7587, %v7589
        %v7591 = vadd.f32 %v7587, %v7590
        %vm7592 = vweird.f32 %v7424
        %vm7593 = vweird.f32 %v7587
        %vm7594 = vmor %vm7592, %vm7593
        %v7595 = vsel %vm7594, %v7587, %v7591
        %v7596 = vand.u32 2147483647, %v7424
        %vm7597 = vcmp.eq.f32.partialorder %v7596, 8.507059e+37
        %v7598 = vand.u32 %v7424, 2147483648
        %v7599 = vor.u32 1.1754944e-38, %v7598
        %v7600 = vsel %vm7597, %v7599, %v7595
        %v7601 = vrcp.pop %v7426
        %v7602 = vmul.f32 %v7426, %v7601
        %v7603 = vsub.f32 1.0, %v7602
        %v7604 = vmul.f32 %v7601, %v7603
        %v7605 = vadd.f32 %v7601, %v7604
        %vm7606 = vweird.f32 %v7426
        %vm7607 = vweird.f32 %v7601
        %vm7608 = vmor %vm7606, %vm7607
        %v7609 = vsel %vm7608, %v7601, %v7605
        %v7610 = vand.u32 2147483647, %v7426
        %vm7611 = vcmp.eq.f32.partialorder %v7610, 8.507059e+37
        %v7612 = vand.u32 %v7426, 2147483648
        %v7613 = vor.u32 1.1754944e-38, %v7612
        %v7614 = vsel %vm7611, %v7613, %v7609
        %v7615 = vrcp.pop %v7428
        %v7616 = vmul.f32 %v7428, %v7615
        %v7617 = vsub.f32 1.0, %v7616
        %v7618 = vmul.f32 %v7615, %v7617
        %v7619 = vadd.f32 %v7615, %v7618
        %vm7620 = vweird.f32 %v7428
        %vm7621 = vweird.f32 %v7615
        %vm7622 = vmor %vm7620, %vm7621
        %v7623 = vsel %vm7622, %v7615, %v7619
        %v7624 = vand.u32 2147483647, %v7428
        %vm7625 = vcmp.eq.f32.partialorder %v7624, 8.507059e+37
        %v7626 = vand.u32 %v7428, 2147483648
        %v7627 = vor.u32 1.1754944e-38, %v7626
        %v7628 = vsel %vm7625, %v7627, %v7623
        %v7629 = vrcp.pop %v7430
        %v7630 = vmul.f32 %v7430, %v7629
        %v7631 = vsub.f32 1.0, %v7630
        %v7632 = vmul.f32 %v7629, %v7631
        %v7633 = vadd.f32 %v7629, %v7632
        %vm7634 = vweird.f32 %v7430
        %vm7635 = vweird.f32 %v7629
        %vm7636 = vmor %vm7634, %vm7635
        %v7637 = vsel %vm7636, %v7629, %v7633
        %v7638 = vand.u32 2147483647, %v7430
        %vm7639 = vcmp.eq.f32.partialorder %v7638, 8.507059e+37
        %v7640 = vand.u32 %v7430, 2147483648
        %v7641 = vor.u32 1.1754944e-38, %v7640
        %v7642 = vsel %vm7639, %v7641, %v7637
        %v7643 = vrcp.pop %v7432
        %v7644 = vmul.f32 %v7432, %v7643
        %v7645 = vsub.f32 1.0, %v7644
        %v7646 = vmul.f32 %v7643, %v7645
        %v7647 = vadd.f32 %v7643, %v7646
        %vm7648 = vweird.f32 %v7432
        %vm7649 = vweird.f32 %v7643
        %vm7650 = vmor %vm7648, %vm7649
        %v7651 = vsel %vm7650, %v7643, %v7647
        %v7652 = vand.u32 2147483647, %v7432
        %vm7653 = vcmp.eq.f32.partialorder %v7652, 8.507059e+37
        %v7654 = vand.u32 %v7432, 2147483648
        %v7655 = vor.u32 1.1754944e-38, %v7654
        %v7656 = vsel %vm7653, %v7655, %v7651
        %v7657 = vpack.c.bf16 %v7370, %v7370
        %v7658 = vpack.c.bf16 %v7372, %v7372
        %v7659 = vpack.c.bf16 %v7374, %v7374
        %v7660 = vpack.c.bf16 %v7376, %v7376
        %v7661 = vpack.c.bf16 %v7378, %v7378
        %v7662 = vpack.c.bf16 %v7380, %v7380
        %v7663 = vpack.c.bf16 %v7382, %v7382
        %v7664 = vpack.c.bf16 %v7384, %v7384
        %v7665 = vpack.c.bf16 %v7386, %v7386
        %v7666 = vpack.c.bf16 %v7388, %v7388
        %v7667 = vpack.c.bf16 %v7390, %v7390
        %v7668 = vpack.c.bf16 %v7392, %v7392
        %v7669 = vpack.c.bf16 %v7394, %v7394
        %v7670 = vpack.c.bf16 %v7396, %v7396
        %v7671 = vpack.c.bf16 %v7398, %v7398
        %v7672 = vpack.c.bf16 %v7400, %v7400
        %v7689 = vunpack.c.l.b16 %v7657
        %v7690 = vunpack.c.l.b16 %v7658
        %v7691 = vunpack.c.l.b16 %v7659
        %v7692 = vunpack.c.l.b16 %v7660
        %v7693 = vunpack.c.l.b16 %v7661
        %v7694 = vunpack.c.l.b16 %v7662
        %v7695 = vunpack.c.l.b16 %v7663
        %v7696 = vunpack.c.l.b16 %v7664
        %v7697 = vunpack.c.l.b16 %v7665
        %v7698 = vunpack.c.l.b16 %v7666
        %v7699 = vunpack.c.l.b16 %v7667
        %v7700 = vunpack.c.l.b16 %v7668
        %v7701 = vunpack.c.l.b16 %v7669
        %v7702 = vunpack.c.l.b16 %v7670
        %v7703 = vunpack.c.l.b16 %v7671
        %v7704 = vunpack.c.l.b16 %v7672
        %v7705 = vpack.c.b16 %v7690, %v7689
        %v7706 = vpack.c.b16 %v7692, %v7691
        %v7707 = vpack.c.b16 %v7694, %v7693
        %v7708 = vpack.c.b16 %v7696, %v7695
        %v7709 = vpack.c.b16 %v7698, %v7697
        %v7710 = vpack.c.b16 %v7700, %v7699
        %v7711 = vpack.c.b16 %v7702, %v7701
        %v7712 = vpack.c.b16 %v7704, %v7703
        %7721 = vrot.lane.b32.xlu0 %v4982, 40
        %v7722 = vpop.permute.xlu0 %7721
        %7723 = vrot.lane.b32.xlu0 %v4983, 40
        %v7724 = vpop.permute.xlu0 %7723
        %7725 = vrot.lane.b32.xlu0 %v4984, 40
        %v7726 = vpop.permute.xlu0 %7725
        %7727 = vrot.lane.b32.xlu0 %v4985, 40
        %v7728 = vpop.permute.xlu0 %7727
        %7729 = vrot.lane.b32.xlu0 %v4986, 40
        %v7730 = vpop.permute.xlu0 %7729
        %7731 = vrot.lane.b32.xlu0 %v4987, 40
        %v7732 = vpop.permute.xlu0 %7731
        %7733 = vrot.lane.b32.xlu0 %v4988, 40
        %v7734 = vpop.permute.xlu0 %7733
        %7735 = vrot.lane.b32.xlu0 %v4989, 40
        %v7736 = vpop.permute.xlu0 %7735
        %7745 = vmatpush.bf16.msra.mxu0 %v7736
        %7746 = vmatpush.bf16.msra.mxu0 %v7734
        %7747 = vmatpush.bf16.msra.mxu0 %v7732
        %7748 = vmatpush.bf16.msra.mxu0 %v7730
        %7749 = vmatpush.bf16.msra.mxu0 %v7728
        %7750 = vmatpush.bf16.msra.mxu0 %v7726
        %7751 = vmatpush.bf16.msra.mxu0 %v7724
        %7752 = vmatpush.bf16.msra.mxu0 %v7722
        %7753 = vmatmul.bf16.gmra.mxu0 %v7705
        %v7754 = vpop.f32.mrf.mxu0
        %v7755 = vadd.f32 0.0, %v7754
        %v7756 = vpop.f32.mrf.mxu0
        %v7757 = vadd.f32 0.0, %v7756
        %7758 = vmatmul.bf16.gmra.mxu0 %v7706
        %v7759 = vpop.f32.mrf.mxu0
        %v7760 = vadd.f32 0.0, %v7759
        %v7761 = vpop.f32.mrf.mxu0
        %v7762 = vadd.f32 0.0, %v7761
        %7763 = vmatmul.bf16.gmra.mxu0 %v7707
        %v7764 = vpop.f32.mrf.mxu0
        %v7765 = vadd.f32 0.0, %v7764
        %v7766 = vpop.f32.mrf.mxu0
        %v7767 = vadd.f32 0.0, %v7766
        %7768 = vmatmul.bf16.gmra.mxu0 %v7708
        %v7769 = vpop.f32.mrf.mxu0
        %v7770 = vadd.f32 0.0, %v7769
        %v7771 = vpop.f32.mrf.mxu0
        %v7772 = vadd.f32 0.0, %v7771
        %7773 = vmatmul.bf16.gmra.mxu0 %v7709
        %v7774 = vpop.f32.mrf.mxu0
        %v7775 = vadd.f32 0.0, %v7774
        %v7776 = vpop.f32.mrf.mxu0
        %v7777 = vadd.f32 0.0, %v7776
        %7778 = vmatmul.bf16.gmra.mxu0 %v7710
        %v7779 = vpop.f32.mrf.mxu0
        %v7780 = vadd.f32 0.0, %v7779
        %v7781 = vpop.f32.mrf.mxu0
        %v7782 = vadd.f32 0.0, %v7781
        %7783 = vmatmul.bf16.gmra.mxu0 %v7711
        %v7784 = vpop.f32.mrf.mxu0
        %v7785 = vadd.f32 0.0, %v7784
        %v7786 = vpop.f32.mrf.mxu0
        %v7787 = vadd.f32 0.0, %v7786
        %7788 = vmatmul.bf16.gmra.mxu0 %v7712
        %v7789 = vpop.f32.mrf.mxu0
        %v7790 = vadd.f32 0.0, %v7789
        %v7791 = vpop.f32.mrf.mxu0
        %v7792 = vadd.f32 0.0, %v7791
        %7793 = vdwg.mxu0
        %v7794 = vmul.f32 %v7755, %v7446
        %v7795 = vmul.f32 %v7757, %v7460
        %v7796 = vmul.f32 %v7760, %v7474
        %v7797 = vmul.f32 %v7762, %v7488
        %v7798 = vmul.f32 %v7765, %v7502
        %v7799 = vmul.f32 %v7767, %v7516
        %v7800 = vmul.f32 %v7770, %v7530
        %v7801 = vmul.f32 %v7772, %v7544
        %v7802 = vmul.f32 %v7775, %v7558
        %v7803 = vmul.f32 %v7777, %v7572
        %v7804 = vmul.f32 %v7780, %v7586
        %v7805 = vmul.f32 %v7782, %v7600
        %v7806 = vmul.f32 %v7785, %v7614
        %v7807 = vmul.f32 %v7787, %v7628
        %v7808 = vmul.f32 %v7790, %v7642
        %v7809 = vmul.f32 %v7792, %v7656
        %v7810 = vmul.f32 %v7370, %v7446
        %v7811 = vmul.f32 %v7372, %v7460
        %v7812 = vmul.f32 %v7374, %v7474
        %v7813 = vmul.f32 %v7376, %v7488
        %v7814 = vmul.f32 %v7378, %v7502
        %v7815 = vmul.f32 %v7380, %v7516
        %v7816 = vmul.f32 %v7382, %v7530
        %v7817 = vmul.f32 %v7384, %v7544
        %v7818 = vmul.f32 %v7386, %v7558
        %v7819 = vmul.f32 %v7388, %v7572
        %v7820 = vmul.f32 %v7390, %v7586
        %v7821 = vmul.f32 %v7392, %v7600
        %v7822 = vmul.f32 %v7394, %v7614
        %v7823 = vmul.f32 %v7396, %v7628
        %v7824 = vmul.f32 %v7398, %v7642
        %v7825 = vmul.f32 %v7400, %v7656
        %v7826 = vadd.f32 %v7076, %v7810
        %v7827 = vadd.f32 %v7077, %v7811
        %v7828 = vadd.f32 %v7078, %v7812
        %v7829 = vadd.f32 %v7079, %v7813
        %v7830 = vadd.f32 %v7080, %v7814
        %v7831 = vadd.f32 %v7081, %v7815
        %v7832 = vadd.f32 %v7082, %v7816
        %v7833 = vadd.f32 %v7083, %v7817
        %v7834 = vadd.f32 %v7084, %v7818
        %v7835 = vadd.f32 %v7085, %v7819
        %v7836 = vadd.f32 %v7086, %v7820
        %v7837 = vadd.f32 %v7087, %v7821
        %v7838 = vadd.f32 %v7088, %v7822
        %v7839 = vadd.f32 %v7089, %v7823
        %v7840 = vadd.f32 %v7090, %v7824
        %v7841 = vadd.f32 %v7091, %v7825
        %v7842 = vpack.c.bf16 %v7795, %v7794
        %v7843 = vpack.c.bf16 %v7797, %v7796
        %v7844 = vpack.c.bf16 %v7799, %v7798
        %v7845 = vpack.c.bf16 %v7801, %v7800
        %v7846 = vpack.c.bf16 %v7803, %v7802
        %v7847 = vpack.c.bf16 %v7805, %v7804
        %v7848 = vpack.c.bf16 %v7807, %v7806
        %v7849 = vpack.c.bf16 %v7809, %v7808
        %v7851 = vsel %vm714, %v7842, 0
        %v7854 = vsel %vm714, %v7843, 0
        %v7857 = vsel %vm714, %v7844, 0
        %v7860 = vsel %vm714, %v7845, 0
        %v7863 = vsel %vm714, %v7846, 0
        %v7866 = vsel %vm714, %v7847, 0
        %v7869 = vsel %vm714, %v7848, 0
        %v7872 = vsel %vm714, %v7849, 0
        %v7875 = vsel %vm2023, %v4740, 0
        %7877 = vmatpush.bf16.msra.mxu0 0
        %7878 = vmatpush.bf16.msra.mxu0 0
        %7879 = vmatpush.bf16.msra.mxu0 0
        %7880 = vmatpush.bf16.msra.mxu0 0
        %7881 = vmatpush.bf16.msra.mxu0 0
        %7882 = vmatpush.bf16.msra.mxu0 0
        %7883 = vmatpush.bf16.msra.mxu0 0
        %7884 = vmatpush.bf16.msra.mxu0 %v7875
        %7885 = vmatmul.bf16.gmra.mxu0 %v7851
        %v7886 = vpop.f32.mrf.mxu0
        %v7887 = vadd.f32 0.0, %v7886
        %v7888 = vpop.f32.mrf.mxu0
        %v7889 = vadd.f32 0.0, %v7888
        %7890 = vmatmul.bf16.gmra.mxu0 %v7854
        %v7891 = vpop.f32.mrf.mxu0
        %v7892 = vadd.f32 0.0, %v7891
        %v7893 = vpop.f32.mrf.mxu0
        %v7894 = vadd.f32 0.0, %v7893
        %7895 = vmatmul.bf16.gmra.mxu0 %v7857
        %v7896 = vpop.f32.mrf.mxu0
        %v7897 = vadd.f32 0.0, %v7896
        %v7898 = vpop.f32.mrf.mxu0
        %v7899 = vadd.f32 0.0, %v7898
        %7900 = vmatmul.bf16.gmra.mxu0 %v7860
        %v7901 = vpop.f32.mrf.mxu0
        %v7902 = vadd.f32 0.0, %v7901
        %v7903 = vpop.f32.mrf.mxu0
        %v7904 = vadd.f32 0.0, %v7903
        %7905 = vmatmul.bf16.gmra.mxu0 %v7863
        %v7906 = vpop.f32.mrf.mxu0
        %v7907 = vadd.f32 0.0, %v7906
        %v7908 = vpop.f32.mrf.mxu0
        %v7909 = vadd.f32 0.0, %v7908
        %7910 = vmatmul.bf16.gmra.mxu0 %v7866
        %v7911 = vpop.f32.mrf.mxu0
        %v7912 = vadd.f32 0.0, %v7911
        %v7913 = vpop.f32.mrf.mxu0
        %v7914 = vadd.f32 0.0, %v7913
        %7915 = vmatmul.bf16.gmra.mxu0 %v7869
        %v7916 = vpop.f32.mrf.mxu0
        %v7917 = vadd.f32 0.0, %v7916
        %v7918 = vpop.f32.mrf.mxu0
        %v7919 = vadd.f32 0.0, %v7918
        %7920 = vmatmul.bf16.gmra.mxu0 %v7872
        %v7921 = vpop.f32.mrf.mxu0
        %v7922 = vadd.f32 0.0, %v7921
        %v7923 = vpop.f32.mrf.mxu0
        %v7924 = vadd.f32 0.0, %v7923
        %7925 = vdwg.mxu0
        %v7926 = vadd.f32 %v7176, %v7887
        %v7927 = vadd.f32 %v7177, %v7889
        %v7928 = vadd.f32 %v7178, %v7892
        %v7929 = vadd.f32 %v7179, %v7894
        %v7930 = vadd.f32 %v7180, %v7897
        %v7931 = vadd.f32 %v7181, %v7899
        %v7932 = vadd.f32 %v7182, %v7902
        %v7933 = vadd.f32 %v7183, %v7904
        %v7934 = vadd.f32 %v7184, %v7907
        %v7935 = vadd.f32 %v7185, %v7909
        %v7936 = vadd.f32 %v7186, %v7912
        %v7937 = vadd.f32 %v7187, %v7914
        %v7938 = vadd.f32 %v7188, %v7917
        %v7939 = vadd.f32 %v7189, %v7919
        %v7940 = vadd.f32 %v7190, %v7922
        %v7941 = vadd.f32 %v7191, %v7924
        %v7942 = vmul.f32 %v7826, 0.25
        %v7943 = vmul.f32 %v7827, 0.25
        %v7944 = vmul.f32 %v7828, 0.25
        %v7945 = vmul.f32 %v7829, 0.25
        %v7946 = vmul.f32 %v7830, 0.25
        %v7947 = vmul.f32 %v7831, 0.25
        %v7948 = vmul.f32 %v7832, 0.25
        %v7949 = vmul.f32 %v7833, 0.25
        %v7950 = vmul.f32 %v7834, 0.25
        %v7951 = vmul.f32 %v7835, 0.25
        %v7952 = vmul.f32 %v7836, 0.25
        %v7953 = vmul.f32 %v7837, 0.25
        %v7954 = vmul.f32 %v7838, 0.25
        %v7955 = vmul.f32 %v7839, 0.25
        %v7956 = vmul.f32 %v7840, 0.25
        %v7957 = vmul.f32 %v7841, 0.25
        %s7958 = scalar_lea.vmem %s418, 128 [#allocation3]
        %7959 = vst [vmem:[%s7958] sm:$0xff] %v7942
        %7960 = vst [vmem:[%s7958 + $0x8] sm:$0xff] %v7943
        %7961 = vst [vmem:[%s7958 + $0x10] sm:$0xff] %v7944
        %7962 = vst [vmem:[%s7958 + $0x18] sm:$0xff] %v7945
        %7963 = vst [vmem:[%s7958 + $0x20] sm:$0xff] %v7946
        %7964 = vst [vmem:[%s7958 + $0x28] sm:$0xff] %v7947
        %7965 = vst [vmem:[%s7958 + $0x30] sm:$0xff] %v7948
        %7966 = vst [vmem:[%s7958 + $0x38] sm:$0xff] %v7949
        %7967 = vst [vmem:[%s7958 + $0x40] sm:$0xff] %v7950
        %7968 = vst [vmem:[%s7958 + $0x48] sm:$0xff] %v7951
        %7969 = vst [vmem:[%s7958 + $0x50] sm:$0xff] %v7952
        %7970 = vst [vmem:[%s7958 + $0x58] sm:$0xff] %v7953
        %7971 = vst [vmem:[%s7958 + $0x60] sm:$0xff] %v7954
        %7972 = vst [vmem:[%s7958 + $0x68] sm:$0xff] %v7955
        %7973 = vst [vmem:[%s7958 + $0x70] sm:$0xff] %v7956
        %7974 = vst [vmem:[%s7958 + $0x78] sm:$0xff] %v7957
        %v7975 = vadd.f32 %v4715, %v7926
        %v7976 = vadd.f32 %v4716, %v7927
        %v7977 = vadd.f32 %v4717, %v7928
        %v7978 = vadd.f32 %v4718, %v7929
        %v7979 = vadd.f32 %v4719, %v7930
        %v7980 = vadd.f32 %v4720, %v7931
        %v7981 = vadd.f32 %v4721, %v7932
        %v7982 = vadd.f32 %v4722, %v7933
        %v7983 = vadd.f32 %v4723, %v7934
        %v7984 = vadd.f32 %v4724, %v7935
        %v7985 = vadd.f32 %v4725, %v7936
        %v7986 = vadd.f32 %v4726, %v7937
        %v7987 = vadd.f32 %v4727, %v7938
        %v7988 = vadd.f32 %v4728, %v7939
        %v7989 = vadd.f32 %v4729, %v7940
        %v7990 = vadd.f32 %v4730, %v7941
        %v7991 = vperm.slane %v4760, 0
        %v7992 = vadd.f32 %v7975, %v7991
        %v7993 = vadd.f32 %v7976, %v7991
        %v7994 = vadd.f32 %v7977, %v7991
        %v7995 = vadd.f32 %v7978, %v7991
        %v7996 = vadd.f32 %v7979, %v7991
        %v7997 = vadd.f32 %v7980, %v7991
        %v7998 = vadd.f32 %v7981, %v7991
        %v7999 = vadd.f32 %v7982, %v7991
        %v8000 = vadd.f32 %v7983, %v7991
        %v8001 = vadd.f32 %v7984, %v7991
        %v8002 = vadd.f32 %v7985, %v7991
        %v8003 = vadd.f32 %v7986, %v7991
        %v8004 = vadd.f32 %v7987, %v7991
        %v8005 = vadd.f32 %v7988, %v7991
        %v8006 = vadd.f32 %v7989, %v7991
        %v8007 = vadd.f32 %v7990, %v7991
        %v8008 = vsel %vm493, %v7992, 0.0
        %8009 = vadd.xlane.f32.xlu0 %v8008
        %v8010 = vpop.xlane.xlu0 %8009
        %v8011 = vsel %vm493, %v7993, 0.0
        %8012 = vadd.xlane.f32.xlu0 %v8011
        %v8013 = vpop.xlane.xlu0 %8012
        %v8014 = vsel %vm493, %v7994, 0.0
        %8015 = vadd.xlane.f32.xlu0 %v8014
        %v8016 = vpop.xlane.xlu0 %8015
        %v8017 = vsel %vm493, %v7995, 0.0
        %8018 = vadd.xlane.f32.xlu0 %v8017
        %v8019 = vpop.xlane.xlu0 %8018
        %v8020 = vsel %vm493, %v7996, 0.0
        %8021 = vadd.xlane.f32.xlu0 %v8020
        %v8022 = vpop.xlane.xlu0 %8021
        %v8023 = vsel %vm493, %v7997, 0.0
        %8024 = vadd.xlane.f32.xlu0 %v8023
        %v8025 = vpop.xlane.xlu0 %8024
        %v8026 = vsel %vm493, %v7998, 0.0
        %8027 = vadd.xlane.f32.xlu0 %v8026
        %v8028 = vpop.xlane.xlu0 %8027
        %v8029 = vsel %vm493, %v7999, 0.0
        %8030 = vadd.xlane.f32.xlu0 %v8029
        %v8031 = vpop.xlane.xlu0 %8030
        %v8032 = vsel %vm493, %v8000, 0.0
        %8033 = vadd.xlane.f32.xlu0 %v8032
        %v8034 = vpop.xlane.xlu0 %8033
        %v8035 = vsel %vm493, %v8001, 0.0
        %8036 = vadd.xlane.f32.xlu0 %v8035
        %v8037 = vpop.xlane.xlu0 %8036
        %v8038 = vsel %vm493, %v8002, 0.0
        %8039 = vadd.xlane.f32.xlu0 %v8038
        %v8040 = vpop.xlane.xlu0 %8039
        %v8041 = vsel %vm493, %v8003, 0.0
        %8042 = vadd.xlane.f32.xlu0 %v8041
        %v8043 = vpop.xlane.xlu0 %8042
        %v8044 = vsel %vm493, %v8004, 0.0
        %8045 = vadd.xlane.f32.xlu0 %v8044
        %v8046 = vpop.xlane.xlu0 %8045
        %v8047 = vsel %vm493, %v8005, 0.0
        %8048 = vadd.xlane.f32.xlu0 %v8047
        %v8049 = vpop.xlane.xlu0 %8048
        %v8050 = vsel %vm493, %v8006, 0.0
        %8051 = vadd.xlane.f32.xlu0 %v8050
        %v8052 = vpop.xlane.xlu0 %8051
        %v8053 = vsel %vm493, %v8007, 0.0
        %8054 = vadd.xlane.f32.xlu0 %v8053
        %v8055 = vpop.xlane.xlu0 %8054
        %v8056 = vmul.f32 %v8010, %v3771
        %v8057 = vmul.f32 %v8013, %v3771
        %v8058 = vmul.f32 %v8016, %v3771
        %v8059 = vmul.f32 %v8019, %v3771
        %v8060 = vmul.f32 %v8022, %v3771
        %v8061 = vmul.f32 %v8025, %v3771
        %v8062 = vmul.f32 %v8028, %v3771
        %v8063 = vmul.f32 %v8031, %v3771
        %v8064 = vmul.f32 %v8034, %v3771
        %v8065 = vmul.f32 %v8037, %v3771
        %v8066 = vmul.f32 %v8040, %v3771
        %v8067 = vmul.f32 %v8043, %v3771
        %v8068 = vmul.f32 %v8046, %v3771
        %v8069 = vmul.f32 %v8049, %v3771
        %v8070 = vmul.f32 %v8052, %v3771
        %v8071 = vmul.f32 %v8055, %v3771
        %v8072 = vsub.f32 %v7992, %v8056
        %v8073 = vsub.f32 %v7993, %v8057
        %v8074 = vsub.f32 %v7994, %v8058
        %v8075 = vsub.f32 %v7995, %v8059
        %v8076 = vsub.f32 %v7996, %v8060
        %v8077 = vsub.f32 %v7997, %v8061
        %v8078 = vsub.f32 %v7998, %v8062
        %v8079 = vsub.f32 %v7999, %v8063
        %v8080 = vsub.f32 %v8000, %v8064
        %v8081 = vsub.f32 %v8001, %v8065
        %v8082 = vsub.f32 %v8002, %v8066
        %v8083 = vsub.f32 %v8003, %v8067
        %v8084 = vsub.f32 %v8004, %v8068
        %v8085 = vsub.f32 %v8005, %v8069
        %v8086 = vsub.f32 %v8006, %v8070
        %v8087 = vsub.f32 %v8007, %v8071
        %v8088 = vmul.f32 %v8072, %v8072
        %v8089 = vmul.f32 %v8073, %v8073
        %v8090 = vmul.f32 %v8074, %v8074
        %v8091 = vmul.f32 %v8075, %v8075
        %v8092 = vmul.f32 %v8076, %v8076
        %v8093 = vmul.f32 %v8077, %v8077
        %v8094 = vmul.f32 %v8078, %v8078
        %v8095 = vmul.f32 %v8079, %v8079
        %v8096 = vmul.f32 %v8080, %v8080
        %v8097 = vmul.f32 %v8081, %v8081
        %v8098 = vmul.f32 %v8082, %v8082
        %v8099 = vmul.f32 %v8083, %v8083
        %v8100 = vmul.f32 %v8084, %v8084
        %v8101 = vmul.f32 %v8085, %v8085
        %v8102 = vmul.f32 %v8086, %v8086
        %v8103 = vmul.f32 %v8087, %v8087
        %v8104 = vsel %vm493, %v8088, 0.0
        %8105 = vadd.xlane.f32.xlu0 %v8104
        %v8106 = vpop.xlane.xlu0 %8105
        %v8107 = vsel %vm493, %v8089, 0.0
        %8108 = vadd.xlane.f32.xlu0 %v8107
        %v8109 = vpop.xlane.xlu0 %8108
        %v8110 = vsel %vm493, %v8090, 0.0
        %8111 = vadd.xlane.f32.xlu0 %v8110
        %v8112 = vpop.xlane.xlu0 %8111
        %v8113 = vsel %vm493, %v8091, 0.0
        %8114 = vadd.xlane.f32.xlu0 %v8113
        %v8115 = vpop.xlane.xlu0 %8114
        %v8116 = vsel %vm493, %v8092, 0.0
        %8117 = vadd.xlane.f32.xlu0 %v8116
        %v8118 = vpop.xlane.xlu0 %8117
        %v8119 = vsel %vm493, %v8093, 0.0
        %8120 = vadd.xlane.f32.xlu0 %v8119
        %v8121 = vpop.xlane.xlu0 %8120
        %v8122 = vsel %vm493, %v8094, 0.0
        %8123 = vadd.xlane.f32.xlu0 %v8122
        %v8124 = vpop.xlane.xlu0 %8123
        %v8125 = vsel %vm493, %v8095, 0.0
        %8126 = vadd.xlane.f32.xlu0 %v8125
        %v8127 = vpop.xlane.xlu0 %8126
        %v8128 = vsel %vm493, %v8096, 0.0
        %8129 = vadd.xlane.f32.xlu0 %v8128
        %v8130 = vpop.xlane.xlu0 %8129
        %v8131 = vsel %vm493, %v8097, 0.0
        %8132 = vadd.xlane.f32.xlu0 %v8131
        %v8133 = vpop.xlane.xlu0 %8132
        %v8134 = vsel %vm493, %v8098, 0.0
        %8135 = vadd.xlane.f32.xlu0 %v8134
        %v8136 = vpop.xlane.xlu0 %8135
        %v8137 = vsel %vm493, %v8099, 0.0
        %8138 = vadd.xlane.f32.xlu0 %v8137
        %v8139 = vpop.xlane.xlu0 %8138
        %v8140 = vsel %vm493, %v8100, 0.0
        %8141 = vadd.xlane.f32.xlu0 %v8140
        %v8142 = vpop.xlane.xlu0 %8141
        %v8143 = vsel %vm493, %v8101, 0.0
        %8144 = vadd.xlane.f32.xlu0 %v8143
        %v8145 = vpop.xlane.xlu0 %8144
        %v8146 = vsel %vm493, %v8102, 0.0
        %8147 = vadd.xlane.f32.xlu0 %v8146
        %v8148 = vpop.xlane.xlu0 %8147
        %v8149 = vsel %vm493, %v8103, 0.0
        %8150 = vadd.xlane.f32.xlu0 %v8149
        %v8151 = vpop.xlane.xlu0 %8150
        %v8152 = vmul.f32 %v8106, %v3771
        %v8153 = vmul.f32 %v8109, %v3771
        %v8154 = vmul.f32 %v8112, %v3771
        %v8155 = vmul.f32 %v8115, %v3771
        %v8156 = vmul.f32 %v8118, %v3771
        %v8157 = vmul.f32 %v8121, %v3771
        %v8158 = vmul.f32 %v8124, %v3771
        %v8159 = vmul.f32 %v8127, %v3771
        %v8160 = vmul.f32 %v8130, %v3771
        %v8161 = vmul.f32 %v8133, %v3771
        %v8162 = vmul.f32 %v8136, %v3771
        %v8163 = vmul.f32 %v8139, %v3771
        %v8164 = vmul.f32 %v8142, %v3771
        %v8165 = vmul.f32 %v8145, %v3771
        %v8166 = vmul.f32 %v8148, %v3771
        %v8167 = vmul.f32 %v8151, %v3771
        %v8168 = vadd.f32 %v8152, 1e-05
        %v8169 = vadd.f32 %v8153, 1e-05
        %v8170 = vadd.f32 %v8154, 1e-05
        %v8171 = vadd.f32 %v8155, 1e-05
        %v8172 = vadd.f32 %v8156, 1e-05
        %v8173 = vadd.f32 %v8157, 1e-05
        %v8174 = vadd.f32 %v8158, 1e-05
        %v8175 = vadd.f32 %v8159, 1e-05
        %v8176 = vadd.f32 %v8160, 1e-05
        %v8177 = vadd.f32 %v8161, 1e-05
        %v8178 = vadd.f32 %v8162, 1e-05
        %v8179 = vadd.f32 %v8163, 1e-05
        %v8180 = vadd.f32 %v8164, 1e-05
        %v8181 = vadd.f32 %v8165, 1e-05
        %v8182 = vadd.f32 %v8166, 1e-05
        %v8183 = vadd.f32 %v8167, 1e-05
        %v8184 = vrsqrt.pop %v8168
        %v8185 = vmul.f32 %v8184, %v8168
        %v8186 = vmul.f32 %v8185, %v8184
        %v8187 = vmul.f32 0.5, %v8186
        %v8188 = vsub.f32 1.5, %v8187
        %v8189 = vmul.f32 %v8184, %v8188
        %vm8190 = vweird.f32 %v8168
        %vm8191 = vweird.f32 %v8184
        %vm8192 = vmor %vm8190, %vm8191
        %v8193 = vsel %vm8192, %v8184, %v8189
        %v8194 = vrsqrt.pop %v8169
        %v8195 = vmul.f32 %v8194, %v8169
        %v8196 = vmul.f32 %v8195, %v8194
        %v8197 = vmul.f32 0.5, %v8196
        %v8198 = vsub.f32 1.5, %v8197
        %v8199 = vmul.f32 %v8194, %v8198
        %vm8200 = vweird.f32 %v8169
        %vm8201 = vweird.f32 %v8194
        %vm8202 = vmor %vm8200, %vm8201
        %v8203 = vsel %vm8202, %v8194, %v8199
        %v8204 = vrsqrt.pop %v8170
        %v8205 = vmul.f32 %v8204, %v8170
        %v8206 = vmul.f32 %v8205, %v8204
        %v8207 = vmul.f32 0.5, %v8206
        %v8208 = vsub.f32 1.5, %v8207
        %v8209 = vmul.f32 %v8204, %v8208
        %vm8210 = vweird.f32 %v8170
        %vm8211 = vweird.f32 %v8204
        %vm8212 = vmor %vm8210, %vm8211
        %v8213 = vsel %vm8212, %v8204, %v8209
        %v8214 = vrsqrt.pop %v8171
        %v8215 = vmul.f32 %v8214, %v8171
        %v8216 = vmul.f32 %v8215, %v8214
        %v8217 = vmul.f32 0.5, %v8216
        %v8218 = vsub.f32 1.5, %v8217
        %v8219 = vmul.f32 %v8214, %v8218
        %vm8220 = vweird.f32 %v8171
        %vm8221 = vweird.f32 %v8214
        %vm8222 = vmor %vm8220, %vm8221
        %v8223 = vsel %vm8222, %v8214, %v8219
        %v8224 = vrsqrt.pop %v8172
        %v8225 = vmul.f32 %v8224, %v8172
        %v8226 = vmul.f32 %v8225, %v8224
        %v8227 = vmul.f32 0.5, %v8226
        %v8228 = vsub.f32 1.5, %v8227
        %v8229 = vmul.f32 %v8224, %v8228
        %vm8230 = vweird.f32 %v8172
        %vm8231 = vweird.f32 %v8224
        %vm8232 = vmor %vm8230, %vm8231
        %v8233 = vsel %vm8232, %v8224, %v8229
        %v8234 = vrsqrt.pop %v8173
        %v8235 = vmul.f32 %v8234, %v8173
        %v8236 = vmul.f32 %v8235, %v8234
        %v8237 = vmul.f32 0.5, %v8236
        %v8238 = vsub.f32 1.5, %v8237
        %v8239 = vmul.f32 %v8234, %v8238
        %vm8240 = vweird.f32 %v8173
        %vm8241 = vweird.f32 %v8234
        %vm8242 = vmor %vm8240, %vm8241
        %v8243 = vsel %vm8242, %v8234, %v8239
        %v8244 = vrsqrt.pop %v8174
        %v8245 = vmul.f32 %v8244, %v8174
        %v8246 = vmul.f32 %v8245, %v8244
        %v8247 = vmul.f32 0.5, %v8246
        %v8248 = vsub.f32 1.5, %v8247
        %v8249 = vmul.f32 %v8244, %v8248
        %vm8250 = vweird.f32 %v8174
        %vm8251 = vweird.f32 %v8244
        %vm8252 = vmor %vm8250, %vm8251
        %v8253 = vsel %vm8252, %v8244, %v8249
        %v8254 = vrsqrt.pop %v8175
        %v8255 = vmul.f32 %v8254, %v8175
        %v8256 = vmul.f32 %v8255, %v8254
        %v8257 = vmul.f32 0.5, %v8256
        %v8258 = vsub.f32 1.5, %v8257
        %v8259 = vmul.f32 %v8254, %v8258
        %vm8260 = vweird.f32 %v8175
        %vm8261 = vweird.f32 %v8254
        %vm8262 = vmor %vm8260, %vm8261
        %v8263 = vsel %vm8262, %v8254, %v8259
        %v8264 = vrsqrt.pop %v8176
        %v8265 = vmul.f32 %v8264, %v8176
        %v8266 = vmul.f32 %v8265, %v8264
        %v8267 = vmul.f32 0.5, %v8266
        %v8268 = vsub.f32 1.5, %v8267
        %v8269 = vmul.f32 %v8264, %v8268
        %vm8270 = vweird.f32 %v8176
        %vm8271 = vweird.f32 %v8264
        %vm8272 = vmor %vm8270, %vm8271
        %v8273 = vsel %vm8272, %v8264, %v8269
        %v8274 = vrsqrt.pop %v8177
        %v8275 = vmul.f32 %v8274, %v8177
        %v8276 = vmul.f32 %v8275, %v8274
        %v8277 = vmul.f32 0.5, %v8276
        %v8278 = vsub.f32 1.5, %v8277
        %v8279 = vmul.f32 %v8274, %v8278
        %vm8280 = vweird.f32 %v8177
        %vm8281 = vweird.f32 %v8274
        %vm8282 = vmor %vm8280, %vm8281
        %v8283 = vsel %vm8282, %v8274, %v8279
        %v8284 = vrsqrt.pop %v8178
        %v8285 = vmul.f32 %v8284, %v8178
        %v8286 = vmul.f32 %v8285, %v8284
        %v8287 = vmul.f32 0.5, %v8286
        %v8288 = vsub.f32 1.5, %v8287
        %v8289 = vmul.f32 %v8284, %v8288
        %vm8290 = vweird.f32 %v8178
        %vm8291 = vweird.f32 %v8284
        %vm8292 = vmor %vm8290, %vm8291
        %v8293 = vsel %vm8292, %v8284, %v8289
        %v8294 = vrsqrt.pop %v8179
        %v8295 = vmul.f32 %v8294, %v8179
        %v8296 = vmul.f32 %v8295, %v8294
        %v8297 = vmul.f32 0.5, %v8296
        %v8298 = vsub.f32 1.5, %v8297
        %v8299 = vmul.f32 %v8294, %v8298
        %vm8300 = vweird.f32 %v8179
        %vm8301 = vweird.f32 %v8294
        %vm8302 = vmor %vm8300, %vm8301
        %v8303 = vsel %vm8302, %v8294, %v8299
        %v8304 = vrsqrt.pop %v8180
        %v8305 = vmul.f32 %v8304, %v8180
        %v8306 = vmul.f32 %v8305, %v8304
        %v8307 = vmul.f32 0.5, %v8306
        %v8308 = vsub.f32 1.5, %v8307
        %v8309 = vmul.f32 %v8304, %v8308
        %vm8310 = vweird.f32 %v8180
        %vm8311 = vweird.f32 %v8304
        %vm8312 = vmor %vm8310, %vm8311
        %v8313 = vsel %vm8312, %v8304, %v8309
        %v8314 = vrsqrt.pop %v8181
        %v8315 = vmul.f32 %v8314, %v8181
        %v8316 = vmul.f32 %v8315, %v8314
        %v8317 = vmul.f32 0.5, %v8316
        %v8318 = vsub.f32 1.5, %v8317
        %v8319 = vmul.f32 %v8314, %v8318
        %vm8320 = vweird.f32 %v8181
        %vm8321 = vweird.f32 %v8314
        %vm8322 = vmor %vm8320, %vm8321
        %v8323 = vsel %vm8322, %v8314, %v8319
        %v8324 = vrsqrt.pop %v8182
        %v8325 = vmul.f32 %v8324, %v8182
        %v8326 = vmul.f32 %v8325, %v8324
        %v8327 = vmul.f32 0.5, %v8326
        %v8328 = vsub.f32 1.5, %v8327
        %v8329 = vmul.f32 %v8324, %v8328
        %vm8330 = vweird.f32 %v8182
        %vm8331 = vweird.f32 %v8324
        %vm8332 = vmor %vm8330, %vm8331
        %v8333 = vsel %vm8332, %v8324, %v8329
        %v8334 = vrsqrt.pop %v8183
        %v8335 = vmul.f32 %v8334, %v8183
        %v8336 = vmul.f32 %v8335, %v8334
        %v8337 = vmul.f32 0.5, %v8336
        %v8338 = vsub.f32 1.5, %v8337
        %v8339 = vmul.f32 %v8334, %v8338
        %vm8340 = vweird.f32 %v8183
        %vm8341 = vweird.f32 %v8334
        %vm8342 = vmor %vm8340, %vm8341
        %v8343 = vsel %vm8342, %v8334, %v8339
        %v8344 = vmul.f32 %v8072, %v8193
        %v8345 = vmul.f32 %v8073, %v8203
        %v8346 = vmul.f32 %v8074, %v8213
        %v8347 = vmul.f32 %v8075, %v8223
        %v8348 = vmul.f32 %v8076, %v8233
        %v8349 = vmul.f32 %v8077, %v8243
        %v8350 = vmul.f32 %v8078, %v8253
        %v8351 = vmul.f32 %v8079, %v8263
        %v8352 = vmul.f32 %v8080, %v8273
        %v8353 = vmul.f32 %v8081, %v8283
        %v8354 = vmul.f32 %v8082, %v8293
        %v8355 = vmul.f32 %v8083, %v8303
        %v8356 = vmul.f32 %v8084, %v8313
        %v8357 = vmul.f32 %v8085, %v8323
        %v8358 = vmul.f32 %v8086, %v8333
        %v8359 = vmul.f32 %v8087, %v8343
        %v8360 = vperm.slane %v4760, 2
        %v8361 = vmul.f32 %v8344, %v8360
        %v8362 = vmul.f32 %v8345, %v8360
        %v8363 = vmul.f32 %v8346, %v8360
        %v8364 = vmul.f32 %v8347, %v8360
        %v8365 = vmul.f32 %v8348, %v8360
        %v8366 = vmul.f32 %v8349, %v8360
        %v8367 = vmul.f32 %v8350, %v8360
        %v8368 = vmul.f32 %v8351, %v8360
        %v8369 = vmul.f32 %v8352, %v8360
        %v8370 = vmul.f32 %v8353, %v8360
        %v8371 = vmul.f32 %v8354, %v8360
        %v8372 = vmul.f32 %v8355, %v8360
        %v8373 = vmul.f32 %v8356, %v8360
        %v8374 = vmul.f32 %v8357, %v8360
        %v8375 = vmul.f32 %v8358, %v8360
        %v8376 = vmul.f32 %v8359, %v8360
        %v8377 = vperm.slane %v4760, 3
        %v8378 = vadd.f32 %v8361, %v8377
        %v8379 = vadd.f32 %v8362, %v8377
        %v8380 = vadd.f32 %v8363, %v8377
        %v8381 = vadd.f32 %v8364, %v8377
        %v8382 = vadd.f32 %v8365, %v8377
        %v8383 = vadd.f32 %v8366, %v8377
        %v8384 = vadd.f32 %v8367, %v8377
        %v8385 = vadd.f32 %v8368, %v8377
        %v8386 = vadd.f32 %v8369, %v8377
        %v8387 = vadd.f32 %v8370, %v8377
        %v8388 = vadd.f32 %v8371, %v8377
        %v8389 = vadd.f32 %v8372, %v8377
        %v8390 = vadd.f32 %v8373, %v8377
        %v8391 = vadd.f32 %v8374, %v8377
        %v8392 = vadd.f32 %v8375, %v8377
        %v8393 = vadd.f32 %v8376, %v8377
        %v8394 = vpack.c.bf16 %v8379, %v8378
        %v8395 = vpack.c.bf16 %v8381, %v8380
        %v8396 = vpack.c.bf16 %v8383, %v8382
        %v8397 = vpack.c.bf16 %v8385, %v8384
        %v8398 = vpack.c.bf16 %v8387, %v8386
        %v8399 = vpack.c.bf16 %v8389, %v8388
        %v8400 = vpack.c.bf16 %v8391, %v8390
        %v8401 = vpack.c.bf16 %v8393, %v8392
        %v8403 = vperm.slane %v4758, 0
        %v8409 = vunpack.c.l.b16 %v4742
        %v8410 = vunpack.c.l.b16 %v4743
        %v8411 = vunpack.c.l.b16 %v4744
        %v8412 = vunpack.c.l.b16 %v4745
        %v8413 = vpack.c.b16 %v8410, %v8409
        %v8414 = vpack.c.b16 %v8412, %v8411
        %v8418 = vsel %vm493, %v8394, 0
        %v8421 = vsel %vm493, %v8395, 0
        %v8424 = vsel %vm493, %v8396, 0
        %v8427 = vsel %vm493, %v8397, 0
        %v8430 = vsel %vm493, %v8398, 0
        %v8433 = vsel %vm493, %v8399, 0
        %v8436 = vsel %vm493, %v8400, 0
        %v8439 = vsel %vm493, %v8401, 0
        %8441 = vmatpush.bf16.msra.mxu0 0
        %8442 = vmatpush.bf16.msra.mxu0 0
        %8443 = vmatpush.bf16.msra.mxu0 0
        %8444 = vmatpush.bf16.msra.mxu0 0
        %8445 = vmatpush.bf16.msra.mxu0 0
        %8446 = vmatpush.bf16.msra.mxu0 0
        %8447 = vmatpush.bf16.msra.mxu0 %v8414
        %8448 = vmatpush.bf16.msra.mxu0 %v8413
        %8449 = vmatmul.bf16.gmra.mxu0 %v8418
        %v8450 = vpop.f32.mrf.mxu0
        %v8451 = vadd.f32 %v8403, %v8450
        %v8452 = vpop.f32.mrf.mxu0
        %v8453 = vadd.f32 %v8403, %v8452
        %8454 = vmatmul.bf16.gmra.mxu0 %v8421
        %v8455 = vpop.f32.mrf.mxu0
        %v8456 = vadd.f32 %v8403, %v8455
        %v8457 = vpop.f32.mrf.mxu0
        %v8458 = vadd.f32 %v8403, %v8457
        %8459 = vmatmul.bf16.gmra.mxu0 %v8424
        %v8460 = vpop.f32.mrf.mxu0
        %v8461 = vadd.f32 %v8403, %v8460
        %v8462 = vpop.f32.mrf.mxu0
        %v8463 = vadd.f32 %v8403, %v8462
        %8464 = vmatmul.bf16.gmra.mxu0 %v8427
        %v8465 = vpop.f32.mrf.mxu0
        %v8466 = vadd.f32 %v8403, %v8465
        %v8467 = vpop.f32.mrf.mxu0
        %v8468 = vadd.f32 %v8403, %v8467
        %8469 = vmatmul.bf16.gmra.mxu0 %v8430
        %v8470 = vpop.f32.mrf.mxu0
        %v8471 = vadd.f32 %v8403, %v8470
        %v8472 = vpop.f32.mrf.mxu0
        %v8473 = vadd.f32 %v8403, %v8472
        %8474 = vmatmul.bf16.gmra.mxu0 %v8433
        %v8475 = vpop.f32.mrf.mxu0
        %v8476 = vadd.f32 %v8403, %v8475
        %v8477 = vpop.f32.mrf.mxu0
        %v8478 = vadd.f32 %v8403, %v8477
        %8479 = vmatmul.bf16.gmra.mxu0 %v8436
        %v8480 = vpop.f32.mrf.mxu0
        %v8481 = vadd.f32 %v8403, %v8480
        %v8482 = vpop.f32.mrf.mxu0
        %v8483 = vadd.f32 %v8403, %v8482
        %8484 = vmatmul.bf16.gmra.mxu0 %v8439
        %v8485 = vpop.f32.mrf.mxu0
        %v8486 = vadd.f32 %v8403, %v8485
        %v8487 = vpop.f32.mrf.mxu0
        %v8488 = vadd.f32 %v8403, %v8487
        %8489 = vdwg.mxu0
        %v8490 = vmax.f32 %v8451, 0.0
        %v8491 = vmax.f32 %v8453, 0.0
        %v8492 = vmax.f32 %v8456, 0.0
        %v8493 = vmax.f32 %v8458, 0.0
        %v8494 = vmax.f32 %v8461, 0.0
        %v8495 = vmax.f32 %v8463, 0.0
        %v8496 = vmax.f32 %v8466, 0.0
        %v8497 = vmax.f32 %v8468, 0.0
        %v8498 = vmax.f32 %v8471, 0.0
        %v8499 = vmax.f32 %v8473, 0.0
        %v8500 = vmax.f32 %v8476, 0.0
        %v8501 = vmax.f32 %v8478, 0.0
        %v8502 = vmax.f32 %v8481, 0.0
        %v8503 = vmax.f32 %v8483, 0.0
        %v8504 = vmax.f32 %v8486, 0.0
        %v8505 = vmax.f32 %v8488, 0.0
        %v8506 = vpack.c.bf16 %v8491, %v8490
        %v8507 = vpack.c.bf16 %v8493, %v8492
        %v8508 = vpack.c.bf16 %v8495, %v8494
        %v8509 = vpack.c.bf16 %v8497, %v8496
        %v8510 = vpack.c.bf16 %v8499, %v8498
        %v8511 = vpack.c.bf16 %v8501, %v8500
        %v8512 = vpack.c.bf16 %v8503, %v8502
        %v8513 = vpack.c.bf16 %v8505, %v8504
        %v8514 = vperm.slane %v4760, 1
        %v8523 = vunpack.c.l.b16 %v4747
        %v8524 = vunpack.c.l.b16 %v4748
        %v8525 = vunpack.c.l.b16 %v4749
        %v8526 = vunpack.c.l.b16 %v4750
        %v8527 = vunpack.c.l.b16 %v4751
        %v8528 = vunpack.c.l.b16 %v4752
        %v8529 = vunpack.c.l.b16 %v4753
        %v8530 = vunpack.c.l.b16 %v4754
        %v8531 = vpack.c.b16 %v8524, %v8523
        %v8532 = vpack.c.b16 %v8526, %v8525
        %v8533 = vpack.c.b16 %v8528, %v8527
        %v8534 = vpack.c.b16 %v8530, %v8529
        %v8540 = vsel %vm4255, %v8506, 0
        %v8543 = vsel %vm4255, %v8507, 0
        %v8546 = vsel %vm4255, %v8508, 0
        %v8549 = vsel %vm4255, %v8509, 0
        %v8552 = vsel %vm4255, %v8510, 0
        %v8555 = vsel %vm4255, %v8511, 0
        %v8558 = vsel %vm4255, %v8512, 0
        %v8561 = vsel %vm4255, %v8513, 0
        %8563 = vmatpush.bf16.msra.mxu0 0
        %8564 = vmatpush.bf16.msra.mxu0 0
        %8565 = vmatpush.bf16.msra.mxu0 0
        %8566 = vmatpush.bf16.msra.mxu0 0
        %8567 = vmatpush.bf16.msra.mxu0 %v8534
        %8568 = vmatpush.bf16.msra.mxu0 %v8533
        %8569 = vmatpush.bf16.msra.mxu0 %v8532
        %8570 = vmatpush.bf16.msra.mxu0 %v8531
        %8571 = vmatmul.bf16.gmra.mxu0 %v8540
        %v8572 = vpop.f32.mrf.mxu0
        %v8573 = vadd.f32 %v8514, %v8572
        %v8574 = vpop.f32.mrf.mxu0
        %v8575 = vadd.f32 %v8514, %v8574
        %8576 = vmatmul.bf16.gmra.mxu0 %v8543
        %v8577 = vpop.f32.mrf.mxu0
        %v8578 = vadd.f32 %v8514, %v8577
        %v8579 = vpop.f32.mrf.mxu0
        %v8580 = vadd.f32 %v8514, %v8579
        %8581 = vmatmul.bf16.gmra.mxu0 %v8546
        %v8582 = vpop.f32.mrf.mxu0
        %v8583 = vadd.f32 %v8514, %v8582
        %v8584 = vpop.f32.mrf.mxu0
        %v8585 = vadd.f32 %v8514, %v8584
        %8586 = vmatmul.bf16.gmra.mxu0 %v8549
        %v8587 = vpop.f32.mrf.mxu0
        %v8588 = vadd.f32 %v8514, %v8587
        %v8589 = vpop.f32.mrf.mxu0
        %v8590 = vadd.f32 %v8514, %v8589
        %8591 = vmatmul.bf16.gmra.mxu0 %v8552
        %v8592 = vpop.f32.mrf.mxu0
        %v8593 = vadd.f32 %v8514, %v8592
        %v8594 = vpop.f32.mrf.mxu0
        %v8595 = vadd.f32 %v8514, %v8594
        %8596 = vmatmul.bf16.gmra.mxu0 %v8555
        %v8597 = vpop.f32.mrf.mxu0
        %v8598 = vadd.f32 %v8514, %v8597
        %v8599 = vpop.f32.mrf.mxu0
        %v8600 = vadd.f32 %v8514, %v8599
        %8601 = vmatmul.bf16.gmra.mxu0 %v8558
        %v8602 = vpop.f32.mrf.mxu0
        %v8603 = vadd.f32 %v8514, %v8602
        %v8604 = vpop.f32.mrf.mxu0
        %v8605 = vadd.f32 %v8514, %v8604
        %8606 = vmatmul.bf16.gmra.mxu0 %v8561
        %v8607 = vpop.f32.mrf.mxu0
        %v8608 = vadd.f32 %v8514, %v8607
        %v8609 = vpop.f32.mrf.mxu0
        %v8610 = vadd.f32 %v8514, %v8609
        %8611 = vdwg.mxu0
        %v8612 = vadd.f32 %v8378, %v8573
        %v8613 = vadd.f32 %v8379, %v8575
        %v8614 = vadd.f32 %v8380, %v8578
        %v8615 = vadd.f32 %v8381, %v8580
        %v8616 = vadd.f32 %v8382, %v8583
        %v8617 = vadd.f32 %v8383, %v8585
        %v8618 = vadd.f32 %v8384, %v8588
        %v8619 = vadd.f32 %v8385, %v8590
        %v8620 = vadd.f32 %v8386, %v8593
        %v8621 = vadd.f32 %v8387, %v8595
        %v8622 = vadd.f32 %v8388, %v8598
        %v8623 = vadd.f32 %v8389, %v8600
        %v8624 = vadd.f32 %v8390, %v8603
        %v8625 = vadd.f32 %v8391, %v8605
        %v8626 = vadd.f32 %v8392, %v8608
        %v8627 = vadd.f32 %v8393, %v8610
        %v8628 = vsel %vm493, %v8612, 0.0
        %8629 = vadd.xlane.f32.xlu0 %v8628
        %v8630 = vpop.xlane.xlu0 %8629
        %v8631 = vsel %vm493, %v8613, 0.0
        %8632 = vadd.xlane.f32.xlu0 %v8631
        %v8633 = vpop.xlane.xlu0 %8632
        %v8634 = vsel %vm493, %v8614, 0.0
        %8635 = vadd.xlane.f32.xlu0 %v8634
        %v8636 = vpop.xlane.xlu0 %8635
        %v8637 = vsel %vm493, %v8615, 0.0
        %8638 = vadd.xlane.f32.xlu0 %v8637
        %v8639 = vpop.xlane.xlu0 %8638
        %v8640 = vsel %vm493, %v8616, 0.0
        %8641 = vadd.xlane.f32.xlu0 %v8640
        %v8642 = vpop.xlane.xlu0 %8641
        %v8643 = vsel %vm493, %v8617, 0.0
        %8644 = vadd.xlane.f32.xlu0 %v8643
        %v8645 = vpop.xlane.xlu0 %8644
        %v8646 = vsel %vm493, %v8618, 0.0
        %8647 = vadd.xlane.f32.xlu0 %v8646
        %v8648 = vpop.xlane.xlu0 %8647
        %v8649 = vsel %vm493, %v8619, 0.0
        %8650 = vadd.xlane.f32.xlu0 %v8649
        %v8651 = vpop.xlane.xlu0 %8650
        %v8652 = vsel %vm493, %v8620, 0.0
        %8653 = vadd.xlane.f32.xlu0 %v8652
        %v8654 = vpop.xlane.xlu0 %8653
        %v8655 = vsel %vm493, %v8621, 0.0
        %8656 = vadd.xlane.f32.xlu0 %v8655
        %v8657 = vpop.xlane.xlu0 %8656
        %v8658 = vsel %vm493, %v8622, 0.0
        %8659 = vadd.xlane.f32.xlu0 %v8658
        %v8660 = vpop.xlane.xlu0 %8659
        %v8661 = vsel %vm493, %v8623, 0.0
        %8662 = vadd.xlane.f32.xlu0 %v8661
        %v8663 = vpop.xlane.xlu0 %8662
        %v8664 = vsel %vm493, %v8624, 0.0
        %8665 = vadd.xlane.f32.xlu0 %v8664
        %v8666 = vpop.xlane.xlu0 %8665
        %v8667 = vsel %vm493, %v8625, 0.0
        %8668 = vadd.xlane.f32.xlu0 %v8667
        %v8669 = vpop.xlane.xlu0 %8668
        %v8670 = vsel %vm493, %v8626, 0.0
        %8671 = vadd.xlane.f32.xlu0 %v8670
        %v8672 = vpop.xlane.xlu0 %8671
        %v8673 = vsel %vm493, %v8627, 0.0
        %8674 = vadd.xlane.f32.xlu0 %v8673
        %v8675 = vpop.xlane.xlu0 %8674
        %v8676 = vmul.f32 %v8630, %v3771
        %v8677 = vmul.f32 %v8633, %v3771
        %v8678 = vmul.f32 %v8636, %v3771
        %v8679 = vmul.f32 %v8639, %v3771
        %v8680 = vmul.f32 %v8642, %v3771
        %v8681 = vmul.f32 %v8645, %v3771
        %v8682 = vmul.f32 %v8648, %v3771
        %v8683 = vmul.f32 %v8651, %v3771
        %v8684 = vmul.f32 %v8654, %v3771
        %v8685 = vmul.f32 %v8657, %v3771
        %v8686 = vmul.f32 %v8660, %v3771
        %v8687 = vmul.f32 %v8663, %v3771
        %v8688 = vmul.f32 %v8666, %v3771
        %v8689 = vmul.f32 %v8669, %v3771
        %v8690 = vmul.f32 %v8672, %v3771
        %v8691 = vmul.f32 %v8675, %v3771
        %v8692 = vsub.f32 %v8612, %v8676
        %v8693 = vsub.f32 %v8613, %v8677
        %v8694 = vsub.f32 %v8614, %v8678
        %v8695 = vsub.f32 %v8615, %v8679
        %v8696 = vsub.f32 %v8616, %v8680
        %v8697 = vsub.f32 %v8617, %v8681
        %v8698 = vsub.f32 %v8618, %v8682
        %v8699 = vsub.f32 %v8619, %v8683
        %v8700 = vsub.f32 %v8620, %v8684
        %v8701 = vsub.f32 %v8621, %v8685
        %v8702 = vsub.f32 %v8622, %v8686
        %v8703 = vsub.f32 %v8623, %v8687
        %v8704 = vsub.f32 %v8624, %v8688
        %v8705 = vsub.f32 %v8625, %v8689
        %v8706 = vsub.f32 %v8626, %v8690
        %v8707 = vsub.f32 %v8627, %v8691
        %v8708 = vmul.f32 %v8692, %v8692
        %v8709 = vmul.f32 %v8693, %v8693
        %v8710 = vmul.f32 %v8694, %v8694
        %v8711 = vmul.f32 %v8695, %v8695
        %v8712 = vmul.f32 %v8696, %v8696
        %v8713 = vmul.f32 %v8697, %v8697
        %v8714 = vmul.f32 %v8698, %v8698
        %v8715 = vmul.f32 %v8699, %v8699
        %v8716 = vmul.f32 %v8700, %v8700
        %v8717 = vmul.f32 %v8701, %v8701
        %v8718 = vmul.f32 %v8702, %v8702
        %v8719 = vmul.f32 %v8703, %v8703
        %v8720 = vmul.f32 %v8704, %v8704
        %v8721 = vmul.f32 %v8705, %v8705
        %v8722 = vmul.f32 %v8706, %v8706
        %v8723 = vmul.f32 %v8707, %v8707
        %v8724 = vsel %vm493, %v8708, 0.0
        %8725 = vadd.xlane.f32.xlu0 %v8724
        %v8726 = vpop.xlane.xlu0 %8725
        %v8727 = vsel %vm493, %v8709, 0.0
        %8728 = vadd.xlane.f32.xlu0 %v8727
        %v8729 = vpop.xlane.xlu0 %8728
        %v8730 = vsel %vm493, %v8710, 0.0
        %8731 = vadd.xlane.f32.xlu0 %v8730
        %v8732 = vpop.xlane.xlu0 %8731
        %v8733 = vsel %vm493, %v8711, 0.0
        %8734 = vadd.xlane.f32.xlu0 %v8733
        %v8735 = vpop.xlane.xlu0 %8734
        %v8736 = vsel %vm493, %v8712, 0.0
        %8737 = vadd.xlane.f32.xlu0 %v8736
        %v8738 = vpop.xlane.xlu0 %8737
        %v8739 = vsel %vm493, %v8713, 0.0
        %8740 = vadd.xlane.f32.xlu0 %v8739
        %v8741 = vpop.xlane.xlu0 %8740
        %v8742 = vsel %vm493, %v8714, 0.0
        %8743 = vadd.xlane.f32.xlu0 %v8742
        %v8744 = vpop.xlane.xlu0 %8743
        %v8745 = vsel %vm493, %v8715, 0.0
        %8746 = vadd.xlane.f32.xlu0 %v8745
        %v8747 = vpop.xlane.xlu0 %8746
        %v8748 = vsel %vm493, %v8716, 0.0
        %8749 = vadd.xlane.f32.xlu0 %v8748
        %v8750 = vpop.xlane.xlu0 %8749
        %v8751 = vsel %vm493, %v8717, 0.0
        %8752 = vadd.xlane.f32.xlu0 %v8751
        %v8753 = vpop.xlane.xlu0 %8752
        %v8754 = vsel %vm493, %v8718, 0.0
        %8755 = vadd.xlane.f32.xlu0 %v8754
        %v8756 = vpop.xlane.xlu0 %8755
        %v8757 = vsel %vm493, %v8719, 0.0
        %8758 = vadd.xlane.f32.xlu0 %v8757
        %v8759 = vpop.xlane.xlu0 %8758
        %v8760 = vsel %vm493, %v8720, 0.0
        %8761 = vadd.xlane.f32.xlu0 %v8760
        %v8762 = vpop.xlane.xlu0 %8761
        %v8763 = vsel %vm493, %v8721, 0.0
        %8764 = vadd.xlane.f32.xlu0 %v8763
        %v8765 = vpop.xlane.xlu0 %8764
        %v8766 = vsel %vm493, %v8722, 0.0
        %8767 = vadd.xlane.f32.xlu0 %v8766
        %v8768 = vpop.xlane.xlu0 %8767
        %v8769 = vsel %vm493, %v8723, 0.0
        %8770 = vadd.xlane.f32.xlu0 %v8769
        %v8771 = vpop.xlane.xlu0 %8770
        %v8772 = vmul.f32 %v8726, %v3771
        %v8773 = vmul.f32 %v8729, %v3771
        %v8774 = vmul.f32 %v8732, %v3771
        %v8775 = vmul.f32 %v8735, %v3771
        %v8776 = vmul.f32 %v8738, %v3771
        %v8777 = vmul.f32 %v8741, %v3771
        %v8778 = vmul.f32 %v8744, %v3771
        %v8779 = vmul.f32 %v8747, %v3771
        %v8780 = vmul.f32 %v8750, %v3771
        %v8781 = vmul.f32 %v8753, %v3771
        %v8782 = vmul.f32 %v8756, %v3771
        %v8783 = vmul.f32 %v8759, %v3771
        %v8784 = vmul.f32 %v8762, %v3771
        %v8785 = vmul.f32 %v8765, %v3771
        %v8786 = vmul.f32 %v8768, %v3771
        %v8787 = vmul.f32 %v8771, %v3771
        %v8788 = vadd.f32 %v8772, 1e-05
        %v8789 = vadd.f32 %v8773, 1e-05
        %v8790 = vadd.f32 %v8774, 1e-05
        %v8791 = vadd.f32 %v8775, 1e-05
        %v8792 = vadd.f32 %v8776, 1e-05
        %v8793 = vadd.f32 %v8777, 1e-05
        %v8794 = vadd.f32 %v8778, 1e-05
        %v8795 = vadd.f32 %v8779, 1e-05
        %v8796 = vadd.f32 %v8780, 1e-05
        %v8797 = vadd.f32 %v8781, 1e-05
        %v8798 = vadd.f32 %v8782, 1e-05
        %v8799 = vadd.f32 %v8783, 1e-05
        %v8800 = vadd.f32 %v8784, 1e-05
        %v8801 = vadd.f32 %v8785, 1e-05
        %v8802 = vadd.f32 %v8786, 1e-05
        %v8803 = vadd.f32 %v8787, 1e-05
        %v8804 = vrsqrt.pop %v8788
        %v8805 = vmul.f32 %v8804, %v8788
        %v8806 = vmul.f32 %v8805, %v8804
        %v8807 = vmul.f32 0.5, %v8806
        %v8808 = vsub.f32 1.5, %v8807
        %v8809 = vmul.f32 %v8804, %v8808
        %vm8810 = vweird.f32 %v8788
        %vm8811 = vweird.f32 %v8804
        %vm8812 = vmor %vm8810, %vm8811
        %v8813 = vsel %vm8812, %v8804, %v8809
        %v8814 = vrsqrt.pop %v8789
        %v8815 = vmul.f32 %v8814, %v8789
        %v8816 = vmul.f32 %v8815, %v8814
        %v8817 = vmul.f32 0.5, %v8816
        %v8818 = vsub.f32 1.5, %v8817
        %v8819 = vmul.f32 %v8814, %v8818
        %vm8820 = vweird.f32 %v8789
        %vm8821 = vweird.f32 %v8814
        %vm8822 = vmor %vm8820, %vm8821
        %v8823 = vsel %vm8822, %v8814, %v8819
        %v8824 = vrsqrt.pop %v8790
        %v8825 = vmul.f32 %v8824, %v8790
        %v8826 = vmul.f32 %v8825, %v8824
        %v8827 = vmul.f32 0.5, %v8826
        %v8828 = vsub.f32 1.5, %v8827
        %v8829 = vmul.f32 %v8824, %v8828
        %vm8830 = vweird.f32 %v8790
        %vm8831 = vweird.f32 %v8824
        %vm8832 = vmor %vm8830, %vm8831
        %v8833 = vsel %vm8832, %v8824, %v8829
        %v8834 = vrsqrt.pop %v8791
        %v8835 = vmul.f32 %v8834, %v8791
        %v8836 = vmul.f32 %v8835, %v8834
        %v8837 = vmul.f32 0.5, %v8836
        %v8838 = vsub.f32 1.5, %v8837
        %v8839 = vmul.f32 %v8834, %v8838
        %vm8840 = vweird.f32 %v8791
        %vm8841 = vweird.f32 %v8834
        %vm8842 = vmor %vm8840, %vm8841
        %v8843 = vsel %vm8842, %v8834, %v8839
        %v8844 = vrsqrt.pop %v8792
        %v8845 = vmul.f32 %v8844, %v8792
        %v8846 = vmul.f32 %v8845, %v8844
        %v8847 = vmul.f32 0.5, %v8846
        %v8848 = vsub.f32 1.5, %v8847
        %v8849 = vmul.f32 %v8844, %v8848
        %vm8850 = vweird.f32 %v8792
        %vm8851 = vweird.f32 %v8844
        %vm8852 = vmor %vm8850, %vm8851
        %v8853 = vsel %vm8852, %v8844, %v8849
        %v8854 = vrsqrt.pop %v8793
        %v8855 = vmul.f32 %v8854, %v8793
        %v8856 = vmul.f32 %v8855, %v8854
        %v8857 = vmul.f32 0.5, %v8856
        %v8858 = vsub.f32 1.5, %v8857
        %v8859 = vmul.f32 %v8854, %v8858
        %vm8860 = vweird.f32 %v8793
        %vm8861 = vweird.f32 %v8854
        %vm8862 = vmor %vm8860, %vm8861
        %v8863 = vsel %vm8862, %v8854, %v8859
        %v8864 = vrsqrt.pop %v8794
        %v8865 = vmul.f32 %v8864, %v8794
        %v8866 = vmul.f32 %v8865, %v8864
        %v8867 = vmul.f32 0.5, %v8866
        %v8868 = vsub.f32 1.5, %v8867
        %v8869 = vmul.f32 %v8864, %v8868
        %vm8870 = vweird.f32 %v8794
        %vm8871 = vweird.f32 %v8864
        %vm8872 = vmor %vm8870, %vm8871
        %v8873 = vsel %vm8872, %v8864, %v8869
        %v8874 = vrsqrt.pop %v8795
        %v8875 = vmul.f32 %v8874, %v8795
        %v8876 = vmul.f32 %v8875, %v8874
        %v8877 = vmul.f32 0.5, %v8876
        %v8878 = vsub.f32 1.5, %v8877
        %v8879 = vmul.f32 %v8874, %v8878
        %vm8880 = vweird.f32 %v8795
        %vm8881 = vweird.f32 %v8874
        %vm8882 = vmor %vm8880, %vm8881
        %v8883 = vsel %vm8882, %v8874, %v8879
        %v8884 = vrsqrt.pop %v8796
        %v8885 = vmul.f32 %v8884, %v8796
        %v8886 = vmul.f32 %v8885, %v8884
        %v8887 = vmul.f32 0.5, %v8886
        %v8888 = vsub.f32 1.5, %v8887
        %v8889 = vmul.f32 %v8884, %v8888
        %vm8890 = vweird.f32 %v8796
        %vm8891 = vweird.f32 %v8884
        %vm8892 = vmor %vm8890, %vm8891
        %v8893 = vsel %vm8892, %v8884, %v8889
        %v8894 = vrsqrt.pop %v8797
        %v8895 = vmul.f32 %v8894, %v8797
        %v8896 = vmul.f32 %v8895, %v8894
        %v8897 = vmul.f32 0.5, %v8896
        %v8898 = vsub.f32 1.5, %v8897
        %v8899 = vmul.f32 %v8894, %v8898
        %vm8900 = vweird.f32 %v8797
        %vm8901 = vweird.f32 %v8894
        %vm8902 = vmor %vm8900, %vm8901
        %v8903 = vsel %vm8902, %v8894, %v8899
        %v8904 = vrsqrt.pop %v8798
        %v8905 = vmul.f32 %v8904, %v8798
        %v8906 = vmul.f32 %v8905, %v8904
        %v8907 = vmul.f32 0.5, %v8906
        %v8908 = vsub.f32 1.5, %v8907
        %v8909 = vmul.f32 %v8904, %v8908
        %vm8910 = vweird.f32 %v8798
        %vm8911 = vweird.f32 %v8904
        %vm8912 = vmor %vm8910, %vm8911
        %v8913 = vsel %vm8912, %v8904, %v8909
        %v8914 = vrsqrt.pop %v8799
        %v8915 = vmul.f32 %v8914, %v8799
        %v8916 = vmul.f32 %v8915, %v8914
        %v8917 = vmul.f32 0.5, %v8916
        %v8918 = vsub.f32 1.5, %v8917
        %v8919 = vmul.f32 %v8914, %v8918
        %vm8920 = vweird.f32 %v8799
        %vm8921 = vweird.f32 %v8914
        %vm8922 = vmor %vm8920, %vm8921
        %v8923 = vsel %vm8922, %v8914, %v8919
        %v8924 = vrsqrt.pop %v8800
        %v8925 = vmul.f32 %v8924, %v8800
        %v8926 = vmul.f32 %v8925, %v8924
        %v8927 = vmul.f32 0.5, %v8926
        %v8928 = vsub.f32 1.5, %v8927
        %v8929 = vmul.f32 %v8924, %v8928
        %vm8930 = vweird.f32 %v8800
        %vm8931 = vweird.f32 %v8924
        %vm8932 = vmor %vm8930, %vm8931
        %v8933 = vsel %vm8932, %v8924, %v8929
        %v8934 = vrsqrt.pop %v8801
        %v8935 = vmul.f32 %v8934, %v8801
        %v8936 = vmul.f32 %v8935, %v8934
        %v8937 = vmul.f32 0.5, %v8936
        %v8938 = vsub.f32 1.5, %v8937
        %v8939 = vmul.f32 %v8934, %v8938
        %vm8940 = vweird.f32 %v8801
        %vm8941 = vweird.f32 %v8934
        %vm8942 = vmor %vm8940, %vm8941
        %v8943 = vsel %vm8942, %v8934, %v8939
        %v8944 = vrsqrt.pop %v8802
        %v8945 = vmul.f32 %v8944, %v8802
        %v8946 = vmul.f32 %v8945, %v8944
        %v8947 = vmul.f32 0.5, %v8946
        %v8948 = vsub.f32 1.5, %v8947
        %v8949 = vmul.f32 %v8944, %v8948
        %vm8950 = vweird.f32 %v8802
        %vm8951 = vweird.f32 %v8944
        %vm8952 = vmor %vm8950, %vm8951
        %v8953 = vsel %vm8952, %v8944, %v8949
        %v8954 = vrsqrt.pop %v8803
        %v8955 = vmul.f32 %v8954, %v8803
        %v8956 = vmul.f32 %v8955, %v8954
        %v8957 = vmul.f32 0.5, %v8956
        %v8958 = vsub.f32 1.5, %v8957
        %v8959 = vmul.f32 %v8954, %v8958
        %vm8960 = vweird.f32 %v8803
        %vm8961 = vweird.f32 %v8954
        %vm8962 = vmor %vm8960, %vm8961
        %v8963 = vsel %vm8962, %v8954, %v8959
        %v8964 = vmul.f32 %v8692, %v8813
        %v8965 = vmul.f32 %v8693, %v8823
        %v8966 = vmul.f32 %v8694, %v8833
        %v8967 = vmul.f32 %v8695, %v8843
        %v8968 = vmul.f32 %v8696, %v8853
        %v8969 = vmul.f32 %v8697, %v8863
        %v8970 = vmul.f32 %v8698, %v8873
        %v8971 = vmul.f32 %v8699, %v8883
        %v8972 = vmul.f32 %v8700, %v8893
        %v8973 = vmul.f32 %v8701, %v8903
        %v8974 = vmul.f32 %v8702, %v8913
        %v8975 = vmul.f32 %v8703, %v8923
        %v8976 = vmul.f32 %v8704, %v8933
        %v8977 = vmul.f32 %v8705, %v8943
        %v8978 = vmul.f32 %v8706, %v8953
        %v8979 = vmul.f32 %v8707, %v8963
        %v8980 = vperm.slane %v4760, 4
        %v8981 = vmul.f32 %v8964, %v8980
        %v8982 = vmul.f32 %v8965, %v8980
        %v8983 = vmul.f32 %v8966, %v8980
        %v8984 = vmul.f32 %v8967, %v8980
        %v8985 = vmul.f32 %v8968, %v8980
        %v8986 = vmul.f32 %v8969, %v8980
        %v8987 = vmul.f32 %v8970, %v8980
        %v8988 = vmul.f32 %v8971, %v8980
        %v8989 = vmul.f32 %v8972, %v8980
        %v8990 = vmul.f32 %v8973, %v8980
        %v8991 = vmul.f32 %v8974, %v8980
        %v8992 = vmul.f32 %v8975, %v8980
        %v8993 = vmul.f32 %v8976, %v8980
        %v8994 = vmul.f32 %v8977, %v8980
        %v8995 = vmul.f32 %v8978, %v8980
        %v8996 = vmul.f32 %v8979, %v8980
        %v8997 = vperm.slane %v4760, 5
        %v8998 = vadd.f32 %v8981, %v8997
        %v8999 = vadd.f32 %v8982, %v8997
        %v9000 = vadd.f32 %v8983, %v8997
        %v9001 = vadd.f32 %v8984, %v8997
        %v9002 = vadd.f32 %v8985, %v8997
        %v9003 = vadd.f32 %v8986, %v8997
        %v9004 = vadd.f32 %v8987, %v8997
        %v9005 = vadd.f32 %v8988, %v8997
        %v9006 = vadd.f32 %v8989, %v8997
        %v9007 = vadd.f32 %v8990, %v8997
        %v9008 = vadd.f32 %v8991, %v8997
        %v9009 = vadd.f32 %v8992, %v8997
        %v9010 = vadd.f32 %v8993, %v8997
        %v9011 = vadd.f32 %v8994, %v8997
        %v9012 = vadd.f32 %v8995, %v8997
        %v9013 = vadd.f32 %v8996, %v8997
        %9014 = vst.msk [vmem:[%s428] sm:$0xff] %vm493, %v8998
        %9015 = vst.msk [vmem:[%s428 + $0x8] sm:$0xff] %vm493, %v8999
        %9016 = vst.msk [vmem:[%s428 + $0x10] sm:$0xff] %vm493, %v9000
        %9017 = vst.msk [vmem:[%s428 + $0x18] sm:$0xff] %vm493, %v9001
        %9018 = vst.msk [vmem:[%s428 + $0x20] sm:$0xff] %vm493, %v9002
        %9019 = vst.msk [vmem:[%s428 + $0x28] sm:$0xff] %vm493, %v9003
        %9020 = vst.msk [vmem:[%s428 + $0x30] sm:$0xff] %vm493, %v9004
        %9021 = vst.msk [vmem:[%s428 + $0x38] sm:$0xff] %vm493, %v9005
        %9022 = vst.msk [vmem:[%s428 + $0x40] sm:$0xff] %vm493, %v9006
        %9023 = vst.msk [vmem:[%s428 + $0x48] sm:$0xff] %vm493, %v9007
        %9024 = vst.msk [vmem:[%s428 + $0x50] sm:$0xff] %vm493, %v9008
        %9025 = vst.msk [vmem:[%s428 + $0x58] sm:$0xff] %vm493, %v9009
        %9026 = vst.msk [vmem:[%s428 + $0x60] sm:$0xff] %vm493, %v9010
        %9027 = vst.msk [vmem:[%s428 + $0x68] sm:$0xff] %vm493, %v9011
        %9028 = vst.msk [vmem:[%s428 + $0x70] sm:$0xff] %vm493, %v9012
        %9029 = vst.msk [vmem:[%s428 + $0x78] sm:$0xff] %vm493, %v9013
        %p9030 = scmp.lt.s32.totalorder %s25, 1
        %s9031 = scalar_select %p9030, %s25, 1
        %s9032 = smul.addr %s9031, 16
        %s9033 = smul.addr %s9032, 8
        %s9034 = scalar_lea.vmem %s9, %s9033
        %s9035 = sand.u32 %s258, 1
        %s9036 = scalar_lea.sflag [#allocation4], %s9035
        %s9037 = sand.u32 %s258, 1
        %s9038 = smul.addr %s9037, 256
        %s9039 = scalar_lea.vmem [#allocation3], %s9038
        // Predicated region
        $region91: #{tpu_custom_call.1} parent=85 // pred_check
          %p9040 = pneg %p242
        $region92: #{tpu_custom_call.1} parent=85 // pred_check_branch
          %9042 = sbr.rel (%p9040) target = $region94
        $region93: #{tpu_custom_call.1} parent=85 // pred_region
          _
        $region94: #{tpu_custom_call.1} parent=85 // pred_fallthru
          _
        // Predicated region
        $region95: #{tpu_custom_call.1} parent=85 // pred_check
          %p9043 = pneg %p268
        $region96: #{tpu_custom_call.1} parent=85 // pred_check_branch
          %9045 = sbr.rel (%p9043) target = $region98
        $region97: #{tpu_custom_call.1} parent=85 // pred_region
          #allocation6 [shape = 'u32[6]{0}', space=smem, size = 0x18, scoped, tag = 'DMA stride descriptor']
          %9047 = vsyncadd %s9036, 0
          %s9048 = smul.addr %s25, 16
          %s9049 = smul.addr %s9048, 8
          %s9050 = scalar_lea.hbm %s10, %s9049
          %s9052 = sshll.u32 1, 14
          %s9053 = sxor.u32 4294967295, %s9052
          %s9056 = sshll.u32 7, 18
          %s9057 = sxor.u32 4294967295, %s9056
          %s9058 = sand.u32 0, %s9057
          %s9060 = sor.u32 %s9058, 0
          %s9061 = sshll.u32 %s9039, 4
          %s9062 = int_to_ptr.vmem [resolvable:$true] %s9061
          %s9063 = sshll.u32 %s9050, 4
          %s9064 = int_to_ptr.hbm [resolvable:$true] %s9063
          %9070 = sst [smem:[#allocation6]] 2048
          %s9071 = scalar_lea.smem [#allocation6], 1
          %9072 = sst [smem:[%s9071]] 4096
          %s9073 = scalar_lea.smem [#allocation6], 2
          %9074 = sst [smem:[%s9073]] 16
          %s9075 = scalar_lea.smem [#allocation6], 3
          %9076 = sst [smem:[%s9075]] 128
          %s9077 = scalar_lea.smem [#allocation6], 4
          %9078 = sst [smem:[%s9077]] 128
          %s9079 = scalar_lea.smem [#allocation6], 5
          %9080 = sst [smem:[%s9079]] 8
          %9082 = dma.general %s9062, 4096, %s9064, %s9036, [#allocation5], [#allocation6], %s9060, 0
        $region98: #{tpu_custom_call.1} parent=85 // pred_fallthru
          _
      $region86: #{tpu_custom_call.1} parent=5 // pred_fallthru
        _
      %p9083 = scmp.le.s32.totalorder 2, %s20
      // Predicated region
      $region99: #{tpu_custom_call.1} parent=5 // pred_check
        %p9084 = pneg %p9083
      $region100: #{tpu_custom_call.1} parent=5 // pred_check_branch
        %9086 = sbr.rel (%p9084) target = $region102
      $region101: #{tpu_custom_call.1} parent=5 // pred_region
        %s9087 = ssub.s32 %s20, 2
        // Predicated region
        $region103: #{tpu_custom_call.1} parent=101 // pred_check
          %p9088 = pneg %p248
        $region104: #{tpu_custom_call.1} parent=101 // pred_check_branch
          %9090 = sbr.rel (%p9088) target = $region106
        $region105: #{tpu_custom_call.1} parent=101 // pred_region
          %p9091 = scmp.lt.s32.totalorder %s26, 1
          %s9092 = scalar_select %p9091, %s26, 1
          %s9093 = smul.addr %s9092, 16
          %s9094 = smul.addr %s9093, 8
          %s9095 = scalar_lea.vmem %s9, %s9094
        $region106: #{tpu_custom_call.1} parent=101 // pred_fallthru
          _
        // Predicated region
        $region107: #{tpu_custom_call.1} parent=101 // pred_check
          %p9096 = pneg %p274
        $region108: #{tpu_custom_call.1} parent=101 // pred_check_branch
          %9098 = sbr.rel (%p9096) target = $region110
        $region109: #{tpu_custom_call.1} parent=101 // pred_region
          %s9099 = sand.u32 %s259, 1
          %s9100 = scalar_lea.sflag [#allocation4], %s9099
          %s9101 = sand.u32 %s259, 1
          %s9102 = smul.addr %s9101, 256
          %s9103 = scalar_lea.vmem [#allocation3], %s9102
          %9105 = dma.done %s9100, 4096
        $region110: #{tpu_custom_call.1} parent=101 // pred_fallthru
          _
      $region102: #{tpu_custom_call.1} parent=5 // pred_fallthru
        _
    $region6: #{tpu_custom_call.1} parent=1 // loop_footer
      %s24 = sadd.s32 1, %s20
    $region7: #{tpu_custom_call.1} parent=1 // loop_footer_branch
      %19 = sbr.rel target = $region3
    $region8: #{tpu_custom_call.1} parent=1 // loop_exit
      _
    %9106 = vsyncpa [#allocation4], 1
    %s9107 = scalar_lea.sflag [#allocation4], 1
    %9108 = vsyncpa %s9107, 1

</llo_original>
